<compile_context>
chip_gen: v5e
topology: v5e:2x2
jax: 0.10.0
libtpu: 0.0.40
codegen_flags: <defaults>
</compile_context>

<pallas_src>
import numpy as np
import jax
import jax.numpy as jnp
from jax import lax
from jax.experimental import pallas as pl
from jax.experimental.pallas import tpu as pltpu

NUMFILT = 16
CONV_K = 3
H_IN = W_IN = 28
H_C = W_C = 26          # after 3x3 valid conv
H_P = W_P = 12          # after max_pool2d(3, 2)
HID = 32
NCLS = 10
FLAT = NUMFILT * H_P * W_P          # 2304

BT = 8                               # images per grid step (sub-batch tile)
NSEG = 512                           # lane width of one conv-row segment (416 real lanes)
KWIN = 5 * W_IN                      # 140 input values feeding one pooled row
WSEG = NSEG - 2 * NUMFILT            # 480: width after the 3-tap sliding max over columns


def net_kernel(x_ref, crhs_ref, cbias_ref, w1_ref, b1_ref, w2_ref, b2_ref, o_ref):
    """Fused Net forward for one batch tile of BT images.

    x_ref    : (BT, 784)       flattened images (row-major 28x28), f32
    crhs_ref : (140, 1536)     bf16 banded conv weights (3 conv rows x [j*16+c])
    cbias_ref: (1, 512)        f32 conv bias in [j*16+c] layout (j<26), else 0
    w1_ref   : (5760, 32)      bf16 permuted / zero-padded linear1 weight
    b1_ref   : (1, 32)  w2_ref: (32, 10)  b2_ref: (1, 10)
    o_ref    : (BT, 10)        log-probabilities
    """
    crhs = crhs_ref[...]
    cbias = cbias_ref[...]
    hid = jnp.zeros((BT, HID), jnp.float32)

    for p in range(H_P):                                    # 12 pooled output rows
        # input rows 2p .. 2p+4, lane-dense slice of the flattened image
        lhs = x_ref[:, pl.ds(2 * p * W_IN, KWIN)].astype(jnp.bfloat16)   # (BT, 140)
        # one MXU matmul emits conv rows 2p, 2p+1, 2p+2 side by side on lanes
        rows3 = jnp.dot(lhs, crhs, preferred_element_type=jnp.float32)   # (BT, 1536)
        # max over the 3 conv rows of the pool window (bias is per-lane, so it
        # commutes with the max; ReLU is monotone, so relu(max) == max(relu)).
        seg = jnp.maximum(jnp.maximum(rows3[:, 0:NSEG], rows3[:, NSEG:2 * NSEG]),
                          rows3[:, 2 * NSEG:3 * NSEG])                   # (BT, 512)
        rowp = jnp.maximum(seg + cbias, 0.0)                             # (BT, 512)
        # max over the 3 pool-window columns: lanes l, l+16, l+32 in [j*16+c] layout
        wmax = jnp.maximum(jnp.maximum(rowp[:, 0:WSEG],
                                       rowp[:, NUMFILT:NUMFILT + WSEG]),
                           rowp[:, 2 * NUMFILT:2 * NUMFILT + WSEG])      # (BT, 480)
        # accumulate linear1 directly; the stride-2 pick and torch.flatten order
        # are folded into the permuted weight slice (garbage lanes hit zero rows).
        w1p = w1_ref[pl.ds(p * WSEG, WSEG), :]                           # (480, 32)
        hid = hid + jnp.dot(wmax.astype(jnp.bfloat16), w1p,
                            preferred_element_type=jnp.float32)          # (BT, 32)

    h = jnp.maximum(hid + b1_ref[...], 0.0)                              # (BT, 32)
    logits = jnp.dot(h.astype(jnp.bfloat16), w2_ref[...].astype(jnp.bfloat16),
                     preferred_element_type=jnp.float32) + b2_ref[...]   # (BT, 10)
    m = jnp.max(logits, axis=-1, keepdims=True)
    z = logits - m
    o_ref[...] = z - jnp.log(jnp.sum(jnp.exp(z), axis=-1, keepdims=True))


# ---------------------------------------------------------------------------
# Glue: parameter re-layouts (cheap, done in plain JAX outside the kernel)
# ---------------------------------------------------------------------------
def _build_conv_rhs(w_conv):
    """(140, 1536) banded matrix: one matmul emits 3 conv rows for 16 channels.

    RHS[(r+dy)*28 + (j+dx), r*512 + j*16 + c] = w_conv[c, 0, dy, dx]
    """
    co, r, j, dy, dx = np.meshgrid(np.arange(NUMFILT), np.arange(CONV_K),
                                   np.arange(W_C), np.arange(CONV_K),
                                   np.arange(CONV_K), indexing="ij")
    rows = ((r + dy) * W_IN + (j + dx)).ravel()
    cols = (r * NSEG + j * NUMFILT + co).ravel()
    vals = w_conv[co.ravel(), 0, dy.ravel(), dx.ravel()]
    rhs = jnp.zeros((KWIN, CONV_K * NSEG), jnp.float32).at[rows, cols].set(vals)
    return rhs.astype(jnp.bfloat16)


def _build_conv_bias(b_conv):
    bias = jnp.concatenate([jnp.tile(b_conv, W_C),
                            jnp.zeros((NSEG - W_C * NUMFILT,), jnp.float32)])
    return bias.reshape(1, NSEG)


def _build_w1_perm(w1):
    """(5760, 32): linear1 weight permuted to the kernel's pooled-lane layout.

    The pooled value for (channel c, pool row p, pool col q) sits at kernel row
    p*480 + 32*q + c; its torch.flatten index is c*144 + p*12 + q.  All other
    rows are zero, so pooling "garbage" lanes contribute exactly nothing.
    """
    p, q, c = np.meshgrid(np.arange(H_P), np.arange(W_P), np.arange(NUMFILT),
                          indexing="ij")
    rows = (p * WSEG + 2 * NUMFILT * q + c).ravel()
    flat = (c * (H_P * W_P) + p * W_P + q).ravel()
    w1_t = w1.T                                                     # (2304, 32)
    perm = jnp.zeros((H_P * WSEG, HID), jnp.float32).at[rows, :].set(w1_t[flat, :])
    return perm.astype(jnp.bfloat16)


def init_params(key):
    k1, k2, k3, k4, k5, k6 = jax.random.split(key, 6)
    return {
        "w_conv": jax.random.normal(k1, (NUMFILT, 1, CONV_K, CONV_K), jnp.float32) * 0.1,
        "b_conv": jax.random.normal(k2, (NUMFILT,), jnp.float32) * 0.1,
        "w1": jax.random.normal(k3, (HID, FLAT), jnp.float32) * 0.02,
        "b1": jax.random.normal(k4, (HID,), jnp.float32) * 0.02,
        "w2": jax.random.normal(k5, (NCLS, HID), jnp.float32) * 0.1,
        "b2": jax.random.normal(k6, (NCLS,), jnp.float32) * 0.1,
    }


def net_forward(x_nchw, params):
    B = x_nchw.shape[0]
    nb = -(-B // BT)                     # ceil(B / BT)
    b_pad = nb * BT

    x_flat = x_nchw.reshape(B, H_IN * W_IN)
    if b_pad != B:
        x_flat = jnp.pad(x_flat, ((0, b_pad - B), (0, 0)))

    crhs = _build_conv_rhs(params["w_conv"])
    cbias = _build_conv_bias(params["b_conv"])
    w1p = _build_w1_perm(params["w1"])
    b1 = params["b1"].reshape(1, HID)
    w2t = params["w2"].T
    b2 = params["b2"].reshape(1, NCLS)

    out = pl.pallas_call(
        net_kernel,
        out_shape=jax.ShapeDtypeStruct((b_pad, NCLS), jnp.float32),
        grid=(nb,),
        in_specs=[
            pl.BlockSpec((BT, H_IN * W_IN), lambda i: (i, 0)),       # images
            pl.BlockSpec((KWIN, CONV_K * NSEG), lambda i: (0, 0)),   # conv weights (resident)
            pl.BlockSpec((1, NSEG), lambda i: (0, 0)),               # conv bias
            pl.BlockSpec((H_P * WSEG, HID), lambda i: (0, 0)),       # permuted linear1
            pl.BlockSpec((1, HID), lambda i: (0, 0)),                # b1
            pl.BlockSpec((HID, NCLS), lambda i: (0, 0)),             # w2^T
            pl.BlockSpec((1, NCLS), lambda i: (0, 0)),               # b2
        ],
        out_specs=pl.BlockSpec((BT, NCLS), lambda i: (i, 0)),
        compiler_params=pltpu.CompilerParams(dimension_semantics=("parallel",)),
    )(x_flat, crhs, cbias, w1p, b1, w2t, b2)
    return out[:B]


def reference_forward(x_nchw, params):
    """Pure-JAX reference (matches PyTorch Net.forward semantics)."""
    B = x_nchw.shape[0]
    conv = lax.conv_general_dilated(
        x_nchw, params["w_conv"], window_strides=(1, 1), padding="VALID",
        dimension_numbers=("NCHW", "OIHW", "NCHW"),
        precision=lax.Precision.HIGHEST,
    ) + params["b_conv"][None, :, None, None]
    relu = jnp.maximum(conv, 0.0)
    pooled = lax.reduce_window(relu, -jnp.inf, lax.max,
                               window_dimensions=(1, 1, 3, 3),
                               window_strides=(1, 1, 2, 2),
                               padding="VALID")
    flat = pooled.reshape(B, -1)
    h = jnp.maximum(
        jnp.dot(flat, params["w1"].T, precision=lax.Precision.HIGHEST) + params["b1"], 0.0)
    logits = jnp.dot(h, params["w2"].T, precision=lax.Precision.HIGHEST) + params["b2"]
    return jax.nn.log_softmax(logits, axis=1)


if __name__ == "__main__":
    key = jax.random.PRNGKey(0)
    kx, kp = jax.random.split(key)
    x = jax.random.normal(kx, (16, 1, 28, 28), jnp.float32)   # NCHW, MNIST-sized
    params = init_params(kp)

    forward = jax.jit(net_forward)
    out = forward(x, params)
    out = jax.block_until_ready(out)
    assert out.shape == (16, NCLS)

    ref = reference_forward(x, params)
    # bf16 MXU operands (f32 accumulation) vs. f32 HIGHEST reference -> loose tol.
    if not jnp.allclose(out, ref, atol=2e-2, rtol=2e-2):
        raise AssertionError(
            f"kernel/reference mismatch, max_abs_err={float(jnp.max(jnp.abs(out - ref)))}")

    print("KERNEL_OK")
</pallas_src>

<mosaic_0001>
module attributes {stable_mosaic.version = 11 : i64} {
  func.func @net_kernel(%arg0: i32, %arg1: memref<8x784xf32, #tpu.memory_space<vmem>>, %arg2: memref<140x1536xbf16, #tpu.memory_space<vmem>>, %arg3: memref<1x512xf32, #tpu.memory_space<vmem>>, %arg4: memref<5760x32xbf16, #tpu.memory_space<vmem>>, %arg5: memref<1x32xf32, #tpu.memory_space<vmem>>, %arg6: memref<32x10xf32, #tpu.memory_space<vmem>>, %arg7: memref<1x10xf32, #tpu.memory_space<vmem>>, %arg8: memref<8x10xf32, #tpu.memory_space<vmem>>) attributes {dimension_semantics = [#tpu.dimension_semantics<parallel>], iteration_bounds = array<i64: 2>, scalar_prefetch = 0 : i64, scratch_operands = 0 : i64, tpu.core_type = #tpu.core_type<tc>, window_params = [{transform_indices = @transform_0, window_bounds = array<i64: 8, 784>}, {pipeline_mode = #tpu.pipeline_mode<synchronous>, transform_indices = @transform_1, window_bounds = array<i64: 140, 1536>}, {pipeline_mode = #tpu.pipeline_mode<synchronous>, transform_indices = @transform_2, window_bounds = array<i64: 1, 512>}, {pipeline_mode = #tpu.pipeline_mode<synchronous>, transform_indices = @transform_3, window_bounds = array<i64: 5760, 32>}, {pipeline_mode = #tpu.pipeline_mode<synchronous>, transform_indices = @transform_4, window_bounds = array<i64: 1, 32>}, {pipeline_mode = #tpu.pipeline_mode<synchronous>, transform_indices = @transform_5, window_bounds = array<i64: 32, 10>}, {pipeline_mode = #tpu.pipeline_mode<synchronous>, transform_indices = @transform_6, window_bounds = array<i64: 1, 10>}, {transform_indices = @transform_7, window_bounds = array<i64: 8, 10>}]} {
    %c0 = arith.constant 0 : index
    %c0_0 = arith.constant 0 : index
    %0 = vector.load %arg2[%c0, %c0_0] : memref<140x1536xbf16, #tpu.memory_space<vmem>>, vector<140x1536xbf16>
    %c0_1 = arith.constant 0 : index
    %c0_2 = arith.constant 0 : index
    %1 = vector.load %arg3[%c0_1, %c0_2] : memref<1x512xf32, #tpu.memory_space<vmem>>, vector<1x512xf32>
    %cst = arith.constant 0.000000e+00 : f32
    %2 = vector.broadcast %cst : f32 to vector<8x32xf32>
    %c0_3 = arith.constant 0 : index
    %c0_4 = arith.constant 0 : index
    %3 = vector.load %arg1[%c0_3, %c0_4] : memref<8x784xf32, #tpu.memory_space<vmem>>, vector<8x140xf32>
    %4 = arith.truncf %3 : vector<8x140xf32> to vector<8x140xbf16>
    %cst_5 = arith.constant dense<0.000000e+00> : vector<8x1536xf32>
    %5 = tpu.matmul %4, %0, %cst_5 {dimension_numbers = #tpu.dot_dimension_numbers<[1], [0], [0], [1], [0, 0, 1, 1], [], []>} : vector<8x140xbf16>, vector<140x1536xbf16>, vector<8x1536xf32> -> vector<8x1536xf32>
    %6 = vector.extract_strided_slice %5 {offsets = [0, 0], sizes = [8, 512], strides = [1, 1]} : vector<8x1536xf32> to vector<8x512xf32>
    %7 = vector.extract_strided_slice %5 {offsets = [0, 512], sizes = [8, 512], strides = [1, 1]} : vector<8x1536xf32> to vector<8x512xf32>
    %8 = arith.maximumf %6, %7 : vector<8x512xf32>
    %9 = vector.extract_strided_slice %5 {offsets = [0, 1024], sizes = [8, 512], strides = [1, 1]} : vector<8x1536xf32> to vector<8x512xf32>
    %10 = arith.maximumf %8, %9 : vector<8x512xf32>
    %11 = vector.broadcast %1 : vector<1x512xf32> to vector<8x512xf32>
    %12 = arith.addf %10, %11 : vector<8x512xf32>
    %cst_6 = arith.constant 0.000000e+00 : f32
    %13 = vector.broadcast %cst_6 : f32 to vector<8x512xf32>
    %14 = arith.maximumf %12, %13 : vector<8x512xf32>
    %15 = vector.extract_strided_slice %14 {offsets = [0, 0], sizes = [8, 480], strides = [1, 1]} : vector<8x512xf32> to vector<8x480xf32>
    %16 = vector.extract_strided_slice %14 {offsets = [0, 16], sizes = [8, 480], strides = [1, 1]} : vector<8x512xf32> to vector<8x480xf32>
    %17 = arith.maximumf %15, %16 : vector<8x480xf32>
    %18 = vector.extract_strided_slice %14 {offsets = [0, 32], sizes = [8, 480], strides = [1, 1]} : vector<8x512xf32> to vector<8x480xf32>
    %19 = arith.maximumf %17, %18 : vector<8x480xf32>
    %c0_7 = arith.constant 0 : index
    %c0_8 = arith.constant 0 : index
    %20 = vector.load %arg4[%c0_7, %c0_8] : memref<5760x32xbf16, #tpu.memory_space<vmem>>, vector<480x32xbf16>
    %21 = arith.truncf %19 : vector<8x480xf32> to vector<8x480xbf16>
    %cst_9 = arith.constant dense<0.000000e+00> : vector<8x32xf32>
    %22 = tpu.matmul %21, %20, %cst_9 {dimension_numbers = #tpu.dot_dimension_numbers<[1], [0], [0], [1], [0, 0, 1, 1], [], []>} : vector<8x480xbf16>, vector<480x32xbf16>, vector<8x32xf32> -> vector<8x32xf32>
    %23 = arith.addf %2, %22 : vector<8x32xf32>
    %c0_10 = arith.constant 0 : index
    %c56 = arith.constant 56 : index
    %24 = vector.load %arg1[%c0_10, %c56] : memref<8x784xf32, #tpu.memory_space<vmem>>, vector<8x140xf32>
    %25 = arith.truncf %24 : vector<8x140xf32> to vector<8x140xbf16>
    %cst_11 = arith.constant dense<0.000000e+00> : vector<8x1536xf32>
    %26 = tpu.matmul %25, %0, %cst_11 {dimension_numbers = #tpu.dot_dimension_numbers<[1], [0], [0], [1], [0, 0, 1, 1], [], []>} : vector<8x140xbf16>, vector<140x1536xbf16>, vector<8x1536xf32> -> vector<8x1536xf32>
    %27 = vector.extract_strided_slice %26 {offsets = [0, 0], sizes = [8, 512], strides = [1, 1]} : vector<8x1536xf32> to vector<8x512xf32>
    %28 = vector.extract_strided_slice %26 {offsets = [0, 512], sizes = [8, 512], strides = [1, 1]} : vector<8x1536xf32> to vector<8x512xf32>
    %29 = arith.maximumf %27, %28 : vector<8x512xf32>
    %30 = vector.extract_strided_slice %26 {offsets = [0, 1024], sizes = [8, 512], strides = [1, 1]} : vector<8x1536xf32> to vector<8x512xf32>
    %31 = arith.maximumf %29, %30 : vector<8x512xf32>
    %32 = vector.broadcast %1 : vector<1x512xf32> to vector<8x512xf32>
    %33 = arith.addf %31, %32 : vector<8x512xf32>
    %cst_12 = arith.constant 0.000000e+00 : f32
    %34 = vector.broadcast %cst_12 : f32 to vector<8x512xf32>
    %35 = arith.maximumf %33, %34 : vector<8x512xf32>
    %36 = vector.extract_strided_slice %35 {offsets = [0, 0], sizes = [8, 480], strides = [1, 1]} : vector<8x512xf32> to vector<8x480xf32>
    %37 = vector.extract_strided_slice %35 {offsets = [0, 16], sizes = [8, 480], strides = [1, 1]} : vector<8x512xf32> to vector<8x480xf32>
    %38 = arith.maximumf %36, %37 : vector<8x480xf32>
    %39 = vector.extract_strided_slice %35 {offsets = [0, 32], sizes = [8, 480], strides = [1, 1]} : vector<8x512xf32> to vector<8x480xf32>
    %40 = arith.maximumf %38, %39 : vector<8x480xf32>
    %c480 = arith.constant 480 : index
    %c0_13 = arith.constant 0 : index
    %41 = vector.load %arg4[%c480, %c0_13] : memref<5760x32xbf16, #tpu.memory_space<vmem>>, vector<480x32xbf16>
    %42 = arith.truncf %40 : vector<8x480xf32> to vector<8x480xbf16>
    %cst_14 = arith.constant dense<0.000000e+00> : vector<8x32xf32>
    %43 = tpu.matmul %42, %41, %cst_14 {dimension_numbers = #tpu.dot_dimension_numbers<[1], [0], [0], [1], [0, 0, 1, 1], [], []>} : vector<8x480xbf16>, vector<480x32xbf16>, vector<8x32xf32> -> vector<8x32xf32>
    %44 = arith.addf %23, %43 : vector<8x32xf32>
    %c0_15 = arith.constant 0 : index
    %c112 = arith.constant 112 : index
    %45 = vector.load %arg1[%c0_15, %c112] : memref<8x784xf32, #tpu.memory_space<vmem>>, vector<8x140xf32>
    %46 = arith.truncf %45 : vector<8x140xf32> to vector<8x140xbf16>
    %cst_16 = arith.constant dense<0.000000e+00> : vector<8x1536xf32>
    %47 = tpu.matmul %46, %0, %cst_16 {dimension_numbers = #tpu.dot_dimension_numbers<[1], [0], [0], [1], [0, 0, 1, 1], [], []>} : vector<8x140xbf16>, vector<140x1536xbf16>, vector<8x1536xf32> -> vector<8x1536xf32>
    %48 = vector.extract_strided_slice %47 {offsets = [0, 0], sizes = [8, 512], strides = [1, 1]} : vector<8x1536xf32> to vector<8x512xf32>
    %49 = vector.extract_strided_slice %47 {offsets = [0, 512], sizes = [8, 512], strides = [1, 1]} : vector<8x1536xf32> to vector<8x512xf32>
    %50 = arith.maximumf %48, %49 : vector<8x512xf32>
    %51 = vector.extract_strided_slice %47 {offsets = [0, 1024], sizes = [8, 512], strides = [1, 1]} : vector<8x1536xf32> to vector<8x512xf32>
    %52 = arith.maximumf %50, %51 : vector<8x512xf32>
    %53 = vector.broadcast %1 : vector<1x512xf32> to vector<8x512xf32>
    %54 = arith.addf %52, %53 : vector<8x512xf32>
    %cst_17 = arith.constant 0.000000e+00 : f32
    %55 = vector.broadcast %cst_17 : f32 to vector<8x512xf32>
    %56 = arith.maximumf %54, %55 : vector<8x512xf32>
    %57 = vector.extract_strided_slice %56 {offsets = [0, 0], sizes = [8, 480], strides = [1, 1]} : vector<8x512xf32> to vector<8x480xf32>
    %58 = vector.extract_strided_slice %56 {offsets = [0, 16], sizes = [8, 480], strides = [1, 1]} : vector<8x512xf32> to vector<8x480xf32>
    %59 = arith.maximumf %57, %58 : vector<8x480xf32>
    %60 = vector.extract_strided_slice %56 {offsets = [0, 32], sizes = [8, 480], strides = [1, 1]} : vector<8x512xf32> to vector<8x480xf32>
    %61 = arith.maximumf %59, %60 : vector<8x480xf32>
    %c960 = arith.constant 960 : index
    %c0_18 = arith.constant 0 : index
    %62 = vector.load %arg4[%c960, %c0_18] : memref<5760x32xbf16, #tpu.memory_space<vmem>>, vector<480x32xbf16>
    %63 = arith.truncf %61 : vector<8x480xf32> to vector<8x480xbf16>
    %cst_19 = arith.constant dense<0.000000e+00> : vector<8x32xf32>
    %64 = tpu.matmul %63, %62, %cst_19 {dimension_numbers = #tpu.dot_dimension_numbers<[1], [0], [0], [1], [0, 0, 1, 1], [], []>} : vector<8x480xbf16>, vector<480x32xbf16>, vector<8x32xf32> -> vector<8x32xf32>
    %65 = arith.addf %44, %64 : vector<8x32xf32>
    %c0_20 = arith.constant 0 : index
    %c168 = arith.constant 168 : index
    %66 = vector.load %arg1[%c0_20, %c168] : memref<8x784xf32, #tpu.memory_space<vmem>>, vector<8x140xf32>
    %67 = arith.truncf %66 : vector<8x140xf32> to vector<8x140xbf16>
    %cst_21 = arith.constant dense<0.000000e+00> : vector<8x1536xf32>
    %68 = tpu.matmul %67, %0, %cst_21 {dimension_numbers = #tpu.dot_dimension_numbers<[1], [0], [0], [1], [0, 0, 1, 1], [], []>} : vector<8x140xbf16>, vector<140x1536xbf16>, vector<8x1536xf32> -> vector<8x1536xf32>
    %69 = vector.extract_strided_slice %68 {offsets = [0, 0], sizes = [8, 512], strides = [1, 1]} : vector<8x1536xf32> to vector<8x512xf32>
    %70 = vector.extract_strided_slice %68 {offsets = [0, 512], sizes = [8, 512], strides = [1, 1]} : vector<8x1536xf32> to vector<8x512xf32>
    %71 = arith.maximumf %69, %70 : vector<8x512xf32>
    %72 = vector.extract_strided_slice %68 {offsets = [0, 1024], sizes = [8, 512], strides = [1, 1]} : vector<8x1536xf32> to vector<8x512xf32>
    %73 = arith.maximumf %71, %72 : vector<8x512xf32>
    %74 = vector.broadcast %1 : vector<1x512xf32> to vector<8x512xf32>
    %75 = arith.addf %73, %74 : vector<8x512xf32>
    %cst_22 = arith.constant 0.000000e+00 : f32
    %76 = vector.broadcast %cst_22 : f32 to vector<8x512xf32>
    %77 = arith.maximumf %75, %76 : vector<8x512xf32>
    %78 = vector.extract_strided_slice %77 {offsets = [0, 0], sizes = [8, 480], strides = [1, 1]} : vector<8x512xf32> to vector<8x480xf32>
    %79 = vector.extract_strided_slice %77 {offsets = [0, 16], sizes = [8, 480], strides = [1, 1]} : vector<8x512xf32> to vector<8x480xf32>
    %80 = arith.maximumf %78, %79 : vector<8x480xf32>
    %81 = vector.extract_strided_slice %77 {offsets = [0, 32], sizes = [8, 480], strides = [1, 1]} : vector<8x512xf32> to vector<8x480xf32>
    %82 = arith.maximumf %80, %81 : vector<8x480xf32>
    %c1440 = arith.constant 1440 : index
    %c0_23 = arith.constant 0 : index
    %83 = vector.load %arg4[%c1440, %c0_23] : memref<5760x32xbf16, #tpu.memory_space<vmem>>, vector<480x32xbf16>
    %84 = arith.truncf %82 : vector<8x480xf32> to vector<8x480xbf16>
    %cst_24 = arith.constant dense<0.000000e+00> : vector<8x32xf32>
    %85 = tpu.matmul %84, %83, %cst_24 {dimension_numbers = #tpu.dot_dimension_numbers<[1], [0], [0], [1], [0, 0, 1, 1], [], []>} : vector<8x480xbf16>, vector<480x32xbf16>, vector<8x32xf32> -> vector<8x32xf32>
    %86 = arith.addf %65, %85 : vector<8x32xf32>
    %c0_25 = arith.constant 0 : index
    %c224 = arith.constant 224 : index
    %87 = vector.load %arg1[%c0_25, %c224] : memref<8x784xf32, #tpu.memory_space<vmem>>, vector<8x140xf32>
    %88 = arith.truncf %87 : vector<8x140xf32> to vector<8x140xbf16>
    %cst_26 = arith.constant dense<0.000000e+00> : vector<8x1536xf32>
    %89 = tpu.matmul %88, %0, %cst_26 {dimension_numbers = #tpu.dot_dimension_numbers<[1], [0], [0], [1], [0, 0, 1, 1], [], []>} : vector<8x140xbf16>, vector<140x1536xbf16>, vector<8x1536xf32> -> vector<8x1536xf32>
    %90 = vector.extract_strided_slice %89 {offsets = [0, 0], sizes = [8, 512], strides = [1, 1]} : vector<8x1536xf32> to vector<8x512xf32>
    %91 = vector.extract_strided_slice %89 {offsets = [0, 512], sizes = [8, 512], strides = [1, 1]} : vector<8x1536xf32> to vector<8x512xf32>
    %92 = arith.maximumf %90, %91 : vector<8x512xf32>
    %93 = vector.extract_strided_slice %89 {offsets = [0, 1024], sizes = [8, 512], strides = [1, 1]} : vector<8x1536xf32> to vector<8x512xf32>
    %94 = arith.maximumf %92, %93 : vector<8x512xf32>
    %95 = vector.broadcast %1 : vector<1x512xf32> to vector<8x512xf32>
    %96 = arith.addf %94, %95 : vector<8x512xf32>
    %cst_27 = arith.constant 0.000000e+00 : f32
    %97 = vector.broadcast %cst_27 : f32 to vector<8x512xf32>
    %98 = arith.maximumf %96, %97 : vector<8x512xf32>
    %99 = vector.extract_strided_slice %98 {offsets = [0, 0], sizes = [8, 480], strides = [1, 1]} : vector<8x512xf32> to vector<8x480xf32>
    %100 = vector.extract_strided_slice %98 {offsets = [0, 16], sizes = [8, 480], strides = [1, 1]} : vector<8x512xf32> to vector<8x480xf32>
    %101 = arith.maximumf %99, %100 : vector<8x480xf32>
    %102 = vector.extract_strided_slice %98 {offsets = [0, 32], sizes = [8, 480], strides = [1, 1]} : vector<8x512xf32> to vector<8x480xf32>
    %103 = arith.maximumf %101, %102 : vector<8x480xf32>
    %c1920 = arith.constant 1920 : index
    %c0_28 = arith.constant 0 : index
    %104 = vector.load %arg4[%c1920, %c0_28] : memref<5760x32xbf16, #tpu.memory_space<vmem>>, vector<480x32xbf16>
    %105 = arith.truncf %103 : vector<8x480xf32> to vector<8x480xbf16>
    %cst_29 = arith.constant dense<0.000000e+00> : vector<8x32xf32>
    %106 = tpu.matmul %105, %104, %cst_29 {dimension_numbers = #tpu.dot_dimension_numbers<[1], [0], [0], [1], [0, 0, 1, 1], [], []>} : vector<8x480xbf16>, vector<480x32xbf16>, vector<8x32xf32> -> vector<8x32xf32>
    %107 = arith.addf %86, %106 : vector<8x32xf32>
    %c0_30 = arith.constant 0 : index
    %c280 = arith.constant 280 : index
    %108 = vector.load %arg1[%c0_30, %c280] : memref<8x784xf32, #tpu.memory_space<vmem>>, vector<8x140xf32>
    %109 = arith.truncf %108 : vector<8x140xf32> to vector<8x140xbf16>
    %cst_31 = arith.constant dense<0.000000e+00> : vector<8x1536xf32>
    %110 = tpu.matmul %109, %0, %cst_31 {dimension_numbers = #tpu.dot_dimension_numbers<[1], [0], [0], [1], [0, 0, 1, 1], [], []>} : vector<8x140xbf16>, vector<140x1536xbf16>, vector<8x1536xf32> -> vector<8x1536xf32>
    %111 = vector.extract_strided_slice %110 {offsets = [0, 0], sizes = [8, 512], strides = [1, 1]} : vector<8x1536xf32> to vector<8x512xf32>
    %112 = vector.extract_strided_slice %110 {offsets = [0, 512], sizes = [8, 512], strides = [1, 1]} : vector<8x1536xf32> to vector<8x512xf32>
    %113 = arith.maximumf %111, %112 : vector<8x512xf32>
    %114 = vector.extract_strided_slice %110 {offsets = [0, 1024], sizes = [8, 512], strides = [1, 1]} : vector<8x1536xf32> to vector<8x512xf32>
    %115 = arith.maximumf %113, %114 : vector<8x512xf32>
    %116 = vector.broadcast %1 : vector<1x512xf32> to vector<8x512xf32>
    %117 = arith.addf %115, %116 : vector<8x512xf32>
    %cst_32 = arith.constant 0.000000e+00 : f32
    %118 = vector.broadcast %cst_32 : f32 to vector<8x512xf32>
    %119 = arith.maximumf %117, %118 : vector<8x512xf32>
    %120 = vector.extract_strided_slice %119 {offsets = [0, 0], sizes = [8, 480], strides = [1, 1]} : vector<8x512xf32> to vector<8x480xf32>
    %121 = vector.extract_strided_slice %119 {offsets = [0, 16], sizes = [8, 480], strides = [1, 1]} : vector<8x512xf32> to vector<8x480xf32>
    %122 = arith.maximumf %120, %121 : vector<8x480xf32>
    %123 = vector.extract_strided_slice %119 {offsets = [0, 32], sizes = [8, 480], strides = [1, 1]} : vector<8x512xf32> to vector<8x480xf32>
    %124 = arith.maximumf %122, %123 : vector<8x480xf32>
    %c2400 = arith.constant 2400 : index
    %c0_33 = arith.constant 0 : index
    %125 = vector.load %arg4[%c2400, %c0_33] : memref<5760x32xbf16, #tpu.memory_space<vmem>>, vector<480x32xbf16>
    %126 = arith.truncf %124 : vector<8x480xf32> to vector<8x480xbf16>
    %cst_34 = arith.constant dense<0.000000e+00> : vector<8x32xf32>
    %127 = tpu.matmul %126, %125, %cst_34 {dimension_numbers = #tpu.dot_dimension_numbers<[1], [0], [0], [1], [0, 0, 1, 1], [], []>} : vector<8x480xbf16>, vector<480x32xbf16>, vector<8x32xf32> -> vector<8x32xf32>
    %128 = arith.addf %107, %127 : vector<8x32xf32>
    %c0_35 = arith.constant 0 : index
    %c336 = arith.constant 336 : index
    %129 = vector.load %arg1[%c0_35, %c336] : memref<8x784xf32, #tpu.memory_space<vmem>>, vector<8x140xf32>
    %130 = arith.truncf %129 : vector<8x140xf32> to vector<8x140xbf16>
    %cst_36 = arith.constant dense<0.000000e+00> : vector<8x1536xf32>
    %131 = tpu.matmul %130, %0, %cst_36 {dimension_numbers = #tpu.dot_dimension_numbers<[1], [0], [0], [1], [0, 0, 1, 1], [], []>} : vector<8x140xbf16>, vector<140x1536xbf16>, vector<8x1536xf32> -> vector<8x1536xf32>
    %132 = vector.extract_strided_slice %131 {offsets = [0, 0], sizes = [8, 512], strides = [1, 1]} : vector<8x1536xf32> to vector<8x512xf32>
    %133 = vector.extract_strided_slice %131 {offsets = [0, 512], sizes = [8, 512], strides = [1, 1]} : vector<8x1536xf32> to vector<8x512xf32>
    %134 = arith.maximumf %132, %133 : vector<8x512xf32>
    %135 = vector.extract_strided_slice %131 {offsets = [0, 1024], sizes = [8, 512], strides = [1, 1]} : vector<8x1536xf32> to vector<8x512xf32>
    %136 = arith.maximumf %134, %135 : vector<8x512xf32>
    %137 = vector.broadcast %1 : vector<1x512xf32> to vector<8x512xf32>
    %138 = arith.addf %136, %137 : vector<8x512xf32>
    %cst_37 = arith.constant 0.000000e+00 : f32
    %139 = vector.broadcast %cst_37 : f32 to vector<8x512xf32>
    %140 = arith.maximumf %138, %139 : vector<8x512xf32>
    %141 = vector.extract_strided_slice %140 {offsets = [0, 0], sizes = [8, 480], strides = [1, 1]} : vector<8x512xf32> to vector<8x480xf32>
    %142 = vector.extract_strided_slice %140 {offsets = [0, 16], sizes = [8, 480], strides = [1, 1]} : vector<8x512xf32> to vector<8x480xf32>
    %143 = arith.maximumf %141, %142 : vector<8x480xf32>
    %144 = vector.extract_strided_slice %140 {offsets = [0, 32], sizes = [8, 480], strides = [1, 1]} : vector<8x512xf32> to vector<8x480xf32>
    %145 = arith.maximumf %143, %144 : vector<8x480xf32>
    %c2880 = arith.constant 2880 : index
    %c0_38 = arith.constant 0 : index
    %146 = vector.load %arg4[%c2880, %c0_38] : memref<5760x32xbf16, #tpu.memory_space<vmem>>, vector<480x32xbf16>
    %147 = arith.truncf %145 : vector<8x480xf32> to vector<8x480xbf16>
    %cst_39 = arith.constant dense<0.000000e+00> : vector<8x32xf32>
    %148 = tpu.matmul %147, %146, %cst_39 {dimension_numbers = #tpu.dot_dimension_numbers<[1], [0], [0], [1], [0, 0, 1, 1], [], []>} : vector<8x480xbf16>, vector<480x32xbf16>, vector<8x32xf32> -> vector<8x32xf32>
    %149 = arith.addf %128, %148 : vector<8x32xf32>
    %c0_40 = arith.constant 0 : index
    %c392 = arith.constant 392 : index
    %150 = vector.load %arg1[%c0_40, %c392] : memref<8x784xf32, #tpu.memory_space<vmem>>, vector<8x140xf32>
    %151 = arith.truncf %150 : vector<8x140xf32> to vector<8x140xbf16>
    %cst_41 = arith.constant dense<0.000000e+00> : vector<8x1536xf32>
    %152 = tpu.matmul %151, %0, %cst_41 {dimension_numbers = #tpu.dot_dimension_numbers<[1], [0], [0], [1], [0, 0, 1, 1], [], []>} : vector<8x140xbf16>, vector<140x1536xbf16>, vector<8x1536xf32> -> vector<8x1536xf32>
    %153 = vector.extract_strided_slice %152 {offsets = [0, 0], sizes = [8, 512], strides = [1, 1]} : vector<8x1536xf32> to vector<8x512xf32>
    %154 = vector.extract_strided_slice %152 {offsets = [0, 512], sizes = [8, 512], strides = [1, 1]} : vector<8x1536xf32> to vector<8x512xf32>
    %155 = arith.maximumf %153, %154 : vector<8x512xf32>
    %156 = vector.extract_strided_slice %152 {offsets = [0, 1024], sizes = [8, 512], strides = [1, 1]} : vector<8x1536xf32> to vector<8x512xf32>
    %157 = arith.maximumf %155, %156 : vector<8x512xf32>
    %158 = vector.broadcast %1 : vector<1x512xf32> to vector<8x512xf32>
    %159 = arith.addf %157, %158 : vector<8x512xf32>
    %cst_42 = arith.constant 0.000000e+00 : f32
    %160 = vector.broadcast %cst_42 : f32 to vector<8x512xf32>
    %161 = arith.maximumf %159, %160 : vector<8x512xf32>
    %162 = vector.extract_strided_slice %161 {offsets = [0, 0], sizes = [8, 480], strides = [1, 1]} : vector<8x512xf32> to vector<8x480xf32>
    %163 = vector.extract_strided_slice %161 {offsets = [0, 16], sizes = [8, 480], strides = [1, 1]} : vector<8x512xf32> to vector<8x480xf32>
    %164 = arith.maximumf %162, %163 : vector<8x480xf32>
    %165 = vector.extract_strided_slice %161 {offsets = [0, 32], sizes = [8, 480], strides = [1, 1]} : vector<8x512xf32> to vector<8x480xf32>
    %166 = arith.maximumf %164, %165 : vector<8x480xf32>
    %c3360 = arith.constant 3360 : index
    %c0_43 = arith.constant 0 : index
    %167 = vector.load %arg4[%c3360, %c0_43] : memref<5760x32xbf16, #tpu.memory_space<vmem>>, vector<480x32xbf16>
    %168 = arith.truncf %166 : vector<8x480xf32> to vector<8x480xbf16>
    %cst_44 = arith.constant dense<0.000000e+00> : vector<8x32xf32>
    %169 = tpu.matmul %168, %167, %cst_44 {dimension_numbers = #tpu.dot_dimension_numbers<[1], [0], [0], [1], [0, 0, 1, 1], [], []>} : vector<8x480xbf16>, vector<480x32xbf16>, vector<8x32xf32> -> vector<8x32xf32>
    %170 = arith.addf %149, %169 : vector<8x32xf32>
    %c0_45 = arith.constant 0 : index
    %c448 = arith.constant 448 : index
    %171 = vector.load %arg1[%c0_45, %c448] : memref<8x784xf32, #tpu.memory_space<vmem>>, vector<8x140xf32>
    %172 = arith.truncf %171 : vector<8x140xf32> to vector<8x140xbf16>
    %cst_46 = arith.constant dense<0.000000e+00> : vector<8x1536xf32>
    %173 = tpu.matmul %172, %0, %cst_46 {dimension_numbers = #tpu.dot_dimension_numbers<[1], [0], [0], [1], [0, 0, 1, 1], [], []>} : vector<8x140xbf16>, vector<140x1536xbf16>, vector<8x1536xf32> -> vector<8x1536xf32>
    %174 = vector.extract_strided_slice %173 {offsets = [0, 0], sizes = [8, 512], strides = [1, 1]} : vector<8x1536xf32> to vector<8x512xf32>
    %175 = vector.extract_strided_slice %173 {offsets = [0, 512], sizes = [8, 512], strides = [1, 1]} : vector<8x1536xf32> to vector<8x512xf32>
    %176 = arith.maximumf %174, %175 : vector<8x512xf32>
    %177 = vector.extract_strided_slice %173 {offsets = [0, 1024], sizes = [8, 512], strides = [1, 1]} : vector<8x1536xf32> to vector<8x512xf32>
    %178 = arith.maximumf %176, %177 : vector<8x512xf32>
    %179 = vector.broadcast %1 : vector<1x512xf32> to vector<8x512xf32>
    %180 = arith.addf %178, %179 : vector<8x512xf32>
    %cst_47 = arith.constant 0.000000e+00 : f32
    %181 = vector.broadcast %cst_47 : f32 to vector<8x512xf32>
    %182 = arith.maximumf %180, %181 : vector<8x512xf32>
    %183 = vector.extract_strided_slice %182 {offsets = [0, 0], sizes = [8, 480], strides = [1, 1]} : vector<8x512xf32> to vector<8x480xf32>
    %184 = vector.extract_strided_slice %182 {offsets = [0, 16], sizes = [8, 480], strides = [1, 1]} : vector<8x512xf32> to vector<8x480xf32>
    %185 = arith.maximumf %183, %184 : vector<8x480xf32>
    %186 = vector.extract_strided_slice %182 {offsets = [0, 32], sizes = [8, 480], strides = [1, 1]} : vector<8x512xf32> to vector<8x480xf32>
    %187 = arith.maximumf %185, %186 : vector<8x480xf32>
    %c3840 = arith.constant 3840 : index
    %c0_48 = arith.constant 0 : index
    %188 = vector.load %arg4[%c3840, %c0_48] : memref<5760x32xbf16, #tpu.memory_space<vmem>>, vector<480x32xbf16>
    %189 = arith.truncf %187 : vector<8x480xf32> to vector<8x480xbf16>
    %cst_49 = arith.constant dense<0.000000e+00> : vector<8x32xf32>
    %190 = tpu.matmul %189, %188, %cst_49 {dimension_numbers = #tpu.dot_dimension_numbers<[1], [0], [0], [1], [0, 0, 1, 1], [], []>} : vector<8x480xbf16>, vector<480x32xbf16>, vector<8x32xf32> -> vector<8x32xf32>
    %191 = arith.addf %170, %190 : vector<8x32xf32>
    %c0_50 = arith.constant 0 : index
    %c504 = arith.constant 504 : index
    %192 = vector.load %arg1[%c0_50, %c504] : memref<8x784xf32, #tpu.memory_space<vmem>>, vector<8x140xf32>
    %193 = arith.truncf %192 : vector<8x140xf32> to vector<8x140xbf16>
    %cst_51 = arith.constant dense<0.000000e+00> : vector<8x1536xf32>
    %194 = tpu.matmul %193, %0, %cst_51 {dimension_numbers = #tpu.dot_dimension_numbers<[1], [0], [0], [1], [0, 0, 1, 1], [], []>} : vector<8x140xbf16>, vector<140x1536xbf16>, vector<8x1536xf32> -> vector<8x1536xf32>
    %195 = vector.extract_strided_slice %194 {offsets = [0, 0], sizes = [8, 512], strides = [1, 1]} : vector<8x1536xf32> to vector<8x512xf32>
    %196 = vector.extract_strided_slice %194 {offsets = [0, 512], sizes = [8, 512], strides = [1, 1]} : vector<8x1536xf32> to vector<8x512xf32>
    %197 = arith.maximumf %195, %196 : vector<8x512xf32>
    %198 = vector.extract_strided_slice %194 {offsets = [0, 1024], sizes = [8, 512], strides = [1, 1]} : vector<8x1536xf32> to vector<8x512xf32>
    %199 = arith.maximumf %197, %198 : vector<8x512xf32>
    %200 = vector.broadcast %1 : vector<1x512xf32> to vector<8x512xf32>
    %201 = arith.addf %199, %200 : vector<8x512xf32>
    %cst_52 = arith.constant 0.000000e+00 : f32
    %202 = vector.broadcast %cst_52 : f32 to vector<8x512xf32>
    %203 = arith.maximumf %201, %202 : vector<8x512xf32>
    %204 = vector.extract_strided_slice %203 {offsets = [0, 0], sizes = [8, 480], strides = [1, 1]} : vector<8x512xf32> to vector<8x480xf32>
    %205 = vector.extract_strided_slice %203 {offsets = [0, 16], sizes = [8, 480], strides = [1, 1]} : vector<8x512xf32> to vector<8x480xf32>
    %206 = arith.maximumf %204, %205 : vector<8x480xf32>
    %207 = vector.extract_strided_slice %203 {offsets = [0, 32], sizes = [8, 480], strides = [1, 1]} : vector<8x512xf32> to vector<8x480xf32>
    %208 = arith.maximumf %206, %207 : vector<8x480xf32>
    %c4320 = arith.constant 4320 : index
    %c0_53 = arith.constant 0 : index
    %209 = vector.load %arg4[%c4320, %c0_53] : memref<5760x32xbf16, #tpu.memory_space<vmem>>, vector<480x32xbf16>
    %210 = arith.truncf %208 : vector<8x480xf32> to vector<8x480xbf16>
    %cst_54 = arith.constant dense<0.000000e+00> : vector<8x32xf32>
    %211 = tpu.matmul %210, %209, %cst_54 {dimension_numbers = #tpu.dot_dimension_numbers<[1], [0], [0], [1], [0, 0, 1, 1], [], []>} : vector<8x480xbf16>, vector<480x32xbf16>, vector<8x32xf32> -> vector<8x32xf32>
    %212 = arith.addf %191, %211 : vector<8x32xf32>
    %c0_55 = arith.constant 0 : index
    %c560 = arith.constant 560 : index
    %213 = vector.load %arg1[%c0_55, %c560] : memref<8x784xf32, #tpu.memory_space<vmem>>, vector<8x140xf32>
    %214 = arith.truncf %213 : vector<8x140xf32> to vector<8x140xbf16>
    %cst_56 = arith.constant dense<0.000000e+00> : vector<8x1536xf32>
    %215 = tpu.matmul %214, %0, %cst_56 {dimension_numbers = #tpu.dot_dimension_numbers<[1], [0], [0], [1], [0, 0, 1, 1], [], []>} : vector<8x140xbf16>, vector<140x1536xbf16>, vector<8x1536xf32> -> vector<8x1536xf32>
    %216 = vector.extract_strided_slice %215 {offsets = [0, 0], sizes = [8, 512], strides = [1, 1]} : vector<8x1536xf32> to vector<8x512xf32>
    %217 = vector.extract_strided_slice %215 {offsets = [0, 512], sizes = [8, 512], strides = [1, 1]} : vector<8x1536xf32> to vector<8x512xf32>
    %218 = arith.maximumf %216, %217 : vector<8x512xf32>
    %219 = vector.extract_strided_slice %215 {offsets = [0, 1024], sizes = [8, 512], strides = [1, 1]} : vector<8x1536xf32> to vector<8x512xf32>
    %220 = arith.maximumf %218, %219 : vector<8x512xf32>
    %221 = vector.broadcast %1 : vector<1x512xf32> to vector<8x512xf32>
    %222 = arith.addf %220, %221 : vector<8x512xf32>
    %cst_57 = arith.constant 0.000000e+00 : f32
    %223 = vector.broadcast %cst_57 : f32 to vector<8x512xf32>
    %224 = arith.maximumf %222, %223 : vector<8x512xf32>
    %225 = vector.extract_strided_slice %224 {offsets = [0, 0], sizes = [8, 480], strides = [1, 1]} : vector<8x512xf32> to vector<8x480xf32>
    %226 = vector.extract_strided_slice %224 {offsets = [0, 16], sizes = [8, 480], strides = [1, 1]} : vector<8x512xf32> to vector<8x480xf32>
    %227 = arith.maximumf %225, %226 : vector<8x480xf32>
    %228 = vector.extract_strided_slice %224 {offsets = [0, 32], sizes = [8, 480], strides = [1, 1]} : vector<8x512xf32> to vector<8x480xf32>
    %229 = arith.maximumf %227, %228 : vector<8x480xf32>
    %c4800 = arith.constant 4800 : index
    %c0_58 = arith.constant 0 : index
    %230 = vector.load %arg4[%c4800, %c0_58] : memref<5760x32xbf16, #tpu.memory_space<vmem>>, vector<480x32xbf16>
    %231 = arith.truncf %229 : vector<8x480xf32> to vector<8x480xbf16>
    %cst_59 = arith.constant dense<0.000000e+00> : vector<8x32xf32>
    %232 = tpu.matmul %231, %230, %cst_59 {dimension_numbers = #tpu.dot_dimension_numbers<[1], [0], [0], [1], [0, 0, 1, 1], [], []>} : vector<8x480xbf16>, vector<480x32xbf16>, vector<8x32xf32> -> vector<8x32xf32>
    %233 = arith.addf %212, %232 : vector<8x32xf32>
    %c0_60 = arith.constant 0 : index
    %c616 = arith.constant 616 : index
    %234 = vector.load %arg1[%c0_60, %c616] : memref<8x784xf32, #tpu.memory_space<vmem>>, vector<8x140xf32>
    %235 = arith.truncf %234 : vector<8x140xf32> to vector<8x140xbf16>
    %cst_61 = arith.constant dense<0.000000e+00> : vector<8x1536xf32>
    %236 = tpu.matmul %235, %0, %cst_61 {dimension_numbers = #tpu.dot_dimension_numbers<[1], [0], [0], [1], [0, 0, 1, 1], [], []>} : vector<8x140xbf16>, vector<140x1536xbf16>, vector<8x1536xf32> -> vector<8x1536xf32>
    %237 = vector.extract_strided_slice %236 {offsets = [0, 0], sizes = [8, 512], strides = [1, 1]} : vector<8x1536xf32> to vector<8x512xf32>
    %238 = vector.extract_strided_slice %236 {offsets = [0, 512], sizes = [8, 512], strides = [1, 1]} : vector<8x1536xf32> to vector<8x512xf32>
    %239 = arith.maximumf %237, %238 : vector<8x512xf32>
    %240 = vector.extract_strided_slice %236 {offsets = [0, 1024], sizes = [8, 512], strides = [1, 1]} : vector<8x1536xf32> to vector<8x512xf32>
    %241 = arith.maximumf %239, %240 : vector<8x512xf32>
    %242 = vector.broadcast %1 : vector<1x512xf32> to vector<8x512xf32>
    %243 = arith.addf %241, %242 : vector<8x512xf32>
    %cst_62 = arith.constant 0.000000e+00 : f32
    %244 = vector.broadcast %cst_62 : f32 to vector<8x512xf32>
    %245 = arith.maximumf %243, %244 : vector<8x512xf32>
    %246 = vector.extract_strided_slice %245 {offsets = [0, 0], sizes = [8, 480], strides = [1, 1]} : vector<8x512xf32> to vector<8x480xf32>
    %247 = vector.extract_strided_slice %245 {offsets = [0, 16], sizes = [8, 480], strides = [1, 1]} : vector<8x512xf32> to vector<8x480xf32>
    %248 = arith.maximumf %246, %247 : vector<8x480xf32>
    %249 = vector.extract_strided_slice %245 {offsets = [0, 32], sizes = [8, 480], strides = [1, 1]} : vector<8x512xf32> to vector<8x480xf32>
    %250 = arith.maximumf %248, %249 : vector<8x480xf32>
    %c5280 = arith.constant 5280 : index
    %c0_63 = arith.constant 0 : index
    %251 = vector.load %arg4[%c5280, %c0_63] : memref<5760x32xbf16, #tpu.memory_space<vmem>>, vector<480x32xbf16>
    %252 = arith.truncf %250 : vector<8x480xf32> to vector<8x480xbf16>
    %cst_64 = arith.constant dense<0.000000e+00> : vector<8x32xf32>
    %253 = tpu.matmul %252, %251, %cst_64 {dimension_numbers = #tpu.dot_dimension_numbers<[1], [0], [0], [1], [0, 0, 1, 1], [], []>} : vector<8x480xbf16>, vector<480x32xbf16>, vector<8x32xf32> -> vector<8x32xf32>
    %254 = arith.addf %233, %253 : vector<8x32xf32>
    %c0_65 = arith.constant 0 : index
    %c0_66 = arith.constant 0 : index
    %255 = vector.load %arg5[%c0_65, %c0_66] : memref<1x32xf32, #tpu.memory_space<vmem>>, vector<1x32xf32>
    %256 = vector.broadcast %255 : vector<1x32xf32> to vector<8x32xf32>
    %257 = arith.addf %254, %256 : vector<8x32xf32>
    %cst_67 = arith.constant 0.000000e+00 : f32
    %258 = vector.broadcast %cst_67 : f32 to vector<8x32xf32>
    %259 = arith.maximumf %257, %258 : vector<8x32xf32>
    %260 = arith.truncf %259 : vector<8x32xf32> to vector<8x32xbf16>
    %c0_68 = arith.constant 0 : index
    %c0_69 = arith.constant 0 : index
    %261 = vector.load %arg6[%c0_68, %c0_69] : memref<32x10xf32, #tpu.memory_space<vmem>>, vector<32x10xf32>
    %262 = arith.truncf %261 : vector<32x10xf32> to vector<32x10xbf16>
    %cst_70 = arith.constant dense<0.000000e+00> : vector<8x10xf32>
    %263 = tpu.matmul %260, %262, %cst_70 {dimension_numbers = #tpu.dot_dimension_numbers<[1], [0], [0], [1], [0, 0, 1, 1], [], []>} : vector<8x32xbf16>, vector<32x10xbf16>, vector<8x10xf32> -> vector<8x10xf32>
    %c0_71 = arith.constant 0 : index
    %c0_72 = arith.constant 0 : index
    %264 = vector.load %arg7[%c0_71, %c0_72] : memref<1x10xf32, #tpu.memory_space<vmem>>, vector<1x10xf32>
    %265 = vector.broadcast %264 : vector<1x10xf32> to vector<8x10xf32>
    %266 = arith.addf %263, %265 : vector<8x10xf32>
    %cst_73 = arith.constant dense<0xFF800000> : vector<8xf32>
    %267 = vector.multi_reduction <maximumf>, %266, %cst_73 [1] : vector<8x10xf32> to vector<8xf32>
    %268 = vector.shape_cast %267 : vector<8xf32> to vector<8x1xf32>
    %269 = vector.broadcast %268 : vector<8x1xf32> to vector<8x10xf32>
    %270 = arith.subf %266, %269 : vector<8x10xf32>
    %271 = math.exp %270 : vector<8x10xf32>
    %cst_74 = arith.constant dense<0.000000e+00> : vector<8xf32>
    %272 = vector.multi_reduction <add>, %271, %cst_74 [1] : vector<8x10xf32> to vector<8xf32>
    %273 = vector.shape_cast %272 : vector<8xf32> to vector<8x1xf32>
    %274 = math.log %273 : vector<8x1xf32>
    %275 = vector.broadcast %274 : vector<8x1xf32> to vector<8x10xf32>
    %276 = arith.subf %270, %275 : vector<8x10xf32>
    %c0_75 = arith.constant 0 : index
    %c0_76 = arith.constant 0 : index
    %277 = vector.load %arg8[%c0_75, %c0_76] : memref<8x10xf32, #tpu.memory_space<vmem>>, vector<8x10xf32>
    tpu.vector_store %arg8[%c0_75, %c0_76], %276 {strides = array<i32>} : memref<8x10xf32, #tpu.memory_space<vmem>>, vector<8x10xf32>,
    return
  }
  func.func @transform_0(%arg0: i32) -> (i32, i32) {
    %c0_i32 = arith.constant 0 : i32
    %c0_i32_0 = arith.constant 0 : i32
    return %arg0, %c0_i32 : i32, i32
  }
  func.func @transform_1(%arg0: i32) -> (i32, i32) {
    %c0_i32 = arith.constant 0 : i32
    %c0_i32_0 = arith.constant 0 : i32
    %c0_i32_1 = arith.constant 0 : i32
    return %c0_i32, %c0_i32_0 : i32, i32
  }
  func.func @transform_2(%arg0: i32) -> (i32, i32) {
    %c0_i32 = arith.constant 0 : i32
    %c0_i32_0 = arith.constant 0 : i32
    %c0_i32_1 = arith.constant 0 : i32
    return %c0_i32, %c0_i32_0 : i32, i32
  }
  func.func @transform_3(%arg0: i32) -> (i32, i32) {
    %c0_i32 = arith.constant 0 : i32
    %c0_i32_0 = arith.constant 0 : i32
    %c0_i32_1 = arith.constant 0 : i32
    return %c0_i32, %c0_i32_0 : i32, i32
  }
  func.func @transform_4(%arg0: i32) -> (i32, i32) {
    %c0_i32 = arith.constant 0 : i32
    %c0_i32_0 = arith.constant 0 : i32
    %c0_i32_1 = arith.constant 0 : i32
    return %c0_i32, %c0_i32_0 : i32, i32
  }
  func.func @transform_5(%arg0: i32) -> (i32, i32) {
    %c0_i32 = arith.constant 0 : i32
    %c0_i32_0 = arith.constant 0 : i32
    %c0_i32_1 = arith.constant 0 : i32
    return %c0_i32, %c0_i32_0 : i32, i32
  }
  func.func @transform_6(%arg0: i32) -> (i32, i32) {
    %c0_i32 = arith.constant 0 : i32
    %c0_i32_0 = arith.constant 0 : i32
    %c0_i32_1 = arith.constant 0 : i32
    return %c0_i32, %c0_i32_0 : i32, i32
  }
  func.func @transform_7(%arg0: i32) -> (i32, i32) {
    %c0_i32 = arith.constant 0 : i32
    %c0_i32_0 = arith.constant 0 : i32
    return %arg0, %c0_i32 : i32, i32
  }
}

</mosaic_0001>

<llo_original>
// kernel: tile.8
$region0: #{tile.8}
  #allocation0 [shape = 's32[1]{0}', space=sflag, size = 0x4, scoped, tag = 'scoped memory for tile.8']
  %s0 = inlined_call_operand.vmem [shape: f32[16], index: 0, kind: input, shape index: {}]
  %s1 = inlined_call_operand.vmem [shape: f32[26,16], index: 1, kind: output, shape index: {}]
  // Predicated region
  $region2: #{tile.8} parent=0 // pred_check
    _
  $region3: #{tile.8} parent=0 // pred_check_branch
    %3 = sbr.rel (0) target = $region5
  $region4: #{tile.8} parent=0 // pred_region
    _
  $region5: #{tile.8} parent=0 // pred_fallthru
    _
  %v4 = vld [vmem:[%s0] ss:$0 sm:$0xff]
  %5 = vst [vmem:[%s1] sm:$0xff] %v4
  %s6 = scalar_lea.vmem %s1, 8
  %7 = vst [vmem:[%s6] sm:$0xff] %v4
  %s8 = scalar_lea.vmem %s1, 16
  %9 = vst [vmem:[%s8] sm:$0xff] %v4
  %s10 = scalar_lea.vmem %s1, 24
  %11 = vst [vmem:[%s10] sm:$0xff] %v4

// kernel: tile.9
$region0: #{tile.9}
  %s0 = inlined_call_operand.vmem [shape: f32[26,16], index: 0, kind: input, shape index: {}]
  %s1 = inlined_call_operand.vmem [shape: f32[416], index: 1, kind: output, shape index: {}]
  $region1: #{tile.9} parent=0
    #allocation0 [shape = 'u8[4096]{0}', space=vmem, size = 0x1000, scoped, tag = 'scoped mem for output reshape']
    %v2 = vld [vmem:[%s0] ss:$8 sm:$0xf]
    %vm3 = vcmask 130048
    %4 = vst.msk [vmem:[#allocation0] sm:$0xf] %vm3, %v2
    %s5 = scalar_lea.vmem %s0, 7
    %v6 = vld [vmem:[%s5] ss:$8 sm:$0x7]
    %7 = vrot.lane.b32.xlu0 %v6, 112
    %v8 = vpop.permute.xlu0 %7
    %vm9 = vcmask 1048448
    %10 = vst.msk [vmem:[#allocation0] sm:$0x7] %vm9, %v8
    %s11 = scalar_lea.vmem %s0, 6
    %v12 = vld [vmem:[%s11] ss:$8 sm:$0x7]
    %13 = vrot.lane.b32.xlu0 %v12, 96
    %v14 = vpop.permute.xlu0 %13
    %vm15 = vcmask 917248
    %16 = vst.msk [vmem:[#allocation0] sm:$0x7] %vm15, %v14
    %s17 = scalar_lea.vmem %s0, 5
    %v18 = vld [vmem:[%s17] ss:$8 sm:$0x7]
    %19 = vrot.lane.b32.xlu0 %v18, 80
    %v20 = vpop.permute.xlu0 %19
    %vm21 = vcmask 786048
    %22 = vst.msk [vmem:[#allocation0] sm:$0x7] %vm21, %v20
    %s23 = scalar_lea.vmem %s0, 4
    %v24 = vld [vmem:[%s23] ss:$8 sm:$0x7]
    %25 = vrot.lane.b32.xlu0 %v24, 64
    %v26 = vpop.permute.xlu0 %25
    %vm27 = vcmask 654848
    %28 = vst.msk [vmem:[#allocation0] sm:$0x7] %vm27, %v26
    %s29 = scalar_lea.vmem %s0, 3
    %v30 = vld [vmem:[%s29] ss:$8 sm:$0x7]
    %31 = vrot.lane.b32.xlu0 %v30, 48
    %v32 = vpop.permute.xlu0 %31
    %vm33 = vcmask 523648
    %34 = vst.msk [vmem:[#allocation0] sm:$0x7] %vm33, %v32
    %s35 = scalar_lea.vmem %s0, 2
    %v36 = vld [vmem:[%s35] ss:$8 sm:$0x7]
    %37 = vrot.lane.b32.xlu0 %v36, 32
    %v38 = vpop.permute.xlu0 %37
    %vm39 = vcmask 392448
    %40 = vst.msk [vmem:[#allocation0] sm:$0x7] %vm39, %v38
    %s41 = scalar_lea.vmem %s0, 1
    %v42 = vld [vmem:[%s41] ss:$8 sm:$0xf]
    %43 = vrot.lane.b32.xlu0 %v42, 16
    %v44 = vpop.permute.xlu0 %43
    %vm45 = vcmask 261248
    %46 = vst.msk [vmem:[#allocation0] sm:$0xf] %vm45, %v44
    %s48 = ssub.s32 16, 1
    %v49 = vld [vmem:[#allocation0] sm:%s48]
    %s51 = ssub.s32 16, 1
    %52 = vst [vmem:[%s1] sm:%s51] %v49

// kernel: net_forward.1
$region0: #{net_forward.1}
  #allocation0 [shape = 'u32[]', space=smem, size = 0x4, offset = 0x4, fixed_abs, tag = 'smem constant byte address 0x4 - core index']
  #allocation1 [shape = 'u32[72,128]{1,0:T(1,128)}', space=vmem, size = 0x9000, scoped, tag = 'internal scratch']
  %s0 = inlined_call_operand.vmem [shape: f32[16,784], index: 0, kind: input, shape index: {}]
  %s1 = inlined_call_operand.vmem [shape: bf16[140,1536], index: 1, kind: input, shape index: {}]
  %s2 = inlined_call_operand.vmem [shape: f32[1,512], index: 2, kind: input, shape index: {}]
  %s3 = inlined_call_operand.vmem [shape: bf16[5760,32], index: 3, kind: input, shape index: {}]
  %s4 = inlined_call_operand.vmem [shape: f32[1,32], index: 4, kind: input, shape index: {}]
  %s5 = inlined_call_operand.vmem [shape: f32[32,10], index: 5, kind: input, shape index: {}]
  %s6 = inlined_call_operand.vmem [shape: f32[1,10], index: 6, kind: input, shape index: {}]
  %s7 = inlined_call_operand.hbm [shape: f32[16,10], index: 7, kind: output, shape index: {}]
  %s8 = sld [smem:[#allocation0]]
  $region61: #{net_forward.1} parent=0
    _
  %s10 = ssub.s32 1, %s8
  %s11 = scalar_select 0, %s10, %s8
  $region1: #{net_forward.1} parent=0
    #allocation2 [shape = 'u8[8192]{0}', space=vmem, size = 0x2000, scoped, tag = 'output window, operand 0']
    #allocation3 [shape = 's32[2]{0}', space=sflag, size = 0x8, scoped, tag = 'scoped memory for net_forward.1']
    %12 = vsyncpa [#allocation3], 0
    %s13 = scalar_lea.sflag [#allocation3], 1
    %14 = vsyncpa %s13, 0
    loop: start=0, step=1, limit=4
    $region2: #{net_forward.1} parent=1 // loop_pre_header
      _
    $region3: #{net_forward.1} parent=1 // loop_header
      %s16 = sphi 0, %s20
      %p17 = scmp.ge.s32.totalorder %s16, 4
      %s26 = sphi 0, %s28
      %s29 = sphi 0, %s26
      %s30 = sphi 0, %s29
      %s46 = sphi 0, %s30
      %s50 = sphi 0, %s50
      %s52 = sphi 0, %s50
      %s53 = sphi 0, %s52
      %s67 = sphi 0, %s53
      %s71 = sphi 0, %s71
      %s73 = sphi 0, %s71
      %s74 = sphi 0, %s73
      %s88 = sphi 0, %s74
      %s92 = sphi 0, %s92
      %s94 = sphi 0, %s92
      %s95 = sphi 0, %s94
      %s109 = sphi 0, %s95
      %s113 = sphi 0, %s113
      %s115 = sphi 0, %s113
      %s116 = sphi 0, %s115
      %s130 = sphi 0, %s116
      %s134 = sphi 0, %s134
      %s136 = sphi 0, %s134
      %s137 = sphi 0, %s136
      %s151 = sphi 0, %s137
      %s155 = sphi 0, %s155
      %s157 = sphi 0, %s155
      %s158 = sphi 0, %s157
      %s172 = sphi 0, %s158
      %s178 = sphi 0, %s180
      %s181 = sphi 0, %s178
      %s182 = sphi 0, %s181
      %s198 = sphi 0, %s182
    $region4: #{net_forward.1} parent=1 // loop_header_branch
      %19 = sbr.rel (%p17) target = $region8
    $region5: #{net_forward.1} parent=1 // loop_body
      %s21 = ssub.s32 %s16, 1
      %s22 = ssub.s32 %s16, 2
      %s23 = sadd.s32 %s16, 1
      %s24 = ssub.s32 %s16, %s23
      %p25 = scmp.eq.s32.totalorder %s24, 0
      %s27 = sadd.s32 %s26, 1
      %s28 = scalar_select %p25, %s26, %s27
      %p31 = pneg %p25
      %p32 = scmp.eq.s32.totalorder %s16, 1
      %p33 = por %p31, %p32
      %p34 = scmp.ne.s32.totalorder %s26, %s29
      %p35 = scmp.eq.s32.totalorder %s16, 0
      %p36 = por %p34, %p35
      %p37 = scmp.ne.s32.totalorder %s26, %s29
      %p38 = scmp.eq.s32.totalorder %s21, 1
      %p39 = por %p37, %p38
      %p40 = scmp.ne.s32.totalorder %s29, %s30
      %p41 = scmp.eq.s32.totalorder %s21, 0
      %p42 = por %p40, %p41
      %p43 = scmp.ne.s32.totalorder %s29, %s30
      %p44 = scmp.eq.s32.totalorder %s22, 1
      %p45 = por %p43, %p44
      %p47 = scmp.ne.s32.totalorder %s30, %s46
      %p48 = scmp.eq.s32.totalorder %s22, 0
      %p49 = por %p47, %p48
      %s51 = sadd.s32 %s50, 1
      %p54 = scmp.eq.s32.totalorder %s16, 1
      %p55 = scmp.ne.s32.totalorder %s50, %s52
      %p56 = scmp.eq.s32.totalorder %s16, 0
      %p57 = por %p55, %p56
      %p58 = scmp.ne.s32.totalorder %s50, %s52
      %p59 = scmp.eq.s32.totalorder %s21, 1
      %p60 = por %p58, %p59
      %p61 = scmp.ne.s32.totalorder %s52, %s53
      %p62 = scmp.eq.s32.totalorder %s21, 0
      %p63 = por %p61, %p62
      %p64 = scmp.ne.s32.totalorder %s52, %s53
      %p65 = scmp.eq.s32.totalorder %s22, 1
      %p66 = por %p64, %p65
      %p68 = scmp.ne.s32.totalorder %s53, %s67
      %p69 = scmp.eq.s32.totalorder %s22, 0
      %p70 = por %p68, %p69
      %s72 = sadd.s32 %s71, 1
      %p75 = scmp.eq.s32.totalorder %s16, 1
      %p76 = scmp.ne.s32.totalorder %s71, %s73
      %p77 = scmp.eq.s32.totalorder %s16, 0
      %p78 = por %p76, %p77
      %p79 = scmp.ne.s32.totalorder %s71, %s73
      %p80 = scmp.eq.s32.totalorder %s21, 1
      %p81 = por %p79, %p80
      %p82 = scmp.ne.s32.totalorder %s73, %s74
      %p83 = scmp.eq.s32.totalorder %s21, 0
      %p84 = por %p82, %p83
      %p85 = scmp.ne.s32.totalorder %s73, %s74
      %p86 = scmp.eq.s32.totalorder %s22, 1
      %p87 = por %p85, %p86
      %p89 = scmp.ne.s32.totalorder %s74, %s88
      %p90 = scmp.eq.s32.totalorder %s22, 0
      %p91 = por %p89, %p90
      %s93 = sadd.s32 %s92, 1
      %p96 = scmp.eq.s32.totalorder %s16, 1
      %p97 = scmp.ne.s32.totalorder %s92, %s94
      %p98 = scmp.eq.s32.totalorder %s16, 0
      %p99 = por %p97, %p98
      %p100 = scmp.ne.s32.totalorder %s92, %s94
      %p101 = scmp.eq.s32.totalorder %s21, 1
      %p102 = por %p100, %p101
      %p103 = scmp.ne.s32.totalorder %s94, %s95
      %p104 = scmp.eq.s32.totalorder %s21, 0
      %p105 = por %p103, %p104
      %p106 = scmp.ne.s32.totalorder %s94, %s95
      %p107 = scmp.eq.s32.totalorder %s22, 1
      %p108 = por %p106, %p107
      %p110 = scmp.ne.s32.totalorder %s95, %s109
      %p111 = scmp.eq.s32.totalorder %s22, 0
      %p112 = por %p110, %p111
      %s114 = sadd.s32 %s113, 1
      %p117 = scmp.eq.s32.totalorder %s16, 1
      %p118 = scmp.ne.s32.totalorder %s113, %s115
      %p119 = scmp.eq.s32.totalorder %s16, 0
      %p120 = por %p118, %p119
      %p121 = scmp.ne.s32.totalorder %s113, %s115
      %p122 = scmp.eq.s32.totalorder %s21, 1
      %p123 = por %p121, %p122
      %p124 = scmp.ne.s32.totalorder %s115, %s116
      %p125 = scmp.eq.s32.totalorder %s21, 0
      %p126 = por %p124, %p125
      %p127 = scmp.ne.s32.totalorder %s115, %s116
      %p128 = scmp.eq.s32.totalorder %s22, 1
      %p129 = por %p127, %p128
      %p131 = scmp.ne.s32.totalorder %s116, %s130
      %p132 = scmp.eq.s32.totalorder %s22, 0
      %p133 = por %p131, %p132
      %s135 = sadd.s32 %s134, 1
      %p138 = scmp.eq.s32.totalorder %s16, 1
      %p139 = scmp.ne.s32.totalorder %s134, %s136
      %p140 = scmp.eq.s32.totalorder %s16, 0
      %p141 = por %p139, %p140
      %p142 = scmp.ne.s32.totalorder %s134, %s136
      %p143 = scmp.eq.s32.totalorder %s21, 1
      %p144 = por %p142, %p143
      %p145 = scmp.ne.s32.totalorder %s136, %s137
      %p146 = scmp.eq.s32.totalorder %s21, 0
      %p147 = por %p145, %p146
      %p148 = scmp.ne.s32.totalorder %s136, %s137
      %p149 = scmp.eq.s32.totalorder %s22, 1
      %p150 = por %p148, %p149
      %p152 = scmp.ne.s32.totalorder %s137, %s151
      %p153 = scmp.eq.s32.totalorder %s22, 0
      %p154 = por %p152, %p153
      %s156 = sadd.s32 %s155, 1
      %p159 = scmp.eq.s32.totalorder %s16, 1
      %p160 = scmp.ne.s32.totalorder %s155, %s157
      %p161 = scmp.eq.s32.totalorder %s16, 0
      %p162 = por %p160, %p161
      %p163 = scmp.ne.s32.totalorder %s155, %s157
      %p164 = scmp.eq.s32.totalorder %s21, 1
      %p165 = por %p163, %p164
      %p166 = scmp.ne.s32.totalorder %s157, %s158
      %p167 = scmp.eq.s32.totalorder %s21, 0
      %p168 = por %p166, %p167
      %p169 = scmp.ne.s32.totalorder %s157, %s158
      %p170 = scmp.eq.s32.totalorder %s22, 1
      %p171 = por %p169, %p170
      %p173 = scmp.ne.s32.totalorder %s158, %s172
      %p174 = scmp.eq.s32.totalorder %s22, 0
      %p175 = por %p173, %p174
      %s176 = ssub.s32 %s16, %s23
      %p177 = scmp.eq.s32.totalorder %s176, 0
      %s179 = sadd.s32 %s178, 1
      %s180 = scalar_select %p177, %s178, %s179
      %p183 = pneg %p177
      %p184 = scmp.eq.s32.totalorder %s16, 1
      %p185 = por %p183, %p184
      %p186 = scmp.ne.s32.totalorder %s178, %s181
      %p187 = scmp.eq.s32.totalorder %s16, 0
      %p188 = por %p186, %p187
      %p189 = scmp.ne.s32.totalorder %s178, %s181
      %p190 = scmp.eq.s32.totalorder %s21, 1
      %p191 = por %p189, %p190
      %p192 = scmp.ne.s32.totalorder %s181, %s182
      %p193 = scmp.eq.s32.totalorder %s21, 0
      %p194 = por %p192, %p193
      %p195 = scmp.ne.s32.totalorder %s181, %s182
      %p196 = scmp.eq.s32.totalorder %s22, 1
      %p197 = por %p195, %p196
      %p199 = scmp.ne.s32.totalorder %s182, %s198
      %p200 = scmp.eq.s32.totalorder %s22, 0
      %p201 = por %p199, %p200
      %p202 = scmp.le.s32.totalorder 1, %s16
      %p203 = scmp.lt.s32.totalorder %s16, 3
      %p204 = pnand %p202, %p203
      %p205 = pneg %p204
      // Predicated region
      $region9: #{net_forward.1} parent=5 // pred_check
        _
      $region10: #{net_forward.1} parent=5 // pred_check_branch
        %207 = sbr.rel (%p204) target = $region12
      $region11: #{net_forward.1} parent=5 // pred_region
        %s208 = ssub.s32 %s16, 1
        // Predicated region
        $region13: #{net_forward.1} parent=11 // pred_check
          %p209 = pneg %p63
        $region14: #{net_forward.1} parent=11 // pred_check_branch
          %211 = sbr.rel (%p209) target = $region16
        $region15: #{net_forward.1} parent=11 // pred_region
          _
        $region16: #{net_forward.1} parent=11 // pred_fallthru
          _
        // Predicated region
        $region17: #{net_forward.1} parent=11 // pred_check
          %p212 = pneg %p84
        $region18: #{net_forward.1} parent=11 // pred_check_branch
          %214 = sbr.rel (%p212) target = $region20
        $region19: #{net_forward.1} parent=11 // pred_region
          _
        $region20: #{net_forward.1} parent=11 // pred_fallthru
          _
        // Predicated region
        $region21: #{net_forward.1} parent=11 // pred_check
          %p215 = pneg %p105
        $region22: #{net_forward.1} parent=11 // pred_check_branch
          %217 = sbr.rel (%p215) target = $region24
        $region23: #{net_forward.1} parent=11 // pred_region
          _
        $region24: #{net_forward.1} parent=11 // pred_fallthru
          _
        // Predicated region
        $region25: #{net_forward.1} parent=11 // pred_check
          %p218 = pneg %p126
        $region26: #{net_forward.1} parent=11 // pred_check_branch
          %220 = sbr.rel (%p218) target = $region28
        $region27: #{net_forward.1} parent=11 // pred_region
          _
        $region28: #{net_forward.1} parent=11 // pred_fallthru
          _
        // Predicated region
        $region29: #{net_forward.1} parent=11 // pred_check
          %p221 = pneg %p147
        $region30: #{net_forward.1} parent=11 // pred_check_branch
          %223 = sbr.rel (%p221) target = $region32
        $region31: #{net_forward.1} parent=11 // pred_region
          _
        $region32: #{net_forward.1} parent=11 // pred_fallthru
          _
        // Predicated region
        $region33: #{net_forward.1} parent=11 // pred_check
          %p224 = pneg %p168
        $region34: #{net_forward.1} parent=11 // pred_check_branch
          %226 = sbr.rel (%p224) target = $region36
        $region35: #{net_forward.1} parent=11 // pred_region
          _
        $region36: #{net_forward.1} parent=11 // pred_fallthru
          _
      $region12: #{net_forward.1} parent=5 // pred_fallthru
        _
      %p227 = scmp.lt.s32.totalorder %s16, 2
      // Predicated region
      $region37: #{net_forward.1} parent=5 // pred_check
        %p228 = pneg %p227
      $region38: #{net_forward.1} parent=5 // pred_check_branch
        %230 = sbr.rel (%p228) target = $region40
      $region39: #{net_forward.1} parent=5 // pred_region
        // Predicated region
        $region41: #{net_forward.1} parent=39 // pred_check
          %p231 = pneg %p36
        $region42: #{net_forward.1} parent=39 // pred_check_branch
          %233 = sbr.rel (%p231) target = $region44
        $region43: #{net_forward.1} parent=39 // pred_region
          %p234 = scmp.lt.s32.totalorder %s16, 1
          %s235 = scalar_select %p234, %s16, 1
          %s236 = smul.addr %s235, 7
          %s237 = smul.addr %s236, 8
          %s238 = scalar_lea.vmem %s0, %s237
        $region44: #{net_forward.1} parent=39 // pred_fallthru
          _
      $region40: #{net_forward.1} parent=5 // pred_fallthru
        _
      %p239 = scmp.le.s32.totalorder 1, %s16
      %p240 = scmp.lt.s32.totalorder %s16, 3
      %p241 = pnand %p239, %p240
      %p242 = pneg %p241
      // Predicated region
      $region45: #{net_forward.1} parent=5 // pred_check
        _
      $region46: #{net_forward.1} parent=5 // pred_check_branch
        %244 = sbr.rel (%p241) target = $region48
      $region47: #{net_forward.1} parent=5 // pred_region
        %s245 = ssub.s32 %s16, 1
        %p246 = scmp.lt.s32.totalorder %s21, 1
        %s247 = scalar_select %p246, %s21, 1
        %s248 = smul.addr %s247, 7
        %s249 = smul.addr %s248, 8
        %s250 = scalar_lea.vmem %s0, %s249
        %p251 = pneg %p42
        %p252 = pneg %p39
        %p253 = pneg %p63
        %p254 = pneg %p60
        %p255 = pneg %p84
        %p256 = pneg %p81
        %p257 = pneg %p105
        %p258 = pneg %p102
        %p259 = pneg %p126
        %p260 = pneg %p123
        %p261 = pneg %p147
        %p262 = pneg %p144
        %p263 = pneg %p168
        %p264 = pneg %p165
        %p265 = pneg %p194
        %p266 = pneg %p191
        %s267 = sand.u32 %s181, 1
        %s268 = scalar_lea.sflag [#allocation3], %s267
        %s269 = sand.u32 %s181, 1
        %s270 = smul.addr %s269, 8
        %s271 = scalar_lea.vmem [#allocation2], %s270
        %p272 = scmp.lt.s32.totalorder %s21, 1
        %s273 = scalar_select %p272, %s21, 1
        %s274 = smul.addr %s273, 7
        %s275 = smul.addr %s274, 8
        %s276 = scalar_lea.vmem %s0, %s275
        %v278 = vld [vmem:[%s1] sm:$0xff]
        %v279 = vld [vmem:[%s1 + $0x8] sm:$0xff]
        %v280 = vld [vmem:[%s1 + $0x10] sm:$0xff]
        %v281 = vld [vmem:[%s1 + $0x18] sm:$0xff]
        %v282 = vld [vmem:[%s1 + $0x20] sm:$0xff]
        %v283 = vld [vmem:[%s1 + $0x28] sm:$0xff]
        %v284 = vld [vmem:[%s1 + $0x30] sm:$0xff]
        %v285 = vld [vmem:[%s1 + $0x38] sm:$0xff]
        %v286 = vld [vmem:[%s1 + $0x40] sm:$0xff]
        %v287 = vld [vmem:[%s1 + $0x48] sm:$0xff]
        %v288 = vld [vmem:[%s1 + $0x50] sm:$0xff]
        %v289 = vld [vmem:[%s1 + $0x58] sm:$0xff]
        %v290 = vld [vmem:[%s1 + $0x60] sm:$0xff]
        %v291 = vld [vmem:[%s1 + $0x68] sm:$0xff]
        %v292 = vld [vmem:[%s1 + $0x70] sm:$0xff]
        %v293 = vld [vmem:[%s1 + $0x78] sm:$0xff]
        %v294 = vld [vmem:[%s1 + $0x80] sm:$0xff]
        %v295 = vld [vmem:[%s1 + $0x88] sm:$0xff]
        %v296 = vld [vmem:[%s1 + $0x90] sm:$0xff]
        %v297 = vld [vmem:[%s1 + $0x98] sm:$0xff]
        %v298 = vld [vmem:[%s1 + $0xa0] sm:$0xff]
        %v299 = vld [vmem:[%s1 + $0xa8] sm:$0xff]
        %v300 = vld [vmem:[%s1 + $0xb0] sm:$0xff]
        %v301 = vld [vmem:[%s1 + $0xb8] sm:$0xff]
        %v302 = vld [vmem:[%s1 + $0xc0] sm:$0xff]
        %v303 = vld [vmem:[%s1 + $0xc8] sm:$0xff]
        %v304 = vld [vmem:[%s1 + $0xd0] sm:$0xff]
        %v305 = vld [vmem:[%s1 + $0xd8] sm:$0xff]
        %v306 = vld [vmem:[%s1 + $0xe0] sm:$0xff]
        %v307 = vld [vmem:[%s1 + $0xe8] sm:$0xff]
        %v308 = vld [vmem:[%s1 + $0xf0] sm:$0xff]
        %v309 = vld [vmem:[%s1 + $0xf8] sm:$0xff]
        %v310 = vld [vmem:[%s1 + $0x100] sm:$0xff]
        %v311 = vld [vmem:[%s1 + $0x108] sm:$0xff]
        %v312 = vld [vmem:[%s1 + $0x110] sm:$0xff]
        %v313 = vld [vmem:[%s1 + $0x118] sm:$0xff]
        %v314 = vld [vmem:[%s1 + $0x120] sm:$0xff]
        %v315 = vld [vmem:[%s1 + $0x128] sm:$0xff]
        %v316 = vld [vmem:[%s1 + $0x130] sm:$0xff]
        %v317 = vld [vmem:[%s1 + $0x138] sm:$0xff]
        %v318 = vld [vmem:[%s1 + $0x140] sm:$0xff]
        %v319 = vld [vmem:[%s1 + $0x148] sm:$0xff]
        %v320 = vld [vmem:[%s1 + $0x150] sm:$0xff]
        %v321 = vld [vmem:[%s1 + $0x158] sm:$0xff]
        %v322 = vld [vmem:[%s1 + $0x160] sm:$0xff]
        %v323 = vld [vmem:[%s1 + $0x168] sm:$0xff]
        %v324 = vld [vmem:[%s1 + $0x170] sm:$0xff]
        %v325 = vld [vmem:[%s1 + $0x178] sm:$0xff]
        %v326 = vld [vmem:[%s1 + $0x180] sm:$0xff]
        %v327 = vld [vmem:[%s1 + $0x188] sm:$0xff]
        %v328 = vld [vmem:[%s1 + $0x190] sm:$0xff]
        %v329 = vld [vmem:[%s1 + $0x198] sm:$0xff]
        %v330 = vld [vmem:[%s1 + $0x1a0] sm:$0xff]
        %v331 = vld [vmem:[%s1 + $0x1a8] sm:$0xff]
        %v332 = vld [vmem:[%s1 + $0x1b0] sm:$0xff]
        %v333 = vld [vmem:[%s1 + $0x1b8] sm:$0xff]
        %v334 = vld [vmem:[%s1 + $0x1c0] sm:$0xff]
        %v335 = vld [vmem:[%s1 + $0x1c8] sm:$0xff]
        %v336 = vld [vmem:[%s1 + $0x1d0] sm:$0xff]
        %v337 = vld [vmem:[%s1 + $0x1d8] sm:$0xff]
        %v338 = vld [vmem:[%s1 + $0x1e0] sm:$0xff]
        %v339 = vld [vmem:[%s1 + $0x1e8] sm:$0xff]
        %v340 = vld [vmem:[%s1 + $0x1f0] sm:$0xff]
        %v341 = vld [vmem:[%s1 + $0x1f8] sm:$0xff]
        %v342 = vld [vmem:[%s1 + $0x200] sm:$0xff]
        %v343 = vld [vmem:[%s1 + $0x208] sm:$0xff]
        %v344 = vld [vmem:[%s1 + $0x210] sm:$0xff]
        %v345 = vld [vmem:[%s1 + $0x218] sm:$0xff]
        %v346 = vld [vmem:[%s1 + $0x220] sm:$0xff]
        %v347 = vld [vmem:[%s1 + $0x228] sm:$0xff]
        %v348 = vld [vmem:[%s1 + $0x230] sm:$0xff]
        %v349 = vld [vmem:[%s1 + $0x238] sm:$0xff]
        %v350 = vld [vmem:[%s1 + $0x240] sm:$0xff]
        %v351 = vld [vmem:[%s1 + $0x248] sm:$0xff]
        %v352 = vld [vmem:[%s1 + $0x250] sm:$0xff]
        %v353 = vld [vmem:[%s1 + $0x258] sm:$0xff]
        %v354 = vld [vmem:[%s1 + $0x260] sm:$0xff]
        %v355 = vld [vmem:[%s1 + $0x268] sm:$0xff]
        %v356 = vld [vmem:[%s1 + $0x270] sm:$0xff]
        %v357 = vld [vmem:[%s1 + $0x278] sm:$0xff]
        %v358 = vld [vmem:[%s1 + $0x280] sm:$0xff]
        %v359 = vld [vmem:[%s1 + $0x288] sm:$0xff]
        %v360 = vld [vmem:[%s1 + $0x290] sm:$0xff]
        %v361 = vld [vmem:[%s1 + $0x298] sm:$0xff]
        %v362 = vld [vmem:[%s1 + $0x2a0] sm:$0xff]
        %v363 = vld [vmem:[%s1 + $0x2a8] sm:$0xff]
        %v364 = vld [vmem:[%s1 + $0x2b0] sm:$0xff]
        %v365 = vld [vmem:[%s1 + $0x2b8] sm:$0xff]
        %v366 = vld [vmem:[%s1 + $0x2c0] sm:$0xff]
        %v367 = vld [vmem:[%s1 + $0x2c8] sm:$0xff]
        %v368 = vld [vmem:[%s1 + $0x2d0] sm:$0xff]
        %v369 = vld [vmem:[%s1 + $0x2d8] sm:$0xff]
        %v370 = vld [vmem:[%s1 + $0x2e0] sm:$0xff]
        %v371 = vld [vmem:[%s1 + $0x2e8] sm:$0xff]
        %v372 = vld [vmem:[%s1 + $0x2f0] sm:$0xff]
        %v373 = vld [vmem:[%s1 + $0x2f8] sm:$0xff]
        %v374 = vld [vmem:[%s1 + $0x300] sm:$0xff]
        %v375 = vld [vmem:[%s1 + $0x308] sm:$0xff]
        %v376 = vld [vmem:[%s1 + $0x310] sm:$0xff]
        %v377 = vld [vmem:[%s1 + $0x318] sm:$0xff]
        %v378 = vld [vmem:[%s1 + $0x320] sm:$0xff]
        %v379 = vld [vmem:[%s1 + $0x328] sm:$0xff]
        %v380 = vld [vmem:[%s1 + $0x330] sm:$0x33]
        %v381 = vld [vmem:[%s1 + $0x338] sm:$0x33]
        %v382 = vld [vmem:[%s1 + $0x340] sm:$0x33]
        %v383 = vld [vmem:[%s1 + $0x348] sm:$0x33]
        %v384 = vld [vmem:[%s1 + $0x350] sm:$0x33]
        %v385 = vld [vmem:[%s1 + $0x358] sm:$0x33]
        %v386 = vld [vmem:[%s2] sm:$0xf]
        %v387 = vld [vmem:[%s276] sm:$0xff]
        %v388 = vld [vmem:[%s276 + $0x8] sm:$0xff]
        %v389 = vpack.c.bf16 %v387, %v387
        %v390 = vpack.c.bf16 %v388, %v388
        %v499 = vunpack.c.l.b16 %v278
        %v500 = vunpack.c.h.b16 %v278
        %v501 = vunpack.c.l.b16 %v279
        %v502 = vunpack.c.h.b16 %v279
        %v503 = vunpack.c.l.b16 %v280
        %v504 = vunpack.c.h.b16 %v280
        %v505 = vunpack.c.l.b16 %v281
        %v506 = vunpack.c.h.b16 %v281
        %v507 = vunpack.c.l.b16 %v282
        %v508 = vunpack.c.h.b16 %v282
        %v509 = vunpack.c.l.b16 %v283
        %v510 = vunpack.c.h.b16 %v283
        %v511 = vunpack.c.l.b16 %v284
        %v512 = vunpack.c.h.b16 %v284
        %v513 = vunpack.c.l.b16 %v285
        %v514 = vunpack.c.h.b16 %v285
        %v515 = vunpack.c.l.b16 %v286
        %v516 = vunpack.c.h.b16 %v286
        %v517 = vunpack.c.l.b16 %v287
        %v518 = vunpack.c.h.b16 %v287
        %v519 = vunpack.c.l.b16 %v288
        %v520 = vunpack.c.h.b16 %v288
        %v521 = vunpack.c.l.b16 %v289
        %v522 = vunpack.c.h.b16 %v289
        %v523 = vunpack.c.l.b16 %v290
        %v524 = vunpack.c.h.b16 %v290
        %v525 = vunpack.c.l.b16 %v291
        %v526 = vunpack.c.h.b16 %v291
        %v527 = vunpack.c.l.b16 %v292
        %v528 = vunpack.c.h.b16 %v292
        %v529 = vunpack.c.l.b16 %v293
        %v530 = vunpack.c.h.b16 %v293
        %v531 = vunpack.c.l.b16 %v294
        %v532 = vunpack.c.h.b16 %v294
        %v533 = vunpack.c.l.b16 %v295
        %v534 = vunpack.c.h.b16 %v295
        %v535 = vunpack.c.l.b16 %v296
        %v536 = vunpack.c.h.b16 %v296
        %v537 = vunpack.c.l.b16 %v297
        %v538 = vunpack.c.h.b16 %v297
        %v539 = vunpack.c.l.b16 %v298
        %v540 = vunpack.c.h.b16 %v298
        %v541 = vunpack.c.l.b16 %v299
        %v542 = vunpack.c.h.b16 %v299
        %v543 = vunpack.c.l.b16 %v300
        %v544 = vunpack.c.h.b16 %v300
        %v545 = vunpack.c.l.b16 %v301
        %v546 = vunpack.c.h.b16 %v301
        %v547 = vunpack.c.l.b16 %v302
        %v548 = vunpack.c.h.b16 %v302
        %v549 = vunpack.c.l.b16 %v303
        %v550 = vunpack.c.h.b16 %v303
        %v551 = vunpack.c.l.b16 %v304
        %v552 = vunpack.c.h.b16 %v304
        %v553 = vunpack.c.l.b16 %v305
        %v554 = vunpack.c.h.b16 %v305
        %v555 = vunpack.c.l.b16 %v306
        %v556 = vunpack.c.h.b16 %v306
        %v557 = vunpack.c.l.b16 %v307
        %v558 = vunpack.c.h.b16 %v307
        %v559 = vunpack.c.l.b16 %v308
        %v560 = vunpack.c.h.b16 %v308
        %v561 = vunpack.c.l.b16 %v309
        %v562 = vunpack.c.h.b16 %v309
        %v563 = vunpack.c.l.b16 %v310
        %v564 = vunpack.c.h.b16 %v310
        %v565 = vunpack.c.l.b16 %v311
        %v566 = vunpack.c.h.b16 %v311
        %v567 = vunpack.c.l.b16 %v312
        %v568 = vunpack.c.h.b16 %v312
        %v569 = vunpack.c.l.b16 %v313
        %v570 = vunpack.c.h.b16 %v313
        %v571 = vunpack.c.l.b16 %v314
        %v572 = vunpack.c.h.b16 %v314
        %v573 = vunpack.c.l.b16 %v315
        %v574 = vunpack.c.h.b16 %v315
        %v575 = vunpack.c.l.b16 %v316
        %v576 = vunpack.c.h.b16 %v316
        %v577 = vunpack.c.l.b16 %v317
        %v578 = vunpack.c.h.b16 %v317
        %v579 = vunpack.c.l.b16 %v318
        %v580 = vunpack.c.h.b16 %v318
        %v581 = vunpack.c.l.b16 %v319
        %v582 = vunpack.c.h.b16 %v319
        %v583 = vunpack.c.l.b16 %v320
        %v584 = vunpack.c.h.b16 %v320
        %v585 = vunpack.c.l.b16 %v321
        %v586 = vunpack.c.h.b16 %v321
        %v587 = vunpack.c.l.b16 %v322
        %v588 = vunpack.c.h.b16 %v322
        %v589 = vunpack.c.l.b16 %v323
        %v590 = vunpack.c.h.b16 %v323
        %v591 = vunpack.c.l.b16 %v324
        %v592 = vunpack.c.h.b16 %v324
        %v593 = vunpack.c.l.b16 %v325
        %v594 = vunpack.c.h.b16 %v325
        %v595 = vunpack.c.l.b16 %v326
        %v596 = vunpack.c.h.b16 %v326
        %v597 = vunpack.c.l.b16 %v327
        %v598 = vunpack.c.h.b16 %v327
        %v599 = vunpack.c.l.b16 %v328
        %v600 = vunpack.c.h.b16 %v328
        %v601 = vunpack.c.l.b16 %v329
        %v602 = vunpack.c.h.b16 %v329
        %v603 = vunpack.c.l.b16 %v330
        %v604 = vunpack.c.h.b16 %v330
        %v605 = vunpack.c.l.b16 %v331
        %v606 = vunpack.c.h.b16 %v331
        %v607 = vunpack.c.l.b16 %v332
        %v608 = vunpack.c.h.b16 %v332
        %v609 = vunpack.c.l.b16 %v333
        %v610 = vunpack.c.h.b16 %v333
        %v611 = vunpack.c.l.b16 %v334
        %v612 = vunpack.c.h.b16 %v334
        %v613 = vunpack.c.l.b16 %v335
        %v614 = vunpack.c.h.b16 %v335
        %v615 = vunpack.c.l.b16 %v336
        %v616 = vunpack.c.h.b16 %v336
        %v617 = vunpack.c.l.b16 %v337
        %v618 = vunpack.c.h.b16 %v337
        %v619 = vunpack.c.l.b16 %v338
        %v620 = vunpack.c.h.b16 %v338
        %v621 = vunpack.c.l.b16 %v339
        %v622 = vunpack.c.h.b16 %v339
        %v623 = vunpack.c.l.b16 %v340
        %v624 = vunpack.c.h.b16 %v340
        %v625 = vunpack.c.l.b16 %v341
        %v626 = vunpack.c.h.b16 %v341
        %v627 = vunpack.c.l.b16 %v342
        %v628 = vunpack.c.h.b16 %v342
        %v629 = vunpack.c.l.b16 %v343
        %v630 = vunpack.c.h.b16 %v343
        %v631 = vunpack.c.l.b16 %v344
        %v632 = vunpack.c.h.b16 %v344
        %v633 = vunpack.c.l.b16 %v345
        %v634 = vunpack.c.h.b16 %v345
        %v635 = vunpack.c.l.b16 %v346
        %v636 = vunpack.c.h.b16 %v346
        %v637 = vunpack.c.l.b16 %v347
        %v638 = vunpack.c.h.b16 %v347
        %v639 = vunpack.c.l.b16 %v348
        %v640 = vunpack.c.h.b16 %v348
        %v641 = vunpack.c.l.b16 %v349
        %v642 = vunpack.c.h.b16 %v349
        %v643 = vunpack.c.l.b16 %v350
        %v644 = vunpack.c.h.b16 %v350
        %v645 = vunpack.c.l.b16 %v351
        %v646 = vunpack.c.h.b16 %v351
        %v647 = vunpack.c.l.b16 %v352
        %v648 = vunpack.c.h.b16 %v352
        %v649 = vunpack.c.l.b16 %v353
        %v650 = vunpack.c.h.b16 %v353
        %v651 = vunpack.c.l.b16 %v354
        %v652 = vunpack.c.h.b16 %v354
        %v653 = vunpack.c.l.b16 %v355
        %v654 = vunpack.c.h.b16 %v355
        %v655 = vunpack.c.l.b16 %v356
        %v656 = vunpack.c.h.b16 %v356
        %v657 = vunpack.c.l.b16 %v357
        %v658 = vunpack.c.h.b16 %v357
        %v659 = vunpack.c.l.b16 %v358
        %v660 = vunpack.c.h.b16 %v358
        %v661 = vunpack.c.l.b16 %v359
        %v662 = vunpack.c.h.b16 %v359
        %v663 = vunpack.c.l.b16 %v360
        %v664 = vunpack.c.h.b16 %v360
        %v665 = vunpack.c.l.b16 %v361
        %v666 = vunpack.c.h.b16 %v361
        %v667 = vunpack.c.l.b16 %v362
        %v668 = vunpack.c.h.b16 %v362
        %v669 = vunpack.c.l.b16 %v363
        %v670 = vunpack.c.h.b16 %v363
        %v671 = vunpack.c.l.b16 %v364
        %v672 = vunpack.c.h.b16 %v364
        %v673 = vunpack.c.l.b16 %v365
        %v674 = vunpack.c.h.b16 %v365
        %v675 = vunpack.c.l.b16 %v366
        %v676 = vunpack.c.h.b16 %v366
        %v677 = vunpack.c.l.b16 %v367
        %v678 = vunpack.c.h.b16 %v367
        %v679 = vunpack.c.l.b16 %v368
        %v680 = vunpack.c.h.b16 %v368
        %v681 = vunpack.c.l.b16 %v369
        %v682 = vunpack.c.h.b16 %v369
        %v683 = vunpack.c.l.b16 %v370
        %v684 = vunpack.c.h.b16 %v370
        %v685 = vunpack.c.l.b16 %v371
        %v686 = vunpack.c.h.b16 %v371
        %v687 = vunpack.c.l.b16 %v372
        %v688 = vunpack.c.h.b16 %v372
        %v689 = vunpack.c.l.b16 %v373
        %v690 = vunpack.c.h.b16 %v373
        %v691 = vunpack.c.l.b16 %v374
        %v692 = vunpack.c.h.b16 %v374
        %v693 = vunpack.c.l.b16 %v375
        %v694 = vunpack.c.h.b16 %v375
        %v695 = vunpack.c.l.b16 %v376
        %v696 = vunpack.c.h.b16 %v376
        %v697 = vunpack.c.l.b16 %v377
        %v698 = vunpack.c.h.b16 %v377
        %v699 = vunpack.c.l.b16 %v378
        %v700 = vunpack.c.h.b16 %v378
        %v701 = vunpack.c.l.b16 %v379
        %v702 = vunpack.c.h.b16 %v379
        %v703 = vunpack.c.l.b16 %v380
        %v704 = vunpack.c.h.b16 %v380
        %v705 = vunpack.c.l.b16 %v381
        %v706 = vunpack.c.h.b16 %v381
        %v707 = vunpack.c.l.b16 %v382
        %v708 = vunpack.c.h.b16 %v382
        %v709 = vunpack.c.l.b16 %v383
        %v710 = vunpack.c.h.b16 %v383
        %v711 = vunpack.c.l.b16 %v384
        %v712 = vunpack.c.h.b16 %v384
        %v713 = vunpack.c.l.b16 %v385
        %v714 = vunpack.c.h.b16 %v385
        %v715 = vpack.c.b16 %v511, %v499
        %v716 = vpack.c.b16 %v512, %v500
        %v717 = vpack.c.b16 %v513, %v501
        %v718 = vpack.c.b16 %v514, %v502
        %v719 = vpack.c.b16 %v515, %v503
        %v720 = vpack.c.b16 %v516, %v504
        %v721 = vpack.c.b16 %v517, %v505
        %v722 = vpack.c.b16 %v518, %v506
        %v723 = vpack.c.b16 %v519, %v507
        %v724 = vpack.c.b16 %v520, %v508
        %v725 = vpack.c.b16 %v521, %v509
        %v726 = vpack.c.b16 %v522, %v510
        %v727 = vpack.c.b16 %v535, %v523
        %v728 = vpack.c.b16 %v536, %v524
        %v729 = vpack.c.b16 %v537, %v525
        %v730 = vpack.c.b16 %v538, %v526
        %v731 = vpack.c.b16 %v539, %v527
        %v732 = vpack.c.b16 %v540, %v528
        %v733 = vpack.c.b16 %v541, %v529
        %v734 = vpack.c.b16 %v542, %v530
        %v735 = vpack.c.b16 %v543, %v531
        %v736 = vpack.c.b16 %v544, %v532
        %v737 = vpack.c.b16 %v545, %v533
        %v738 = vpack.c.b16 %v546, %v534
        %v739 = vpack.c.b16 %v559, %v547
        %v740 = vpack.c.b16 %v560, %v548
        %v741 = vpack.c.b16 %v561, %v549
        %v742 = vpack.c.b16 %v562, %v550
        %v743 = vpack.c.b16 %v563, %v551
        %v744 = vpack.c.b16 %v564, %v552
        %v745 = vpack.c.b16 %v565, %v553
        %v746 = vpack.c.b16 %v566, %v554
        %v747 = vpack.c.b16 %v567, %v555
        %v748 = vpack.c.b16 %v568, %v556
        %v749 = vpack.c.b16 %v569, %v557
        %v750 = vpack.c.b16 %v570, %v558
        %v751 = vpack.c.b16 %v583, %v571
        %v752 = vpack.c.b16 %v584, %v572
        %v753 = vpack.c.b16 %v585, %v573
        %v754 = vpack.c.b16 %v586, %v574
        %v755 = vpack.c.b16 %v587, %v575
        %v756 = vpack.c.b16 %v588, %v576
        %v757 = vpack.c.b16 %v589, %v577
        %v758 = vpack.c.b16 %v590, %v578
        %v759 = vpack.c.b16 %v591, %v579
        %v760 = vpack.c.b16 %v592, %v580
        %v761 = vpack.c.b16 %v593, %v581
        %v762 = vpack.c.b16 %v594, %v582
        %v763 = vpack.c.b16 %v607, %v595
        %v764 = vpack.c.b16 %v608, %v596
        %v765 = vpack.c.b16 %v609, %v597
        %v766 = vpack.c.b16 %v610, %v598
        %v767 = vpack.c.b16 %v611, %v599
        %v768 = vpack.c.b16 %v612, %v600
        %v769 = vpack.c.b16 %v613, %v601
        %v770 = vpack.c.b16 %v614, %v602
        %v771 = vpack.c.b16 %v615, %v603
        %v772 = vpack.c.b16 %v616, %v604
        %v773 = vpack.c.b16 %v617, %v605
        %v774 = vpack.c.b16 %v618, %v606
        %v775 = vpack.c.b16 %v631, %v619
        %v776 = vpack.c.b16 %v632, %v620
        %v777 = vpack.c.b16 %v633, %v621
        %v778 = vpack.c.b16 %v634, %v622
        %v779 = vpack.c.b16 %v635, %v623
        %v780 = vpack.c.b16 %v636, %v624
        %v781 = vpack.c.b16 %v637, %v625
        %v782 = vpack.c.b16 %v638, %v626
        %v783 = vpack.c.b16 %v639, %v627
        %v784 = vpack.c.b16 %v640, %v628
        %v785 = vpack.c.b16 %v641, %v629
        %v786 = vpack.c.b16 %v642, %v630
        %v787 = vpack.c.b16 %v655, %v643
        %v788 = vpack.c.b16 %v656, %v644
        %v789 = vpack.c.b16 %v657, %v645
        %v790 = vpack.c.b16 %v658, %v646
        %v791 = vpack.c.b16 %v659, %v647
        %v792 = vpack.c.b16 %v660, %v648
        %v793 = vpack.c.b16 %v661, %v649
        %v794 = vpack.c.b16 %v662, %v650
        %v795 = vpack.c.b16 %v663, %v651
        %v796 = vpack.c.b16 %v664, %v652
        %v797 = vpack.c.b16 %v665, %v653
        %v798 = vpack.c.b16 %v666, %v654
        %v799 = vpack.c.b16 %v679, %v667
        %v800 = vpack.c.b16 %v680, %v668
        %v801 = vpack.c.b16 %v681, %v669
        %v802 = vpack.c.b16 %v682, %v670
        %v803 = vpack.c.b16 %v683, %v671
        %v804 = vpack.c.b16 %v684, %v672
        %v805 = vpack.c.b16 %v685, %v673
        %v806 = vpack.c.b16 %v686, %v674
        %v807 = vpack.c.b16 %v687, %v675
        %v808 = vpack.c.b16 %v688, %v676
        %v809 = vpack.c.b16 %v689, %v677
        %v810 = vpack.c.b16 %v690, %v678
        %v811 = vpack.c.b16 %v703, %v691
        %v812 = vpack.c.b16 %v704, %v692
        %v813 = vpack.c.b16 %v705, %v693
        %v814 = vpack.c.b16 %v706, %v694
        %v815 = vpack.c.b16 %v707, %v695
        %v816 = vpack.c.b16 %v708, %v696
        %v817 = vpack.c.b16 %v709, %v697
        %v818 = vpack.c.b16 %v710, %v698
        %v819 = vpack.c.b16 %v711, %v699
        %v820 = vpack.c.b16 %v712, %v700
        %v821 = vpack.c.b16 %v713, %v701
        %v822 = vpack.c.b16 %v714, %v702
        %vm919 = vcmask 97280
        %v921 = vsel %vm919, %v390, 0
        %vm923 = vcmask 1045504
        %v925 = vsel %vm923, %v811, 0
        %v928 = vsel %vm923, %v812, 0
        %v931 = vsel %vm923, %v813, 0
        %v934 = vsel %vm923, %v814, 0
        %v937 = vsel %vm923, %v815, 0
        %v940 = vsel %vm923, %v816, 0
        %v943 = vsel %vm923, %v817, 0
        %v946 = vsel %vm923, %v818, 0
        %v949 = vsel %vm923, %v819, 0
        %v952 = vsel %vm923, %v820, 0
        %v955 = vsel %vm923, %v821, 0
        %v958 = vsel %vm923, %v822, 0
        %960 = vmatpush.bf16.msra.mxu0 %v799
        %961 = vmatpush.bf16.msra.mxu0 %v787
        %962 = vmatpush.bf16.msra.mxu0 %v775
        %963 = vmatpush.bf16.msra.mxu0 %v763
        %964 = vmatpush.bf16.msra.mxu0 %v751
        %965 = vmatpush.bf16.msra.mxu0 %v739
        %966 = vmatpush.bf16.msra.mxu0 %v727
        %967 = vmatpush.bf16.msra.mxu0 %v715
        %968 = vmatmul.bf16.gmra.mxu0 %v389
        %v969 = vpop.f32.mrf.mxu0
        %v970 = vadd.f32 0.0, %v969
        %v971 = vpop.f32.mrf.mxu0
        %972 = vdwg.mxu0
        %973 = vmatpush.bf16.msra.mxu0 0
        %974 = vmatpush.bf16.msra.mxu0 0
        %975 = vmatpush.bf16.msra.mxu0 0
        %976 = vmatpush.bf16.msra.mxu0 0
        %977 = vmatpush.bf16.msra.mxu0 0
        %978 = vmatpush.bf16.msra.mxu0 0
        %979 = vmatpush.bf16.msra.mxu0 0
        %980 = vmatpush.bf16.msra.mxu0 %v925
        %981 = vmatmul.bf16.gmra.mxu0 %v921
        %v982 = vpop.f32.mrf.mxu0
        %v983 = vadd.f32 %v970, %v982
        %v984 = vpop.f32.mrf.mxu0
        %985 = vdwg.mxu0
        %986 = vmatpush.bf16.msra.mxu0 %v800
        %987 = vmatpush.bf16.msra.mxu0 %v788
        %988 = vmatpush.bf16.msra.mxu0 %v776
        %989 = vmatpush.bf16.msra.mxu0 %v764
        %990 = vmatpush.bf16.msra.mxu0 %v752
        %991 = vmatpush.bf16.msra.mxu0 %v740
        %992 = vmatpush.bf16.msra.mxu0 %v728
        %993 = vmatpush.bf16.msra.mxu0 %v716
        %994 = vmatmul.bf16.gmra.mxu0 %v389
        %v995 = vpop.f32.mrf.mxu0
        %v996 = vadd.f32 0.0, %v995
        %v997 = vpop.f32.mrf.mxu0
        %998 = vdwg.mxu0
        %999 = vmatpush.bf16.msra.mxu0 0
        %1000 = vmatpush.bf16.msra.mxu0 0
        %1001 = vmatpush.bf16.msra.mxu0 0
        %1002 = vmatpush.bf16.msra.mxu0 0
        %1003 = vmatpush.bf16.msra.mxu0 0
        %1004 = vmatpush.bf16.msra.mxu0 0
        %1005 = vmatpush.bf16.msra.mxu0 0
        %1006 = vmatpush.bf16.msra.mxu0 %v928
        %1007 = vmatmul.bf16.gmra.mxu0 %v921
        %v1008 = vpop.f32.mrf.mxu0
        %v1009 = vadd.f32 %v996, %v1008
        %v1010 = vpop.f32.mrf.mxu0
        %1011 = vdwg.mxu0
        %1012 = vmatpush.bf16.msra.mxu0 %v801
        %1013 = vmatpush.bf16.msra.mxu0 %v789
        %1014 = vmatpush.bf16.msra.mxu0 %v777
        %1015 = vmatpush.bf16.msra.mxu0 %v765
        %1016 = vmatpush.bf16.msra.mxu0 %v753
        %1017 = vmatpush.bf16.msra.mxu0 %v741
        %1018 = vmatpush.bf16.msra.mxu0 %v729
        %1019 = vmatpush.bf16.msra.mxu0 %v717
        %1020 = vmatmul.bf16.gmra.mxu0 %v389
        %v1021 = vpop.f32.mrf.mxu0
        %v1022 = vadd.f32 0.0, %v1021
        %v1023 = vpop.f32.mrf.mxu0
        %1024 = vdwg.mxu0
        %1025 = vmatpush.bf16.msra.mxu0 0
        %1026 = vmatpush.bf16.msra.mxu0 0
        %1027 = vmatpush.bf16.msra.mxu0 0
        %1028 = vmatpush.bf16.msra.mxu0 0
        %1029 = vmatpush.bf16.msra.mxu0 0
        %1030 = vmatpush.bf16.msra.mxu0 0
        %1031 = vmatpush.bf16.msra.mxu0 0
        %1032 = vmatpush.bf16.msra.mxu0 %v931
        %1033 = vmatmul.bf16.gmra.mxu0 %v921
        %v1034 = vpop.f32.mrf.mxu0
        %v1035 = vadd.f32 %v1022, %v1034
        %v1036 = vpop.f32.mrf.mxu0
        %1037 = vdwg.mxu0
        %1038 = vmatpush.bf16.msra.mxu0 %v802
        %1039 = vmatpush.bf16.msra.mxu0 %v790
        %1040 = vmatpush.bf16.msra.mxu0 %v778
        %1041 = vmatpush.bf16.msra.mxu0 %v766
        %1042 = vmatpush.bf16.msra.mxu0 %v754
        %1043 = vmatpush.bf16.msra.mxu0 %v742
        %1044 = vmatpush.bf16.msra.mxu0 %v730
        %1045 = vmatpush.bf16.msra.mxu0 %v718
        %1046 = vmatmul.bf16.gmra.mxu0 %v389
        %v1047 = vpop.f32.mrf.mxu0
        %v1048 = vadd.f32 0.0, %v1047
        %v1049 = vpop.f32.mrf.mxu0
        %1050 = vdwg.mxu0
        %1051 = vmatpush.bf16.msra.mxu0 0
        %1052 = vmatpush.bf16.msra.mxu0 0
        %1053 = vmatpush.bf16.msra.mxu0 0
        %1054 = vmatpush.bf16.msra.mxu0 0
        %1055 = vmatpush.bf16.msra.mxu0 0
        %1056 = vmatpush.bf16.msra.mxu0 0
        %1057 = vmatpush.bf16.msra.mxu0 0
        %1058 = vmatpush.bf16.msra.mxu0 %v934
        %1059 = vmatmul.bf16.gmra.mxu0 %v921
        %v1060 = vpop.f32.mrf.mxu0
        %v1061 = vadd.f32 %v1048, %v1060
        %v1062 = vpop.f32.mrf.mxu0
        %1063 = vdwg.mxu0
        %1064 = vmatpush.bf16.msra.mxu0 %v803
        %1065 = vmatpush.bf16.msra.mxu0 %v791
        %1066 = vmatpush.bf16.msra.mxu0 %v779
        %1067 = vmatpush.bf16.msra.mxu0 %v767
        %1068 = vmatpush.bf16.msra.mxu0 %v755
        %1069 = vmatpush.bf16.msra.mxu0 %v743
        %1070 = vmatpush.bf16.msra.mxu0 %v731
        %1071 = vmatpush.bf16.msra.mxu0 %v719
        %1072 = vmatmul.bf16.gmra.mxu0 %v389
        %v1073 = vpop.f32.mrf.mxu0
        %v1074 = vadd.f32 0.0, %v1073
        %v1075 = vpop.f32.mrf.mxu0
        %1076 = vdwg.mxu0
        %1077 = vmatpush.bf16.msra.mxu0 0
        %1078 = vmatpush.bf16.msra.mxu0 0
        %1079 = vmatpush.bf16.msra.mxu0 0
        %1080 = vmatpush.bf16.msra.mxu0 0
        %1081 = vmatpush.bf16.msra.mxu0 0
        %1082 = vmatpush.bf16.msra.mxu0 0
        %1083 = vmatpush.bf16.msra.mxu0 0
        %1084 = vmatpush.bf16.msra.mxu0 %v937
        %1085 = vmatmul.bf16.gmra.mxu0 %v921
        %v1086 = vpop.f32.mrf.mxu0
        %v1087 = vadd.f32 %v1074, %v1086
        %v1088 = vpop.f32.mrf.mxu0
        %1089 = vdwg.mxu0
        %1090 = vmatpush.bf16.msra.mxu0 %v804
        %1091 = vmatpush.bf16.msra.mxu0 %v792
        %1092 = vmatpush.bf16.msra.mxu0 %v780
        %1093 = vmatpush.bf16.msra.mxu0 %v768
        %1094 = vmatpush.bf16.msra.mxu0 %v756
        %1095 = vmatpush.bf16.msra.mxu0 %v744
        %1096 = vmatpush.bf16.msra.mxu0 %v732
        %1097 = vmatpush.bf16.msra.mxu0 %v720
        %1098 = vmatmul.bf16.gmra.mxu0 %v389
        %v1099 = vpop.f32.mrf.mxu0
        %v1100 = vadd.f32 0.0, %v1099
        %v1101 = vpop.f32.mrf.mxu0
        %1102 = vdwg.mxu0
        %1103 = vmatpush.bf16.msra.mxu0 0
        %1104 = vmatpush.bf16.msra.mxu0 0
        %1105 = vmatpush.bf16.msra.mxu0 0
        %1106 = vmatpush.bf16.msra.mxu0 0
        %1107 = vmatpush.bf16.msra.mxu0 0
        %1108 = vmatpush.bf16.msra.mxu0 0
        %1109 = vmatpush.bf16.msra.mxu0 0
        %1110 = vmatpush.bf16.msra.mxu0 %v940
        %1111 = vmatmul.bf16.gmra.mxu0 %v921
        %v1112 = vpop.f32.mrf.mxu0
        %v1113 = vadd.f32 %v1100, %v1112
        %v1114 = vpop.f32.mrf.mxu0
        %1115 = vdwg.mxu0
        %1116 = vmatpush.bf16.msra.mxu0 %v805
        %1117 = vmatpush.bf16.msra.mxu0 %v793
        %1118 = vmatpush.bf16.msra.mxu0 %v781
        %1119 = vmatpush.bf16.msra.mxu0 %v769
        %1120 = vmatpush.bf16.msra.mxu0 %v757
        %1121 = vmatpush.bf16.msra.mxu0 %v745
        %1122 = vmatpush.bf16.msra.mxu0 %v733
        %1123 = vmatpush.bf16.msra.mxu0 %v721
        %1124 = vmatmul.bf16.gmra.mxu0 %v389
        %v1125 = vpop.f32.mrf.mxu0
        %v1126 = vadd.f32 0.0, %v1125
        %v1127 = vpop.f32.mrf.mxu0
        %1128 = vdwg.mxu0
        %1129 = vmatpush.bf16.msra.mxu0 0
        %1130 = vmatpush.bf16.msra.mxu0 0
        %1131 = vmatpush.bf16.msra.mxu0 0
        %1132 = vmatpush.bf16.msra.mxu0 0
        %1133 = vmatpush.bf16.msra.mxu0 0
        %1134 = vmatpush.bf16.msra.mxu0 0
        %1135 = vmatpush.bf16.msra.mxu0 0
        %1136 = vmatpush.bf16.msra.mxu0 %v943
        %1137 = vmatmul.bf16.gmra.mxu0 %v921
        %v1138 = vpop.f32.mrf.mxu0
        %v1139 = vadd.f32 %v1126, %v1138
        %v1140 = vpop.f32.mrf.mxu0
        %1141 = vdwg.mxu0
        %1142 = vmatpush.bf16.msra.mxu0 %v806
        %1143 = vmatpush.bf16.msra.mxu0 %v794
        %1144 = vmatpush.bf16.msra.mxu0 %v782
        %1145 = vmatpush.bf16.msra.mxu0 %v770
        %1146 = vmatpush.bf16.msra.mxu0 %v758
        %1147 = vmatpush.bf16.msra.mxu0 %v746
        %1148 = vmatpush.bf16.msra.mxu0 %v734
        %1149 = vmatpush.bf16.msra.mxu0 %v722
        %1150 = vmatmul.bf16.gmra.mxu0 %v389
        %v1151 = vpop.f32.mrf.mxu0
        %v1152 = vadd.f32 0.0, %v1151
        %v1153 = vpop.f32.mrf.mxu0
        %1154 = vdwg.mxu0
        %1155 = vmatpush.bf16.msra.mxu0 0
        %1156 = vmatpush.bf16.msra.mxu0 0
        %1157 = vmatpush.bf16.msra.mxu0 0
        %1158 = vmatpush.bf16.msra.mxu0 0
        %1159 = vmatpush.bf16.msra.mxu0 0
        %1160 = vmatpush.bf16.msra.mxu0 0
        %1161 = vmatpush.bf16.msra.mxu0 0
        %1162 = vmatpush.bf16.msra.mxu0 %v946
        %1163 = vmatmul.bf16.gmra.mxu0 %v921
        %v1164 = vpop.f32.mrf.mxu0
        %v1165 = vadd.f32 %v1152, %v1164
        %v1166 = vpop.f32.mrf.mxu0
        %1167 = vdwg.mxu0
        %1168 = vmatpush.bf16.msra.mxu0 %v807
        %1169 = vmatpush.bf16.msra.mxu0 %v795
        %1170 = vmatpush.bf16.msra.mxu0 %v783
        %1171 = vmatpush.bf16.msra.mxu0 %v771
        %1172 = vmatpush.bf16.msra.mxu0 %v759
        %1173 = vmatpush.bf16.msra.mxu0 %v747
        %1174 = vmatpush.bf16.msra.mxu0 %v735
        %1175 = vmatpush.bf16.msra.mxu0 %v723
        %1176 = vmatmul.bf16.gmra.mxu0 %v389
        %v1177 = vpop.f32.mrf.mxu0
        %v1178 = vadd.f32 0.0, %v1177
        %v1179 = vpop.f32.mrf.mxu0
        %1180 = vdwg.mxu0
        %1181 = vmatpush.bf16.msra.mxu0 0
        %1182 = vmatpush.bf16.msra.mxu0 0
        %1183 = vmatpush.bf16.msra.mxu0 0
        %1184 = vmatpush.bf16.msra.mxu0 0
        %1185 = vmatpush.bf16.msra.mxu0 0
        %1186 = vmatpush.bf16.msra.mxu0 0
        %1187 = vmatpush.bf16.msra.mxu0 0
        %1188 = vmatpush.bf16.msra.mxu0 %v949
        %1189 = vmatmul.bf16.gmra.mxu0 %v921
        %v1190 = vpop.f32.mrf.mxu0
        %v1191 = vadd.f32 %v1178, %v1190
        %v1192 = vpop.f32.mrf.mxu0
        %1193 = vdwg.mxu0
        %1194 = vmatpush.bf16.msra.mxu0 %v808
        %1195 = vmatpush.bf16.msra.mxu0 %v796
        %1196 = vmatpush.bf16.msra.mxu0 %v784
        %1197 = vmatpush.bf16.msra.mxu0 %v772
        %1198 = vmatpush.bf16.msra.mxu0 %v760
        %1199 = vmatpush.bf16.msra.mxu0 %v748
        %1200 = vmatpush.bf16.msra.mxu0 %v736
        %1201 = vmatpush.bf16.msra.mxu0 %v724
        %1202 = vmatmul.bf16.gmra.mxu0 %v389
        %v1203 = vpop.f32.mrf.mxu0
        %v1204 = vadd.f32 0.0, %v1203
        %v1205 = vpop.f32.mrf.mxu0
        %1206 = vdwg.mxu0
        %1207 = vmatpush.bf16.msra.mxu0 0
        %1208 = vmatpush.bf16.msra.mxu0 0
        %1209 = vmatpush.bf16.msra.mxu0 0
        %1210 = vmatpush.bf16.msra.mxu0 0
        %1211 = vmatpush.bf16.msra.mxu0 0
        %1212 = vmatpush.bf16.msra.mxu0 0
        %1213 = vmatpush.bf16.msra.mxu0 0
        %1214 = vmatpush.bf16.msra.mxu0 %v952
        %1215 = vmatmul.bf16.gmra.mxu0 %v921
        %v1216 = vpop.f32.mrf.mxu0
        %v1217 = vadd.f32 %v1204, %v1216
        %v1218 = vpop.f32.mrf.mxu0
        %1219 = vdwg.mxu0
        %1220 = vmatpush.bf16.msra.mxu0 %v809
        %1221 = vmatpush.bf16.msra.mxu0 %v797
        %1222 = vmatpush.bf16.msra.mxu0 %v785
        %1223 = vmatpush.bf16.msra.mxu0 %v773
        %1224 = vmatpush.bf16.msra.mxu0 %v761
        %1225 = vmatpush.bf16.msra.mxu0 %v749
        %1226 = vmatpush.bf16.msra.mxu0 %v737
        %1227 = vmatpush.bf16.msra.mxu0 %v725
        %1228 = vmatmul.bf16.gmra.mxu0 %v389
        %v1229 = vpop.f32.mrf.mxu0
        %v1230 = vadd.f32 0.0, %v1229
        %v1231 = vpop.f32.mrf.mxu0
        %1232 = vdwg.mxu0
        %1233 = vmatpush.bf16.msra.mxu0 0
        %1234 = vmatpush.bf16.msra.mxu0 0
        %1235 = vmatpush.bf16.msra.mxu0 0
        %1236 = vmatpush.bf16.msra.mxu0 0
        %1237 = vmatpush.bf16.msra.mxu0 0
        %1238 = vmatpush.bf16.msra.mxu0 0
        %1239 = vmatpush.bf16.msra.mxu0 0
        %1240 = vmatpush.bf16.msra.mxu0 %v955
        %1241 = vmatmul.bf16.gmra.mxu0 %v921
        %v1242 = vpop.f32.mrf.mxu0
        %v1243 = vadd.f32 %v1230, %v1242
        %v1244 = vpop.f32.mrf.mxu0
        %1245 = vdwg.mxu0
        %1246 = vmatpush.bf16.msra.mxu0 %v810
        %1247 = vmatpush.bf16.msra.mxu0 %v798
        %1248 = vmatpush.bf16.msra.mxu0 %v786
        %1249 = vmatpush.bf16.msra.mxu0 %v774
        %1250 = vmatpush.bf16.msra.mxu0 %v762
        %1251 = vmatpush.bf16.msra.mxu0 %v750
        %1252 = vmatpush.bf16.msra.mxu0 %v738
        %1253 = vmatpush.bf16.msra.mxu0 %v726
        %1254 = vmatmul.bf16.gmra.mxu0 %v389
        %v1255 = vpop.f32.mrf.mxu0
        %v1256 = vadd.f32 0.0, %v1255
        %v1257 = vpop.f32.mrf.mxu0
        %1258 = vdwg.mxu0
        %1259 = vmatpush.bf16.msra.mxu0 0
        %1260 = vmatpush.bf16.msra.mxu0 0
        %1261 = vmatpush.bf16.msra.mxu0 0
        %1262 = vmatpush.bf16.msra.mxu0 0
        %1263 = vmatpush.bf16.msra.mxu0 0
        %1264 = vmatpush.bf16.msra.mxu0 0
        %1265 = vmatpush.bf16.msra.mxu0 0
        %1266 = vmatpush.bf16.msra.mxu0 %v958
        %1267 = vmatmul.bf16.gmra.mxu0 %v921
        %v1268 = vpop.f32.mrf.mxu0
        %v1269 = vadd.f32 %v1256, %v1268
        %v1270 = vpop.f32.mrf.mxu0
        %1271 = vdwg.mxu0
        %v1272 = vmax.f32 %v983, %v1087
        %v1273 = vmax.f32 %v1009, %v1113
        %v1274 = vmax.f32 %v1035, %v1139
        %v1275 = vmax.f32 %v1061, %v1165
        %v1276 = vmax.f32 %v1272, %v1191
        %v1277 = vmax.f32 %v1273, %v1217
        %v1278 = vmax.f32 %v1274, %v1243
        %v1279 = vmax.f32 %v1275, %v1269
        %v1281 = vperm.slane %v386, 0
        %v1282 = vperm.slane %v386, 1
        %v1283 = vperm.slane %v386, 2
        %v1284 = vperm.slane %v386, 3
        %v1289 = vadd.f32 %v1276, %v1281
        %v1290 = vadd.f32 %v1277, %v1282
        %v1291 = vadd.f32 %v1278, %v1283
        %v1292 = vadd.f32 %v1279, %v1284
        %v1293 = vmax.f32 %v1289, 0.0
        %v1294 = vmax.f32 %v1290, 0.0
        %v1295 = vmax.f32 %v1291, 0.0
        %v1296 = vmax.f32 %v1292, 0.0
        %1301 = vrot.lane.b32.xlu0 %v1293, 112
        %v1302 = vpop.permute.xlu0 %1301
        %1303 = vrot.lane.b32.xlu0 %v1294, 112
        %v1304 = vpop.permute.xlu0 %1303
        %1305 = vrot.lane.b32.xlu0 %v1295, 112
        %v1306 = vpop.permute.xlu0 %1305
        %1307 = vrot.lane.b32.xlu0 %v1296, 112
        %v1308 = vpop.permute.xlu0 %1307
        %vm1309 = vcmask 916480
        %v1310 = vsel %vm1309, %v1302, %v1304
        %v1311 = vsel %vm1309, %v1304, %v1306
        %v1312 = vsel %vm1309, %v1306, %v1308
        %v1317 = vmax.f32 %v1293, %v1310
        %v1318 = vmax.f32 %v1294, %v1311
        %v1319 = vmax.f32 %v1295, %v1312
        %v1320 = vmax.f32 %v1296, %v1308
        %1321 = vrot.lane.b32.xlu0 %v1293, 96
        %v1322 = vpop.permute.xlu0 %1321
        %1323 = vrot.lane.b32.xlu0 %v1294, 96
        %v1324 = vpop.permute.xlu0 %1323
        %1325 = vrot.lane.b32.xlu0 %v1295, 96
        %v1326 = vpop.permute.xlu0 %1325
        %1327 = vrot.lane.b32.xlu0 %v1296, 96
        %v1328 = vpop.permute.xlu0 %1327
        %vm1329 = vcmask 785408
        %v1330 = vsel %vm1329, %v1322, %v1324
        %v1331 = vsel %vm1329, %v1324, %v1326
        %v1332 = vsel %vm1329, %v1326, %v1328
        %v1337 = vmax.f32 %v1317, %v1330
        %v1338 = vmax.f32 %v1318, %v1331
        %v1339 = vmax.f32 %v1319, %v1332
        %v1340 = vmax.f32 %v1320, %v1328
        %v1341 = vld [vmem:[%s3] sm:$0xf]
        %v1342 = vld [vmem:[%s3 + $0x4] sm:$0xf]
        %v1343 = vld [vmem:[%s3 + $0x8] sm:$0xf]
        %v1344 = vld [vmem:[%s3 + $0xc] sm:$0xf]
        %v1345 = vld [vmem:[%s3 + $0x10] sm:$0xf]
        %v1346 = vld [vmem:[%s3 + $0x14] sm:$0xf]
        %v1347 = vld [vmem:[%s3 + $0x18] sm:$0xf]
        %v1348 = vld [vmem:[%s3 + $0x1c] sm:$0xf]
        %v1349 = vld [vmem:[%s3 + $0x20] sm:$0xf]
        %v1350 = vld [vmem:[%s3 + $0x24] sm:$0xf]
        %v1351 = vld [vmem:[%s3 + $0x28] sm:$0xf]
        %v1352 = vld [vmem:[%s3 + $0x2c] sm:$0xf]
        %v1353 = vld [vmem:[%s3 + $0x30] sm:$0xf]
        %v1354 = vld [vmem:[%s3 + $0x34] sm:$0xf]
        %v1355 = vld [vmem:[%s3 + $0x38] sm:$0xf]
        %v1356 = vld [vmem:[%s3 + $0x3c] sm:$0xf]
        %v1357 = vld [vmem:[%s3 + $0x40] sm:$0xf]
        %v1358 = vld [vmem:[%s3 + $0x44] sm:$0xf]
        %v1359 = vld [vmem:[%s3 + $0x48] sm:$0xf]
        %v1360 = vld [vmem:[%s3 + $0x4c] sm:$0xf]
        %v1361 = vld [vmem:[%s3 + $0x50] sm:$0xf]
        %v1362 = vld [vmem:[%s3 + $0x54] sm:$0xf]
        %v1363 = vld [vmem:[%s3 + $0x58] sm:$0xf]
        %v1364 = vld [vmem:[%s3 + $0x5c] sm:$0xf]
        %v1365 = vld [vmem:[%s3 + $0x60] sm:$0xf]
        %v1366 = vld [vmem:[%s3 + $0x64] sm:$0xf]
        %v1367 = vld [vmem:[%s3 + $0x68] sm:$0xf]
        %v1368 = vld [vmem:[%s3 + $0x6c] sm:$0xf]
        %v1369 = vld [vmem:[%s3 + $0x70] sm:$0xf]
        %v1370 = vld [vmem:[%s3 + $0x74] sm:$0xf]
        %v1371 = vld [vmem:[%s3 + $0x78] sm:$0xf]
        %v1372 = vld [vmem:[%s3 + $0x7c] sm:$0xf]
        %v1373 = vld [vmem:[%s3 + $0x80] sm:$0xf]
        %v1374 = vld [vmem:[%s3 + $0x84] sm:$0xf]
        %v1375 = vld [vmem:[%s3 + $0x88] sm:$0xf]
        %v1376 = vld [vmem:[%s3 + $0x8c] sm:$0xf]
        %v1377 = vld [vmem:[%s3 + $0x90] sm:$0xf]
        %v1378 = vld [vmem:[%s3 + $0x94] sm:$0xf]
        %v1379 = vld [vmem:[%s3 + $0x98] sm:$0xf]
        %v1380 = vld [vmem:[%s3 + $0x9c] sm:$0xf]
        %v1381 = vld [vmem:[%s3 + $0xa0] sm:$0xf]
        %v1382 = vld [vmem:[%s3 + $0xa4] sm:$0xf]
        %v1383 = vld [vmem:[%s3 + $0xa8] sm:$0xf]
        %v1384 = vld [vmem:[%s3 + $0xac] sm:$0xf]
        %v1385 = vld [vmem:[%s3 + $0xb0] sm:$0xf]
        %v1386 = vld [vmem:[%s3 + $0xb4] sm:$0xf]
        %v1387 = vld [vmem:[%s3 + $0xb8] sm:$0xf]
        %v1388 = vld [vmem:[%s3 + $0xbc] sm:$0xf]
        %v1389 = vld [vmem:[%s3 + $0xc0] sm:$0xf]
        %v1390 = vld [vmem:[%s3 + $0xc4] sm:$0xf]
        %v1391 = vld [vmem:[%s3 + $0xc8] sm:$0xf]
        %v1392 = vld [vmem:[%s3 + $0xcc] sm:$0xf]
        %v1393 = vld [vmem:[%s3 + $0xd0] sm:$0xf]
        %v1394 = vld [vmem:[%s3 + $0xd4] sm:$0xf]
        %v1395 = vld [vmem:[%s3 + $0xd8] sm:$0xf]
        %v1396 = vld [vmem:[%s3 + $0xdc] sm:$0xf]
        %v1397 = vld [vmem:[%s3 + $0xe0] sm:$0xf]
        %v1398 = vld [vmem:[%s3 + $0xe4] sm:$0xf]
        %v1399 = vld [vmem:[%s3 + $0xe8] sm:$0xf]
        %v1400 = vld [vmem:[%s3 + $0xec] sm:$0xf]
        %v1401 = vpack.c.bf16 %v1337, %v1337
        %v1402 = vpack.c.bf16 %v1338, %v1338
        %v1403 = vpack.c.bf16 %v1339, %v1339
        %v1404 = vpack.c.bf16 %v1340, %v1340
        %1407 = vrot.lane.b32.xlu0 %v389, 72
        %v1408 = vpop.permute.xlu0 %1407
        %1409 = vrot.lane.b32.xlu0 %v390, 72
        %v1410 = vpop.permute.xlu0 %1409
        %vm1411 = vcmask 588800
        %v1412 = vsel %vm1411, %v1408, %v1410
        %v1415 = vsel %vm919, %v1410, 0
        %1417 = vmatpush.bf16.msra.mxu0 %v799
        %1418 = vmatpush.bf16.msra.mxu0 %v787
        %1419 = vmatpush.bf16.msra.mxu0 %v775
        %1420 = vmatpush.bf16.msra.mxu0 %v763
        %1421 = vmatpush.bf16.msra.mxu0 %v751
        %1422 = vmatpush.bf16.msra.mxu0 %v739
        %1423 = vmatpush.bf16.msra.mxu0 %v727
        %1424 = vmatpush.bf16.msra.mxu0 %v715
        %1425 = vmatmul.bf16.gmra.mxu0 %v1412
        %v1426 = vpop.f32.mrf.mxu0
        %v1427 = vadd.f32 0.0, %v1426
        %v1428 = vpop.f32.mrf.mxu0
        %1429 = vdwg.mxu0
        %1430 = vmatpush.bf16.msra.mxu0 0
        %1431 = vmatpush.bf16.msra.mxu0 0
        %1432 = vmatpush.bf16.msra.mxu0 0
        %1433 = vmatpush.bf16.msra.mxu0 0
        %1434 = vmatpush.bf16.msra.mxu0 0
        %1435 = vmatpush.bf16.msra.mxu0 0
        %1436 = vmatpush.bf16.msra.mxu0 0
        %1437 = vmatpush.bf16.msra.mxu0 %v925
        %1438 = vmatmul.bf16.gmra.mxu0 %v1415
        %v1439 = vpop.f32.mrf.mxu0
        %v1440 = vadd.f32 %v1427, %v1439
        %v1441 = vpop.f32.mrf.mxu0
        %1442 = vdwg.mxu0
        %1443 = vmatpush.bf16.msra.mxu0 %v800
        %1444 = vmatpush.bf16.msra.mxu0 %v788
        %1445 = vmatpush.bf16.msra.mxu0 %v776
        %1446 = vmatpush.bf16.msra.mxu0 %v764
        %1447 = vmatpush.bf16.msra.mxu0 %v752
        %1448 = vmatpush.bf16.msra.mxu0 %v740
        %1449 = vmatpush.bf16.msra.mxu0 %v728
        %1450 = vmatpush.bf16.msra.mxu0 %v716
        %1451 = vmatmul.bf16.gmra.mxu0 %v1412
        %v1452 = vpop.f32.mrf.mxu0
        %v1453 = vadd.f32 0.0, %v1452
        %v1454 = vpop.f32.mrf.mxu0
        %1455 = vdwg.mxu0
        %1456 = vmatpush.bf16.msra.mxu0 0
        %1457 = vmatpush.bf16.msra.mxu0 0
        %1458 = vmatpush.bf16.msra.mxu0 0
        %1459 = vmatpush.bf16.msra.mxu0 0
        %1460 = vmatpush.bf16.msra.mxu0 0
        %1461 = vmatpush.bf16.msra.mxu0 0
        %1462 = vmatpush.bf16.msra.mxu0 0
        %1463 = vmatpush.bf16.msra.mxu0 %v928
        %1464 = vmatmul.bf16.gmra.mxu0 %v1415
        %v1465 = vpop.f32.mrf.mxu0
        %v1466 = vadd.f32 %v1453, %v1465
        %v1467 = vpop.f32.mrf.mxu0
        %1468 = vdwg.mxu0
        %1469 = vmatpush.bf16.msra.mxu0 %v801
        %1470 = vmatpush.bf16.msra.mxu0 %v789
        %1471 = vmatpush.bf16.msra.mxu0 %v777
        %1472 = vmatpush.bf16.msra.mxu0 %v765
        %1473 = vmatpush.bf16.msra.mxu0 %v753
        %1474 = vmatpush.bf16.msra.mxu0 %v741
        %1475 = vmatpush.bf16.msra.mxu0 %v729
        %1476 = vmatpush.bf16.msra.mxu0 %v717
        %1477 = vmatmul.bf16.gmra.mxu0 %v1412
        %v1478 = vpop.f32.mrf.mxu0
        %v1479 = vadd.f32 0.0, %v1478
        %v1480 = vpop.f32.mrf.mxu0
        %1481 = vdwg.mxu0
        %1482 = vmatpush.bf16.msra.mxu0 0
        %1483 = vmatpush.bf16.msra.mxu0 0
        %1484 = vmatpush.bf16.msra.mxu0 0
        %1485 = vmatpush.bf16.msra.mxu0 0
        %1486 = vmatpush.bf16.msra.mxu0 0
        %1487 = vmatpush.bf16.msra.mxu0 0
        %1488 = vmatpush.bf16.msra.mxu0 0
        %1489 = vmatpush.bf16.msra.mxu0 %v931
        %1490 = vmatmul.bf16.gmra.mxu0 %v1415
        %v1491 = vpop.f32.mrf.mxu0
        %v1492 = vadd.f32 %v1479, %v1491
        %v1493 = vpop.f32.mrf.mxu0
        %1494 = vdwg.mxu0
        %1495 = vmatpush.bf16.msra.mxu0 %v802
        %1496 = vmatpush.bf16.msra.mxu0 %v790
        %1497 = vmatpush.bf16.msra.mxu0 %v778
        %1498 = vmatpush.bf16.msra.mxu0 %v766
        %1499 = vmatpush.bf16.msra.mxu0 %v754
        %1500 = vmatpush.bf16.msra.mxu0 %v742
        %1501 = vmatpush.bf16.msra.mxu0 %v730
        %1502 = vmatpush.bf16.msra.mxu0 %v718
        %1503 = vmatmul.bf16.gmra.mxu0 %v1412
        %v1504 = vpop.f32.mrf.mxu0
        %v1505 = vadd.f32 0.0, %v1504
        %v1506 = vpop.f32.mrf.mxu0
        %1507 = vdwg.mxu0
        %1508 = vmatpush.bf16.msra.mxu0 0
        %1509 = vmatpush.bf16.msra.mxu0 0
        %1510 = vmatpush.bf16.msra.mxu0 0
        %1511 = vmatpush.bf16.msra.mxu0 0
        %1512 = vmatpush.bf16.msra.mxu0 0
        %1513 = vmatpush.bf16.msra.mxu0 0
        %1514 = vmatpush.bf16.msra.mxu0 0
        %1515 = vmatpush.bf16.msra.mxu0 %v934
        %1516 = vmatmul.bf16.gmra.mxu0 %v1415
        %v1517 = vpop.f32.mrf.mxu0
        %v1518 = vadd.f32 %v1505, %v1517
        %v1519 = vpop.f32.mrf.mxu0
        %1520 = vdwg.mxu0
        %1521 = vmatpush.bf16.msra.mxu0 %v803
        %1522 = vmatpush.bf16.msra.mxu0 %v791
        %1523 = vmatpush.bf16.msra.mxu0 %v779
        %1524 = vmatpush.bf16.msra.mxu0 %v767
        %1525 = vmatpush.bf16.msra.mxu0 %v755
        %1526 = vmatpush.bf16.msra.mxu0 %v743
        %1527 = vmatpush.bf16.msra.mxu0 %v731
        %1528 = vmatpush.bf16.msra.mxu0 %v719
        %1529 = vmatmul.bf16.gmra.mxu0 %v1412
        %v1530 = vpop.f32.mrf.mxu0
        %v1531 = vadd.f32 0.0, %v1530
        %v1532 = vpop.f32.mrf.mxu0
        %1533 = vdwg.mxu0
        %1534 = vmatpush.bf16.msra.mxu0 0
        %1535 = vmatpush.bf16.msra.mxu0 0
        %1536 = vmatpush.bf16.msra.mxu0 0
        %1537 = vmatpush.bf16.msra.mxu0 0
        %1538 = vmatpush.bf16.msra.mxu0 0
        %1539 = vmatpush.bf16.msra.mxu0 0
        %1540 = vmatpush.bf16.msra.mxu0 0
        %1541 = vmatpush.bf16.msra.mxu0 %v937
        %1542 = vmatmul.bf16.gmra.mxu0 %v1415
        %v1543 = vpop.f32.mrf.mxu0
        %v1544 = vadd.f32 %v1531, %v1543
        %v1545 = vpop.f32.mrf.mxu0
        %1546 = vdwg.mxu0
        %1547 = vmatpush.bf16.msra.mxu0 %v804
        %1548 = vmatpush.bf16.msra.mxu0 %v792
        %1549 = vmatpush.bf16.msra.mxu0 %v780
        %1550 = vmatpush.bf16.msra.mxu0 %v768
        %1551 = vmatpush.bf16.msra.mxu0 %v756
        %1552 = vmatpush.bf16.msra.mxu0 %v744
        %1553 = vmatpush.bf16.msra.mxu0 %v732
        %1554 = vmatpush.bf16.msra.mxu0 %v720
        %1555 = vmatmul.bf16.gmra.mxu0 %v1412
        %v1556 = vpop.f32.mrf.mxu0
        %v1557 = vadd.f32 0.0, %v1556
        %v1558 = vpop.f32.mrf.mxu0
        %1559 = vdwg.mxu0
        %1560 = vmatpush.bf16.msra.mxu0 0
        %1561 = vmatpush.bf16.msra.mxu0 0
        %1562 = vmatpush.bf16.msra.mxu0 0
        %1563 = vmatpush.bf16.msra.mxu0 0
        %1564 = vmatpush.bf16.msra.mxu0 0
        %1565 = vmatpush.bf16.msra.mxu0 0
        %1566 = vmatpush.bf16.msra.mxu0 0
        %1567 = vmatpush.bf16.msra.mxu0 %v940
        %1568 = vmatmul.bf16.gmra.mxu0 %v1415
        %v1569 = vpop.f32.mrf.mxu0
        %v1570 = vadd.f32 %v1557, %v1569
        %v1571 = vpop.f32.mrf.mxu0
        %1572 = vdwg.mxu0
        %1573 = vmatpush.bf16.msra.mxu0 %v805
        %1574 = vmatpush.bf16.msra.mxu0 %v793
        %1575 = vmatpush.bf16.msra.mxu0 %v781
        %1576 = vmatpush.bf16.msra.mxu0 %v769
        %1577 = vmatpush.bf16.msra.mxu0 %v757
        %1578 = vmatpush.bf16.msra.mxu0 %v745
        %1579 = vmatpush.bf16.msra.mxu0 %v733
        %1580 = vmatpush.bf16.msra.mxu0 %v721
        %1581 = vmatmul.bf16.gmra.mxu0 %v1412
        %v1582 = vpop.f32.mrf.mxu0
        %v1583 = vadd.f32 0.0, %v1582
        %v1584 = vpop.f32.mrf.mxu0
        %1585 = vdwg.mxu0
        %1586 = vmatpush.bf16.msra.mxu0 0
        %1587 = vmatpush.bf16.msra.mxu0 0
        %1588 = vmatpush.bf16.msra.mxu0 0
        %1589 = vmatpush.bf16.msra.mxu0 0
        %1590 = vmatpush.bf16.msra.mxu0 0
        %1591 = vmatpush.bf16.msra.mxu0 0
        %1592 = vmatpush.bf16.msra.mxu0 0
        %1593 = vmatpush.bf16.msra.mxu0 %v943
        %1594 = vmatmul.bf16.gmra.mxu0 %v1415
        %v1595 = vpop.f32.mrf.mxu0
        %v1596 = vadd.f32 %v1583, %v1595
        %v1597 = vpop.f32.mrf.mxu0
        %1598 = vdwg.mxu0
        %1599 = vmatpush.bf16.msra.mxu0 %v806
        %1600 = vmatpush.bf16.msra.mxu0 %v794
        %1601 = vmatpush.bf16.msra.mxu0 %v782
        %1602 = vmatpush.bf16.msra.mxu0 %v770
        %1603 = vmatpush.bf16.msra.mxu0 %v758
        %1604 = vmatpush.bf16.msra.mxu0 %v746
        %1605 = vmatpush.bf16.msra.mxu0 %v734
        %1606 = vmatpush.bf16.msra.mxu0 %v722
        %1607 = vmatmul.bf16.gmra.mxu0 %v1412
        %v1608 = vpop.f32.mrf.mxu0
        %v1609 = vadd.f32 0.0, %v1608
        %v1610 = vpop.f32.mrf.mxu0
        %1611 = vdwg.mxu0
        %1612 = vmatpush.bf16.msra.mxu0 0
        %1613 = vmatpush.bf16.msra.mxu0 0
        %1614 = vmatpush.bf16.msra.mxu0 0
        %1615 = vmatpush.bf16.msra.mxu0 0
        %1616 = vmatpush.bf16.msra.mxu0 0
        %1617 = vmatpush.bf16.msra.mxu0 0
        %1618 = vmatpush.bf16.msra.mxu0 0
        %1619 = vmatpush.bf16.msra.mxu0 %v946
        %1620 = vmatmul.bf16.gmra.mxu0 %v1415
        %v1621 = vpop.f32.mrf.mxu0
        %v1622 = vadd.f32 %v1609, %v1621
        %v1623 = vpop.f32.mrf.mxu0
        %1624 = vdwg.mxu0
        %1625 = vmatpush.bf16.msra.mxu0 %v807
        %1626 = vmatpush.bf16.msra.mxu0 %v795
        %1627 = vmatpush.bf16.msra.mxu0 %v783
        %1628 = vmatpush.bf16.msra.mxu0 %v771
        %1629 = vmatpush.bf16.msra.mxu0 %v759
        %1630 = vmatpush.bf16.msra.mxu0 %v747
        %1631 = vmatpush.bf16.msra.mxu0 %v735
        %1632 = vmatpush.bf16.msra.mxu0 %v723
        %1633 = vmatmul.bf16.gmra.mxu0 %v1412
        %v1634 = vpop.f32.mrf.mxu0
        %v1635 = vadd.f32 0.0, %v1634
        %v1636 = vpop.f32.mrf.mxu0
        %1637 = vdwg.mxu0
        %1638 = vmatpush.bf16.msra.mxu0 0
        %1639 = vmatpush.bf16.msra.mxu0 0
        %1640 = vmatpush.bf16.msra.mxu0 0
        %1641 = vmatpush.bf16.msra.mxu0 0
        %1642 = vmatpush.bf16.msra.mxu0 0
        %1643 = vmatpush.bf16.msra.mxu0 0
        %1644 = vmatpush.bf16.msra.mxu0 0
        %1645 = vmatpush.bf16.msra.mxu0 %v949
        %1646 = vmatmul.bf16.gmra.mxu0 %v1415
        %v1647 = vpop.f32.mrf.mxu0
        %v1648 = vadd.f32 %v1635, %v1647
        %v1649 = vpop.f32.mrf.mxu0
        %1650 = vdwg.mxu0
        %1651 = vmatpush.bf16.msra.mxu0 %v808
        %1652 = vmatpush.bf16.msra.mxu0 %v796
        %1653 = vmatpush.bf16.msra.mxu0 %v784
        %1654 = vmatpush.bf16.msra.mxu0 %v772
        %1655 = vmatpush.bf16.msra.mxu0 %v760
        %1656 = vmatpush.bf16.msra.mxu0 %v748
        %1657 = vmatpush.bf16.msra.mxu0 %v736
        %1658 = vmatpush.bf16.msra.mxu0 %v724
        %1659 = vmatmul.bf16.gmra.mxu0 %v1412
        %v1660 = vpop.f32.mrf.mxu0
        %v1661 = vadd.f32 0.0, %v1660
        %v1662 = vpop.f32.mrf.mxu0
        %1663 = vdwg.mxu0
        %1664 = vmatpush.bf16.msra.mxu0 0
        %1665 = vmatpush.bf16.msra.mxu0 0
        %1666 = vmatpush.bf16.msra.mxu0 0
        %1667 = vmatpush.bf16.msra.mxu0 0
        %1668 = vmatpush.bf16.msra.mxu0 0
        %1669 = vmatpush.bf16.msra.mxu0 0
        %1670 = vmatpush.bf16.msra.mxu0 0
        %1671 = vmatpush.bf16.msra.mxu0 %v952
        %1672 = vmatmul.bf16.gmra.mxu0 %v1415
        %v1673 = vpop.f32.mrf.mxu0
        %v1674 = vadd.f32 %v1661, %v1673
        %v1675 = vpop.f32.mrf.mxu0
        %1676 = vdwg.mxu0
        %1677 = vmatpush.bf16.msra.mxu0 %v809
        %1678 = vmatpush.bf16.msra.mxu0 %v797
        %1679 = vmatpush.bf16.msra.mxu0 %v785
        %1680 = vmatpush.bf16.msra.mxu0 %v773
        %1681 = vmatpush.bf16.msra.mxu0 %v761
        %1682 = vmatpush.bf16.msra.mxu0 %v749
        %1683 = vmatpush.bf16.msra.mxu0 %v737
        %1684 = vmatpush.bf16.msra.mxu0 %v725
        %1685 = vmatmul.bf16.gmra.mxu0 %v1412
        %v1686 = vpop.f32.mrf.mxu0
        %v1687 = vadd.f32 0.0, %v1686
        %v1688 = vpop.f32.mrf.mxu0
        %1689 = vdwg.mxu0
        %1690 = vmatpush.bf16.msra.mxu0 0
        %1691 = vmatpush.bf16.msra.mxu0 0
        %1692 = vmatpush.bf16.msra.mxu0 0
        %1693 = vmatpush.bf16.msra.mxu0 0
        %1694 = vmatpush.bf16.msra.mxu0 0
        %1695 = vmatpush.bf16.msra.mxu0 0
        %1696 = vmatpush.bf16.msra.mxu0 0
        %1697 = vmatpush.bf16.msra.mxu0 %v955
        %1698 = vmatmul.bf16.gmra.mxu0 %v1415
        %v1699 = vpop.f32.mrf.mxu0
        %v1700 = vadd.f32 %v1687, %v1699
        %v1701 = vpop.f32.mrf.mxu0
        %1702 = vdwg.mxu0
        %1703 = vmatpush.bf16.msra.mxu0 %v810
        %1704 = vmatpush.bf16.msra.mxu0 %v798
        %1705 = vmatpush.bf16.msra.mxu0 %v786
        %1706 = vmatpush.bf16.msra.mxu0 %v774
        %1707 = vmatpush.bf16.msra.mxu0 %v762
        %1708 = vmatpush.bf16.msra.mxu0 %v750
        %1709 = vmatpush.bf16.msra.mxu0 %v738
        %1710 = vmatpush.bf16.msra.mxu0 %v726
        %1711 = vmatmul.bf16.gmra.mxu0 %v1412
        %v1712 = vpop.f32.mrf.mxu0
        %v1713 = vadd.f32 0.0, %v1712
        %v1714 = vpop.f32.mrf.mxu0
        %1715 = vdwg.mxu0
        %1716 = vmatpush.bf16.msra.mxu0 0
        %1717 = vmatpush.bf16.msra.mxu0 0
        %1718 = vmatpush.bf16.msra.mxu0 0
        %1719 = vmatpush.bf16.msra.mxu0 0
        %1720 = vmatpush.bf16.msra.mxu0 0
        %1721 = vmatpush.bf16.msra.mxu0 0
        %1722 = vmatpush.bf16.msra.mxu0 0
        %1723 = vmatpush.bf16.msra.mxu0 %v958
        %1724 = vmatmul.bf16.gmra.mxu0 %v1415
        %v1725 = vpop.f32.mrf.mxu0
        %v1726 = vadd.f32 %v1713, %v1725
        %v1727 = vpop.f32.mrf.mxu0
        %1728 = vdwg.mxu0
        %v1729 = vmax.f32 %v1440, %v1544
        %v1730 = vmax.f32 %v1466, %v1570
        %v1731 = vmax.f32 %v1492, %v1596
        %v1732 = vmax.f32 %v1518, %v1622
        %v1733 = vmax.f32 %v1729, %v1648
        %v1734 = vmax.f32 %v1730, %v1674
        %v1735 = vmax.f32 %v1731, %v1700
        %v1736 = vmax.f32 %v1732, %v1726
        %v1737 = vadd.f32 %v1733, %v1281
        %v1738 = vadd.f32 %v1734, %v1282
        %v1739 = vadd.f32 %v1735, %v1283
        %v1740 = vadd.f32 %v1736, %v1284
        %v1741 = vmax.f32 %v1737, 0.0
        %v1742 = vmax.f32 %v1738, 0.0
        %v1743 = vmax.f32 %v1739, 0.0
        %v1744 = vmax.f32 %v1740, 0.0
        %1749 = vrot.lane.b32.xlu0 %v1741, 112
        %v1750 = vpop.permute.xlu0 %1749
        %1751 = vrot.lane.b32.xlu0 %v1742, 112
        %v1752 = vpop.permute.xlu0 %1751
        %1753 = vrot.lane.b32.xlu0 %v1743, 112
        %v1754 = vpop.permute.xlu0 %1753
        %1755 = vrot.lane.b32.xlu0 %v1744, 112
        %v1756 = vpop.permute.xlu0 %1755
        %v1757 = vsel %vm1309, %v1750, %v1752
        %v1758 = vsel %vm1309, %v1752, %v1754
        %v1759 = vsel %vm1309, %v1754, %v1756
        %v1764 = vmax.f32 %v1741, %v1757
        %v1765 = vmax.f32 %v1742, %v1758
        %v1766 = vmax.f32 %v1743, %v1759
        %v1767 = vmax.f32 %v1744, %v1756
        %1768 = vrot.lane.b32.xlu0 %v1741, 96
        %v1769 = vpop.permute.xlu0 %1768
        %1770 = vrot.lane.b32.xlu0 %v1742, 96
        %v1771 = vpop.permute.xlu0 %1770
        %1772 = vrot.lane.b32.xlu0 %v1743, 96
        %v1773 = vpop.permute.xlu0 %1772
        %1774 = vrot.lane.b32.xlu0 %v1744, 96
        %v1775 = vpop.permute.xlu0 %1774
        %v1776 = vsel %vm1329, %v1769, %v1771
        %v1777 = vsel %vm1329, %v1771, %v1773
        %v1778 = vsel %vm1329, %v1773, %v1775
        %v1783 = vmax.f32 %v1764, %v1776
        %v1784 = vmax.f32 %v1765, %v1777
        %v1785 = vmax.f32 %v1766, %v1778
        %v1786 = vmax.f32 %v1767, %v1775
        %v1787 = vld [vmem:[%s3 + $0xf0] sm:$0xf]
        %v1788 = vld [vmem:[%s3 + $0xf4] sm:$0xf]
        %v1789 = vld [vmem:[%s3 + $0xf8] sm:$0xf]
        %v1790 = vld [vmem:[%s3 + $0xfc] sm:$0xf]
        %v1791 = vld [vmem:[%s3 + $0x100] sm:$0xf]
        %v1792 = vld [vmem:[%s3 + $0x104] sm:$0xf]
        %v1793 = vld [vmem:[%s3 + $0x108] sm:$0xf]
        %v1794 = vld [vmem:[%s3 + $0x10c] sm:$0xf]
        %v1795 = vld [vmem:[%s3 + $0x110] sm:$0xf]
        %v1796 = vld [vmem:[%s3 + $0x114] sm:$0xf]
        %v1797 = vld [vmem:[%s3 + $0x118] sm:$0xf]
        %v1798 = vld [vmem:[%s3 + $0x11c] sm:$0xf]
        %v1799 = vld [vmem:[%s3 + $0x120] sm:$0xf]
        %v1800 = vld [vmem:[%s3 + $0x124] sm:$0xf]
        %v1801 = vld [vmem:[%s3 + $0x128] sm:$0xf]
        %v1802 = vld [vmem:[%s3 + $0x12c] sm:$0xf]
        %v1803 = vld [vmem:[%s3 + $0x130] sm:$0xf]
        %v1804 = vld [vmem:[%s3 + $0x134] sm:$0xf]
        %v1805 = vld [vmem:[%s3 + $0x138] sm:$0xf]
        %v1806 = vld [vmem:[%s3 + $0x13c] sm:$0xf]
        %v1807 = vld [vmem:[%s3 + $0x140] sm:$0xf]
        %v1808 = vld [vmem:[%s3 + $0x144] sm:$0xf]
        %v1809 = vld [vmem:[%s3 + $0x148] sm:$0xf]
        %v1810 = vld [vmem:[%s3 + $0x14c] sm:$0xf]
        %v1811 = vld [vmem:[%s3 + $0x150] sm:$0xf]
        %v1812 = vld [vmem:[%s3 + $0x154] sm:$0xf]
        %v1813 = vld [vmem:[%s3 + $0x158] sm:$0xf]
        %v1814 = vld [vmem:[%s3 + $0x15c] sm:$0xf]
        %v1815 = vld [vmem:[%s3 + $0x160] sm:$0xf]
        %v1816 = vld [vmem:[%s3 + $0x164] sm:$0xf]
        %v1817 = vld [vmem:[%s3 + $0x168] sm:$0xf]
        %v1818 = vld [vmem:[%s3 + $0x16c] sm:$0xf]
        %v1819 = vld [vmem:[%s3 + $0x170] sm:$0xf]
        %v1820 = vld [vmem:[%s3 + $0x174] sm:$0xf]
        %v1821 = vld [vmem:[%s3 + $0x178] sm:$0xf]
        %v1822 = vld [vmem:[%s3 + $0x17c] sm:$0xf]
        %v1823 = vld [vmem:[%s3 + $0x180] sm:$0xf]
        %v1824 = vld [vmem:[%s3 + $0x184] sm:$0xf]
        %v1825 = vld [vmem:[%s3 + $0x188] sm:$0xf]
        %v1826 = vld [vmem:[%s3 + $0x18c] sm:$0xf]
        %v1827 = vld [vmem:[%s3 + $0x190] sm:$0xf]
        %v1828 = vld [vmem:[%s3 + $0x194] sm:$0xf]
        %v1829 = vld [vmem:[%s3 + $0x198] sm:$0xf]
        %v1830 = vld [vmem:[%s3 + $0x19c] sm:$0xf]
        %v1831 = vld [vmem:[%s3 + $0x1a0] sm:$0xf]
        %v1832 = vld [vmem:[%s3 + $0x1a4] sm:$0xf]
        %v1833 = vld [vmem:[%s3 + $0x1a8] sm:$0xf]
        %v1834 = vld [vmem:[%s3 + $0x1ac] sm:$0xf]
        %v1835 = vld [vmem:[%s3 + $0x1b0] sm:$0xf]
        %v1836 = vld [vmem:[%s3 + $0x1b4] sm:$0xf]
        %v1837 = vld [vmem:[%s3 + $0x1b8] sm:$0xf]
        %v1838 = vld [vmem:[%s3 + $0x1bc] sm:$0xf]
        %v1839 = vld [vmem:[%s3 + $0x1c0] sm:$0xf]
        %v1840 = vld [vmem:[%s3 + $0x1c4] sm:$0xf]
        %v1841 = vld [vmem:[%s3 + $0x1c8] sm:$0xf]
        %v1842 = vld [vmem:[%s3 + $0x1cc] sm:$0xf]
        %v1843 = vld [vmem:[%s3 + $0x1d0] sm:$0xf]
        %v1844 = vld [vmem:[%s3 + $0x1d4] sm:$0xf]
        %v1845 = vld [vmem:[%s3 + $0x1d8] sm:$0xf]
        %v1846 = vld [vmem:[%s3 + $0x1dc] sm:$0xf]
        %v1847 = vpack.c.bf16 %v1783, %v1783
        %v1848 = vpack.c.bf16 %v1784, %v1784
        %v1849 = vpack.c.bf16 %v1785, %v1785
        %v1850 = vpack.c.bf16 %v1786, %v1786
        %v1911 = vunpack.c.l.b16 %v1787
        %v1912 = vunpack.c.l.b16 %v1788
        %v1913 = vunpack.c.l.b16 %v1789
        %v1914 = vunpack.c.l.b16 %v1790
        %v1915 = vunpack.c.l.b16 %v1791
        %v1916 = vunpack.c.l.b16 %v1792
        %v1917 = vunpack.c.l.b16 %v1793
        %v1918 = vunpack.c.l.b16 %v1794
        %v1919 = vunpack.c.l.b16 %v1795
        %v1920 = vunpack.c.l.b16 %v1796
        %v1921 = vunpack.c.l.b16 %v1797
        %v1922 = vunpack.c.l.b16 %v1798
        %v1923 = vunpack.c.l.b16 %v1799
        %v1924 = vunpack.c.l.b16 %v1800
        %v1925 = vunpack.c.l.b16 %v1801
        %v1926 = vunpack.c.l.b16 %v1802
        %v1927 = vunpack.c.l.b16 %v1803
        %v1928 = vunpack.c.l.b16 %v1804
        %v1929 = vunpack.c.l.b16 %v1805
        %v1930 = vunpack.c.l.b16 %v1806
        %v1931 = vunpack.c.l.b16 %v1807
        %v1932 = vunpack.c.l.b16 %v1808
        %v1933 = vunpack.c.l.b16 %v1809
        %v1934 = vunpack.c.l.b16 %v1810
        %v1935 = vunpack.c.l.b16 %v1811
        %v1936 = vunpack.c.l.b16 %v1812
        %v1937 = vunpack.c.l.b16 %v1813
        %v1938 = vunpack.c.l.b16 %v1814
        %v1939 = vunpack.c.l.b16 %v1815
        %v1940 = vunpack.c.l.b16 %v1816
        %v1941 = vunpack.c.l.b16 %v1817
        %v1942 = vunpack.c.l.b16 %v1818
        %v1943 = vunpack.c.l.b16 %v1819
        %v1944 = vunpack.c.l.b16 %v1820
        %v1945 = vunpack.c.l.b16 %v1821
        %v1946 = vunpack.c.l.b16 %v1822
        %v1947 = vunpack.c.l.b16 %v1823
        %v1948 = vunpack.c.l.b16 %v1824
        %v1949 = vunpack.c.l.b16 %v1825
        %v1950 = vunpack.c.l.b16 %v1826
        %v1951 = vunpack.c.l.b16 %v1827
        %v1952 = vunpack.c.l.b16 %v1828
        %v1953 = vunpack.c.l.b16 %v1829
        %v1954 = vunpack.c.l.b16 %v1830
        %v1955 = vunpack.c.l.b16 %v1831
        %v1956 = vunpack.c.l.b16 %v1832
        %v1957 = vunpack.c.l.b16 %v1833
        %v1958 = vunpack.c.l.b16 %v1834
        %v1959 = vunpack.c.l.b16 %v1835
        %v1960 = vunpack.c.l.b16 %v1836
        %v1961 = vunpack.c.l.b16 %v1837
        %v1962 = vunpack.c.l.b16 %v1838
        %v1963 = vunpack.c.l.b16 %v1839
        %v1964 = vunpack.c.l.b16 %v1840
        %v1965 = vunpack.c.l.b16 %v1841
        %v1966 = vunpack.c.l.b16 %v1842
        %v1967 = vunpack.c.l.b16 %v1843
        %v1968 = vunpack.c.l.b16 %v1844
        %v1969 = vunpack.c.l.b16 %v1845
        %v1970 = vunpack.c.l.b16 %v1846
        %v1971 = vpack.c.b16 %v1912, %v1911
        %v1972 = vpack.c.b16 %v1914, %v1913
        %v1973 = vpack.c.b16 %v1916, %v1915
        %v1974 = vpack.c.b16 %v1918, %v1917
        %v1975 = vpack.c.b16 %v1920, %v1919
        %v1976 = vpack.c.b16 %v1922, %v1921
        %v1977 = vpack.c.b16 %v1924, %v1923
        %v1978 = vpack.c.b16 %v1926, %v1925
        %v1979 = vpack.c.b16 %v1928, %v1927
        %v1980 = vpack.c.b16 %v1930, %v1929
        %v1981 = vpack.c.b16 %v1932, %v1931
        %v1982 = vpack.c.b16 %v1934, %v1933
        %v1983 = vpack.c.b16 %v1936, %v1935
        %v1984 = vpack.c.b16 %v1938, %v1937
        %v1985 = vpack.c.b16 %v1940, %v1939
        %v1986 = vpack.c.b16 %v1942, %v1941
        %v1987 = vpack.c.b16 %v1944, %v1943
        %v1988 = vpack.c.b16 %v1946, %v1945
        %v1989 = vpack.c.b16 %v1948, %v1947
        %v1990 = vpack.c.b16 %v1950, %v1949
        %v1991 = vpack.c.b16 %v1952, %v1951
        %v1992 = vpack.c.b16 %v1954, %v1953
        %v1993 = vpack.c.b16 %v1956, %v1955
        %v1994 = vpack.c.b16 %v1958, %v1957
        %v1995 = vpack.c.b16 %v1960, %v1959
        %v1996 = vpack.c.b16 %v1962, %v1961
        %v1997 = vpack.c.b16 %v1964, %v1963
        %v1998 = vpack.c.b16 %v1966, %v1965
        %v1999 = vpack.c.b16 %v1968, %v1967
        %v2000 = vpack.c.b16 %v1970, %v1969
        %v2032 = vsel %vm1329, %v1850, 0
        %2034 = vmatpush.bf16.msra.mxu0 %v1978
        %2035 = vmatpush.bf16.msra.mxu0 %v1977
        %2036 = vmatpush.bf16.msra.mxu0 %v1976
        %2037 = vmatpush.bf16.msra.mxu0 %v1975
        %2038 = vmatpush.bf16.msra.mxu0 %v1974
        %2039 = vmatpush.bf16.msra.mxu0 %v1973
        %2040 = vmatpush.bf16.msra.mxu0 %v1972
        %2041 = vmatpush.bf16.msra.mxu0 %v1971
        %2042 = vmatmul.bf16.gmra.mxu0 %v1847
        %v2043 = vpop.f32.mrf.mxu0
        %v2044 = vadd.f32 0.0, %v2043
        %v2045 = vpop.f32.mrf.mxu0
        %2046 = vdwg.mxu0
        %2047 = vmatpush.bf16.msra.mxu0 %v1986
        %2048 = vmatpush.bf16.msra.mxu0 %v1985
        %2049 = vmatpush.bf16.msra.mxu0 %v1984
        %2050 = vmatpush.bf16.msra.mxu0 %v1983
        %2051 = vmatpush.bf16.msra.mxu0 %v1982
        %2052 = vmatpush.bf16.msra.mxu0 %v1981
        %2053 = vmatpush.bf16.msra.mxu0 %v1980
        %2054 = vmatpush.bf16.msra.mxu0 %v1979
        %2055 = vmatmul.bf16.gmra.mxu0 %v1848
        %v2056 = vpop.f32.mrf.mxu0
        %v2057 = vadd.f32 %v2044, %v2056
        %v2058 = vpop.f32.mrf.mxu0
        %2059 = vdwg.mxu0
        %2060 = vmatpush.bf16.msra.mxu0 %v1994
        %2061 = vmatpush.bf16.msra.mxu0 %v1993
        %2062 = vmatpush.bf16.msra.mxu0 %v1992
        %2063 = vmatpush.bf16.msra.mxu0 %v1991
        %2064 = vmatpush.bf16.msra.mxu0 %v1990
        %2065 = vmatpush.bf16.msra.mxu0 %v1989
        %2066 = vmatpush.bf16.msra.mxu0 %v1988
        %2067 = vmatpush.bf16.msra.mxu0 %v1987
        %2068 = vmatmul.bf16.gmra.mxu0 %v1849
        %v2069 = vpop.f32.mrf.mxu0
        %v2070 = vadd.f32 %v2057, %v2069
        %v2071 = vpop.f32.mrf.mxu0
        %2072 = vdwg.mxu0
        %2073 = vmatpush.bf16.msra.mxu0 0
        %2074 = vmatpush.bf16.msra.mxu0 0
        %2075 = vmatpush.bf16.msra.mxu0 %v2000
        %2076 = vmatpush.bf16.msra.mxu0 %v1999
        %2077 = vmatpush.bf16.msra.mxu0 %v1998
        %2078 = vmatpush.bf16.msra.mxu0 %v1997
        %2079 = vmatpush.bf16.msra.mxu0 %v1996
        %2080 = vmatpush.bf16.msra.mxu0 %v1995
        %2081 = vmatmul.bf16.gmra.mxu0 %v2032
        %v2082 = vpop.f32.mrf.mxu0
        %v2083 = vadd.f32 %v2070, %v2082
        %v2084 = vpop.f32.mrf.mxu0
        %2085 = vdwg.mxu0
        %v2146 = vunpack.c.l.b16 %v1341
        %v2147 = vunpack.c.l.b16 %v1342
        %v2148 = vunpack.c.l.b16 %v1343
        %v2149 = vunpack.c.l.b16 %v1344
        %v2150 = vunpack.c.l.b16 %v1345
        %v2151 = vunpack.c.l.b16 %v1346
        %v2152 = vunpack.c.l.b16 %v1347
        %v2153 = vunpack.c.l.b16 %v1348
        %v2154 = vunpack.c.l.b16 %v1349
        %v2155 = vunpack.c.l.b16 %v1350
        %v2156 = vunpack.c.l.b16 %v1351
        %v2157 = vunpack.c.l.b16 %v1352
        %v2158 = vunpack.c.l.b16 %v1353
        %v2159 = vunpack.c.l.b16 %v1354
        %v2160 = vunpack.c.l.b16 %v1355
        %v2161 = vunpack.c.l.b16 %v1356
        %v2162 = vunpack.c.l.b16 %v1357
        %v2163 = vunpack.c.l.b16 %v1358
        %v2164 = vunpack.c.l.b16 %v1359
        %v2165 = vunpack.c.l.b16 %v1360
        %v2166 = vunpack.c.l.b16 %v1361
        %v2167 = vunpack.c.l.b16 %v1362
        %v2168 = vunpack.c.l.b16 %v1363
        %v2169 = vunpack.c.l.b16 %v1364
        %v2170 = vunpack.c.l.b16 %v1365
        %v2171 = vunpack.c.l.b16 %v1366
        %v2172 = vunpack.c.l.b16 %v1367
        %v2173 = vunpack.c.l.b16 %v1368
        %v2174 = vunpack.c.l.b16 %v1369
        %v2175 = vunpack.c.l.b16 %v1370
        %v2176 = vunpack.c.l.b16 %v1371
        %v2177 = vunpack.c.l.b16 %v1372
        %v2178 = vunpack.c.l.b16 %v1373
        %v2179 = vunpack.c.l.b16 %v1374
        %v2180 = vunpack.c.l.b16 %v1375
        %v2181 = vunpack.c.l.b16 %v1376
        %v2182 = vunpack.c.l.b16 %v1377
        %v2183 = vunpack.c.l.b16 %v1378
        %v2184 = vunpack.c.l.b16 %v1379
        %v2185 = vunpack.c.l.b16 %v1380
        %v2186 = vunpack.c.l.b16 %v1381
        %v2187 = vunpack.c.l.b16 %v1382
        %v2188 = vunpack.c.l.b16 %v1383
        %v2189 = vunpack.c.l.b16 %v1384
        %v2190 = vunpack.c.l.b16 %v1385
        %v2191 = vunpack.c.l.b16 %v1386
        %v2192 = vunpack.c.l.b16 %v1387
        %v2193 = vunpack.c.l.b16 %v1388
        %v2194 = vunpack.c.l.b16 %v1389
        %v2195 = vunpack.c.l.b16 %v1390
        %v2196 = vunpack.c.l.b16 %v1391
        %v2197 = vunpack.c.l.b16 %v1392
        %v2198 = vunpack.c.l.b16 %v1393
        %v2199 = vunpack.c.l.b16 %v1394
        %v2200 = vunpack.c.l.b16 %v1395
        %v2201 = vunpack.c.l.b16 %v1396
        %v2202 = vunpack.c.l.b16 %v1397
        %v2203 = vunpack.c.l.b16 %v1398
        %v2204 = vunpack.c.l.b16 %v1399
        %v2205 = vunpack.c.l.b16 %v1400
        %v2206 = vpack.c.b16 %v2147, %v2146
        %v2207 = vpack.c.b16 %v2149, %v2148
        %v2208 = vpack.c.b16 %v2151, %v2150
        %v2209 = vpack.c.b16 %v2153, %v2152
        %v2210 = vpack.c.b16 %v2155, %v2154
        %v2211 = vpack.c.b16 %v2157, %v2156
        %v2212 = vpack.c.b16 %v2159, %v2158
        %v2213 = vpack.c.b16 %v2161, %v2160
        %v2214 = vpack.c.b16 %v2163, %v2162
        %v2215 = vpack.c.b16 %v2165, %v2164
        %v2216 = vpack.c.b16 %v2167, %v2166
        %v2217 = vpack.c.b16 %v2169, %v2168
        %v2218 = vpack.c.b16 %v2171, %v2170
        %v2219 = vpack.c.b16 %v2173, %v2172
        %v2220 = vpack.c.b16 %v2175, %v2174
        %v2221 = vpack.c.b16 %v2177, %v2176
        %v2222 = vpack.c.b16 %v2179, %v2178
        %v2223 = vpack.c.b16 %v2181, %v2180
        %v2224 = vpack.c.b16 %v2183, %v2182
        %v2225 = vpack.c.b16 %v2185, %v2184
        %v2226 = vpack.c.b16 %v2187, %v2186
        %v2227 = vpack.c.b16 %v2189, %v2188
        %v2228 = vpack.c.b16 %v2191, %v2190
        %v2229 = vpack.c.b16 %v2193, %v2192
        %v2230 = vpack.c.b16 %v2195, %v2194
        %v2231 = vpack.c.b16 %v2197, %v2196
        %v2232 = vpack.c.b16 %v2199, %v2198
        %v2233 = vpack.c.b16 %v2201, %v2200
        %v2234 = vpack.c.b16 %v2203, %v2202
        %v2235 = vpack.c.b16 %v2205, %v2204
        %v2267 = vsel %vm1329, %v1404, 0
        %2269 = vmatpush.bf16.msra.mxu0 %v2213
        %2270 = vmatpush.bf16.msra.mxu0 %v2212
        %2271 = vmatpush.bf16.msra.mxu0 %v2211
        %2272 = vmatpush.bf16.msra.mxu0 %v2210
        %2273 = vmatpush.bf16.msra.mxu0 %v2209
        %2274 = vmatpush.bf16.msra.mxu0 %v2208
        %2275 = vmatpush.bf16.msra.mxu0 %v2207
        %2276 = vmatpush.bf16.msra.mxu0 %v2206
        %2277 = vmatmul.bf16.gmra.mxu0 %v1401
        %v2278 = vpop.f32.mrf.mxu0
        %v2279 = vadd.f32 %v2083, %v2278
        %v2280 = vpop.f32.mrf.mxu0
        %2281 = vdwg.mxu0
        %2282 = vmatpush.bf16.msra.mxu0 %v2221
        %2283 = vmatpush.bf16.msra.mxu0 %v2220
        %2284 = vmatpush.bf16.msra.mxu0 %v2219
        %2285 = vmatpush.bf16.msra.mxu0 %v2218
        %2286 = vmatpush.bf16.msra.mxu0 %v2217
        %2287 = vmatpush.bf16.msra.mxu0 %v2216
        %2288 = vmatpush.bf16.msra.mxu0 %v2215
        %2289 = vmatpush.bf16.msra.mxu0 %v2214
        %2290 = vmatmul.bf16.gmra.mxu0 %v1402
        %v2291 = vpop.f32.mrf.mxu0
        %v2292 = vadd.f32 %v2279, %v2291
        %v2293 = vpop.f32.mrf.mxu0
        %2294 = vdwg.mxu0
        %2295 = vmatpush.bf16.msra.mxu0 %v2229
        %2296 = vmatpush.bf16.msra.mxu0 %v2228
        %2297 = vmatpush.bf16.msra.mxu0 %v2227
        %2298 = vmatpush.bf16.msra.mxu0 %v2226
        %2299 = vmatpush.bf16.msra.mxu0 %v2225
        %2300 = vmatpush.bf16.msra.mxu0 %v2224
        %2301 = vmatpush.bf16.msra.mxu0 %v2223
        %2302 = vmatpush.bf16.msra.mxu0 %v2222
        %2303 = vmatmul.bf16.gmra.mxu0 %v1403
        %v2304 = vpop.f32.mrf.mxu0
        %v2305 = vadd.f32 %v2292, %v2304
        %v2306 = vpop.f32.mrf.mxu0
        %2307 = vdwg.mxu0
        %2308 = vmatpush.bf16.msra.mxu0 0
        %2309 = vmatpush.bf16.msra.mxu0 0
        %2310 = vmatpush.bf16.msra.mxu0 %v2235
        %2311 = vmatpush.bf16.msra.mxu0 %v2234
        %2312 = vmatpush.bf16.msra.mxu0 %v2233
        %2313 = vmatpush.bf16.msra.mxu0 %v2232
        %2314 = vmatpush.bf16.msra.mxu0 %v2231
        %2315 = vmatpush.bf16.msra.mxu0 %v2230
        %2316 = vmatmul.bf16.gmra.mxu0 %v2267
        %v2317 = vpop.f32.mrf.mxu0
        %v2318 = vadd.f32 %v2305, %v2317
        %v2319 = vpop.f32.mrf.mxu0
        %2320 = vdwg.mxu0
        %2321 = vrot.lane.b32.xlu0 %v389, 16
        %v2322 = vpop.permute.xlu0 %2321
        %2323 = vrot.lane.b32.xlu0 %v390, 16
        %v2324 = vpop.permute.xlu0 %2323
        %vm2325 = vcmask 130048
        %v2326 = vsel %vm2325, %v2322, %v2324
        %v2329 = vsel %vm919, %v2324, 0
        %2331 = vmatpush.bf16.msra.mxu0 %v799
        %2332 = vmatpush.bf16.msra.mxu0 %v787
        %2333 = vmatpush.bf16.msra.mxu0 %v775
        %2334 = vmatpush.bf16.msra.mxu0 %v763
        %2335 = vmatpush.bf16.msra.mxu0 %v751
        %2336 = vmatpush.bf16.msra.mxu0 %v739
        %2337 = vmatpush.bf16.msra.mxu0 %v727
        %2338 = vmatpush.bf16.msra.mxu0 %v715
        %2339 = vmatmul.bf16.gmra.mxu0 %v2326
        %v2340 = vpop.f32.mrf.mxu0
        %v2341 = vadd.f32 0.0, %v2340
        %v2342 = vpop.f32.mrf.mxu0
        %2343 = vdwg.mxu0
        %2344 = vmatpush.bf16.msra.mxu0 0
        %2345 = vmatpush.bf16.msra.mxu0 0
        %2346 = vmatpush.bf16.msra.mxu0 0
        %2347 = vmatpush.bf16.msra.mxu0 0
        %2348 = vmatpush.bf16.msra.mxu0 0
        %2349 = vmatpush.bf16.msra.mxu0 0
        %2350 = vmatpush.bf16.msra.mxu0 0
        %2351 = vmatpush.bf16.msra.mxu0 %v925
        %2352 = vmatmul.bf16.gmra.mxu0 %v2329
        %v2353 = vpop.f32.mrf.mxu0
        %v2354 = vadd.f32 %v2341, %v2353
        %v2355 = vpop.f32.mrf.mxu0
        %2356 = vdwg.mxu0
        %2357 = vmatpush.bf16.msra.mxu0 %v800
        %2358 = vmatpush.bf16.msra.mxu0 %v788
        %2359 = vmatpush.bf16.msra.mxu0 %v776
        %2360 = vmatpush.bf16.msra.mxu0 %v764
        %2361 = vmatpush.bf16.msra.mxu0 %v752
        %2362 = vmatpush.bf16.msra.mxu0 %v740
        %2363 = vmatpush.bf16.msra.mxu0 %v728
        %2364 = vmatpush.bf16.msra.mxu0 %v716
        %2365 = vmatmul.bf16.gmra.mxu0 %v2326
        %v2366 = vpop.f32.mrf.mxu0
        %v2367 = vadd.f32 0.0, %v2366
        %v2368 = vpop.f32.mrf.mxu0
        %2369 = vdwg.mxu0
        %2370 = vmatpush.bf16.msra.mxu0 0
        %2371 = vmatpush.bf16.msra.mxu0 0
        %2372 = vmatpush.bf16.msra.mxu0 0
        %2373 = vmatpush.bf16.msra.mxu0 0
        %2374 = vmatpush.bf16.msra.mxu0 0
        %2375 = vmatpush.bf16.msra.mxu0 0
        %2376 = vmatpush.bf16.msra.mxu0 0
        %2377 = vmatpush.bf16.msra.mxu0 %v928
        %2378 = vmatmul.bf16.gmra.mxu0 %v2329
        %v2379 = vpop.f32.mrf.mxu0
        %v2380 = vadd.f32 %v2367, %v2379
        %v2381 = vpop.f32.mrf.mxu0
        %2382 = vdwg.mxu0
        %2383 = vmatpush.bf16.msra.mxu0 %v801
        %2384 = vmatpush.bf16.msra.mxu0 %v789
        %2385 = vmatpush.bf16.msra.mxu0 %v777
        %2386 = vmatpush.bf16.msra.mxu0 %v765
        %2387 = vmatpush.bf16.msra.mxu0 %v753
        %2388 = vmatpush.bf16.msra.mxu0 %v741
        %2389 = vmatpush.bf16.msra.mxu0 %v729
        %2390 = vmatpush.bf16.msra.mxu0 %v717
        %2391 = vmatmul.bf16.gmra.mxu0 %v2326
        %v2392 = vpop.f32.mrf.mxu0
        %v2393 = vadd.f32 0.0, %v2392
        %v2394 = vpop.f32.mrf.mxu0
        %2395 = vdwg.mxu0
        %2396 = vmatpush.bf16.msra.mxu0 0
        %2397 = vmatpush.bf16.msra.mxu0 0
        %2398 = vmatpush.bf16.msra.mxu0 0
        %2399 = vmatpush.bf16.msra.mxu0 0
        %2400 = vmatpush.bf16.msra.mxu0 0
        %2401 = vmatpush.bf16.msra.mxu0 0
        %2402 = vmatpush.bf16.msra.mxu0 0
        %2403 = vmatpush.bf16.msra.mxu0 %v931
        %2404 = vmatmul.bf16.gmra.mxu0 %v2329
        %v2405 = vpop.f32.mrf.mxu0
        %v2406 = vadd.f32 %v2393, %v2405
        %v2407 = vpop.f32.mrf.mxu0
        %2408 = vdwg.mxu0
        %2409 = vmatpush.bf16.msra.mxu0 %v802
        %2410 = vmatpush.bf16.msra.mxu0 %v790
        %2411 = vmatpush.bf16.msra.mxu0 %v778
        %2412 = vmatpush.bf16.msra.mxu0 %v766
        %2413 = vmatpush.bf16.msra.mxu0 %v754
        %2414 = vmatpush.bf16.msra.mxu0 %v742
        %2415 = vmatpush.bf16.msra.mxu0 %v730
        %2416 = vmatpush.bf16.msra.mxu0 %v718
        %2417 = vmatmul.bf16.gmra.mxu0 %v2326
        %v2418 = vpop.f32.mrf.mxu0
        %v2419 = vadd.f32 0.0, %v2418
        %v2420 = vpop.f32.mrf.mxu0
        %2421 = vdwg.mxu0
        %2422 = vmatpush.bf16.msra.mxu0 0
        %2423 = vmatpush.bf16.msra.mxu0 0
        %2424 = vmatpush.bf16.msra.mxu0 0
        %2425 = vmatpush.bf16.msra.mxu0 0
        %2426 = vmatpush.bf16.msra.mxu0 0
        %2427 = vmatpush.bf16.msra.mxu0 0
        %2428 = vmatpush.bf16.msra.mxu0 0
        %2429 = vmatpush.bf16.msra.mxu0 %v934
        %2430 = vmatmul.bf16.gmra.mxu0 %v2329
        %v2431 = vpop.f32.mrf.mxu0
        %v2432 = vadd.f32 %v2419, %v2431
        %v2433 = vpop.f32.mrf.mxu0
        %2434 = vdwg.mxu0
        %2435 = vmatpush.bf16.msra.mxu0 %v803
        %2436 = vmatpush.bf16.msra.mxu0 %v791
        %2437 = vmatpush.bf16.msra.mxu0 %v779
        %2438 = vmatpush.bf16.msra.mxu0 %v767
        %2439 = vmatpush.bf16.msra.mxu0 %v755
        %2440 = vmatpush.bf16.msra.mxu0 %v743
        %2441 = vmatpush.bf16.msra.mxu0 %v731
        %2442 = vmatpush.bf16.msra.mxu0 %v719
        %2443 = vmatmul.bf16.gmra.mxu0 %v2326
        %v2444 = vpop.f32.mrf.mxu0
        %v2445 = vadd.f32 0.0, %v2444
        %v2446 = vpop.f32.mrf.mxu0
        %2447 = vdwg.mxu0
        %2448 = vmatpush.bf16.msra.mxu0 0
        %2449 = vmatpush.bf16.msra.mxu0 0
        %2450 = vmatpush.bf16.msra.mxu0 0
        %2451 = vmatpush.bf16.msra.mxu0 0
        %2452 = vmatpush.bf16.msra.mxu0 0
        %2453 = vmatpush.bf16.msra.mxu0 0
        %2454 = vmatpush.bf16.msra.mxu0 0
        %2455 = vmatpush.bf16.msra.mxu0 %v937
        %2456 = vmatmul.bf16.gmra.mxu0 %v2329
        %v2457 = vpop.f32.mrf.mxu0
        %v2458 = vadd.f32 %v2445, %v2457
        %v2459 = vpop.f32.mrf.mxu0
        %2460 = vdwg.mxu0
        %2461 = vmatpush.bf16.msra.mxu0 %v804
        %2462 = vmatpush.bf16.msra.mxu0 %v792
        %2463 = vmatpush.bf16.msra.mxu0 %v780
        %2464 = vmatpush.bf16.msra.mxu0 %v768
        %2465 = vmatpush.bf16.msra.mxu0 %v756
        %2466 = vmatpush.bf16.msra.mxu0 %v744
        %2467 = vmatpush.bf16.msra.mxu0 %v732
        %2468 = vmatpush.bf16.msra.mxu0 %v720
        %2469 = vmatmul.bf16.gmra.mxu0 %v2326
        %v2470 = vpop.f32.mrf.mxu0
        %v2471 = vadd.f32 0.0, %v2470
        %v2472 = vpop.f32.mrf.mxu0
        %2473 = vdwg.mxu0
        %2474 = vmatpush.bf16.msra.mxu0 0
        %2475 = vmatpush.bf16.msra.mxu0 0
        %2476 = vmatpush.bf16.msra.mxu0 0
        %2477 = vmatpush.bf16.msra.mxu0 0
        %2478 = vmatpush.bf16.msra.mxu0 0
        %2479 = vmatpush.bf16.msra.mxu0 0
        %2480 = vmatpush.bf16.msra.mxu0 0
        %2481 = vmatpush.bf16.msra.mxu0 %v940
        %2482 = vmatmul.bf16.gmra.mxu0 %v2329
        %v2483 = vpop.f32.mrf.mxu0
        %v2484 = vadd.f32 %v2471, %v2483
        %v2485 = vpop.f32.mrf.mxu0
        %2486 = vdwg.mxu0
        %2487 = vmatpush.bf16.msra.mxu0 %v805
        %2488 = vmatpush.bf16.msra.mxu0 %v793
        %2489 = vmatpush.bf16.msra.mxu0 %v781
        %2490 = vmatpush.bf16.msra.mxu0 %v769
        %2491 = vmatpush.bf16.msra.mxu0 %v757
        %2492 = vmatpush.bf16.msra.mxu0 %v745
        %2493 = vmatpush.bf16.msra.mxu0 %v733
        %2494 = vmatpush.bf16.msra.mxu0 %v721
        %2495 = vmatmul.bf16.gmra.mxu0 %v2326
        %v2496 = vpop.f32.mrf.mxu0
        %v2497 = vadd.f32 0.0, %v2496
        %v2498 = vpop.f32.mrf.mxu0
        %2499 = vdwg.mxu0
        %2500 = vmatpush.bf16.msra.mxu0 0
        %2501 = vmatpush.bf16.msra.mxu0 0
        %2502 = vmatpush.bf16.msra.mxu0 0
        %2503 = vmatpush.bf16.msra.mxu0 0
        %2504 = vmatpush.bf16.msra.mxu0 0
        %2505 = vmatpush.bf16.msra.mxu0 0
        %2506 = vmatpush.bf16.msra.mxu0 0
        %2507 = vmatpush.bf16.msra.mxu0 %v943
        %2508 = vmatmul.bf16.gmra.mxu0 %v2329
        %v2509 = vpop.f32.mrf.mxu0
        %v2510 = vadd.f32 %v2497, %v2509
        %v2511 = vpop.f32.mrf.mxu0
        %2512 = vdwg.mxu0
        %2513 = vmatpush.bf16.msra.mxu0 %v806
        %2514 = vmatpush.bf16.msra.mxu0 %v794
        %2515 = vmatpush.bf16.msra.mxu0 %v782
        %2516 = vmatpush.bf16.msra.mxu0 %v770
        %2517 = vmatpush.bf16.msra.mxu0 %v758
        %2518 = vmatpush.bf16.msra.mxu0 %v746
        %2519 = vmatpush.bf16.msra.mxu0 %v734
        %2520 = vmatpush.bf16.msra.mxu0 %v722
        %2521 = vmatmul.bf16.gmra.mxu0 %v2326
        %v2522 = vpop.f32.mrf.mxu0
        %v2523 = vadd.f32 0.0, %v2522
        %v2524 = vpop.f32.mrf.mxu0
        %2525 = vdwg.mxu0
        %2526 = vmatpush.bf16.msra.mxu0 0
        %2527 = vmatpush.bf16.msra.mxu0 0
        %2528 = vmatpush.bf16.msra.mxu0 0
        %2529 = vmatpush.bf16.msra.mxu0 0
        %2530 = vmatpush.bf16.msra.mxu0 0
        %2531 = vmatpush.bf16.msra.mxu0 0
        %2532 = vmatpush.bf16.msra.mxu0 0
        %2533 = vmatpush.bf16.msra.mxu0 %v946
        %2534 = vmatmul.bf16.gmra.mxu0 %v2329
        %v2535 = vpop.f32.mrf.mxu0
        %v2536 = vadd.f32 %v2523, %v2535
        %v2537 = vpop.f32.mrf.mxu0
        %2538 = vdwg.mxu0
        %2539 = vmatpush.bf16.msra.mxu0 %v807
        %2540 = vmatpush.bf16.msra.mxu0 %v795
        %2541 = vmatpush.bf16.msra.mxu0 %v783
        %2542 = vmatpush.bf16.msra.mxu0 %v771
        %2543 = vmatpush.bf16.msra.mxu0 %v759
        %2544 = vmatpush.bf16.msra.mxu0 %v747
        %2545 = vmatpush.bf16.msra.mxu0 %v735
        %2546 = vmatpush.bf16.msra.mxu0 %v723
        %2547 = vmatmul.bf16.gmra.mxu0 %v2326
        %v2548 = vpop.f32.mrf.mxu0
        %v2549 = vadd.f32 0.0, %v2548
        %v2550 = vpop.f32.mrf.mxu0
        %2551 = vdwg.mxu0
        %2552 = vmatpush.bf16.msra.mxu0 0
        %2553 = vmatpush.bf16.msra.mxu0 0
        %2554 = vmatpush.bf16.msra.mxu0 0
        %2555 = vmatpush.bf16.msra.mxu0 0
        %2556 = vmatpush.bf16.msra.mxu0 0
        %2557 = vmatpush.bf16.msra.mxu0 0
        %2558 = vmatpush.bf16.msra.mxu0 0
        %2559 = vmatpush.bf16.msra.mxu0 %v949
        %2560 = vmatmul.bf16.gmra.mxu0 %v2329
        %v2561 = vpop.f32.mrf.mxu0
        %v2562 = vadd.f32 %v2549, %v2561
        %v2563 = vpop.f32.mrf.mxu0
        %2564 = vdwg.mxu0
        %2565 = vmatpush.bf16.msra.mxu0 %v808
        %2566 = vmatpush.bf16.msra.mxu0 %v796
        %2567 = vmatpush.bf16.msra.mxu0 %v784
        %2568 = vmatpush.bf16.msra.mxu0 %v772
        %2569 = vmatpush.bf16.msra.mxu0 %v760
        %2570 = vmatpush.bf16.msra.mxu0 %v748
        %2571 = vmatpush.bf16.msra.mxu0 %v736
        %2572 = vmatpush.bf16.msra.mxu0 %v724
        %2573 = vmatmul.bf16.gmra.mxu0 %v2326
        %v2574 = vpop.f32.mrf.mxu0
        %v2575 = vadd.f32 0.0, %v2574
        %v2576 = vpop.f32.mrf.mxu0
        %2577 = vdwg.mxu0
        %2578 = vmatpush.bf16.msra.mxu0 0
        %2579 = vmatpush.bf16.msra.mxu0 0
        %2580 = vmatpush.bf16.msra.mxu0 0
        %2581 = vmatpush.bf16.msra.mxu0 0
        %2582 = vmatpush.bf16.msra.mxu0 0
        %2583 = vmatpush.bf16.msra.mxu0 0
        %2584 = vmatpush.bf16.msra.mxu0 0
        %2585 = vmatpush.bf16.msra.mxu0 %v952
        %2586 = vmatmul.bf16.gmra.mxu0 %v2329
        %v2587 = vpop.f32.mrf.mxu0
        %v2588 = vadd.f32 %v2575, %v2587
        %v2589 = vpop.f32.mrf.mxu0
        %2590 = vdwg.mxu0
        %2591 = vmatpush.bf16.msra.mxu0 %v809
        %2592 = vmatpush.bf16.msra.mxu0 %v797
        %2593 = vmatpush.bf16.msra.mxu0 %v785
        %2594 = vmatpush.bf16.msra.mxu0 %v773
        %2595 = vmatpush.bf16.msra.mxu0 %v761
        %2596 = vmatpush.bf16.msra.mxu0 %v749
        %2597 = vmatpush.bf16.msra.mxu0 %v737
        %2598 = vmatpush.bf16.msra.mxu0 %v725
        %2599 = vmatmul.bf16.gmra.mxu0 %v2326
        %v2600 = vpop.f32.mrf.mxu0
        %v2601 = vadd.f32 0.0, %v2600
        %v2602 = vpop.f32.mrf.mxu0
        %2603 = vdwg.mxu0
        %2604 = vmatpush.bf16.msra.mxu0 0
        %2605 = vmatpush.bf16.msra.mxu0 0
        %2606 = vmatpush.bf16.msra.mxu0 0
        %2607 = vmatpush.bf16.msra.mxu0 0
        %2608 = vmatpush.bf16.msra.mxu0 0
        %2609 = vmatpush.bf16.msra.mxu0 0
        %2610 = vmatpush.bf16.msra.mxu0 0
        %2611 = vmatpush.bf16.msra.mxu0 %v955
        %2612 = vmatmul.bf16.gmra.mxu0 %v2329
        %v2613 = vpop.f32.mrf.mxu0
        %v2614 = vadd.f32 %v2601, %v2613
        %v2615 = vpop.f32.mrf.mxu0
        %2616 = vdwg.mxu0
        %2617 = vmatpush.bf16.msra.mxu0 %v810
        %2618 = vmatpush.bf16.msra.mxu0 %v798
        %2619 = vmatpush.bf16.msra.mxu0 %v786
        %2620 = vmatpush.bf16.msra.mxu0 %v774
        %2621 = vmatpush.bf16.msra.mxu0 %v762
        %2622 = vmatpush.bf16.msra.mxu0 %v750
        %2623 = vmatpush.bf16.msra.mxu0 %v738
        %2624 = vmatpush.bf16.msra.mxu0 %v726
        %2625 = vmatmul.bf16.gmra.mxu0 %v2326
        %v2626 = vpop.f32.mrf.mxu0
        %v2627 = vadd.f32 0.0, %v2626
        %v2628 = vpop.f32.mrf.mxu0
        %2629 = vdwg.mxu0
        %2630 = vmatpush.bf16.msra.mxu0 0
        %2631 = vmatpush.bf16.msra.mxu0 0
        %2632 = vmatpush.bf16.msra.mxu0 0
        %2633 = vmatpush.bf16.msra.mxu0 0
        %2634 = vmatpush.bf16.msra.mxu0 0
        %2635 = vmatpush.bf16.msra.mxu0 0
        %2636 = vmatpush.bf16.msra.mxu0 0
        %2637 = vmatpush.bf16.msra.mxu0 %v958
        %2638 = vmatmul.bf16.gmra.mxu0 %v2329
        %v2639 = vpop.f32.mrf.mxu0
        %v2640 = vadd.f32 %v2627, %v2639
        %v2641 = vpop.f32.mrf.mxu0
        %2642 = vdwg.mxu0
        %v2643 = vmax.f32 %v2354, %v2458
        %v2644 = vmax.f32 %v2380, %v2484
        %v2645 = vmax.f32 %v2406, %v2510
        %v2646 = vmax.f32 %v2432, %v2536
        %v2647 = vmax.f32 %v2643, %v2562
        %v2648 = vmax.f32 %v2644, %v2588
        %v2649 = vmax.f32 %v2645, %v2614
        %v2650 = vmax.f32 %v2646, %v2640
        %v2651 = vadd.f32 %v2647, %v1281
        %v2652 = vadd.f32 %v2648, %v1282
        %v2653 = vadd.f32 %v2649, %v1283
        %v2654 = vadd.f32 %v2650, %v1284
        %v2655 = vmax.f32 %v2651, 0.0
        %v2656 = vmax.f32 %v2652, 0.0
        %v2657 = vmax.f32 %v2653, 0.0
        %v2658 = vmax.f32 %v2654, 0.0
        %2663 = vrot.lane.b32.xlu0 %v2655, 112
        %v2664 = vpop.permute.xlu0 %2663
        %2665 = vrot.lane.b32.xlu0 %v2656, 112
        %v2666 = vpop.permute.xlu0 %2665
        %2667 = vrot.lane.b32.xlu0 %v2657, 112
        %v2668 = vpop.permute.xlu0 %2667
        %2669 = vrot.lane.b32.xlu0 %v2658, 112
        %v2670 = vpop.permute.xlu0 %2669
        %v2671 = vsel %vm1309, %v2664, %v2666
        %v2672 = vsel %vm1309, %v2666, %v2668
        %v2673 = vsel %vm1309, %v2668, %v2670
        %v2678 = vmax.f32 %v2655, %v2671
        %v2679 = vmax.f32 %v2656, %v2672
        %v2680 = vmax.f32 %v2657, %v2673
        %v2681 = vmax.f32 %v2658, %v2670
        %2682 = vrot.lane.b32.xlu0 %v2655, 96
        %v2683 = vpop.permute.xlu0 %2682
        %2684 = vrot.lane.b32.xlu0 %v2656, 96
        %v2685 = vpop.permute.xlu0 %2684
        %2686 = vrot.lane.b32.xlu0 %v2657, 96
        %v2687 = vpop.permute.xlu0 %2686
        %2688 = vrot.lane.b32.xlu0 %v2658, 96
        %v2689 = vpop.permute.xlu0 %2688
        %v2690 = vsel %vm1329, %v2683, %v2685
        %v2691 = vsel %vm1329, %v2685, %v2687
        %v2692 = vsel %vm1329, %v2687, %v2689
        %v2697 = vmax.f32 %v2678, %v2690
        %v2698 = vmax.f32 %v2679, %v2691
        %v2699 = vmax.f32 %v2680, %v2692
        %v2700 = vmax.f32 %v2681, %v2689
        %v2701 = vld [vmem:[%s3 + $0x1e0] sm:$0xf]
        %v2702 = vld [vmem:[%s3 + $0x1e4] sm:$0xf]
        %v2703 = vld [vmem:[%s3 + $0x1e8] sm:$0xf]
        %v2704 = vld [vmem:[%s3 + $0x1ec] sm:$0xf]
        %v2705 = vld [vmem:[%s3 + $0x1f0] sm:$0xf]
        %v2706 = vld [vmem:[%s3 + $0x1f4] sm:$0xf]
        %v2707 = vld [vmem:[%s3 + $0x1f8] sm:$0xf]
        %v2708 = vld [vmem:[%s3 + $0x1fc] sm:$0xf]
        %v2709 = vld [vmem:[%s3 + $0x200] sm:$0xf]
        %v2710 = vld [vmem:[%s3 + $0x204] sm:$0xf]
        %v2711 = vld [vmem:[%s3 + $0x208] sm:$0xf]
        %v2712 = vld [vmem:[%s3 + $0x20c] sm:$0xf]
        %v2713 = vld [vmem:[%s3 + $0x210] sm:$0xf]
        %v2714 = vld [vmem:[%s3 + $0x214] sm:$0xf]
        %v2715 = vld [vmem:[%s3 + $0x218] sm:$0xf]
        %v2716 = vld [vmem:[%s3 + $0x21c] sm:$0xf]
        %v2717 = vld [vmem:[%s3 + $0x220] sm:$0xf]
        %v2718 = vld [vmem:[%s3 + $0x224] sm:$0xf]
        %v2719 = vld [vmem:[%s3 + $0x228] sm:$0xf]
        %v2720 = vld [vmem:[%s3 + $0x22c] sm:$0xf]
        %v2721 = vld [vmem:[%s3 + $0x230] sm:$0xf]
        %v2722 = vld [vmem:[%s3 + $0x234] sm:$0xf]
        %v2723 = vld [vmem:[%s3 + $0x238] sm:$0xf]
        %v2724 = vld [vmem:[%s3 + $0x23c] sm:$0xf]
        %v2725 = vld [vmem:[%s3 + $0x240] sm:$0xf]
        %v2726 = vld [vmem:[%s3 + $0x244] sm:$0xf]
        %v2727 = vld [vmem:[%s3 + $0x248] sm:$0xf]
        %v2728 = vld [vmem:[%s3 + $0x24c] sm:$0xf]
        %v2729 = vld [vmem:[%s3 + $0x250] sm:$0xf]
        %v2730 = vld [vmem:[%s3 + $0x254] sm:$0xf]
        %v2731 = vld [vmem:[%s3 + $0x258] sm:$0xf]
        %v2732 = vld [vmem:[%s3 + $0x25c] sm:$0xf]
        %v2733 = vld [vmem:[%s3 + $0x260] sm:$0xf]
        %v2734 = vld [vmem:[%s3 + $0x264] sm:$0xf]
        %v2735 = vld [vmem:[%s3 + $0x268] sm:$0xf]
        %v2736 = vld [vmem:[%s3 + $0x26c] sm:$0xf]
        %v2737 = vld [vmem:[%s3 + $0x270] sm:$0xf]
        %v2738 = vld [vmem:[%s3 + $0x274] sm:$0xf]
        %v2739 = vld [vmem:[%s3 + $0x278] sm:$0xf]
        %v2740 = vld [vmem:[%s3 + $0x27c] sm:$0xf]
        %v2741 = vld [vmem:[%s3 + $0x280] sm:$0xf]
        %v2742 = vld [vmem:[%s3 + $0x284] sm:$0xf]
        %v2743 = vld [vmem:[%s3 + $0x288] sm:$0xf]
        %v2744 = vld [vmem:[%s3 + $0x28c] sm:$0xf]
        %v2745 = vld [vmem:[%s3 + $0x290] sm:$0xf]
        %v2746 = vld [vmem:[%s3 + $0x294] sm:$0xf]
        %v2747 = vld [vmem:[%s3 + $0x298] sm:$0xf]
        %v2748 = vld [vmem:[%s3 + $0x29c] sm:$0xf]
        %v2749 = vld [vmem:[%s3 + $0x2a0] sm:$0xf]
        %v2750 = vld [vmem:[%s3 + $0x2a4] sm:$0xf]
        %v2751 = vld [vmem:[%s3 + $0x2a8] sm:$0xf]
        %v2752 = vld [vmem:[%s3 + $0x2ac] sm:$0xf]
        %v2753 = vld [vmem:[%s3 + $0x2b0] sm:$0xf]
        %v2754 = vld [vmem:[%s3 + $0x2b4] sm:$0xf]
        %v2755 = vld [vmem:[%s3 + $0x2b8] sm:$0xf]
        %v2756 = vld [vmem:[%s3 + $0x2bc] sm:$0xf]
        %v2757 = vld [vmem:[%s3 + $0x2c0] sm:$0xf]
        %v2758 = vld [vmem:[%s3 + $0x2c4] sm:$0xf]
        %v2759 = vld [vmem:[%s3 + $0x2c8] sm:$0xf]
        %v2760 = vld [vmem:[%s3 + $0x2cc] sm:$0xf]
        %v2761 = vpack.c.bf16 %v2697, %v2697
        %v2762 = vpack.c.bf16 %v2698, %v2698
        %v2763 = vpack.c.bf16 %v2699, %v2699
        %v2764 = vpack.c.bf16 %v2700, %v2700
        %v2825 = vunpack.c.l.b16 %v2701
        %v2826 = vunpack.c.l.b16 %v2702
        %v2827 = vunpack.c.l.b16 %v2703
        %v2828 = vunpack.c.l.b16 %v2704
        %v2829 = vunpack.c.l.b16 %v2705
        %v2830 = vunpack.c.l.b16 %v2706
        %v2831 = vunpack.c.l.b16 %v2707
        %v2832 = vunpack.c.l.b16 %v2708
        %v2833 = vunpack.c.l.b16 %v2709
        %v2834 = vunpack.c.l.b16 %v2710
        %v2835 = vunpack.c.l.b16 %v2711
        %v2836 = vunpack.c.l.b16 %v2712
        %v2837 = vunpack.c.l.b16 %v2713
        %v2838 = vunpack.c.l.b16 %v2714
        %v2839 = vunpack.c.l.b16 %v2715
        %v2840 = vunpack.c.l.b16 %v2716
        %v2841 = vunpack.c.l.b16 %v2717
        %v2842 = vunpack.c.l.b16 %v2718
        %v2843 = vunpack.c.l.b16 %v2719
        %v2844 = vunpack.c.l.b16 %v2720
        %v2845 = vunpack.c.l.b16 %v2721
        %v2846 = vunpack.c.l.b16 %v2722
        %v2847 = vunpack.c.l.b16 %v2723
        %v2848 = vunpack.c.l.b16 %v2724
        %v2849 = vunpack.c.l.b16 %v2725
        %v2850 = vunpack.c.l.b16 %v2726
        %v2851 = vunpack.c.l.b16 %v2727
        %v2852 = vunpack.c.l.b16 %v2728
        %v2853 = vunpack.c.l.b16 %v2729
        %v2854 = vunpack.c.l.b16 %v2730
        %v2855 = vunpack.c.l.b16 %v2731
        %v2856 = vunpack.c.l.b16 %v2732
        %v2857 = vunpack.c.l.b16 %v2733
        %v2858 = vunpack.c.l.b16 %v2734
        %v2859 = vunpack.c.l.b16 %v2735
        %v2860 = vunpack.c.l.b16 %v2736
        %v2861 = vunpack.c.l.b16 %v2737
        %v2862 = vunpack.c.l.b16 %v2738
        %v2863 = vunpack.c.l.b16 %v2739
        %v2864 = vunpack.c.l.b16 %v2740
        %v2865 = vunpack.c.l.b16 %v2741
        %v2866 = vunpack.c.l.b16 %v2742
        %v2867 = vunpack.c.l.b16 %v2743
        %v2868 = vunpack.c.l.b16 %v2744
        %v2869 = vunpack.c.l.b16 %v2745
        %v2870 = vunpack.c.l.b16 %v2746
        %v2871 = vunpack.c.l.b16 %v2747
        %v2872 = vunpack.c.l.b16 %v2748
        %v2873 = vunpack.c.l.b16 %v2749
        %v2874 = vunpack.c.l.b16 %v2750
        %v2875 = vunpack.c.l.b16 %v2751
        %v2876 = vunpack.c.l.b16 %v2752
        %v2877 = vunpack.c.l.b16 %v2753
        %v2878 = vunpack.c.l.b16 %v2754
        %v2879 = vunpack.c.l.b16 %v2755
        %v2880 = vunpack.c.l.b16 %v2756
        %v2881 = vunpack.c.l.b16 %v2757
        %v2882 = vunpack.c.l.b16 %v2758
        %v2883 = vunpack.c.l.b16 %v2759
        %v2884 = vunpack.c.l.b16 %v2760
        %v2885 = vpack.c.b16 %v2826, %v2825
        %v2886 = vpack.c.b16 %v2828, %v2827
        %v2887 = vpack.c.b16 %v2830, %v2829
        %v2888 = vpack.c.b16 %v2832, %v2831
        %v2889 = vpack.c.b16 %v2834, %v2833
        %v2890 = vpack.c.b16 %v2836, %v2835
        %v2891 = vpack.c.b16 %v2838, %v2837
        %v2892 = vpack.c.b16 %v2840, %v2839
        %v2893 = vpack.c.b16 %v2842, %v2841
        %v2894 = vpack.c.b16 %v2844, %v2843
        %v2895 = vpack.c.b16 %v2846, %v2845
        %v2896 = vpack.c.b16 %v2848, %v2847
        %v2897 = vpack.c.b16 %v2850, %v2849
        %v2898 = vpack.c.b16 %v2852, %v2851
        %v2899 = vpack.c.b16 %v2854, %v2853
        %v2900 = vpack.c.b16 %v2856, %v2855
        %v2901 = vpack.c.b16 %v2858, %v2857
        %v2902 = vpack.c.b16 %v2860, %v2859
        %v2903 = vpack.c.b16 %v2862, %v2861
        %v2904 = vpack.c.b16 %v2864, %v2863
        %v2905 = vpack.c.b16 %v2866, %v2865
        %v2906 = vpack.c.b16 %v2868, %v2867
        %v2907 = vpack.c.b16 %v2870, %v2869
        %v2908 = vpack.c.b16 %v2872, %v2871
        %v2909 = vpack.c.b16 %v2874, %v2873
        %v2910 = vpack.c.b16 %v2876, %v2875
        %v2911 = vpack.c.b16 %v2878, %v2877
        %v2912 = vpack.c.b16 %v2880, %v2879
        %v2913 = vpack.c.b16 %v2882, %v2881
        %v2914 = vpack.c.b16 %v2884, %v2883
        %v2946 = vsel %vm1329, %v2764, 0
        %2948 = vmatpush.bf16.msra.mxu0 %v2892
        %2949 = vmatpush.bf16.msra.mxu0 %v2891
        %2950 = vmatpush.bf16.msra.mxu0 %v2890
        %2951 = vmatpush.bf16.msra.mxu0 %v2889
        %2952 = vmatpush.bf16.msra.mxu0 %v2888
        %2953 = vmatpush.bf16.msra.mxu0 %v2887
        %2954 = vmatpush.bf16.msra.mxu0 %v2886
        %2955 = vmatpush.bf16.msra.mxu0 %v2885
        %2956 = vmatmul.bf16.gmra.mxu0 %v2761
        %v2957 = vpop.f32.mrf.mxu0
        %v2958 = vadd.f32 0.0, %v2957
        %v2959 = vpop.f32.mrf.mxu0
        %2960 = vdwg.mxu0
        %2961 = vmatpush.bf16.msra.mxu0 %v2900
        %2962 = vmatpush.bf16.msra.mxu0 %v2899
        %2963 = vmatpush.bf16.msra.mxu0 %v2898
        %2964 = vmatpush.bf16.msra.mxu0 %v2897
        %2965 = vmatpush.bf16.msra.mxu0 %v2896
        %2966 = vmatpush.bf16.msra.mxu0 %v2895
        %2967 = vmatpush.bf16.msra.mxu0 %v2894
        %2968 = vmatpush.bf16.msra.mxu0 %v2893
        %2969 = vmatmul.bf16.gmra.mxu0 %v2762
        %v2970 = vpop.f32.mrf.mxu0
        %v2971 = vadd.f32 %v2958, %v2970
        %v2972 = vpop.f32.mrf.mxu0
        %2973 = vdwg.mxu0
        %2974 = vmatpush.bf16.msra.mxu0 %v2908
        %2975 = vmatpush.bf16.msra.mxu0 %v2907
        %2976 = vmatpush.bf16.msra.mxu0 %v2906
        %2977 = vmatpush.bf16.msra.mxu0 %v2905
        %2978 = vmatpush.bf16.msra.mxu0 %v2904
        %2979 = vmatpush.bf16.msra.mxu0 %v2903
        %2980 = vmatpush.bf16.msra.mxu0 %v2902
        %2981 = vmatpush.bf16.msra.mxu0 %v2901
        %2982 = vmatmul.bf16.gmra.mxu0 %v2763
        %v2983 = vpop.f32.mrf.mxu0
        %v2984 = vadd.f32 %v2971, %v2983
        %v2985 = vpop.f32.mrf.mxu0
        %2986 = vdwg.mxu0
        %2987 = vmatpush.bf16.msra.mxu0 0
        %2988 = vmatpush.bf16.msra.mxu0 0
        %2989 = vmatpush.bf16.msra.mxu0 %v2914
        %2990 = vmatpush.bf16.msra.mxu0 %v2913
        %2991 = vmatpush.bf16.msra.mxu0 %v2912
        %2992 = vmatpush.bf16.msra.mxu0 %v2911
        %2993 = vmatpush.bf16.msra.mxu0 %v2910
        %2994 = vmatpush.bf16.msra.mxu0 %v2909
        %2995 = vmatmul.bf16.gmra.mxu0 %v2946
        %v2996 = vpop.f32.mrf.mxu0
        %v2997 = vadd.f32 %v2984, %v2996
        %v2998 = vpop.f32.mrf.mxu0
        %2999 = vdwg.mxu0
        %v3000 = vadd.f32 %v2318, %v2997
        %v3001 = vld [vmem:[%s276 + $0x8] sm:$0xff]
        %v3002 = vld [vmem:[%s276 + $0x10] sm:$0xff]
        %v3003 = vpack.c.bf16 %v3001, %v3001
        %v3004 = vpack.c.bf16 %v3002, %v3002
        %3007 = vrot.lane.b32.xlu0 %v3003, 88
        %v3008 = vpop.permute.xlu0 %3007
        %3009 = vrot.lane.b32.xlu0 %v3004, 88
        %v3010 = vpop.permute.xlu0 %3009
        %vm3011 = vcmask 719872
        %v3012 = vsel %vm3011, %v3008, %v3010
        %v3015 = vsel %vm919, %v3010, 0
        %3017 = vmatpush.bf16.msra.mxu0 %v799
        %3018 = vmatpush.bf16.msra.mxu0 %v787
        %3019 = vmatpush.bf16.msra.mxu0 %v775
        %3020 = vmatpush.bf16.msra.mxu0 %v763
        %3021 = vmatpush.bf16.msra.mxu0 %v751
        %3022 = vmatpush.bf16.msra.mxu0 %v739
        %3023 = vmatpush.bf16.msra.mxu0 %v727
        %3024 = vmatpush.bf16.msra.mxu0 %v715
        %3025 = vmatmul.bf16.gmra.mxu0 %v3012
        %v3026 = vpop.f32.mrf.mxu0
        %v3027 = vadd.f32 0.0, %v3026
        %v3028 = vpop.f32.mrf.mxu0
        %3029 = vdwg.mxu0
        %3030 = vmatpush.bf16.msra.mxu0 0
        %3031 = vmatpush.bf16.msra.mxu0 0
        %3032 = vmatpush.bf16.msra.mxu0 0
        %3033 = vmatpush.bf16.msra.mxu0 0
        %3034 = vmatpush.bf16.msra.mxu0 0
        %3035 = vmatpush.bf16.msra.mxu0 0
        %3036 = vmatpush.bf16.msra.mxu0 0
        %3037 = vmatpush.bf16.msra.mxu0 %v925
        %3038 = vmatmul.bf16.gmra.mxu0 %v3015
        %v3039 = vpop.f32.mrf.mxu0
        %v3040 = vadd.f32 %v3027, %v3039
        %v3041 = vpop.f32.mrf.mxu0
        %3042 = vdwg.mxu0
        %3043 = vmatpush.bf16.msra.mxu0 %v800
        %3044 = vmatpush.bf16.msra.mxu0 %v788
        %3045 = vmatpush.bf16.msra.mxu0 %v776
        %3046 = vmatpush.bf16.msra.mxu0 %v764
        %3047 = vmatpush.bf16.msra.mxu0 %v752
        %3048 = vmatpush.bf16.msra.mxu0 %v740
        %3049 = vmatpush.bf16.msra.mxu0 %v728
        %3050 = vmatpush.bf16.msra.mxu0 %v716
        %3051 = vmatmul.bf16.gmra.mxu0 %v3012
        %v3052 = vpop.f32.mrf.mxu0
        %v3053 = vadd.f32 0.0, %v3052
        %v3054 = vpop.f32.mrf.mxu0
        %3055 = vdwg.mxu0
        %3056 = vmatpush.bf16.msra.mxu0 0
        %3057 = vmatpush.bf16.msra.mxu0 0
        %3058 = vmatpush.bf16.msra.mxu0 0
        %3059 = vmatpush.bf16.msra.mxu0 0
        %3060 = vmatpush.bf16.msra.mxu0 0
        %3061 = vmatpush.bf16.msra.mxu0 0
        %3062 = vmatpush.bf16.msra.mxu0 0
        %3063 = vmatpush.bf16.msra.mxu0 %v928
        %3064 = vmatmul.bf16.gmra.mxu0 %v3015
        %v3065 = vpop.f32.mrf.mxu0
        %v3066 = vadd.f32 %v3053, %v3065
        %v3067 = vpop.f32.mrf.mxu0
        %3068 = vdwg.mxu0
        %3069 = vmatpush.bf16.msra.mxu0 %v801
        %3070 = vmatpush.bf16.msra.mxu0 %v789
        %3071 = vmatpush.bf16.msra.mxu0 %v777
        %3072 = vmatpush.bf16.msra.mxu0 %v765
        %3073 = vmatpush.bf16.msra.mxu0 %v753
        %3074 = vmatpush.bf16.msra.mxu0 %v741
        %3075 = vmatpush.bf16.msra.mxu0 %v729
        %3076 = vmatpush.bf16.msra.mxu0 %v717
        %3077 = vmatmul.bf16.gmra.mxu0 %v3012
        %v3078 = vpop.f32.mrf.mxu0
        %v3079 = vadd.f32 0.0, %v3078
        %v3080 = vpop.f32.mrf.mxu0
        %3081 = vdwg.mxu0
        %3082 = vmatpush.bf16.msra.mxu0 0
        %3083 = vmatpush.bf16.msra.mxu0 0
        %3084 = vmatpush.bf16.msra.mxu0 0
        %3085 = vmatpush.bf16.msra.mxu0 0
        %3086 = vmatpush.bf16.msra.mxu0 0
        %3087 = vmatpush.bf16.msra.mxu0 0
        %3088 = vmatpush.bf16.msra.mxu0 0
        %3089 = vmatpush.bf16.msra.mxu0 %v931
        %3090 = vmatmul.bf16.gmra.mxu0 %v3015
        %v3091 = vpop.f32.mrf.mxu0
        %v3092 = vadd.f32 %v3079, %v3091
        %v3093 = vpop.f32.mrf.mxu0
        %3094 = vdwg.mxu0
        %3095 = vmatpush.bf16.msra.mxu0 %v802
        %3096 = vmatpush.bf16.msra.mxu0 %v790
        %3097 = vmatpush.bf16.msra.mxu0 %v778
        %3098 = vmatpush.bf16.msra.mxu0 %v766
        %3099 = vmatpush.bf16.msra.mxu0 %v754
        %3100 = vmatpush.bf16.msra.mxu0 %v742
        %3101 = vmatpush.bf16.msra.mxu0 %v730
        %3102 = vmatpush.bf16.msra.mxu0 %v718
        %3103 = vmatmul.bf16.gmra.mxu0 %v3012
        %v3104 = vpop.f32.mrf.mxu0
        %v3105 = vadd.f32 0.0, %v3104
        %v3106 = vpop.f32.mrf.mxu0
        %3107 = vdwg.mxu0
        %3108 = vmatpush.bf16.msra.mxu0 0
        %3109 = vmatpush.bf16.msra.mxu0 0
        %3110 = vmatpush.bf16.msra.mxu0 0
        %3111 = vmatpush.bf16.msra.mxu0 0
        %3112 = vmatpush.bf16.msra.mxu0 0
        %3113 = vmatpush.bf16.msra.mxu0 0
        %3114 = vmatpush.bf16.msra.mxu0 0
        %3115 = vmatpush.bf16.msra.mxu0 %v934
        %3116 = vmatmul.bf16.gmra.mxu0 %v3015
        %v3117 = vpop.f32.mrf.mxu0
        %v3118 = vadd.f32 %v3105, %v3117
        %v3119 = vpop.f32.mrf.mxu0
        %3120 = vdwg.mxu0
        %3121 = vmatpush.bf16.msra.mxu0 %v803
        %3122 = vmatpush.bf16.msra.mxu0 %v791
        %3123 = vmatpush.bf16.msra.mxu0 %v779
        %3124 = vmatpush.bf16.msra.mxu0 %v767
        %3125 = vmatpush.bf16.msra.mxu0 %v755
        %3126 = vmatpush.bf16.msra.mxu0 %v743
        %3127 = vmatpush.bf16.msra.mxu0 %v731
        %3128 = vmatpush.bf16.msra.mxu0 %v719
        %3129 = vmatmul.bf16.gmra.mxu0 %v3012
        %v3130 = vpop.f32.mrf.mxu0
        %v3131 = vadd.f32 0.0, %v3130
        %v3132 = vpop.f32.mrf.mxu0
        %3133 = vdwg.mxu0
        %3134 = vmatpush.bf16.msra.mxu0 0
        %3135 = vmatpush.bf16.msra.mxu0 0
        %3136 = vmatpush.bf16.msra.mxu0 0
        %3137 = vmatpush.bf16.msra.mxu0 0
        %3138 = vmatpush.bf16.msra.mxu0 0
        %3139 = vmatpush.bf16.msra.mxu0 0
        %3140 = vmatpush.bf16.msra.mxu0 0
        %3141 = vmatpush.bf16.msra.mxu0 %v937
        %3142 = vmatmul.bf16.gmra.mxu0 %v3015
        %v3143 = vpop.f32.mrf.mxu0
        %v3144 = vadd.f32 %v3131, %v3143
        %v3145 = vpop.f32.mrf.mxu0
        %3146 = vdwg.mxu0
        %3147 = vmatpush.bf16.msra.mxu0 %v804
        %3148 = vmatpush.bf16.msra.mxu0 %v792
        %3149 = vmatpush.bf16.msra.mxu0 %v780
        %3150 = vmatpush.bf16.msra.mxu0 %v768
        %3151 = vmatpush.bf16.msra.mxu0 %v756
        %3152 = vmatpush.bf16.msra.mxu0 %v744
        %3153 = vmatpush.bf16.msra.mxu0 %v732
        %3154 = vmatpush.bf16.msra.mxu0 %v720
        %3155 = vmatmul.bf16.gmra.mxu0 %v3012
        %v3156 = vpop.f32.mrf.mxu0
        %v3157 = vadd.f32 0.0, %v3156
        %v3158 = vpop.f32.mrf.mxu0
        %3159 = vdwg.mxu0
        %3160 = vmatpush.bf16.msra.mxu0 0
        %3161 = vmatpush.bf16.msra.mxu0 0
        %3162 = vmatpush.bf16.msra.mxu0 0
        %3163 = vmatpush.bf16.msra.mxu0 0
        %3164 = vmatpush.bf16.msra.mxu0 0
        %3165 = vmatpush.bf16.msra.mxu0 0
        %3166 = vmatpush.bf16.msra.mxu0 0
        %3167 = vmatpush.bf16.msra.mxu0 %v940
        %3168 = vmatmul.bf16.gmra.mxu0 %v3015
        %v3169 = vpop.f32.mrf.mxu0
        %v3170 = vadd.f32 %v3157, %v3169
        %v3171 = vpop.f32.mrf.mxu0
        %3172 = vdwg.mxu0
        %3173 = vmatpush.bf16.msra.mxu0 %v805
        %3174 = vmatpush.bf16.msra.mxu0 %v793
        %3175 = vmatpush.bf16.msra.mxu0 %v781
        %3176 = vmatpush.bf16.msra.mxu0 %v769
        %3177 = vmatpush.bf16.msra.mxu0 %v757
        %3178 = vmatpush.bf16.msra.mxu0 %v745
        %3179 = vmatpush.bf16.msra.mxu0 %v733
        %3180 = vmatpush.bf16.msra.mxu0 %v721
        %3181 = vmatmul.bf16.gmra.mxu0 %v3012
        %v3182 = vpop.f32.mrf.mxu0
        %v3183 = vadd.f32 0.0, %v3182
        %v3184 = vpop.f32.mrf.mxu0
        %3185 = vdwg.mxu0
        %3186 = vmatpush.bf16.msra.mxu0 0
        %3187 = vmatpush.bf16.msra.mxu0 0
        %3188 = vmatpush.bf16.msra.mxu0 0
        %3189 = vmatpush.bf16.msra.mxu0 0
        %3190 = vmatpush.bf16.msra.mxu0 0
        %3191 = vmatpush.bf16.msra.mxu0 0
        %3192 = vmatpush.bf16.msra.mxu0 0
        %3193 = vmatpush.bf16.msra.mxu0 %v943
        %3194 = vmatmul.bf16.gmra.mxu0 %v3015
        %v3195 = vpop.f32.mrf.mxu0
        %v3196 = vadd.f32 %v3183, %v3195
        %v3197 = vpop.f32.mrf.mxu0
        %3198 = vdwg.mxu0
        %3199 = vmatpush.bf16.msra.mxu0 %v806
        %3200 = vmatpush.bf16.msra.mxu0 %v794
        %3201 = vmatpush.bf16.msra.mxu0 %v782
        %3202 = vmatpush.bf16.msra.mxu0 %v770
        %3203 = vmatpush.bf16.msra.mxu0 %v758
        %3204 = vmatpush.bf16.msra.mxu0 %v746
        %3205 = vmatpush.bf16.msra.mxu0 %v734
        %3206 = vmatpush.bf16.msra.mxu0 %v722
        %3207 = vmatmul.bf16.gmra.mxu0 %v3012
        %v3208 = vpop.f32.mrf.mxu0
        %v3209 = vadd.f32 0.0, %v3208
        %v3210 = vpop.f32.mrf.mxu0
        %3211 = vdwg.mxu0
        %3212 = vmatpush.bf16.msra.mxu0 0
        %3213 = vmatpush.bf16.msra.mxu0 0
        %3214 = vmatpush.bf16.msra.mxu0 0
        %3215 = vmatpush.bf16.msra.mxu0 0
        %3216 = vmatpush.bf16.msra.mxu0 0
        %3217 = vmatpush.bf16.msra.mxu0 0
        %3218 = vmatpush.bf16.msra.mxu0 0
        %3219 = vmatpush.bf16.msra.mxu0 %v946
        %3220 = vmatmul.bf16.gmra.mxu0 %v3015
        %v3221 = vpop.f32.mrf.mxu0
        %v3222 = vadd.f32 %v3209, %v3221
        %v3223 = vpop.f32.mrf.mxu0
        %3224 = vdwg.mxu0
        %3225 = vmatpush.bf16.msra.mxu0 %v807
        %3226 = vmatpush.bf16.msra.mxu0 %v795
        %3227 = vmatpush.bf16.msra.mxu0 %v783
        %3228 = vmatpush.bf16.msra.mxu0 %v771
        %3229 = vmatpush.bf16.msra.mxu0 %v759
        %3230 = vmatpush.bf16.msra.mxu0 %v747
        %3231 = vmatpush.bf16.msra.mxu0 %v735
        %3232 = vmatpush.bf16.msra.mxu0 %v723
        %3233 = vmatmul.bf16.gmra.mxu0 %v3012
        %v3234 = vpop.f32.mrf.mxu0
        %v3235 = vadd.f32 0.0, %v3234
        %v3236 = vpop.f32.mrf.mxu0
        %3237 = vdwg.mxu0
        %3238 = vmatpush.bf16.msra.mxu0 0
        %3239 = vmatpush.bf16.msra.mxu0 0
        %3240 = vmatpush.bf16.msra.mxu0 0
        %3241 = vmatpush.bf16.msra.mxu0 0
        %3242 = vmatpush.bf16.msra.mxu0 0
        %3243 = vmatpush.bf16.msra.mxu0 0
        %3244 = vmatpush.bf16.msra.mxu0 0
        %3245 = vmatpush.bf16.msra.mxu0 %v949
        %3246 = vmatmul.bf16.gmra.mxu0 %v3015
        %v3247 = vpop.f32.mrf.mxu0
        %v3248 = vadd.f32 %v3235, %v3247
        %v3249 = vpop.f32.mrf.mxu0
        %3250 = vdwg.mxu0
        %3251 = vmatpush.bf16.msra.mxu0 %v808
        %3252 = vmatpush.bf16.msra.mxu0 %v796
        %3253 = vmatpush.bf16.msra.mxu0 %v784
        %3254 = vmatpush.bf16.msra.mxu0 %v772
        %3255 = vmatpush.bf16.msra.mxu0 %v760
        %3256 = vmatpush.bf16.msra.mxu0 %v748
        %3257 = vmatpush.bf16.msra.mxu0 %v736
        %3258 = vmatpush.bf16.msra.mxu0 %v724
        %3259 = vmatmul.bf16.gmra.mxu0 %v3012
        %v3260 = vpop.f32.mrf.mxu0
        %v3261 = vadd.f32 0.0, %v3260
        %v3262 = vpop.f32.mrf.mxu0
        %3263 = vdwg.mxu0
        %3264 = vmatpush.bf16.msra.mxu0 0
        %3265 = vmatpush.bf16.msra.mxu0 0
        %3266 = vmatpush.bf16.msra.mxu0 0
        %3267 = vmatpush.bf16.msra.mxu0 0
        %3268 = vmatpush.bf16.msra.mxu0 0
        %3269 = vmatpush.bf16.msra.mxu0 0
        %3270 = vmatpush.bf16.msra.mxu0 0
        %3271 = vmatpush.bf16.msra.mxu0 %v952
        %3272 = vmatmul.bf16.gmra.mxu0 %v3015
        %v3273 = vpop.f32.mrf.mxu0
        %v3274 = vadd.f32 %v3261, %v3273
        %v3275 = vpop.f32.mrf.mxu0
        %3276 = vdwg.mxu0
        %3277 = vmatpush.bf16.msra.mxu0 %v809
        %3278 = vmatpush.bf16.msra.mxu0 %v797
        %3279 = vmatpush.bf16.msra.mxu0 %v785
        %3280 = vmatpush.bf16.msra.mxu0 %v773
        %3281 = vmatpush.bf16.msra.mxu0 %v761
        %3282 = vmatpush.bf16.msra.mxu0 %v749
        %3283 = vmatpush.bf16.msra.mxu0 %v737
        %3284 = vmatpush.bf16.msra.mxu0 %v725
        %3285 = vmatmul.bf16.gmra.mxu0 %v3012
        %v3286 = vpop.f32.mrf.mxu0
        %v3287 = vadd.f32 0.0, %v3286
        %v3288 = vpop.f32.mrf.mxu0
        %3289 = vdwg.mxu0
        %3290 = vmatpush.bf16.msra.mxu0 0
        %3291 = vmatpush.bf16.msra.mxu0 0
        %3292 = vmatpush.bf16.msra.mxu0 0
        %3293 = vmatpush.bf16.msra.mxu0 0
        %3294 = vmatpush.bf16.msra.mxu0 0
        %3295 = vmatpush.bf16.msra.mxu0 0
        %3296 = vmatpush.bf16.msra.mxu0 0
        %3297 = vmatpush.bf16.msra.mxu0 %v955
        %3298 = vmatmul.bf16.gmra.mxu0 %v3015
        %v3299 = vpop.f32.mrf.mxu0
        %v3300 = vadd.f32 %v3287, %v3299
        %v3301 = vpop.f32.mrf.mxu0
        %3302 = vdwg.mxu0
        %3303 = vmatpush.bf16.msra.mxu0 %v810
        %3304 = vmatpush.bf16.msra.mxu0 %v798
        %3305 = vmatpush.bf16.msra.mxu0 %v786
        %3306 = vmatpush.bf16.msra.mxu0 %v774
        %3307 = vmatpush.bf16.msra.mxu0 %v762
        %3308 = vmatpush.bf16.msra.mxu0 %v750
        %3309 = vmatpush.bf16.msra.mxu0 %v738
        %3310 = vmatpush.bf16.msra.mxu0 %v726
        %3311 = vmatmul.bf16.gmra.mxu0 %v3012
        %v3312 = vpop.f32.mrf.mxu0
        %v3313 = vadd.f32 0.0, %v3312
        %v3314 = vpop.f32.mrf.mxu0
        %3315 = vdwg.mxu0
        %3316 = vmatpush.bf16.msra.mxu0 0
        %3317 = vmatpush.bf16.msra.mxu0 0
        %3318 = vmatpush.bf16.msra.mxu0 0
        %3319 = vmatpush.bf16.msra.mxu0 0
        %3320 = vmatpush.bf16.msra.mxu0 0
        %3321 = vmatpush.bf16.msra.mxu0 0
        %3322 = vmatpush.bf16.msra.mxu0 0
        %3323 = vmatpush.bf16.msra.mxu0 %v958
        %3324 = vmatmul.bf16.gmra.mxu0 %v3015
        %v3325 = vpop.f32.mrf.mxu0
        %v3326 = vadd.f32 %v3313, %v3325
        %v3327 = vpop.f32.mrf.mxu0
        %3328 = vdwg.mxu0
        %v3329 = vmax.f32 %v3040, %v3144
        %v3330 = vmax.f32 %v3066, %v3170
        %v3331 = vmax.f32 %v3092, %v3196
        %v3332 = vmax.f32 %v3118, %v3222
        %v3333 = vmax.f32 %v3329, %v3248
        %v3334 = vmax.f32 %v3330, %v3274
        %v3335 = vmax.f32 %v3331, %v3300
        %v3336 = vmax.f32 %v3332, %v3326
        %v3337 = vadd.f32 %v3333, %v1281
        %v3338 = vadd.f32 %v3334, %v1282
        %v3339 = vadd.f32 %v3335, %v1283
        %v3340 = vadd.f32 %v3336, %v1284
        %v3341 = vmax.f32 %v3337, 0.0
        %v3342 = vmax.f32 %v3338, 0.0
        %v3343 = vmax.f32 %v3339, 0.0
        %v3344 = vmax.f32 %v3340, 0.0
        %3349 = vrot.lane.b32.xlu0 %v3341, 112
        %v3350 = vpop.permute.xlu0 %3349
        %3351 = vrot.lane.b32.xlu0 %v3342, 112
        %v3352 = vpop.permute.xlu0 %3351
        %3353 = vrot.lane.b32.xlu0 %v3343, 112
        %v3354 = vpop.permute.xlu0 %3353
        %3355 = vrot.lane.b32.xlu0 %v3344, 112
        %v3356 = vpop.permute.xlu0 %3355
        %v3357 = vsel %vm1309, %v3350, %v3352
        %v3358 = vsel %vm1309, %v3352, %v3354
        %v3359 = vsel %vm1309, %v3354, %v3356
        %v3364 = vmax.f32 %v3341, %v3357
        %v3365 = vmax.f32 %v3342, %v3358
        %v3366 = vmax.f32 %v3343, %v3359
        %v3367 = vmax.f32 %v3344, %v3356
        %3368 = vrot.lane.b32.xlu0 %v3341, 96
        %v3369 = vpop.permute.xlu0 %3368
        %3370 = vrot.lane.b32.xlu0 %v3342, 96
        %v3371 = vpop.permute.xlu0 %3370
        %3372 = vrot.lane.b32.xlu0 %v3343, 96
        %v3373 = vpop.permute.xlu0 %3372
        %3374 = vrot.lane.b32.xlu0 %v3344, 96
        %v3375 = vpop.permute.xlu0 %3374
        %v3376 = vsel %vm1329, %v3369, %v3371
        %v3377 = vsel %vm1329, %v3371, %v3373
        %v3378 = vsel %vm1329, %v3373, %v3375
        %v3383 = vmax.f32 %v3364, %v3376
        %v3384 = vmax.f32 %v3365, %v3377
        %v3385 = vmax.f32 %v3366, %v3378
        %v3386 = vmax.f32 %v3367, %v3375
        %v3387 = vld [vmem:[%s3 + $0x2d0] sm:$0xf]
        %v3388 = vld [vmem:[%s3 + $0x2d4] sm:$0xf]
        %v3389 = vld [vmem:[%s3 + $0x2d8] sm:$0xf]
        %v3390 = vld [vmem:[%s3 + $0x2dc] sm:$0xf]
        %v3391 = vld [vmem:[%s3 + $0x2e0] sm:$0xf]
        %v3392 = vld [vmem:[%s3 + $0x2e4] sm:$0xf]
        %v3393 = vld [vmem:[%s3 + $0x2e8] sm:$0xf]
        %v3394 = vld [vmem:[%s3 + $0x2ec] sm:$0xf]
        %v3395 = vld [vmem:[%s3 + $0x2f0] sm:$0xf]
        %v3396 = vld [vmem:[%s3 + $0x2f4] sm:$0xf]
        %v3397 = vld [vmem:[%s3 + $0x2f8] sm:$0xf]
        %v3398 = vld [vmem:[%s3 + $0x2fc] sm:$0xf]
        %v3399 = vld [vmem:[%s3 + $0x300] sm:$0xf]
        %v3400 = vld [vmem:[%s3 + $0x304] sm:$0xf]
        %v3401 = vld [vmem:[%s3 + $0x308] sm:$0xf]
        %v3402 = vld [vmem:[%s3 + $0x30c] sm:$0xf]
        %v3403 = vld [vmem:[%s3 + $0x310] sm:$0xf]
        %v3404 = vld [vmem:[%s3 + $0x314] sm:$0xf]
        %v3405 = vld [vmem:[%s3 + $0x318] sm:$0xf]
        %v3406 = vld [vmem:[%s3 + $0x31c] sm:$0xf]
        %v3407 = vld [vmem:[%s3 + $0x320] sm:$0xf]
        %v3408 = vld [vmem:[%s3 + $0x324] sm:$0xf]
        %v3409 = vld [vmem:[%s3 + $0x328] sm:$0xf]
        %v3410 = vld [vmem:[%s3 + $0x32c] sm:$0xf]
        %v3411 = vld [vmem:[%s3 + $0x330] sm:$0xf]
        %v3412 = vld [vmem:[%s3 + $0x334] sm:$0xf]
        %v3413 = vld [vmem:[%s3 + $0x338] sm:$0xf]
        %v3414 = vld [vmem:[%s3 + $0x33c] sm:$0xf]
        %v3415 = vld [vmem:[%s3 + $0x340] sm:$0xf]
        %v3416 = vld [vmem:[%s3 + $0x344] sm:$0xf]
        %v3417 = vld [vmem:[%s3 + $0x348] sm:$0xf]
        %v3418 = vld [vmem:[%s3 + $0x34c] sm:$0xf]
        %v3419 = vld [vmem:[%s3 + $0x350] sm:$0xf]
        %v3420 = vld [vmem:[%s3 + $0x354] sm:$0xf]
        %v3421 = vld [vmem:[%s3 + $0x358] sm:$0xf]
        %v3422 = vld [vmem:[%s3 + $0x35c] sm:$0xf]
        %v3423 = vld [vmem:[%s3 + $0x360] sm:$0xf]
        %v3424 = vld [vmem:[%s3 + $0x364] sm:$0xf]
        %v3425 = vld [vmem:[%s3 + $0x368] sm:$0xf]
        %v3426 = vld [vmem:[%s3 + $0x36c] sm:$0xf]
        %v3427 = vld [vmem:[%s3 + $0x370] sm:$0xf]
        %v3428 = vld [vmem:[%s3 + $0x374] sm:$0xf]
        %v3429 = vld [vmem:[%s3 + $0x378] sm:$0xf]
        %v3430 = vld [vmem:[%s3 + $0x37c] sm:$0xf]
        %v3431 = vld [vmem:[%s3 + $0x380] sm:$0xf]
        %v3432 = vld [vmem:[%s3 + $0x384] sm:$0xf]
        %v3433 = vld [vmem:[%s3 + $0x388] sm:$0xf]
        %v3434 = vld [vmem:[%s3 + $0x38c] sm:$0xf]
        %v3435 = vld [vmem:[%s3 + $0x390] sm:$0xf]
        %v3436 = vld [vmem:[%s3 + $0x394] sm:$0xf]
        %v3437 = vld [vmem:[%s3 + $0x398] sm:$0xf]
        %v3438 = vld [vmem:[%s3 + $0x39c] sm:$0xf]
        %v3439 = vld [vmem:[%s3 + $0x3a0] sm:$0xf]
        %v3440 = vld [vmem:[%s3 + $0x3a4] sm:$0xf]
        %v3441 = vld [vmem:[%s3 + $0x3a8] sm:$0xf]
        %v3442 = vld [vmem:[%s3 + $0x3ac] sm:$0xf]
        %v3443 = vld [vmem:[%s3 + $0x3b0] sm:$0xf]
        %v3444 = vld [vmem:[%s3 + $0x3b4] sm:$0xf]
        %v3445 = vld [vmem:[%s3 + $0x3b8] sm:$0xf]
        %v3446 = vld [vmem:[%s3 + $0x3bc] sm:$0xf]
        %v3447 = vpack.c.bf16 %v3383, %v3383
        %v3448 = vpack.c.bf16 %v3384, %v3384
        %v3449 = vpack.c.bf16 %v3385, %v3385
        %v3450 = vpack.c.bf16 %v3386, %v3386
        %v3511 = vunpack.c.l.b16 %v3387
        %v3512 = vunpack.c.l.b16 %v3388
        %v3513 = vunpack.c.l.b16 %v3389
        %v3514 = vunpack.c.l.b16 %v3390
        %v3515 = vunpack.c.l.b16 %v3391
        %v3516 = vunpack.c.l.b16 %v3392
        %v3517 = vunpack.c.l.b16 %v3393
        %v3518 = vunpack.c.l.b16 %v3394
        %v3519 = vunpack.c.l.b16 %v3395
        %v3520 = vunpack.c.l.b16 %v3396
        %v3521 = vunpack.c.l.b16 %v3397
        %v3522 = vunpack.c.l.b16 %v3398
        %v3523 = vunpack.c.l.b16 %v3399
        %v3524 = vunpack.c.l.b16 %v3400
        %v3525 = vunpack.c.l.b16 %v3401
        %v3526 = vunpack.c.l.b16 %v3402
        %v3527 = vunpack.c.l.b16 %v3403
        %v3528 = vunpack.c.l.b16 %v3404
        %v3529 = vunpack.c.l.b16 %v3405
        %v3530 = vunpack.c.l.b16 %v3406
        %v3531 = vunpack.c.l.b16 %v3407
        %v3532 = vunpack.c.l.b16 %v3408
        %v3533 = vunpack.c.l.b16 %v3409
        %v3534 = vunpack.c.l.b16 %v3410
        %v3535 = vunpack.c.l.b16 %v3411
        %v3536 = vunpack.c.l.b16 %v3412
        %v3537 = vunpack.c.l.b16 %v3413
        %v3538 = vunpack.c.l.b16 %v3414
        %v3539 = vunpack.c.l.b16 %v3415
        %v3540 = vunpack.c.l.b16 %v3416
        %v3541 = vunpack.c.l.b16 %v3417
        %v3542 = vunpack.c.l.b16 %v3418
        %v3543 = vunpack.c.l.b16 %v3419
        %v3544 = vunpack.c.l.b16 %v3420
        %v3545 = vunpack.c.l.b16 %v3421
        %v3546 = vunpack.c.l.b16 %v3422
        %v3547 = vunpack.c.l.b16 %v3423
        %v3548 = vunpack.c.l.b16 %v3424
        %v3549 = vunpack.c.l.b16 %v3425
        %v3550 = vunpack.c.l.b16 %v3426
        %v3551 = vunpack.c.l.b16 %v3427
        %v3552 = vunpack.c.l.b16 %v3428
        %v3553 = vunpack.c.l.b16 %v3429
        %v3554 = vunpack.c.l.b16 %v3430
        %v3555 = vunpack.c.l.b16 %v3431
        %v3556 = vunpack.c.l.b16 %v3432
        %v3557 = vunpack.c.l.b16 %v3433
        %v3558 = vunpack.c.l.b16 %v3434
        %v3559 = vunpack.c.l.b16 %v3435
        %v3560 = vunpack.c.l.b16 %v3436
        %v3561 = vunpack.c.l.b16 %v3437
        %v3562 = vunpack.c.l.b16 %v3438
        %v3563 = vunpack.c.l.b16 %v3439
        %v3564 = vunpack.c.l.b16 %v3440
        %v3565 = vunpack.c.l.b16 %v3441
        %v3566 = vunpack.c.l.b16 %v3442
        %v3567 = vunpack.c.l.b16 %v3443
        %v3568 = vunpack.c.l.b16 %v3444
        %v3569 = vunpack.c.l.b16 %v3445
        %v3570 = vunpack.c.l.b16 %v3446
        %v3571 = vpack.c.b16 %v3512, %v3511
        %v3572 = vpack.c.b16 %v3514, %v3513
        %v3573 = vpack.c.b16 %v3516, %v3515
        %v3574 = vpack.c.b16 %v3518, %v3517
        %v3575 = vpack.c.b16 %v3520, %v3519
        %v3576 = vpack.c.b16 %v3522, %v3521
        %v3577 = vpack.c.b16 %v3524, %v3523
        %v3578 = vpack.c.b16 %v3526, %v3525
        %v3579 = vpack.c.b16 %v3528, %v3527
        %v3580 = vpack.c.b16 %v3530, %v3529
        %v3581 = vpack.c.b16 %v3532, %v3531
        %v3582 = vpack.c.b16 %v3534, %v3533
        %v3583 = vpack.c.b16 %v3536, %v3535
        %v3584 = vpack.c.b16 %v3538, %v3537
        %v3585 = vpack.c.b16 %v3540, %v3539
        %v3586 = vpack.c.b16 %v3542, %v3541
        %v3587 = vpack.c.b16 %v3544, %v3543
        %v3588 = vpack.c.b16 %v3546, %v3545
        %v3589 = vpack.c.b16 %v3548, %v3547
        %v3590 = vpack.c.b16 %v3550, %v3549
        %v3591 = vpack.c.b16 %v3552, %v3551
        %v3592 = vpack.c.b16 %v3554, %v3553
        %v3593 = vpack.c.b16 %v3556, %v3555
        %v3594 = vpack.c.b16 %v3558, %v3557
        %v3595 = vpack.c.b16 %v3560, %v3559
        %v3596 = vpack.c.b16 %v3562, %v3561
        %v3597 = vpack.c.b16 %v3564, %v3563
        %v3598 = vpack.c.b16 %v3566, %v3565
        %v3599 = vpack.c.b16 %v3568, %v3567
        %v3600 = vpack.c.b16 %v3570, %v3569
        %v3632 = vsel %vm1329, %v3450, 0
        %3634 = vmatpush.bf16.msra.mxu0 %v3578
        %3635 = vmatpush.bf16.msra.mxu0 %v3577
        %3636 = vmatpush.bf16.msra.mxu0 %v3576
        %3637 = vmatpush.bf16.msra.mxu0 %v3575
        %3638 = vmatpush.bf16.msra.mxu0 %v3574
        %3639 = vmatpush.bf16.msra.mxu0 %v3573
        %3640 = vmatpush.bf16.msra.mxu0 %v3572
        %3641 = vmatpush.bf16.msra.mxu0 %v3571
        %3642 = vmatmul.bf16.gmra.mxu0 %v3447
        %v3643 = vpop.f32.mrf.mxu0
        %v3644 = vadd.f32 0.0, %v3643
        %v3645 = vpop.f32.mrf.mxu0
        %3646 = vdwg.mxu0
        %3647 = vmatpush.bf16.msra.mxu0 %v3586
        %3648 = vmatpush.bf16.msra.mxu0 %v3585
        %3649 = vmatpush.bf16.msra.mxu0 %v3584
        %3650 = vmatpush.bf16.msra.mxu0 %v3583
        %3651 = vmatpush.bf16.msra.mxu0 %v3582
        %3652 = vmatpush.bf16.msra.mxu0 %v3581
        %3653 = vmatpush.bf16.msra.mxu0 %v3580
        %3654 = vmatpush.bf16.msra.mxu0 %v3579
        %3655 = vmatmul.bf16.gmra.mxu0 %v3448
        %v3656 = vpop.f32.mrf.mxu0
        %v3657 = vadd.f32 %v3644, %v3656
        %v3658 = vpop.f32.mrf.mxu0
        %3659 = vdwg.mxu0
        %3660 = vmatpush.bf16.msra.mxu0 %v3594
        %3661 = vmatpush.bf16.msra.mxu0 %v3593
        %3662 = vmatpush.bf16.msra.mxu0 %v3592
        %3663 = vmatpush.bf16.msra.mxu0 %v3591
        %3664 = vmatpush.bf16.msra.mxu0 %v3590
        %3665 = vmatpush.bf16.msra.mxu0 %v3589
        %3666 = vmatpush.bf16.msra.mxu0 %v3588
        %3667 = vmatpush.bf16.msra.mxu0 %v3587
        %3668 = vmatmul.bf16.gmra.mxu0 %v3449
        %v3669 = vpop.f32.mrf.mxu0
        %v3670 = vadd.f32 %v3657, %v3669
        %v3671 = vpop.f32.mrf.mxu0
        %3672 = vdwg.mxu0
        %3673 = vmatpush.bf16.msra.mxu0 0
        %3674 = vmatpush.bf16.msra.mxu0 0
        %3675 = vmatpush.bf16.msra.mxu0 %v3600
        %3676 = vmatpush.bf16.msra.mxu0 %v3599
        %3677 = vmatpush.bf16.msra.mxu0 %v3598
        %3678 = vmatpush.bf16.msra.mxu0 %v3597
        %3679 = vmatpush.bf16.msra.mxu0 %v3596
        %3680 = vmatpush.bf16.msra.mxu0 %v3595
        %3681 = vmatmul.bf16.gmra.mxu0 %v3632
        %v3682 = vpop.f32.mrf.mxu0
        %v3683 = vadd.f32 %v3670, %v3682
        %v3684 = vpop.f32.mrf.mxu0
        %3685 = vdwg.mxu0
        %v3686 = vadd.f32 %v3000, %v3683
        %3687 = vrot.lane.b32.xlu0 %v3003, 32
        %v3688 = vpop.permute.xlu0 %3687
        %3689 = vrot.lane.b32.xlu0 %v3004, 32
        %v3690 = vpop.permute.xlu0 %3689
        %vm3691 = vcmask 261120
        %v3692 = vsel %vm3691, %v3688, %v3690
        %v3695 = vsel %vm919, %v3690, 0
        %3697 = vmatpush.bf16.msra.mxu0 %v799
        %3698 = vmatpush.bf16.msra.mxu0 %v787
        %3699 = vmatpush.bf16.msra.mxu0 %v775
        %3700 = vmatpush.bf16.msra.mxu0 %v763
        %3701 = vmatpush.bf16.msra.mxu0 %v751
        %3702 = vmatpush.bf16.msra.mxu0 %v739
        %3703 = vmatpush.bf16.msra.mxu0 %v727
        %3704 = vmatpush.bf16.msra.mxu0 %v715
        %3705 = vmatmul.bf16.gmra.mxu0 %v3692
        %v3706 = vpop.f32.mrf.mxu0
        %v3707 = vadd.f32 0.0, %v3706
        %v3708 = vpop.f32.mrf.mxu0
        %3709 = vdwg.mxu0
        %3710 = vmatpush.bf16.msra.mxu0 0
        %3711 = vmatpush.bf16.msra.mxu0 0
        %3712 = vmatpush.bf16.msra.mxu0 0
        %3713 = vmatpush.bf16.msra.mxu0 0
        %3714 = vmatpush.bf16.msra.mxu0 0
        %3715 = vmatpush.bf16.msra.mxu0 0
        %3716 = vmatpush.bf16.msra.mxu0 0
        %3717 = vmatpush.bf16.msra.mxu0 %v925
        %3718 = vmatmul.bf16.gmra.mxu0 %v3695
        %v3719 = vpop.f32.mrf.mxu0
        %v3720 = vadd.f32 %v3707, %v3719
        %v3721 = vpop.f32.mrf.mxu0
        %3722 = vdwg.mxu0
        %3723 = vmatpush.bf16.msra.mxu0 %v800
        %3724 = vmatpush.bf16.msra.mxu0 %v788
        %3725 = vmatpush.bf16.msra.mxu0 %v776
        %3726 = vmatpush.bf16.msra.mxu0 %v764
        %3727 = vmatpush.bf16.msra.mxu0 %v752
        %3728 = vmatpush.bf16.msra.mxu0 %v740
        %3729 = vmatpush.bf16.msra.mxu0 %v728
        %3730 = vmatpush.bf16.msra.mxu0 %v716
        %3731 = vmatmul.bf16.gmra.mxu0 %v3692
        %v3732 = vpop.f32.mrf.mxu0
        %v3733 = vadd.f32 0.0, %v3732
        %v3734 = vpop.f32.mrf.mxu0
        %3735 = vdwg.mxu0
        %3736 = vmatpush.bf16.msra.mxu0 0
        %3737 = vmatpush.bf16.msra.mxu0 0
        %3738 = vmatpush.bf16.msra.mxu0 0
        %3739 = vmatpush.bf16.msra.mxu0 0
        %3740 = vmatpush.bf16.msra.mxu0 0
        %3741 = vmatpush.bf16.msra.mxu0 0
        %3742 = vmatpush.bf16.msra.mxu0 0
        %3743 = vmatpush.bf16.msra.mxu0 %v928
        %3744 = vmatmul.bf16.gmra.mxu0 %v3695
        %v3745 = vpop.f32.mrf.mxu0
        %v3746 = vadd.f32 %v3733, %v3745
        %v3747 = vpop.f32.mrf.mxu0
        %3748 = vdwg.mxu0
        %3749 = vmatpush.bf16.msra.mxu0 %v801
        %3750 = vmatpush.bf16.msra.mxu0 %v789
        %3751 = vmatpush.bf16.msra.mxu0 %v777
        %3752 = vmatpush.bf16.msra.mxu0 %v765
        %3753 = vmatpush.bf16.msra.mxu0 %v753
        %3754 = vmatpush.bf16.msra.mxu0 %v741
        %3755 = vmatpush.bf16.msra.mxu0 %v729
        %3756 = vmatpush.bf16.msra.mxu0 %v717
        %3757 = vmatmul.bf16.gmra.mxu0 %v3692
        %v3758 = vpop.f32.mrf.mxu0
        %v3759 = vadd.f32 0.0, %v3758
        %v3760 = vpop.f32.mrf.mxu0
        %3761 = vdwg.mxu0
        %3762 = vmatpush.bf16.msra.mxu0 0
        %3763 = vmatpush.bf16.msra.mxu0 0
        %3764 = vmatpush.bf16.msra.mxu0 0
        %3765 = vmatpush.bf16.msra.mxu0 0
        %3766 = vmatpush.bf16.msra.mxu0 0
        %3767 = vmatpush.bf16.msra.mxu0 0
        %3768 = vmatpush.bf16.msra.mxu0 0
        %3769 = vmatpush.bf16.msra.mxu0 %v931
        %3770 = vmatmul.bf16.gmra.mxu0 %v3695
        %v3771 = vpop.f32.mrf.mxu0
        %v3772 = vadd.f32 %v3759, %v3771
        %v3773 = vpop.f32.mrf.mxu0
        %3774 = vdwg.mxu0
        %3775 = vmatpush.bf16.msra.mxu0 %v802
        %3776 = vmatpush.bf16.msra.mxu0 %v790
        %3777 = vmatpush.bf16.msra.mxu0 %v778
        %3778 = vmatpush.bf16.msra.mxu0 %v766
        %3779 = vmatpush.bf16.msra.mxu0 %v754
        %3780 = vmatpush.bf16.msra.mxu0 %v742
        %3781 = vmatpush.bf16.msra.mxu0 %v730
        %3782 = vmatpush.bf16.msra.mxu0 %v718
        %3783 = vmatmul.bf16.gmra.mxu0 %v3692
        %v3784 = vpop.f32.mrf.mxu0
        %v3785 = vadd.f32 0.0, %v3784
        %v3786 = vpop.f32.mrf.mxu0
        %3787 = vdwg.mxu0
        %3788 = vmatpush.bf16.msra.mxu0 0
        %3789 = vmatpush.bf16.msra.mxu0 0
        %3790 = vmatpush.bf16.msra.mxu0 0
        %3791 = vmatpush.bf16.msra.mxu0 0
        %3792 = vmatpush.bf16.msra.mxu0 0
        %3793 = vmatpush.bf16.msra.mxu0 0
        %3794 = vmatpush.bf16.msra.mxu0 0
        %3795 = vmatpush.bf16.msra.mxu0 %v934
        %3796 = vmatmul.bf16.gmra.mxu0 %v3695
        %v3797 = vpop.f32.mrf.mxu0
        %v3798 = vadd.f32 %v3785, %v3797
        %v3799 = vpop.f32.mrf.mxu0
        %3800 = vdwg.mxu0
        %3801 = vmatpush.bf16.msra.mxu0 %v803
        %3802 = vmatpush.bf16.msra.mxu0 %v791
        %3803 = vmatpush.bf16.msra.mxu0 %v779
        %3804 = vmatpush.bf16.msra.mxu0 %v767
        %3805 = vmatpush.bf16.msra.mxu0 %v755
        %3806 = vmatpush.bf16.msra.mxu0 %v743
        %3807 = vmatpush.bf16.msra.mxu0 %v731
        %3808 = vmatpush.bf16.msra.mxu0 %v719
        %3809 = vmatmul.bf16.gmra.mxu0 %v3692
        %v3810 = vpop.f32.mrf.mxu0
        %v3811 = vadd.f32 0.0, %v3810
        %v3812 = vpop.f32.mrf.mxu0
        %3813 = vdwg.mxu0
        %3814 = vmatpush.bf16.msra.mxu0 0
        %3815 = vmatpush.bf16.msra.mxu0 0
        %3816 = vmatpush.bf16.msra.mxu0 0
        %3817 = vmatpush.bf16.msra.mxu0 0
        %3818 = vmatpush.bf16.msra.mxu0 0
        %3819 = vmatpush.bf16.msra.mxu0 0
        %3820 = vmatpush.bf16.msra.mxu0 0
        %3821 = vmatpush.bf16.msra.mxu0 %v937
        %3822 = vmatmul.bf16.gmra.mxu0 %v3695
        %v3823 = vpop.f32.mrf.mxu0
        %v3824 = vadd.f32 %v3811, %v3823
        %v3825 = vpop.f32.mrf.mxu0
        %3826 = vdwg.mxu0
        %3827 = vmatpush.bf16.msra.mxu0 %v804
        %3828 = vmatpush.bf16.msra.mxu0 %v792
        %3829 = vmatpush.bf16.msra.mxu0 %v780
        %3830 = vmatpush.bf16.msra.mxu0 %v768
        %3831 = vmatpush.bf16.msra.mxu0 %v756
        %3832 = vmatpush.bf16.msra.mxu0 %v744
        %3833 = vmatpush.bf16.msra.mxu0 %v732
        %3834 = vmatpush.bf16.msra.mxu0 %v720
        %3835 = vmatmul.bf16.gmra.mxu0 %v3692
        %v3836 = vpop.f32.mrf.mxu0
        %v3837 = vadd.f32 0.0, %v3836
        %v3838 = vpop.f32.mrf.mxu0
        %3839 = vdwg.mxu0
        %3840 = vmatpush.bf16.msra.mxu0 0
        %3841 = vmatpush.bf16.msra.mxu0 0
        %3842 = vmatpush.bf16.msra.mxu0 0
        %3843 = vmatpush.bf16.msra.mxu0 0
        %3844 = vmatpush.bf16.msra.mxu0 0
        %3845 = vmatpush.bf16.msra.mxu0 0
        %3846 = vmatpush.bf16.msra.mxu0 0
        %3847 = vmatpush.bf16.msra.mxu0 %v940
        %3848 = vmatmul.bf16.gmra.mxu0 %v3695
        %v3849 = vpop.f32.mrf.mxu0
        %v3850 = vadd.f32 %v3837, %v3849
        %v3851 = vpop.f32.mrf.mxu0
        %3852 = vdwg.mxu0
        %3853 = vmatpush.bf16.msra.mxu0 %v805
        %3854 = vmatpush.bf16.msra.mxu0 %v793
        %3855 = vmatpush.bf16.msra.mxu0 %v781
        %3856 = vmatpush.bf16.msra.mxu0 %v769
        %3857 = vmatpush.bf16.msra.mxu0 %v757
        %3858 = vmatpush.bf16.msra.mxu0 %v745
        %3859 = vmatpush.bf16.msra.mxu0 %v733
        %3860 = vmatpush.bf16.msra.mxu0 %v721
        %3861 = vmatmul.bf16.gmra.mxu0 %v3692
        %v3862 = vpop.f32.mrf.mxu0
        %v3863 = vadd.f32 0.0, %v3862
        %v3864 = vpop.f32.mrf.mxu0
        %3865 = vdwg.mxu0
        %3866 = vmatpush.bf16.msra.mxu0 0
        %3867 = vmatpush.bf16.msra.mxu0 0
        %3868 = vmatpush.bf16.msra.mxu0 0
        %3869 = vmatpush.bf16.msra.mxu0 0
        %3870 = vmatpush.bf16.msra.mxu0 0
        %3871 = vmatpush.bf16.msra.mxu0 0
        %3872 = vmatpush.bf16.msra.mxu0 0
        %3873 = vmatpush.bf16.msra.mxu0 %v943
        %3874 = vmatmul.bf16.gmra.mxu0 %v3695
        %v3875 = vpop.f32.mrf.mxu0
        %v3876 = vadd.f32 %v3863, %v3875
        %v3877 = vpop.f32.mrf.mxu0
        %3878 = vdwg.mxu0
        %3879 = vmatpush.bf16.msra.mxu0 %v806
        %3880 = vmatpush.bf16.msra.mxu0 %v794
        %3881 = vmatpush.bf16.msra.mxu0 %v782
        %3882 = vmatpush.bf16.msra.mxu0 %v770
        %3883 = vmatpush.bf16.msra.mxu0 %v758
        %3884 = vmatpush.bf16.msra.mxu0 %v746
        %3885 = vmatpush.bf16.msra.mxu0 %v734
        %3886 = vmatpush.bf16.msra.mxu0 %v722
        %3887 = vmatmul.bf16.gmra.mxu0 %v3692
        %v3888 = vpop.f32.mrf.mxu0
        %v3889 = vadd.f32 0.0, %v3888
        %v3890 = vpop.f32.mrf.mxu0
        %3891 = vdwg.mxu0
        %3892 = vmatpush.bf16.msra.mxu0 0
        %3893 = vmatpush.bf16.msra.mxu0 0
        %3894 = vmatpush.bf16.msra.mxu0 0
        %3895 = vmatpush.bf16.msra.mxu0 0
        %3896 = vmatpush.bf16.msra.mxu0 0
        %3897 = vmatpush.bf16.msra.mxu0 0
        %3898 = vmatpush.bf16.msra.mxu0 0
        %3899 = vmatpush.bf16.msra.mxu0 %v946
        %3900 = vmatmul.bf16.gmra.mxu0 %v3695
        %v3901 = vpop.f32.mrf.mxu0
        %v3902 = vadd.f32 %v3889, %v3901
        %v3903 = vpop.f32.mrf.mxu0
        %3904 = vdwg.mxu0
        %3905 = vmatpush.bf16.msra.mxu0 %v807
        %3906 = vmatpush.bf16.msra.mxu0 %v795
        %3907 = vmatpush.bf16.msra.mxu0 %v783
        %3908 = vmatpush.bf16.msra.mxu0 %v771
        %3909 = vmatpush.bf16.msra.mxu0 %v759
        %3910 = vmatpush.bf16.msra.mxu0 %v747
        %3911 = vmatpush.bf16.msra.mxu0 %v735
        %3912 = vmatpush.bf16.msra.mxu0 %v723
        %3913 = vmatmul.bf16.gmra.mxu0 %v3692
        %v3914 = vpop.f32.mrf.mxu0
        %v3915 = vadd.f32 0.0, %v3914
        %v3916 = vpop.f32.mrf.mxu0
        %3917 = vdwg.mxu0
        %3918 = vmatpush.bf16.msra.mxu0 0
        %3919 = vmatpush.bf16.msra.mxu0 0
        %3920 = vmatpush.bf16.msra.mxu0 0
        %3921 = vmatpush.bf16.msra.mxu0 0
        %3922 = vmatpush.bf16.msra.mxu0 0
        %3923 = vmatpush.bf16.msra.mxu0 0
        %3924 = vmatpush.bf16.msra.mxu0 0
        %3925 = vmatpush.bf16.msra.mxu0 %v949
        %3926 = vmatmul.bf16.gmra.mxu0 %v3695
        %v3927 = vpop.f32.mrf.mxu0
        %v3928 = vadd.f32 %v3915, %v3927
        %v3929 = vpop.f32.mrf.mxu0
        %3930 = vdwg.mxu0
        %3931 = vmatpush.bf16.msra.mxu0 %v808
        %3932 = vmatpush.bf16.msra.mxu0 %v796
        %3933 = vmatpush.bf16.msra.mxu0 %v784
        %3934 = vmatpush.bf16.msra.mxu0 %v772
        %3935 = vmatpush.bf16.msra.mxu0 %v760
        %3936 = vmatpush.bf16.msra.mxu0 %v748
        %3937 = vmatpush.bf16.msra.mxu0 %v736
        %3938 = vmatpush.bf16.msra.mxu0 %v724
        %3939 = vmatmul.bf16.gmra.mxu0 %v3692
        %v3940 = vpop.f32.mrf.mxu0
        %v3941 = vadd.f32 0.0, %v3940
        %v3942 = vpop.f32.mrf.mxu0
        %3943 = vdwg.mxu0
        %3944 = vmatpush.bf16.msra.mxu0 0
        %3945 = vmatpush.bf16.msra.mxu0 0
        %3946 = vmatpush.bf16.msra.mxu0 0
        %3947 = vmatpush.bf16.msra.mxu0 0
        %3948 = vmatpush.bf16.msra.mxu0 0
        %3949 = vmatpush.bf16.msra.mxu0 0
        %3950 = vmatpush.bf16.msra.mxu0 0
        %3951 = vmatpush.bf16.msra.mxu0 %v952
        %3952 = vmatmul.bf16.gmra.mxu0 %v3695
        %v3953 = vpop.f32.mrf.mxu0
        %v3954 = vadd.f32 %v3941, %v3953
        %v3955 = vpop.f32.mrf.mxu0
        %3956 = vdwg.mxu0
        %3957 = vmatpush.bf16.msra.mxu0 %v809
        %3958 = vmatpush.bf16.msra.mxu0 %v797
        %3959 = vmatpush.bf16.msra.mxu0 %v785
        %3960 = vmatpush.bf16.msra.mxu0 %v773
        %3961 = vmatpush.bf16.msra.mxu0 %v761
        %3962 = vmatpush.bf16.msra.mxu0 %v749
        %3963 = vmatpush.bf16.msra.mxu0 %v737
        %3964 = vmatpush.bf16.msra.mxu0 %v725
        %3965 = vmatmul.bf16.gmra.mxu0 %v3692
        %v3966 = vpop.f32.mrf.mxu0
        %v3967 = vadd.f32 0.0, %v3966
        %v3968 = vpop.f32.mrf.mxu0
        %3969 = vdwg.mxu0
        %3970 = vmatpush.bf16.msra.mxu0 0
        %3971 = vmatpush.bf16.msra.mxu0 0
        %3972 = vmatpush.bf16.msra.mxu0 0
        %3973 = vmatpush.bf16.msra.mxu0 0
        %3974 = vmatpush.bf16.msra.mxu0 0
        %3975 = vmatpush.bf16.msra.mxu0 0
        %3976 = vmatpush.bf16.msra.mxu0 0
        %3977 = vmatpush.bf16.msra.mxu0 %v955
        %3978 = vmatmul.bf16.gmra.mxu0 %v3695
        %v3979 = vpop.f32.mrf.mxu0
        %v3980 = vadd.f32 %v3967, %v3979
        %v3981 = vpop.f32.mrf.mxu0
        %3982 = vdwg.mxu0
        %3983 = vmatpush.bf16.msra.mxu0 %v810
        %3984 = vmatpush.bf16.msra.mxu0 %v798
        %3985 = vmatpush.bf16.msra.mxu0 %v786
        %3986 = vmatpush.bf16.msra.mxu0 %v774
        %3987 = vmatpush.bf16.msra.mxu0 %v762
        %3988 = vmatpush.bf16.msra.mxu0 %v750
        %3989 = vmatpush.bf16.msra.mxu0 %v738
        %3990 = vmatpush.bf16.msra.mxu0 %v726
        %3991 = vmatmul.bf16.gmra.mxu0 %v3692
        %v3992 = vpop.f32.mrf.mxu0
        %v3993 = vadd.f32 0.0, %v3992
        %v3994 = vpop.f32.mrf.mxu0
        %3995 = vdwg.mxu0
        %3996 = vmatpush.bf16.msra.mxu0 0
        %3997 = vmatpush.bf16.msra.mxu0 0
        %3998 = vmatpush.bf16.msra.mxu0 0
        %3999 = vmatpush.bf16.msra.mxu0 0
        %4000 = vmatpush.bf16.msra.mxu0 0
        %4001 = vmatpush.bf16.msra.mxu0 0
        %4002 = vmatpush.bf16.msra.mxu0 0
        %4003 = vmatpush.bf16.msra.mxu0 %v958
        %4004 = vmatmul.bf16.gmra.mxu0 %v3695
        %v4005 = vpop.f32.mrf.mxu0
        %v4006 = vadd.f32 %v3993, %v4005
        %v4007 = vpop.f32.mrf.mxu0
        %4008 = vdwg.mxu0
        %v4009 = vmax.f32 %v3720, %v3824
        %v4010 = vmax.f32 %v3746, %v3850
        %v4011 = vmax.f32 %v3772, %v3876
        %v4012 = vmax.f32 %v3798, %v3902
        %v4013 = vmax.f32 %v4009, %v3928
        %v4014 = vmax.f32 %v4010, %v3954
        %v4015 = vmax.f32 %v4011, %v3980
        %v4016 = vmax.f32 %v4012, %v4006
        %v4017 = vadd.f32 %v4013, %v1281
        %v4018 = vadd.f32 %v4014, %v1282
        %v4019 = vadd.f32 %v4015, %v1283
        %v4020 = vadd.f32 %v4016, %v1284
        %v4021 = vmax.f32 %v4017, 0.0
        %v4022 = vmax.f32 %v4018, 0.0
        %v4023 = vmax.f32 %v4019, 0.0
        %v4024 = vmax.f32 %v4020, 0.0
        %4029 = vrot.lane.b32.xlu0 %v4021, 112
        %v4030 = vpop.permute.xlu0 %4029
        %4031 = vrot.lane.b32.xlu0 %v4022, 112
        %v4032 = vpop.permute.xlu0 %4031
        %4033 = vrot.lane.b32.xlu0 %v4023, 112
        %v4034 = vpop.permute.xlu0 %4033
        %4035 = vrot.lane.b32.xlu0 %v4024, 112
        %v4036 = vpop.permute.xlu0 %4035
        %v4037 = vsel %vm1309, %v4030, %v4032
        %v4038 = vsel %vm1309, %v4032, %v4034
        %v4039 = vsel %vm1309, %v4034, %v4036
        %v4044 = vmax.f32 %v4021, %v4037
        %v4045 = vmax.f32 %v4022, %v4038
        %v4046 = vmax.f32 %v4023, %v4039
        %v4047 = vmax.f32 %v4024, %v4036
        %4048 = vrot.lane.b32.xlu0 %v4021, 96
        %v4049 = vpop.permute.xlu0 %4048
        %4050 = vrot.lane.b32.xlu0 %v4022, 96
        %v4051 = vpop.permute.xlu0 %4050
        %4052 = vrot.lane.b32.xlu0 %v4023, 96
        %v4053 = vpop.permute.xlu0 %4052
        %4054 = vrot.lane.b32.xlu0 %v4024, 96
        %v4055 = vpop.permute.xlu0 %4054
        %v4056 = vsel %vm1329, %v4049, %v4051
        %v4057 = vsel %vm1329, %v4051, %v4053
        %v4058 = vsel %vm1329, %v4053, %v4055
        %v4063 = vmax.f32 %v4044, %v4056
        %v4064 = vmax.f32 %v4045, %v4057
        %v4065 = vmax.f32 %v4046, %v4058
        %v4066 = vmax.f32 %v4047, %v4055
        %v4067 = vld [vmem:[%s3 + $0x3c0] sm:$0xf]
        %v4068 = vld [vmem:[%s3 + $0x3c4] sm:$0xf]
        %v4069 = vld [vmem:[%s3 + $0x3c8] sm:$0xf]
        %v4070 = vld [vmem:[%s3 + $0x3cc] sm:$0xf]
        %v4071 = vld [vmem:[%s3 + $0x3d0] sm:$0xf]
        %v4072 = vld [vmem:[%s3 + $0x3d4] sm:$0xf]
        %v4073 = vld [vmem:[%s3 + $0x3d8] sm:$0xf]
        %v4074 = vld [vmem:[%s3 + $0x3dc] sm:$0xf]
        %v4075 = vld [vmem:[%s3 + $0x3e0] sm:$0xf]
        %v4076 = vld [vmem:[%s3 + $0x3e4] sm:$0xf]
        %v4077 = vld [vmem:[%s3 + $0x3e8] sm:$0xf]
        %v4078 = vld [vmem:[%s3 + $0x3ec] sm:$0xf]
        %v4079 = vld [vmem:[%s3 + $0x3f0] sm:$0xf]
        %v4080 = vld [vmem:[%s3 + $0x3f4] sm:$0xf]
        %v4081 = vld [vmem:[%s3 + $0x3f8] sm:$0xf]
        %v4082 = vld [vmem:[%s3 + $0x3fc] sm:$0xf]
        %v4083 = vld [vmem:[%s3 + $0x400] sm:$0xf]
        %v4084 = vld [vmem:[%s3 + $0x404] sm:$0xf]
        %v4085 = vld [vmem:[%s3 + $0x408] sm:$0xf]
        %v4086 = vld [vmem:[%s3 + $0x40c] sm:$0xf]
        %v4087 = vld [vmem:[%s3 + $0x410] sm:$0xf]
        %v4088 = vld [vmem:[%s3 + $0x414] sm:$0xf]
        %v4089 = vld [vmem:[%s3 + $0x418] sm:$0xf]
        %v4090 = vld [vmem:[%s3 + $0x41c] sm:$0xf]
        %v4091 = vld [vmem:[%s3 + $0x420] sm:$0xf]
        %v4092 = vld [vmem:[%s3 + $0x424] sm:$0xf]
        %v4093 = vld [vmem:[%s3 + $0x428] sm:$0xf]
        %v4094 = vld [vmem:[%s3 + $0x42c] sm:$0xf]
        %v4095 = vld [vmem:[%s3 + $0x430] sm:$0xf]
        %v4096 = vld [vmem:[%s3 + $0x434] sm:$0xf]
        %v4097 = vld [vmem:[%s3 + $0x438] sm:$0xf]
        %v4098 = vld [vmem:[%s3 + $0x43c] sm:$0xf]
        %v4099 = vld [vmem:[%s3 + $0x440] sm:$0xf]
        %v4100 = vld [vmem:[%s3 + $0x444] sm:$0xf]
        %v4101 = vld [vmem:[%s3 + $0x448] sm:$0xf]
        %v4102 = vld [vmem:[%s3 + $0x44c] sm:$0xf]
        %v4103 = vld [vmem:[%s3 + $0x450] sm:$0xf]
        %v4104 = vld [vmem:[%s3 + $0x454] sm:$0xf]
        %v4105 = vld [vmem:[%s3 + $0x458] sm:$0xf]
        %v4106 = vld [vmem:[%s3 + $0x45c] sm:$0xf]
        %v4107 = vld [vmem:[%s3 + $0x460] sm:$0xf]
        %v4108 = vld [vmem:[%s3 + $0x464] sm:$0xf]
        %v4109 = vld [vmem:[%s3 + $0x468] sm:$0xf]
        %v4110 = vld [vmem:[%s3 + $0x46c] sm:$0xf]
        %v4111 = vld [vmem:[%s3 + $0x470] sm:$0xf]
        %v4112 = vld [vmem:[%s3 + $0x474] sm:$0xf]
        %v4113 = vld [vmem:[%s3 + $0x478] sm:$0xf]
        %v4114 = vld [vmem:[%s3 + $0x47c] sm:$0xf]
        %v4115 = vld [vmem:[%s3 + $0x480] sm:$0xf]
        %v4116 = vld [vmem:[%s3 + $0x484] sm:$0xf]
        %v4117 = vld [vmem:[%s3 + $0x488] sm:$0xf]
        %v4118 = vld [vmem:[%s3 + $0x48c] sm:$0xf]
        %v4119 = vld [vmem:[%s3 + $0x490] sm:$0xf]
        %v4120 = vld [vmem:[%s3 + $0x494] sm:$0xf]
        %v4121 = vld [vmem:[%s3 + $0x498] sm:$0xf]
        %v4122 = vld [vmem:[%s3 + $0x49c] sm:$0xf]
        %v4123 = vld [vmem:[%s3 + $0x4a0] sm:$0xf]
        %v4124 = vld [vmem:[%s3 + $0x4a4] sm:$0xf]
        %v4125 = vld [vmem:[%s3 + $0x4a8] sm:$0xf]
        %v4126 = vld [vmem:[%s3 + $0x4ac] sm:$0xf]
        %v4127 = vpack.c.bf16 %v4063, %v4063
        %v4128 = vpack.c.bf16 %v4064, %v4064
        %v4129 = vpack.c.bf16 %v4065, %v4065
        %v4130 = vpack.c.bf16 %v4066, %v4066
        %v4191 = vunpack.c.l.b16 %v4067
        %v4192 = vunpack.c.l.b16 %v4068
        %v4193 = vunpack.c.l.b16 %v4069
        %v4194 = vunpack.c.l.b16 %v4070
        %v4195 = vunpack.c.l.b16 %v4071
        %v4196 = vunpack.c.l.b16 %v4072
        %v4197 = vunpack.c.l.b16 %v4073
        %v4198 = vunpack.c.l.b16 %v4074
        %v4199 = vunpack.c.l.b16 %v4075
        %v4200 = vunpack.c.l.b16 %v4076
        %v4201 = vunpack.c.l.b16 %v4077
        %v4202 = vunpack.c.l.b16 %v4078
        %v4203 = vunpack.c.l.b16 %v4079
        %v4204 = vunpack.c.l.b16 %v4080
        %v4205 = vunpack.c.l.b16 %v4081
        %v4206 = vunpack.c.l.b16 %v4082
        %v4207 = vunpack.c.l.b16 %v4083
        %v4208 = vunpack.c.l.b16 %v4084
        %v4209 = vunpack.c.l.b16 %v4085
        %v4210 = vunpack.c.l.b16 %v4086
        %v4211 = vunpack.c.l.b16 %v4087
        %v4212 = vunpack.c.l.b16 %v4088
        %v4213 = vunpack.c.l.b16 %v4089
        %v4214 = vunpack.c.l.b16 %v4090
        %v4215 = vunpack.c.l.b16 %v4091
        %v4216 = vunpack.c.l.b16 %v4092
        %v4217 = vunpack.c.l.b16 %v4093
        %v4218 = vunpack.c.l.b16 %v4094
        %v4219 = vunpack.c.l.b16 %v4095
        %v4220 = vunpack.c.l.b16 %v4096
        %v4221 = vunpack.c.l.b16 %v4097
        %v4222 = vunpack.c.l.b16 %v4098
        %v4223 = vunpack.c.l.b16 %v4099
        %v4224 = vunpack.c.l.b16 %v4100
        %v4225 = vunpack.c.l.b16 %v4101
        %v4226 = vunpack.c.l.b16 %v4102
        %v4227 = vunpack.c.l.b16 %v4103
        %v4228 = vunpack.c.l.b16 %v4104
        %v4229 = vunpack.c.l.b16 %v4105
        %v4230 = vunpack.c.l.b16 %v4106
        %v4231 = vunpack.c.l.b16 %v4107
        %v4232 = vunpack.c.l.b16 %v4108
        %v4233 = vunpack.c.l.b16 %v4109
        %v4234 = vunpack.c.l.b16 %v4110
        %v4235 = vunpack.c.l.b16 %v4111
        %v4236 = vunpack.c.l.b16 %v4112
        %v4237 = vunpack.c.l.b16 %v4113
        %v4238 = vunpack.c.l.b16 %v4114
        %v4239 = vunpack.c.l.b16 %v4115
        %v4240 = vunpack.c.l.b16 %v4116
        %v4241 = vunpack.c.l.b16 %v4117
        %v4242 = vunpack.c.l.b16 %v4118
        %v4243 = vunpack.c.l.b16 %v4119
        %v4244 = vunpack.c.l.b16 %v4120
        %v4245 = vunpack.c.l.b16 %v4121
        %v4246 = vunpack.c.l.b16 %v4122
        %v4247 = vunpack.c.l.b16 %v4123
        %v4248 = vunpack.c.l.b16 %v4124
        %v4249 = vunpack.c.l.b16 %v4125
        %v4250 = vunpack.c.l.b16 %v4126
        %v4251 = vpack.c.b16 %v4192, %v4191
        %v4252 = vpack.c.b16 %v4194, %v4193
        %v4253 = vpack.c.b16 %v4196, %v4195
        %v4254 = vpack.c.b16 %v4198, %v4197
        %v4255 = vpack.c.b16 %v4200, %v4199
        %v4256 = vpack.c.b16 %v4202, %v4201
        %v4257 = vpack.c.b16 %v4204, %v4203
        %v4258 = vpack.c.b16 %v4206, %v4205
        %v4259 = vpack.c.b16 %v4208, %v4207
        %v4260 = vpack.c.b16 %v4210, %v4209
        %v4261 = vpack.c.b16 %v4212, %v4211
        %v4262 = vpack.c.b16 %v4214, %v4213
        %v4263 = vpack.c.b16 %v4216, %v4215
        %v4264 = vpack.c.b16 %v4218, %v4217
        %v4265 = vpack.c.b16 %v4220, %v4219
        %v4266 = vpack.c.b16 %v4222, %v4221
        %v4267 = vpack.c.b16 %v4224, %v4223
        %v4268 = vpack.c.b16 %v4226, %v4225
        %v4269 = vpack.c.b16 %v4228, %v4227
        %v4270 = vpack.c.b16 %v4230, %v4229
        %v4271 = vpack.c.b16 %v4232, %v4231
        %v4272 = vpack.c.b16 %v4234, %v4233
        %v4273 = vpack.c.b16 %v4236, %v4235
        %v4274 = vpack.c.b16 %v4238, %v4237
        %v4275 = vpack.c.b16 %v4240, %v4239
        %v4276 = vpack.c.b16 %v4242, %v4241
        %v4277 = vpack.c.b16 %v4244, %v4243
        %v4278 = vpack.c.b16 %v4246, %v4245
        %v4279 = vpack.c.b16 %v4248, %v4247
        %v4280 = vpack.c.b16 %v4250, %v4249
        %v4312 = vsel %vm1329, %v4130, 0
        %4314 = vmatpush.bf16.msra.mxu0 %v4258
        %4315 = vmatpush.bf16.msra.mxu0 %v4257
        %4316 = vmatpush.bf16.msra.mxu0 %v4256
        %4317 = vmatpush.bf16.msra.mxu0 %v4255
        %4318 = vmatpush.bf16.msra.mxu0 %v4254
        %4319 = vmatpush.bf16.msra.mxu0 %v4253
        %4320 = vmatpush.bf16.msra.mxu0 %v4252
        %4321 = vmatpush.bf16.msra.mxu0 %v4251
        %4322 = vmatmul.bf16.gmra.mxu0 %v4127
        %v4323 = vpop.f32.mrf.mxu0
        %v4324 = vadd.f32 0.0, %v4323
        %v4325 = vpop.f32.mrf.mxu0
        %4326 = vdwg.mxu0
        %4327 = vmatpush.bf16.msra.mxu0 %v4266
        %4328 = vmatpush.bf16.msra.mxu0 %v4265
        %4329 = vmatpush.bf16.msra.mxu0 %v4264
        %4330 = vmatpush.bf16.msra.mxu0 %v4263
        %4331 = vmatpush.bf16.msra.mxu0 %v4262
        %4332 = vmatpush.bf16.msra.mxu0 %v4261
        %4333 = vmatpush.bf16.msra.mxu0 %v4260
        %4334 = vmatpush.bf16.msra.mxu0 %v4259
        %4335 = vmatmul.bf16.gmra.mxu0 %v4128
        %v4336 = vpop.f32.mrf.mxu0
        %v4337 = vadd.f32 %v4324, %v4336
        %v4338 = vpop.f32.mrf.mxu0
        %4339 = vdwg.mxu0
        %4340 = vmatpush.bf16.msra.mxu0 %v4274
        %4341 = vmatpush.bf16.msra.mxu0 %v4273
        %4342 = vmatpush.bf16.msra.mxu0 %v4272
        %4343 = vmatpush.bf16.msra.mxu0 %v4271
        %4344 = vmatpush.bf16.msra.mxu0 %v4270
        %4345 = vmatpush.bf16.msra.mxu0 %v4269
        %4346 = vmatpush.bf16.msra.mxu0 %v4268
        %4347 = vmatpush.bf16.msra.mxu0 %v4267
        %4348 = vmatmul.bf16.gmra.mxu0 %v4129
        %v4349 = vpop.f32.mrf.mxu0
        %v4350 = vadd.f32 %v4337, %v4349
        %v4351 = vpop.f32.mrf.mxu0
        %4352 = vdwg.mxu0
        %4353 = vmatpush.bf16.msra.mxu0 0
        %4354 = vmatpush.bf16.msra.mxu0 0
        %4355 = vmatpush.bf16.msra.mxu0 %v4280
        %4356 = vmatpush.bf16.msra.mxu0 %v4279
        %4357 = vmatpush.bf16.msra.mxu0 %v4278
        %4358 = vmatpush.bf16.msra.mxu0 %v4277
        %4359 = vmatpush.bf16.msra.mxu0 %v4276
        %4360 = vmatpush.bf16.msra.mxu0 %v4275
        %4361 = vmatmul.bf16.gmra.mxu0 %v4312
        %v4362 = vpop.f32.mrf.mxu0
        %v4363 = vadd.f32 %v4350, %v4362
        %v4364 = vpop.f32.mrf.mxu0
        %4365 = vdwg.mxu0
        %v4366 = vadd.f32 %v3686, %v4363
        %v4367 = vld [vmem:[%s276 + $0x10] sm:$0xff]
        %v4368 = vld [vmem:[%s276 + $0x18] sm:$0xff]
        %v4369 = vpack.c.bf16 %v4367, %v4367
        %v4370 = vpack.c.bf16 %v4368, %v4368
        %4373 = vrot.lane.b32.xlu0 %v4369, 104
        %v4374 = vpop.permute.xlu0 %4373
        %4375 = vrot.lane.b32.xlu0 %v4370, 104
        %v4376 = vpop.permute.xlu0 %4375
        %vm4377 = vcmask 850944
        %v4378 = vsel %vm4377, %v4374, %v4376
        %v4381 = vsel %vm919, %v4376, 0
        %4383 = vmatpush.bf16.msra.mxu0 %v799
        %4384 = vmatpush.bf16.msra.mxu0 %v787
        %4385 = vmatpush.bf16.msra.mxu0 %v775
        %4386 = vmatpush.bf16.msra.mxu0 %v763
        %4387 = vmatpush.bf16.msra.mxu0 %v751
        %4388 = vmatpush.bf16.msra.mxu0 %v739
        %4389 = vmatpush.bf16.msra.mxu0 %v727
        %4390 = vmatpush.bf16.msra.mxu0 %v715
        %4391 = vmatmul.bf16.gmra.mxu0 %v4378
        %v4392 = vpop.f32.mrf.mxu0
        %v4393 = vadd.f32 0.0, %v4392
        %v4394 = vpop.f32.mrf.mxu0
        %4395 = vdwg.mxu0
        %4396 = vmatpush.bf16.msra.mxu0 0
        %4397 = vmatpush.bf16.msra.mxu0 0
        %4398 = vmatpush.bf16.msra.mxu0 0
        %4399 = vmatpush.bf16.msra.mxu0 0
        %4400 = vmatpush.bf16.msra.mxu0 0
        %4401 = vmatpush.bf16.msra.mxu0 0
        %4402 = vmatpush.bf16.msra.mxu0 0
        %4403 = vmatpush.bf16.msra.mxu0 %v925
        %4404 = vmatmul.bf16.gmra.mxu0 %v4381
        %v4405 = vpop.f32.mrf.mxu0
        %v4406 = vadd.f32 %v4393, %v4405
        %v4407 = vpop.f32.mrf.mxu0
        %4408 = vdwg.mxu0
        %4409 = vmatpush.bf16.msra.mxu0 %v800
        %4410 = vmatpush.bf16.msra.mxu0 %v788
        %4411 = vmatpush.bf16.msra.mxu0 %v776
        %4412 = vmatpush.bf16.msra.mxu0 %v764
        %4413 = vmatpush.bf16.msra.mxu0 %v752
        %4414 = vmatpush.bf16.msra.mxu0 %v740
        %4415 = vmatpush.bf16.msra.mxu0 %v728
        %4416 = vmatpush.bf16.msra.mxu0 %v716
        %4417 = vmatmul.bf16.gmra.mxu0 %v4378
        %v4418 = vpop.f32.mrf.mxu0
        %v4419 = vadd.f32 0.0, %v4418
        %v4420 = vpop.f32.mrf.mxu0
        %4421 = vdwg.mxu0
        %4422 = vmatpush.bf16.msra.mxu0 0
        %4423 = vmatpush.bf16.msra.mxu0 0
        %4424 = vmatpush.bf16.msra.mxu0 0
        %4425 = vmatpush.bf16.msra.mxu0 0
        %4426 = vmatpush.bf16.msra.mxu0 0
        %4427 = vmatpush.bf16.msra.mxu0 0
        %4428 = vmatpush.bf16.msra.mxu0 0
        %4429 = vmatpush.bf16.msra.mxu0 %v928
        %4430 = vmatmul.bf16.gmra.mxu0 %v4381
        %v4431 = vpop.f32.mrf.mxu0
        %v4432 = vadd.f32 %v4419, %v4431
        %v4433 = vpop.f32.mrf.mxu0
        %4434 = vdwg.mxu0
        %4435 = vmatpush.bf16.msra.mxu0 %v801
        %4436 = vmatpush.bf16.msra.mxu0 %v789
        %4437 = vmatpush.bf16.msra.mxu0 %v777
        %4438 = vmatpush.bf16.msra.mxu0 %v765
        %4439 = vmatpush.bf16.msra.mxu0 %v753
        %4440 = vmatpush.bf16.msra.mxu0 %v741
        %4441 = vmatpush.bf16.msra.mxu0 %v729
        %4442 = vmatpush.bf16.msra.mxu0 %v717
        %4443 = vmatmul.bf16.gmra.mxu0 %v4378
        %v4444 = vpop.f32.mrf.mxu0
        %v4445 = vadd.f32 0.0, %v4444
        %v4446 = vpop.f32.mrf.mxu0
        %4447 = vdwg.mxu0
        %4448 = vmatpush.bf16.msra.mxu0 0
        %4449 = vmatpush.bf16.msra.mxu0 0
        %4450 = vmatpush.bf16.msra.mxu0 0
        %4451 = vmatpush.bf16.msra.mxu0 0
        %4452 = vmatpush.bf16.msra.mxu0 0
        %4453 = vmatpush.bf16.msra.mxu0 0
        %4454 = vmatpush.bf16.msra.mxu0 0
        %4455 = vmatpush.bf16.msra.mxu0 %v931
        %4456 = vmatmul.bf16.gmra.mxu0 %v4381
        %v4457 = vpop.f32.mrf.mxu0
        %v4458 = vadd.f32 %v4445, %v4457
        %v4459 = vpop.f32.mrf.mxu0
        %4460 = vdwg.mxu0
        %4461 = vmatpush.bf16.msra.mxu0 %v802
        %4462 = vmatpush.bf16.msra.mxu0 %v790
        %4463 = vmatpush.bf16.msra.mxu0 %v778
        %4464 = vmatpush.bf16.msra.mxu0 %v766
        %4465 = vmatpush.bf16.msra.mxu0 %v754
        %4466 = vmatpush.bf16.msra.mxu0 %v742
        %4467 = vmatpush.bf16.msra.mxu0 %v730
        %4468 = vmatpush.bf16.msra.mxu0 %v718
        %4469 = vmatmul.bf16.gmra.mxu0 %v4378
        %v4470 = vpop.f32.mrf.mxu0
        %v4471 = vadd.f32 0.0, %v4470
        %v4472 = vpop.f32.mrf.mxu0
        %4473 = vdwg.mxu0
        %4474 = vmatpush.bf16.msra.mxu0 0
        %4475 = vmatpush.bf16.msra.mxu0 0
        %4476 = vmatpush.bf16.msra.mxu0 0
        %4477 = vmatpush.bf16.msra.mxu0 0
        %4478 = vmatpush.bf16.msra.mxu0 0
        %4479 = vmatpush.bf16.msra.mxu0 0
        %4480 = vmatpush.bf16.msra.mxu0 0
        %4481 = vmatpush.bf16.msra.mxu0 %v934
        %4482 = vmatmul.bf16.gmra.mxu0 %v4381
        %v4483 = vpop.f32.mrf.mxu0
        %v4484 = vadd.f32 %v4471, %v4483
        %v4485 = vpop.f32.mrf.mxu0
        %4486 = vdwg.mxu0
        %4487 = vmatpush.bf16.msra.mxu0 %v803
        %4488 = vmatpush.bf16.msra.mxu0 %v791
        %4489 = vmatpush.bf16.msra.mxu0 %v779
        %4490 = vmatpush.bf16.msra.mxu0 %v767
        %4491 = vmatpush.bf16.msra.mxu0 %v755
        %4492 = vmatpush.bf16.msra.mxu0 %v743
        %4493 = vmatpush.bf16.msra.mxu0 %v731
        %4494 = vmatpush.bf16.msra.mxu0 %v719
        %4495 = vmatmul.bf16.gmra.mxu0 %v4378
        %v4496 = vpop.f32.mrf.mxu0
        %v4497 = vadd.f32 0.0, %v4496
        %v4498 = vpop.f32.mrf.mxu0
        %4499 = vdwg.mxu0
        %4500 = vmatpush.bf16.msra.mxu0 0
        %4501 = vmatpush.bf16.msra.mxu0 0
        %4502 = vmatpush.bf16.msra.mxu0 0
        %4503 = vmatpush.bf16.msra.mxu0 0
        %4504 = vmatpush.bf16.msra.mxu0 0
        %4505 = vmatpush.bf16.msra.mxu0 0
        %4506 = vmatpush.bf16.msra.mxu0 0
        %4507 = vmatpush.bf16.msra.mxu0 %v937
        %4508 = vmatmul.bf16.gmra.mxu0 %v4381
        %v4509 = vpop.f32.mrf.mxu0
        %v4510 = vadd.f32 %v4497, %v4509
        %v4511 = vpop.f32.mrf.mxu0
        %4512 = vdwg.mxu0
        %4513 = vmatpush.bf16.msra.mxu0 %v804
        %4514 = vmatpush.bf16.msra.mxu0 %v792
        %4515 = vmatpush.bf16.msra.mxu0 %v780
        %4516 = vmatpush.bf16.msra.mxu0 %v768
        %4517 = vmatpush.bf16.msra.mxu0 %v756
        %4518 = vmatpush.bf16.msra.mxu0 %v744
        %4519 = vmatpush.bf16.msra.mxu0 %v732
        %4520 = vmatpush.bf16.msra.mxu0 %v720
        %4521 = vmatmul.bf16.gmra.mxu0 %v4378
        %v4522 = vpop.f32.mrf.mxu0
        %v4523 = vadd.f32 0.0, %v4522
        %v4524 = vpop.f32.mrf.mxu0
        %4525 = vdwg.mxu0
        %4526 = vmatpush.bf16.msra.mxu0 0
        %4527 = vmatpush.bf16.msra.mxu0 0
        %4528 = vmatpush.bf16.msra.mxu0 0
        %4529 = vmatpush.bf16.msra.mxu0 0
        %4530 = vmatpush.bf16.msra.mxu0 0
        %4531 = vmatpush.bf16.msra.mxu0 0
        %4532 = vmatpush.bf16.msra.mxu0 0
        %4533 = vmatpush.bf16.msra.mxu0 %v940
        %4534 = vmatmul.bf16.gmra.mxu0 %v4381
        %v4535 = vpop.f32.mrf.mxu0
        %v4536 = vadd.f32 %v4523, %v4535
        %v4537 = vpop.f32.mrf.mxu0
        %4538 = vdwg.mxu0
        %4539 = vmatpush.bf16.msra.mxu0 %v805
        %4540 = vmatpush.bf16.msra.mxu0 %v793
        %4541 = vmatpush.bf16.msra.mxu0 %v781
        %4542 = vmatpush.bf16.msra.mxu0 %v769
        %4543 = vmatpush.bf16.msra.mxu0 %v757
        %4544 = vmatpush.bf16.msra.mxu0 %v745
        %4545 = vmatpush.bf16.msra.mxu0 %v733
        %4546 = vmatpush.bf16.msra.mxu0 %v721
        %4547 = vmatmul.bf16.gmra.mxu0 %v4378
        %v4548 = vpop.f32.mrf.mxu0
        %v4549 = vadd.f32 0.0, %v4548
        %v4550 = vpop.f32.mrf.mxu0
        %4551 = vdwg.mxu0
        %4552 = vmatpush.bf16.msra.mxu0 0
        %4553 = vmatpush.bf16.msra.mxu0 0
        %4554 = vmatpush.bf16.msra.mxu0 0
        %4555 = vmatpush.bf16.msra.mxu0 0
        %4556 = vmatpush.bf16.msra.mxu0 0
        %4557 = vmatpush.bf16.msra.mxu0 0
        %4558 = vmatpush.bf16.msra.mxu0 0
        %4559 = vmatpush.bf16.msra.mxu0 %v943
        %4560 = vmatmul.bf16.gmra.mxu0 %v4381
        %v4561 = vpop.f32.mrf.mxu0
        %v4562 = vadd.f32 %v4549, %v4561
        %v4563 = vpop.f32.mrf.mxu0
        %4564 = vdwg.mxu0
        %4565 = vmatpush.bf16.msra.mxu0 %v806
        %4566 = vmatpush.bf16.msra.mxu0 %v794
        %4567 = vmatpush.bf16.msra.mxu0 %v782
        %4568 = vmatpush.bf16.msra.mxu0 %v770
        %4569 = vmatpush.bf16.msra.mxu0 %v758
        %4570 = vmatpush.bf16.msra.mxu0 %v746
        %4571 = vmatpush.bf16.msra.mxu0 %v734
        %4572 = vmatpush.bf16.msra.mxu0 %v722
        %4573 = vmatmul.bf16.gmra.mxu0 %v4378
        %v4574 = vpop.f32.mrf.mxu0
        %v4575 = vadd.f32 0.0, %v4574
        %v4576 = vpop.f32.mrf.mxu0
        %4577 = vdwg.mxu0
        %4578 = vmatpush.bf16.msra.mxu0 0
        %4579 = vmatpush.bf16.msra.mxu0 0
        %4580 = vmatpush.bf16.msra.mxu0 0
        %4581 = vmatpush.bf16.msra.mxu0 0
        %4582 = vmatpush.bf16.msra.mxu0 0
        %4583 = vmatpush.bf16.msra.mxu0 0
        %4584 = vmatpush.bf16.msra.mxu0 0
        %4585 = vmatpush.bf16.msra.mxu0 %v946
        %4586 = vmatmul.bf16.gmra.mxu0 %v4381
        %v4587 = vpop.f32.mrf.mxu0
        %v4588 = vadd.f32 %v4575, %v4587
        %v4589 = vpop.f32.mrf.mxu0
        %4590 = vdwg.mxu0
        %4591 = vmatpush.bf16.msra.mxu0 %v807
        %4592 = vmatpush.bf16.msra.mxu0 %v795
        %4593 = vmatpush.bf16.msra.mxu0 %v783
        %4594 = vmatpush.bf16.msra.mxu0 %v771
        %4595 = vmatpush.bf16.msra.mxu0 %v759
        %4596 = vmatpush.bf16.msra.mxu0 %v747
        %4597 = vmatpush.bf16.msra.mxu0 %v735
        %4598 = vmatpush.bf16.msra.mxu0 %v723
        %4599 = vmatmul.bf16.gmra.mxu0 %v4378
        %v4600 = vpop.f32.mrf.mxu0
        %v4601 = vadd.f32 0.0, %v4600
        %v4602 = vpop.f32.mrf.mxu0
        %4603 = vdwg.mxu0
        %4604 = vmatpush.bf16.msra.mxu0 0
        %4605 = vmatpush.bf16.msra.mxu0 0
        %4606 = vmatpush.bf16.msra.mxu0 0
        %4607 = vmatpush.bf16.msra.mxu0 0
        %4608 = vmatpush.bf16.msra.mxu0 0
        %4609 = vmatpush.bf16.msra.mxu0 0
        %4610 = vmatpush.bf16.msra.mxu0 0
        %4611 = vmatpush.bf16.msra.mxu0 %v949
        %4612 = vmatmul.bf16.gmra.mxu0 %v4381
        %v4613 = vpop.f32.mrf.mxu0
        %v4614 = vadd.f32 %v4601, %v4613
        %v4615 = vpop.f32.mrf.mxu0
        %4616 = vdwg.mxu0
        %4617 = vmatpush.bf16.msra.mxu0 %v808
        %4618 = vmatpush.bf16.msra.mxu0 %v796
        %4619 = vmatpush.bf16.msra.mxu0 %v784
        %4620 = vmatpush.bf16.msra.mxu0 %v772
        %4621 = vmatpush.bf16.msra.mxu0 %v760
        %4622 = vmatpush.bf16.msra.mxu0 %v748
        %4623 = vmatpush.bf16.msra.mxu0 %v736
        %4624 = vmatpush.bf16.msra.mxu0 %v724
        %4625 = vmatmul.bf16.gmra.mxu0 %v4378
        %v4626 = vpop.f32.mrf.mxu0
        %v4627 = vadd.f32 0.0, %v4626
        %v4628 = vpop.f32.mrf.mxu0
        %4629 = vdwg.mxu0
        %4630 = vmatpush.bf16.msra.mxu0 0
        %4631 = vmatpush.bf16.msra.mxu0 0
        %4632 = vmatpush.bf16.msra.mxu0 0
        %4633 = vmatpush.bf16.msra.mxu0 0
        %4634 = vmatpush.bf16.msra.mxu0 0
        %4635 = vmatpush.bf16.msra.mxu0 0
        %4636 = vmatpush.bf16.msra.mxu0 0
        %4637 = vmatpush.bf16.msra.mxu0 %v952
        %4638 = vmatmul.bf16.gmra.mxu0 %v4381
        %v4639 = vpop.f32.mrf.mxu0
        %v4640 = vadd.f32 %v4627, %v4639
        %v4641 = vpop.f32.mrf.mxu0
        %4642 = vdwg.mxu0
        %4643 = vmatpush.bf16.msra.mxu0 %v809
        %4644 = vmatpush.bf16.msra.mxu0 %v797
        %4645 = vmatpush.bf16.msra.mxu0 %v785
        %4646 = vmatpush.bf16.msra.mxu0 %v773
        %4647 = vmatpush.bf16.msra.mxu0 %v761
        %4648 = vmatpush.bf16.msra.mxu0 %v749
        %4649 = vmatpush.bf16.msra.mxu0 %v737
        %4650 = vmatpush.bf16.msra.mxu0 %v725
        %4651 = vmatmul.bf16.gmra.mxu0 %v4378
        %v4652 = vpop.f32.mrf.mxu0
        %v4653 = vadd.f32 0.0, %v4652
        %v4654 = vpop.f32.mrf.mxu0
        %4655 = vdwg.mxu0
        %4656 = vmatpush.bf16.msra.mxu0 0
        %4657 = vmatpush.bf16.msra.mxu0 0
        %4658 = vmatpush.bf16.msra.mxu0 0
        %4659 = vmatpush.bf16.msra.mxu0 0
        %4660 = vmatpush.bf16.msra.mxu0 0
        %4661 = vmatpush.bf16.msra.mxu0 0
        %4662 = vmatpush.bf16.msra.mxu0 0
        %4663 = vmatpush.bf16.msra.mxu0 %v955
        %4664 = vmatmul.bf16.gmra.mxu0 %v4381
        %v4665 = vpop.f32.mrf.mxu0
        %v4666 = vadd.f32 %v4653, %v4665
        %v4667 = vpop.f32.mrf.mxu0
        %4668 = vdwg.mxu0
        %4669 = vmatpush.bf16.msra.mxu0 %v810
        %4670 = vmatpush.bf16.msra.mxu0 %v798
        %4671 = vmatpush.bf16.msra.mxu0 %v786
        %4672 = vmatpush.bf16.msra.mxu0 %v774
        %4673 = vmatpush.bf16.msra.mxu0 %v762
        %4674 = vmatpush.bf16.msra.mxu0 %v750
        %4675 = vmatpush.bf16.msra.mxu0 %v738
        %4676 = vmatpush.bf16.msra.mxu0 %v726
        %4677 = vmatmul.bf16.gmra.mxu0 %v4378
        %v4678 = vpop.f32.mrf.mxu0
        %v4679 = vadd.f32 0.0, %v4678
        %v4680 = vpop.f32.mrf.mxu0
        %4681 = vdwg.mxu0
        %4682 = vmatpush.bf16.msra.mxu0 0
        %4683 = vmatpush.bf16.msra.mxu0 0
        %4684 = vmatpush.bf16.msra.mxu0 0
        %4685 = vmatpush.bf16.msra.mxu0 0
        %4686 = vmatpush.bf16.msra.mxu0 0
        %4687 = vmatpush.bf16.msra.mxu0 0
        %4688 = vmatpush.bf16.msra.mxu0 0
        %4689 = vmatpush.bf16.msra.mxu0 %v958
        %4690 = vmatmul.bf16.gmra.mxu0 %v4381
        %v4691 = vpop.f32.mrf.mxu0
        %v4692 = vadd.f32 %v4679, %v4691
        %v4693 = vpop.f32.mrf.mxu0
        %4694 = vdwg.mxu0
        %v4695 = vmax.f32 %v4406, %v4510
        %v4696 = vmax.f32 %v4432, %v4536
        %v4697 = vmax.f32 %v4458, %v4562
        %v4698 = vmax.f32 %v4484, %v4588
        %v4699 = vmax.f32 %v4695, %v4614
        %v4700 = vmax.f32 %v4696, %v4640
        %v4701 = vmax.f32 %v4697, %v4666
        %v4702 = vmax.f32 %v4698, %v4692
        %v4703 = vadd.f32 %v4699, %v1281
        %v4704 = vadd.f32 %v4700, %v1282
        %v4705 = vadd.f32 %v4701, %v1283
        %v4706 = vadd.f32 %v4702, %v1284
        %v4707 = vmax.f32 %v4703, 0.0
        %v4708 = vmax.f32 %v4704, 0.0
        %v4709 = vmax.f32 %v4705, 0.0
        %v4710 = vmax.f32 %v4706, 0.0
        %4715 = vrot.lane.b32.xlu0 %v4707, 112
        %v4716 = vpop.permute.xlu0 %4715
        %4717 = vrot.lane.b32.xlu0 %v4708, 112
        %v4718 = vpop.permute.xlu0 %4717
        %4719 = vrot.lane.b32.xlu0 %v4709, 112
        %v4720 = vpop.permute.xlu0 %4719
        %4721 = vrot.lane.b32.xlu0 %v4710, 112
        %v4722 = vpop.permute.xlu0 %4721
        %v4723 = vsel %vm1309, %v4716, %v4718
        %v4724 = vsel %vm1309, %v4718, %v4720
        %v4725 = vsel %vm1309, %v4720, %v4722
        %v4730 = vmax.f32 %v4707, %v4723
        %v4731 = vmax.f32 %v4708, %v4724
        %v4732 = vmax.f32 %v4709, %v4725
        %v4733 = vmax.f32 %v4710, %v4722
        %4734 = vrot.lane.b32.xlu0 %v4707, 96
        %v4735 = vpop.permute.xlu0 %4734
        %4736 = vrot.lane.b32.xlu0 %v4708, 96
        %v4737 = vpop.permute.xlu0 %4736
        %4738 = vrot.lane.b32.xlu0 %v4709, 96
        %v4739 = vpop.permute.xlu0 %4738
        %4740 = vrot.lane.b32.xlu0 %v4710, 96
        %v4741 = vpop.permute.xlu0 %4740
        %v4742 = vsel %vm1329, %v4735, %v4737
        %v4743 = vsel %vm1329, %v4737, %v4739
        %v4744 = vsel %vm1329, %v4739, %v4741
        %v4749 = vmax.f32 %v4730, %v4742
        %v4750 = vmax.f32 %v4731, %v4743
        %v4751 = vmax.f32 %v4732, %v4744
        %v4752 = vmax.f32 %v4733, %v4741
        %v4753 = vld [vmem:[%s3 + $0x4b0] sm:$0xf]
        %v4754 = vld [vmem:[%s3 + $0x4b4] sm:$0xf]
        %v4755 = vld [vmem:[%s3 + $0x4b8] sm:$0xf]
        %v4756 = vld [vmem:[%s3 + $0x4bc] sm:$0xf]
        %v4757 = vld [vmem:[%s3 + $0x4c0] sm:$0xf]
        %v4758 = vld [vmem:[%s3 + $0x4c4] sm:$0xf]
        %v4759 = vld [vmem:[%s3 + $0x4c8] sm:$0xf]
        %v4760 = vld [vmem:[%s3 + $0x4cc] sm:$0xf]
        %v4761 = vld [vmem:[%s3 + $0x4d0] sm:$0xf]
        %v4762 = vld [vmem:[%s3 + $0x4d4] sm:$0xf]
        %v4763 = vld [vmem:[%s3 + $0x4d8] sm:$0xf]
        %v4764 = vld [vmem:[%s3 + $0x4dc] sm:$0xf]
        %v4765 = vld [vmem:[%s3 + $0x4e0] sm:$0xf]
        %v4766 = vld [vmem:[%s3 + $0x4e4] sm:$0xf]
        %v4767 = vld [vmem:[%s3 + $0x4e8] sm:$0xf]
        %v4768 = vld [vmem:[%s3 + $0x4ec] sm:$0xf]
        %v4769 = vld [vmem:[%s3 + $0x4f0] sm:$0xf]
        %v4770 = vld [vmem:[%s3 + $0x4f4] sm:$0xf]
        %v4771 = vld [vmem:[%s3 + $0x4f8] sm:$0xf]
        %v4772 = vld [vmem:[%s3 + $0x4fc] sm:$0xf]
        %v4773 = vld [vmem:[%s3 + $0x500] sm:$0xf]
        %v4774 = vld [vmem:[%s3 + $0x504] sm:$0xf]
        %v4775 = vld [vmem:[%s3 + $0x508] sm:$0xf]
        %v4776 = vld [vmem:[%s3 + $0x50c] sm:$0xf]
        %v4777 = vld [vmem:[%s3 + $0x510] sm:$0xf]
        %v4778 = vld [vmem:[%s3 + $0x514] sm:$0xf]
        %v4779 = vld [vmem:[%s3 + $0x518] sm:$0xf]
        %v4780 = vld [vmem:[%s3 + $0x51c] sm:$0xf]
        %v4781 = vld [vmem:[%s3 + $0x520] sm:$0xf]
        %v4782 = vld [vmem:[%s3 + $0x524] sm:$0xf]
        %v4783 = vld [vmem:[%s3 + $0x528] sm:$0xf]
        %v4784 = vld [vmem:[%s3 + $0x52c] sm:$0xf]
        %v4785 = vld [vmem:[%s3 + $0x530] sm:$0xf]
        %v4786 = vld [vmem:[%s3 + $0x534] sm:$0xf]
        %v4787 = vld [vmem:[%s3 + $0x538] sm:$0xf]
        %v4788 = vld [vmem:[%s3 + $0x53c] sm:$0xf]
        %v4789 = vld [vmem:[%s3 + $0x540] sm:$0xf]
        %v4790 = vld [vmem:[%s3 + $0x544] sm:$0xf]
        %v4791 = vld [vmem:[%s3 + $0x548] sm:$0xf]
        %v4792 = vld [vmem:[%s3 + $0x54c] sm:$0xf]
        %v4793 = vld [vmem:[%s3 + $0x550] sm:$0xf]
        %v4794 = vld [vmem:[%s3 + $0x554] sm:$0xf]
        %v4795 = vld [vmem:[%s3 + $0x558] sm:$0xf]
        %v4796 = vld [vmem:[%s3 + $0x55c] sm:$0xf]
        %v4797 = vld [vmem:[%s3 + $0x560] sm:$0xf]
        %v4798 = vld [vmem:[%s3 + $0x564] sm:$0xf]
        %v4799 = vld [vmem:[%s3 + $0x568] sm:$0xf]
        %v4800 = vld [vmem:[%s3 + $0x56c] sm:$0xf]
        %v4801 = vld [vmem:[%s3 + $0x570] sm:$0xf]
        %v4802 = vld [vmem:[%s3 + $0x574] sm:$0xf]
        %v4803 = vld [vmem:[%s3 + $0x578] sm:$0xf]
        %v4804 = vld [vmem:[%s3 + $0x57c] sm:$0xf]
        %v4805 = vld [vmem:[%s3 + $0x580] sm:$0xf]
        %v4806 = vld [vmem:[%s3 + $0x584] sm:$0xf]
        %v4807 = vld [vmem:[%s3 + $0x588] sm:$0xf]
        %v4808 = vld [vmem:[%s3 + $0x58c] sm:$0xf]
        %v4809 = vld [vmem:[%s3 + $0x590] sm:$0xf]
        %v4810 = vld [vmem:[%s3 + $0x594] sm:$0xf]
        %v4811 = vld [vmem:[%s3 + $0x598] sm:$0xf]
        %v4812 = vld [vmem:[%s3 + $0x59c] sm:$0xf]
        %v4813 = vpack.c.bf16 %v4749, %v4749
        %v4814 = vpack.c.bf16 %v4750, %v4750
        %v4815 = vpack.c.bf16 %v4751, %v4751
        %v4816 = vpack.c.bf16 %v4752, %v4752
        %v4877 = vunpack.c.l.b16 %v4753
        %v4878 = vunpack.c.l.b16 %v4754
        %v4879 = vunpack.c.l.b16 %v4755
        %v4880 = vunpack.c.l.b16 %v4756
        %v4881 = vunpack.c.l.b16 %v4757
        %v4882 = vunpack.c.l.b16 %v4758
        %v4883 = vunpack.c.l.b16 %v4759
        %v4884 = vunpack.c.l.b16 %v4760
        %v4885 = vunpack.c.l.b16 %v4761
        %v4886 = vunpack.c.l.b16 %v4762
        %v4887 = vunpack.c.l.b16 %v4763
        %v4888 = vunpack.c.l.b16 %v4764
        %v4889 = vunpack.c.l.b16 %v4765
        %v4890 = vunpack.c.l.b16 %v4766
        %v4891 = vunpack.c.l.b16 %v4767
        %v4892 = vunpack.c.l.b16 %v4768
        %v4893 = vunpack.c.l.b16 %v4769
        %v4894 = vunpack.c.l.b16 %v4770
        %v4895 = vunpack.c.l.b16 %v4771
        %v4896 = vunpack.c.l.b16 %v4772
        %v4897 = vunpack.c.l.b16 %v4773
        %v4898 = vunpack.c.l.b16 %v4774
        %v4899 = vunpack.c.l.b16 %v4775
        %v4900 = vunpack.c.l.b16 %v4776
        %v4901 = vunpack.c.l.b16 %v4777
        %v4902 = vunpack.c.l.b16 %v4778
        %v4903 = vunpack.c.l.b16 %v4779
        %v4904 = vunpack.c.l.b16 %v4780
        %v4905 = vunpack.c.l.b16 %v4781
        %v4906 = vunpack.c.l.b16 %v4782
        %v4907 = vunpack.c.l.b16 %v4783
        %v4908 = vunpack.c.l.b16 %v4784
        %v4909 = vunpack.c.l.b16 %v4785
        %v4910 = vunpack.c.l.b16 %v4786
        %v4911 = vunpack.c.l.b16 %v4787
        %v4912 = vunpack.c.l.b16 %v4788
        %v4913 = vunpack.c.l.b16 %v4789
        %v4914 = vunpack.c.l.b16 %v4790
        %v4915 = vunpack.c.l.b16 %v4791
        %v4916 = vunpack.c.l.b16 %v4792
        %v4917 = vunpack.c.l.b16 %v4793
        %v4918 = vunpack.c.l.b16 %v4794
        %v4919 = vunpack.c.l.b16 %v4795
        %v4920 = vunpack.c.l.b16 %v4796
        %v4921 = vunpack.c.l.b16 %v4797
        %v4922 = vunpack.c.l.b16 %v4798
        %v4923 = vunpack.c.l.b16 %v4799
        %v4924 = vunpack.c.l.b16 %v4800
        %v4925 = vunpack.c.l.b16 %v4801
        %v4926 = vunpack.c.l.b16 %v4802
        %v4927 = vunpack.c.l.b16 %v4803
        %v4928 = vunpack.c.l.b16 %v4804
        %v4929 = vunpack.c.l.b16 %v4805
        %v4930 = vunpack.c.l.b16 %v4806
        %v4931 = vunpack.c.l.b16 %v4807
        %v4932 = vunpack.c.l.b16 %v4808
        %v4933 = vunpack.c.l.b16 %v4809
        %v4934 = vunpack.c.l.b16 %v4810
        %v4935 = vunpack.c.l.b16 %v4811
        %v4936 = vunpack.c.l.b16 %v4812
        %v4937 = vpack.c.b16 %v4878, %v4877
        %v4938 = vpack.c.b16 %v4880, %v4879
        %v4939 = vpack.c.b16 %v4882, %v4881
        %v4940 = vpack.c.b16 %v4884, %v4883
        %v4941 = vpack.c.b16 %v4886, %v4885
        %v4942 = vpack.c.b16 %v4888, %v4887
        %v4943 = vpack.c.b16 %v4890, %v4889
        %v4944 = vpack.c.b16 %v4892, %v4891
        %v4945 = vpack.c.b16 %v4894, %v4893
        %v4946 = vpack.c.b16 %v4896, %v4895
        %v4947 = vpack.c.b16 %v4898, %v4897
        %v4948 = vpack.c.b16 %v4900, %v4899
        %v4949 = vpack.c.b16 %v4902, %v4901
        %v4950 = vpack.c.b16 %v4904, %v4903
        %v4951 = vpack.c.b16 %v4906, %v4905
        %v4952 = vpack.c.b16 %v4908, %v4907
        %v4953 = vpack.c.b16 %v4910, %v4909
        %v4954 = vpack.c.b16 %v4912, %v4911
        %v4955 = vpack.c.b16 %v4914, %v4913
        %v4956 = vpack.c.b16 %v4916, %v4915
        %v4957 = vpack.c.b16 %v4918, %v4917
        %v4958 = vpack.c.b16 %v4920, %v4919
        %v4959 = vpack.c.b16 %v4922, %v4921
        %v4960 = vpack.c.b16 %v4924, %v4923
        %v4961 = vpack.c.b16 %v4926, %v4925
        %v4962 = vpack.c.b16 %v4928, %v4927
        %v4963 = vpack.c.b16 %v4930, %v4929
        %v4964 = vpack.c.b16 %v4932, %v4931
        %v4965 = vpack.c.b16 %v4934, %v4933
        %v4966 = vpack.c.b16 %v4936, %v4935
        %v4998 = vsel %vm1329, %v4816, 0
        %5000 = vmatpush.bf16.msra.mxu0 %v4944
        %5001 = vmatpush.bf16.msra.mxu0 %v4943
        %5002 = vmatpush.bf16.msra.mxu0 %v4942
        %5003 = vmatpush.bf16.msra.mxu0 %v4941
        %5004 = vmatpush.bf16.msra.mxu0 %v4940
        %5005 = vmatpush.bf16.msra.mxu0 %v4939
        %5006 = vmatpush.bf16.msra.mxu0 %v4938
        %5007 = vmatpush.bf16.msra.mxu0 %v4937
        %5008 = vmatmul.bf16.gmra.mxu0 %v4813
        %v5009 = vpop.f32.mrf.mxu0
        %v5010 = vadd.f32 0.0, %v5009
        %v5011 = vpop.f32.mrf.mxu0
        %5012 = vdwg.mxu0
        %5013 = vmatpush.bf16.msra.mxu0 %v4952
        %5014 = vmatpush.bf16.msra.mxu0 %v4951
        %5015 = vmatpush.bf16.msra.mxu0 %v4950
        %5016 = vmatpush.bf16.msra.mxu0 %v4949
        %5017 = vmatpush.bf16.msra.mxu0 %v4948
        %5018 = vmatpush.bf16.msra.mxu0 %v4947
        %5019 = vmatpush.bf16.msra.mxu0 %v4946
        %5020 = vmatpush.bf16.msra.mxu0 %v4945
        %5021 = vmatmul.bf16.gmra.mxu0 %v4814
        %v5022 = vpop.f32.mrf.mxu0
        %v5023 = vadd.f32 %v5010, %v5022
        %v5024 = vpop.f32.mrf.mxu0
        %5025 = vdwg.mxu0
        %5026 = vmatpush.bf16.msra.mxu0 %v4960
        %5027 = vmatpush.bf16.msra.mxu0 %v4959
        %5028 = vmatpush.bf16.msra.mxu0 %v4958
        %5029 = vmatpush.bf16.msra.mxu0 %v4957
        %5030 = vmatpush.bf16.msra.mxu0 %v4956
        %5031 = vmatpush.bf16.msra.mxu0 %v4955
        %5032 = vmatpush.bf16.msra.mxu0 %v4954
        %5033 = vmatpush.bf16.msra.mxu0 %v4953
        %5034 = vmatmul.bf16.gmra.mxu0 %v4815
        %v5035 = vpop.f32.mrf.mxu0
        %v5036 = vadd.f32 %v5023, %v5035
        %v5037 = vpop.f32.mrf.mxu0
        %5038 = vdwg.mxu0
        %5039 = vmatpush.bf16.msra.mxu0 0
        %5040 = vmatpush.bf16.msra.mxu0 0
        %5041 = vmatpush.bf16.msra.mxu0 %v4966
        %5042 = vmatpush.bf16.msra.mxu0 %v4965
        %5043 = vmatpush.bf16.msra.mxu0 %v4964
        %5044 = vmatpush.bf16.msra.mxu0 %v4963
        %5045 = vmatpush.bf16.msra.mxu0 %v4962
        %5046 = vmatpush.bf16.msra.mxu0 %v4961
        %5047 = vmatmul.bf16.gmra.mxu0 %v4998
        %v5048 = vpop.f32.mrf.mxu0
        %v5049 = vadd.f32 %v5036, %v5048
        %v5050 = vpop.f32.mrf.mxu0
        %5051 = vdwg.mxu0
        %v5052 = vadd.f32 %v4366, %v5049
        %5053 = vrot.lane.b32.xlu0 %v4369, 48
        %v5054 = vpop.permute.xlu0 %5053
        %5055 = vrot.lane.b32.xlu0 %v4370, 48
        %v5056 = vpop.permute.xlu0 %5055
        %vm5057 = vcmask 392192
        %v5058 = vsel %vm5057, %v5054, %v5056
        %v5061 = vsel %vm919, %v5056, 0
        %5063 = vmatpush.bf16.msra.mxu0 %v799
        %5064 = vmatpush.bf16.msra.mxu0 %v787
        %5065 = vmatpush.bf16.msra.mxu0 %v775
        %5066 = vmatpush.bf16.msra.mxu0 %v763
        %5067 = vmatpush.bf16.msra.mxu0 %v751
        %5068 = vmatpush.bf16.msra.mxu0 %v739
        %5069 = vmatpush.bf16.msra.mxu0 %v727
        %5070 = vmatpush.bf16.msra.mxu0 %v715
        %5071 = vmatmul.bf16.gmra.mxu0 %v5058
        %v5072 = vpop.f32.mrf.mxu0
        %v5073 = vadd.f32 0.0, %v5072
        %v5074 = vpop.f32.mrf.mxu0
        %5075 = vdwg.mxu0
        %5076 = vmatpush.bf16.msra.mxu0 0
        %5077 = vmatpush.bf16.msra.mxu0 0
        %5078 = vmatpush.bf16.msra.mxu0 0
        %5079 = vmatpush.bf16.msra.mxu0 0
        %5080 = vmatpush.bf16.msra.mxu0 0
        %5081 = vmatpush.bf16.msra.mxu0 0
        %5082 = vmatpush.bf16.msra.mxu0 0
        %5083 = vmatpush.bf16.msra.mxu0 %v925
        %5084 = vmatmul.bf16.gmra.mxu0 %v5061
        %v5085 = vpop.f32.mrf.mxu0
        %v5086 = vadd.f32 %v5073, %v5085
        %v5087 = vpop.f32.mrf.mxu0
        %5088 = vdwg.mxu0
        %5089 = vmatpush.bf16.msra.mxu0 %v800
        %5090 = vmatpush.bf16.msra.mxu0 %v788
        %5091 = vmatpush.bf16.msra.mxu0 %v776
        %5092 = vmatpush.bf16.msra.mxu0 %v764
        %5093 = vmatpush.bf16.msra.mxu0 %v752
        %5094 = vmatpush.bf16.msra.mxu0 %v740
        %5095 = vmatpush.bf16.msra.mxu0 %v728
        %5096 = vmatpush.bf16.msra.mxu0 %v716
        %5097 = vmatmul.bf16.gmra.mxu0 %v5058
        %v5098 = vpop.f32.mrf.mxu0
        %v5099 = vadd.f32 0.0, %v5098
        %v5100 = vpop.f32.mrf.mxu0
        %5101 = vdwg.mxu0
        %5102 = vmatpush.bf16.msra.mxu0 0
        %5103 = vmatpush.bf16.msra.mxu0 0
        %5104 = vmatpush.bf16.msra.mxu0 0
        %5105 = vmatpush.bf16.msra.mxu0 0
        %5106 = vmatpush.bf16.msra.mxu0 0
        %5107 = vmatpush.bf16.msra.mxu0 0
        %5108 = vmatpush.bf16.msra.mxu0 0
        %5109 = vmatpush.bf16.msra.mxu0 %v928
        %5110 = vmatmul.bf16.gmra.mxu0 %v5061
        %v5111 = vpop.f32.mrf.mxu0
        %v5112 = vadd.f32 %v5099, %v5111
        %v5113 = vpop.f32.mrf.mxu0
        %5114 = vdwg.mxu0
        %5115 = vmatpush.bf16.msra.mxu0 %v801
        %5116 = vmatpush.bf16.msra.mxu0 %v789
        %5117 = vmatpush.bf16.msra.mxu0 %v777
        %5118 = vmatpush.bf16.msra.mxu0 %v765
        %5119 = vmatpush.bf16.msra.mxu0 %v753
        %5120 = vmatpush.bf16.msra.mxu0 %v741
        %5121 = vmatpush.bf16.msra.mxu0 %v729
        %5122 = vmatpush.bf16.msra.mxu0 %v717
        %5123 = vmatmul.bf16.gmra.mxu0 %v5058
        %v5124 = vpop.f32.mrf.mxu0
        %v5125 = vadd.f32 0.0, %v5124
        %v5126 = vpop.f32.mrf.mxu0
        %5127 = vdwg.mxu0
        %5128 = vmatpush.bf16.msra.mxu0 0
        %5129 = vmatpush.bf16.msra.mxu0 0
        %5130 = vmatpush.bf16.msra.mxu0 0
        %5131 = vmatpush.bf16.msra.mxu0 0
        %5132 = vmatpush.bf16.msra.mxu0 0
        %5133 = vmatpush.bf16.msra.mxu0 0
        %5134 = vmatpush.bf16.msra.mxu0 0
        %5135 = vmatpush.bf16.msra.mxu0 %v931
        %5136 = vmatmul.bf16.gmra.mxu0 %v5061
        %v5137 = vpop.f32.mrf.mxu0
        %v5138 = vadd.f32 %v5125, %v5137
        %v5139 = vpop.f32.mrf.mxu0
        %5140 = vdwg.mxu0
        %5141 = vmatpush.bf16.msra.mxu0 %v802
        %5142 = vmatpush.bf16.msra.mxu0 %v790
        %5143 = vmatpush.bf16.msra.mxu0 %v778
        %5144 = vmatpush.bf16.msra.mxu0 %v766
        %5145 = vmatpush.bf16.msra.mxu0 %v754
        %5146 = vmatpush.bf16.msra.mxu0 %v742
        %5147 = vmatpush.bf16.msra.mxu0 %v730
        %5148 = vmatpush.bf16.msra.mxu0 %v718
        %5149 = vmatmul.bf16.gmra.mxu0 %v5058
        %v5150 = vpop.f32.mrf.mxu0
        %v5151 = vadd.f32 0.0, %v5150
        %v5152 = vpop.f32.mrf.mxu0
        %5153 = vdwg.mxu0
        %5154 = vmatpush.bf16.msra.mxu0 0
        %5155 = vmatpush.bf16.msra.mxu0 0
        %5156 = vmatpush.bf16.msra.mxu0 0
        %5157 = vmatpush.bf16.msra.mxu0 0
        %5158 = vmatpush.bf16.msra.mxu0 0
        %5159 = vmatpush.bf16.msra.mxu0 0
        %5160 = vmatpush.bf16.msra.mxu0 0
        %5161 = vmatpush.bf16.msra.mxu0 %v934
        %5162 = vmatmul.bf16.gmra.mxu0 %v5061
        %v5163 = vpop.f32.mrf.mxu0
        %v5164 = vadd.f32 %v5151, %v5163
        %v5165 = vpop.f32.mrf.mxu0
        %5166 = vdwg.mxu0
        %5167 = vmatpush.bf16.msra.mxu0 %v803
        %5168 = vmatpush.bf16.msra.mxu0 %v791
        %5169 = vmatpush.bf16.msra.mxu0 %v779
        %5170 = vmatpush.bf16.msra.mxu0 %v767
        %5171 = vmatpush.bf16.msra.mxu0 %v755
        %5172 = vmatpush.bf16.msra.mxu0 %v743
        %5173 = vmatpush.bf16.msra.mxu0 %v731
        %5174 = vmatpush.bf16.msra.mxu0 %v719
        %5175 = vmatmul.bf16.gmra.mxu0 %v5058
        %v5176 = vpop.f32.mrf.mxu0
        %v5177 = vadd.f32 0.0, %v5176
        %v5178 = vpop.f32.mrf.mxu0
        %5179 = vdwg.mxu0
        %5180 = vmatpush.bf16.msra.mxu0 0
        %5181 = vmatpush.bf16.msra.mxu0 0
        %5182 = vmatpush.bf16.msra.mxu0 0
        %5183 = vmatpush.bf16.msra.mxu0 0
        %5184 = vmatpush.bf16.msra.mxu0 0
        %5185 = vmatpush.bf16.msra.mxu0 0
        %5186 = vmatpush.bf16.msra.mxu0 0
        %5187 = vmatpush.bf16.msra.mxu0 %v937
        %5188 = vmatmul.bf16.gmra.mxu0 %v5061
        %v5189 = vpop.f32.mrf.mxu0
        %v5190 = vadd.f32 %v5177, %v5189
        %v5191 = vpop.f32.mrf.mxu0
        %5192 = vdwg.mxu0
        %5193 = vmatpush.bf16.msra.mxu0 %v804
        %5194 = vmatpush.bf16.msra.mxu0 %v792
        %5195 = vmatpush.bf16.msra.mxu0 %v780
        %5196 = vmatpush.bf16.msra.mxu0 %v768
        %5197 = vmatpush.bf16.msra.mxu0 %v756
        %5198 = vmatpush.bf16.msra.mxu0 %v744
        %5199 = vmatpush.bf16.msra.mxu0 %v732
        %5200 = vmatpush.bf16.msra.mxu0 %v720
        %5201 = vmatmul.bf16.gmra.mxu0 %v5058
        %v5202 = vpop.f32.mrf.mxu0
        %v5203 = vadd.f32 0.0, %v5202
        %v5204 = vpop.f32.mrf.mxu0
        %5205 = vdwg.mxu0
        %5206 = vmatpush.bf16.msra.mxu0 0
        %5207 = vmatpush.bf16.msra.mxu0 0
        %5208 = vmatpush.bf16.msra.mxu0 0
        %5209 = vmatpush.bf16.msra.mxu0 0
        %5210 = vmatpush.bf16.msra.mxu0 0
        %5211 = vmatpush.bf16.msra.mxu0 0
        %5212 = vmatpush.bf16.msra.mxu0 0
        %5213 = vmatpush.bf16.msra.mxu0 %v940
        %5214 = vmatmul.bf16.gmra.mxu0 %v5061
        %v5215 = vpop.f32.mrf.mxu0
        %v5216 = vadd.f32 %v5203, %v5215
        %v5217 = vpop.f32.mrf.mxu0
        %5218 = vdwg.mxu0
        %5219 = vmatpush.bf16.msra.mxu0 %v805
        %5220 = vmatpush.bf16.msra.mxu0 %v793
        %5221 = vmatpush.bf16.msra.mxu0 %v781
        %5222 = vmatpush.bf16.msra.mxu0 %v769
        %5223 = vmatpush.bf16.msra.mxu0 %v757
        %5224 = vmatpush.bf16.msra.mxu0 %v745
        %5225 = vmatpush.bf16.msra.mxu0 %v733
        %5226 = vmatpush.bf16.msra.mxu0 %v721
        %5227 = vmatmul.bf16.gmra.mxu0 %v5058
        %v5228 = vpop.f32.mrf.mxu0
        %v5229 = vadd.f32 0.0, %v5228
        %v5230 = vpop.f32.mrf.mxu0
        %5231 = vdwg.mxu0
        %5232 = vmatpush.bf16.msra.mxu0 0
        %5233 = vmatpush.bf16.msra.mxu0 0
        %5234 = vmatpush.bf16.msra.mxu0 0
        %5235 = vmatpush.bf16.msra.mxu0 0
        %5236 = vmatpush.bf16.msra.mxu0 0
        %5237 = vmatpush.bf16.msra.mxu0 0
        %5238 = vmatpush.bf16.msra.mxu0 0
        %5239 = vmatpush.bf16.msra.mxu0 %v943
        %5240 = vmatmul.bf16.gmra.mxu0 %v5061
        %v5241 = vpop.f32.mrf.mxu0
        %v5242 = vadd.f32 %v5229, %v5241
        %v5243 = vpop.f32.mrf.mxu0
        %5244 = vdwg.mxu0
        %5245 = vmatpush.bf16.msra.mxu0 %v806
        %5246 = vmatpush.bf16.msra.mxu0 %v794
        %5247 = vmatpush.bf16.msra.mxu0 %v782
        %5248 = vmatpush.bf16.msra.mxu0 %v770
        %5249 = vmatpush.bf16.msra.mxu0 %v758
        %5250 = vmatpush.bf16.msra.mxu0 %v746
        %5251 = vmatpush.bf16.msra.mxu0 %v734
        %5252 = vmatpush.bf16.msra.mxu0 %v722
        %5253 = vmatmul.bf16.gmra.mxu0 %v5058
        %v5254 = vpop.f32.mrf.mxu0
        %v5255 = vadd.f32 0.0, %v5254
        %v5256 = vpop.f32.mrf.mxu0
        %5257 = vdwg.mxu0
        %5258 = vmatpush.bf16.msra.mxu0 0
        %5259 = vmatpush.bf16.msra.mxu0 0
        %5260 = vmatpush.bf16.msra.mxu0 0
        %5261 = vmatpush.bf16.msra.mxu0 0
        %5262 = vmatpush.bf16.msra.mxu0 0
        %5263 = vmatpush.bf16.msra.mxu0 0
        %5264 = vmatpush.bf16.msra.mxu0 0
        %5265 = vmatpush.bf16.msra.mxu0 %v946
        %5266 = vmatmul.bf16.gmra.mxu0 %v5061
        %v5267 = vpop.f32.mrf.mxu0
        %v5268 = vadd.f32 %v5255, %v5267
        %v5269 = vpop.f32.mrf.mxu0
        %5270 = vdwg.mxu0
        %5271 = vmatpush.bf16.msra.mxu0 %v807
        %5272 = vmatpush.bf16.msra.mxu0 %v795
        %5273 = vmatpush.bf16.msra.mxu0 %v783
        %5274 = vmatpush.bf16.msra.mxu0 %v771
        %5275 = vmatpush.bf16.msra.mxu0 %v759
        %5276 = vmatpush.bf16.msra.mxu0 %v747
        %5277 = vmatpush.bf16.msra.mxu0 %v735
        %5278 = vmatpush.bf16.msra.mxu0 %v723
        %5279 = vmatmul.bf16.gmra.mxu0 %v5058
        %v5280 = vpop.f32.mrf.mxu0
        %v5281 = vadd.f32 0.0, %v5280
        %v5282 = vpop.f32.mrf.mxu0
        %5283 = vdwg.mxu0
        %5284 = vmatpush.bf16.msra.mxu0 0
        %5285 = vmatpush.bf16.msra.mxu0 0
        %5286 = vmatpush.bf16.msra.mxu0 0
        %5287 = vmatpush.bf16.msra.mxu0 0
        %5288 = vmatpush.bf16.msra.mxu0 0
        %5289 = vmatpush.bf16.msra.mxu0 0
        %5290 = vmatpush.bf16.msra.mxu0 0
        %5291 = vmatpush.bf16.msra.mxu0 %v949
        %5292 = vmatmul.bf16.gmra.mxu0 %v5061
        %v5293 = vpop.f32.mrf.mxu0
        %v5294 = vadd.f32 %v5281, %v5293
        %v5295 = vpop.f32.mrf.mxu0
        %5296 = vdwg.mxu0
        %5297 = vmatpush.bf16.msra.mxu0 %v808
        %5298 = vmatpush.bf16.msra.mxu0 %v796
        %5299 = vmatpush.bf16.msra.mxu0 %v784
        %5300 = vmatpush.bf16.msra.mxu0 %v772
        %5301 = vmatpush.bf16.msra.mxu0 %v760
        %5302 = vmatpush.bf16.msra.mxu0 %v748
        %5303 = vmatpush.bf16.msra.mxu0 %v736
        %5304 = vmatpush.bf16.msra.mxu0 %v724
        %5305 = vmatmul.bf16.gmra.mxu0 %v5058
        %v5306 = vpop.f32.mrf.mxu0
        %v5307 = vadd.f32 0.0, %v5306
        %v5308 = vpop.f32.mrf.mxu0
        %5309 = vdwg.mxu0
        %5310 = vmatpush.bf16.msra.mxu0 0
        %5311 = vmatpush.bf16.msra.mxu0 0
        %5312 = vmatpush.bf16.msra.mxu0 0
        %5313 = vmatpush.bf16.msra.mxu0 0
        %5314 = vmatpush.bf16.msra.mxu0 0
        %5315 = vmatpush.bf16.msra.mxu0 0
        %5316 = vmatpush.bf16.msra.mxu0 0
        %5317 = vmatpush.bf16.msra.mxu0 %v952
        %5318 = vmatmul.bf16.gmra.mxu0 %v5061
        %v5319 = vpop.f32.mrf.mxu0
        %v5320 = vadd.f32 %v5307, %v5319
        %v5321 = vpop.f32.mrf.mxu0
        %5322 = vdwg.mxu0
        %5323 = vmatpush.bf16.msra.mxu0 %v809
        %5324 = vmatpush.bf16.msra.mxu0 %v797
        %5325 = vmatpush.bf16.msra.mxu0 %v785
        %5326 = vmatpush.bf16.msra.mxu0 %v773
        %5327 = vmatpush.bf16.msra.mxu0 %v761
        %5328 = vmatpush.bf16.msra.mxu0 %v749
        %5329 = vmatpush.bf16.msra.mxu0 %v737
        %5330 = vmatpush.bf16.msra.mxu0 %v725
        %5331 = vmatmul.bf16.gmra.mxu0 %v5058
        %v5332 = vpop.f32.mrf.mxu0
        %v5333 = vadd.f32 0.0, %v5332
        %v5334 = vpop.f32.mrf.mxu0
        %5335 = vdwg.mxu0
        %5336 = vmatpush.bf16.msra.mxu0 0
        %5337 = vmatpush.bf16.msra.mxu0 0
        %5338 = vmatpush.bf16.msra.mxu0 0
        %5339 = vmatpush.bf16.msra.mxu0 0
        %5340 = vmatpush.bf16.msra.mxu0 0
        %5341 = vmatpush.bf16.msra.mxu0 0
        %5342 = vmatpush.bf16.msra.mxu0 0
        %5343 = vmatpush.bf16.msra.mxu0 %v955
        %5344 = vmatmul.bf16.gmra.mxu0 %v5061
        %v5345 = vpop.f32.mrf.mxu0
        %v5346 = vadd.f32 %v5333, %v5345
        %v5347 = vpop.f32.mrf.mxu0
        %5348 = vdwg.mxu0
        %5349 = vmatpush.bf16.msra.mxu0 %v810
        %5350 = vmatpush.bf16.msra.mxu0 %v798
        %5351 = vmatpush.bf16.msra.mxu0 %v786
        %5352 = vmatpush.bf16.msra.mxu0 %v774
        %5353 = vmatpush.bf16.msra.mxu0 %v762
        %5354 = vmatpush.bf16.msra.mxu0 %v750
        %5355 = vmatpush.bf16.msra.mxu0 %v738
        %5356 = vmatpush.bf16.msra.mxu0 %v726
        %5357 = vmatmul.bf16.gmra.mxu0 %v5058
        %v5358 = vpop.f32.mrf.mxu0
        %v5359 = vadd.f32 0.0, %v5358
        %v5360 = vpop.f32.mrf.mxu0
        %5361 = vdwg.mxu0
        %5362 = vmatpush.bf16.msra.mxu0 0
        %5363 = vmatpush.bf16.msra.mxu0 0
        %5364 = vmatpush.bf16.msra.mxu0 0
        %5365 = vmatpush.bf16.msra.mxu0 0
        %5366 = vmatpush.bf16.msra.mxu0 0
        %5367 = vmatpush.bf16.msra.mxu0 0
        %5368 = vmatpush.bf16.msra.mxu0 0
        %5369 = vmatpush.bf16.msra.mxu0 %v958
        %5370 = vmatmul.bf16.gmra.mxu0 %v5061
        %v5371 = vpop.f32.mrf.mxu0
        %v5372 = vadd.f32 %v5359, %v5371
        %v5373 = vpop.f32.mrf.mxu0
        %5374 = vdwg.mxu0
        %v5375 = vmax.f32 %v5086, %v5190
        %v5376 = vmax.f32 %v5112, %v5216
        %v5377 = vmax.f32 %v5138, %v5242
        %v5378 = vmax.f32 %v5164, %v5268
        %v5379 = vmax.f32 %v5375, %v5294
        %v5380 = vmax.f32 %v5376, %v5320
        %v5381 = vmax.f32 %v5377, %v5346
        %v5382 = vmax.f32 %v5378, %v5372
        %v5383 = vadd.f32 %v5379, %v1281
        %v5384 = vadd.f32 %v5380, %v1282
        %v5385 = vadd.f32 %v5381, %v1283
        %v5386 = vadd.f32 %v5382, %v1284
        %v5387 = vmax.f32 %v5383, 0.0
        %v5388 = vmax.f32 %v5384, 0.0
        %v5389 = vmax.f32 %v5385, 0.0
        %v5390 = vmax.f32 %v5386, 0.0
        %5395 = vrot.lane.b32.xlu0 %v5387, 112
        %v5396 = vpop.permute.xlu0 %5395
        %5397 = vrot.lane.b32.xlu0 %v5388, 112
        %v5398 = vpop.permute.xlu0 %5397
        %5399 = vrot.lane.b32.xlu0 %v5389, 112
        %v5400 = vpop.permute.xlu0 %5399
        %5401 = vrot.lane.b32.xlu0 %v5390, 112
        %v5402 = vpop.permute.xlu0 %5401
        %v5403 = vsel %vm1309, %v5396, %v5398
        %v5404 = vsel %vm1309, %v5398, %v5400
        %v5405 = vsel %vm1309, %v5400, %v5402
        %v5410 = vmax.f32 %v5387, %v5403
        %v5411 = vmax.f32 %v5388, %v5404
        %v5412 = vmax.f32 %v5389, %v5405
        %v5413 = vmax.f32 %v5390, %v5402
        %5414 = vrot.lane.b32.xlu0 %v5387, 96
        %v5415 = vpop.permute.xlu0 %5414
        %5416 = vrot.lane.b32.xlu0 %v5388, 96
        %v5417 = vpop.permute.xlu0 %5416
        %5418 = vrot.lane.b32.xlu0 %v5389, 96
        %v5419 = vpop.permute.xlu0 %5418
        %5420 = vrot.lane.b32.xlu0 %v5390, 96
        %v5421 = vpop.permute.xlu0 %5420
        %v5422 = vsel %vm1329, %v5415, %v5417
        %v5423 = vsel %vm1329, %v5417, %v5419
        %v5424 = vsel %vm1329, %v5419, %v5421
        %v5429 = vmax.f32 %v5410, %v5422
        %v5430 = vmax.f32 %v5411, %v5423
        %v5431 = vmax.f32 %v5412, %v5424
        %v5432 = vmax.f32 %v5413, %v5421
        %v5433 = vld [vmem:[%s3 + $0x5a0] sm:$0xf]
        %v5434 = vld [vmem:[%s3 + $0x5a4] sm:$0xf]
        %v5435 = vld [vmem:[%s3 + $0x5a8] sm:$0xf]
        %v5436 = vld [vmem:[%s3 + $0x5ac] sm:$0xf]
        %v5437 = vld [vmem:[%s3 + $0x5b0] sm:$0xf]
        %v5438 = vld [vmem:[%s3 + $0x5b4] sm:$0xf]
        %v5439 = vld [vmem:[%s3 + $0x5b8] sm:$0xf]
        %v5440 = vld [vmem:[%s3 + $0x5bc] sm:$0xf]
        %v5441 = vld [vmem:[%s3 + $0x5c0] sm:$0xf]
        %v5442 = vld [vmem:[%s3 + $0x5c4] sm:$0xf]
        %v5443 = vld [vmem:[%s3 + $0x5c8] sm:$0xf]
        %v5444 = vld [vmem:[%s3 + $0x5cc] sm:$0xf]
        %v5445 = vld [vmem:[%s3 + $0x5d0] sm:$0xf]
        %v5446 = vld [vmem:[%s3 + $0x5d4] sm:$0xf]
        %v5447 = vld [vmem:[%s3 + $0x5d8] sm:$0xf]
        %v5448 = vld [vmem:[%s3 + $0x5dc] sm:$0xf]
        %v5449 = vld [vmem:[%s3 + $0x5e0] sm:$0xf]
        %v5450 = vld [vmem:[%s3 + $0x5e4] sm:$0xf]
        %v5451 = vld [vmem:[%s3 + $0x5e8] sm:$0xf]
        %v5452 = vld [vmem:[%s3 + $0x5ec] sm:$0xf]
        %v5453 = vld [vmem:[%s3 + $0x5f0] sm:$0xf]
        %v5454 = vld [vmem:[%s3 + $0x5f4] sm:$0xf]
        %v5455 = vld [vmem:[%s3 + $0x5f8] sm:$0xf]
        %v5456 = vld [vmem:[%s3 + $0x5fc] sm:$0xf]
        %v5457 = vld [vmem:[%s3 + $0x600] sm:$0xf]
        %v5458 = vld [vmem:[%s3 + $0x604] sm:$0xf]
        %v5459 = vld [vmem:[%s3 + $0x608] sm:$0xf]
        %v5460 = vld [vmem:[%s3 + $0x60c] sm:$0xf]
        %v5461 = vld [vmem:[%s3 + $0x610] sm:$0xf]
        %v5462 = vld [vmem:[%s3 + $0x614] sm:$0xf]
        %v5463 = vld [vmem:[%s3 + $0x618] sm:$0xf]
        %v5464 = vld [vmem:[%s3 + $0x61c] sm:$0xf]
        %v5465 = vld [vmem:[%s3 + $0x620] sm:$0xf]
        %v5466 = vld [vmem:[%s3 + $0x624] sm:$0xf]
        %v5467 = vld [vmem:[%s3 + $0x628] sm:$0xf]
        %v5468 = vld [vmem:[%s3 + $0x62c] sm:$0xf]
        %v5469 = vld [vmem:[%s3 + $0x630] sm:$0xf]
        %v5470 = vld [vmem:[%s3 + $0x634] sm:$0xf]
        %v5471 = vld [vmem:[%s3 + $0x638] sm:$0xf]
        %v5472 = vld [vmem:[%s3 + $0x63c] sm:$0xf]
        %v5473 = vld [vmem:[%s3 + $0x640] sm:$0xf]
        %v5474 = vld [vmem:[%s3 + $0x644] sm:$0xf]
        %v5475 = vld [vmem:[%s3 + $0x648] sm:$0xf]
        %v5476 = vld [vmem:[%s3 + $0x64c] sm:$0xf]
        %v5477 = vld [vmem:[%s3 + $0x650] sm:$0xf]
        %v5478 = vld [vmem:[%s3 + $0x654] sm:$0xf]
        %v5479 = vld [vmem:[%s3 + $0x658] sm:$0xf]
        %v5480 = vld [vmem:[%s3 + $0x65c] sm:$0xf]
        %v5481 = vld [vmem:[%s3 + $0x660] sm:$0xf]
        %v5482 = vld [vmem:[%s3 + $0x664] sm:$0xf]
        %v5483 = vld [vmem:[%s3 + $0x668] sm:$0xf]
        %v5484 = vld [vmem:[%s3 + $0x66c] sm:$0xf]
        %v5485 = vld [vmem:[%s3 + $0x670] sm:$0xf]
        %v5486 = vld [vmem:[%s3 + $0x674] sm:$0xf]
        %v5487 = vld [vmem:[%s3 + $0x678] sm:$0xf]
        %v5488 = vld [vmem:[%s3 + $0x67c] sm:$0xf]
        %v5489 = vld [vmem:[%s3 + $0x680] sm:$0xf]
        %v5490 = vld [vmem:[%s3 + $0x684] sm:$0xf]
        %v5491 = vld [vmem:[%s3 + $0x688] sm:$0xf]
        %v5492 = vld [vmem:[%s3 + $0x68c] sm:$0xf]
        %v5493 = vpack.c.bf16 %v5429, %v5429
        %v5494 = vpack.c.bf16 %v5430, %v5430
        %v5495 = vpack.c.bf16 %v5431, %v5431
        %v5496 = vpack.c.bf16 %v5432, %v5432
        %v5557 = vunpack.c.l.b16 %v5433
        %v5558 = vunpack.c.l.b16 %v5434
        %v5559 = vunpack.c.l.b16 %v5435
        %v5560 = vunpack.c.l.b16 %v5436
        %v5561 = vunpack.c.l.b16 %v5437
        %v5562 = vunpack.c.l.b16 %v5438
        %v5563 = vunpack.c.l.b16 %v5439
        %v5564 = vunpack.c.l.b16 %v5440
        %v5565 = vunpack.c.l.b16 %v5441
        %v5566 = vunpack.c.l.b16 %v5442
        %v5567 = vunpack.c.l.b16 %v5443
        %v5568 = vunpack.c.l.b16 %v5444
        %v5569 = vunpack.c.l.b16 %v5445
        %v5570 = vunpack.c.l.b16 %v5446
        %v5571 = vunpack.c.l.b16 %v5447
        %v5572 = vunpack.c.l.b16 %v5448
        %v5573 = vunpack.c.l.b16 %v5449
        %v5574 = vunpack.c.l.b16 %v5450
        %v5575 = vunpack.c.l.b16 %v5451
        %v5576 = vunpack.c.l.b16 %v5452
        %v5577 = vunpack.c.l.b16 %v5453
        %v5578 = vunpack.c.l.b16 %v5454
        %v5579 = vunpack.c.l.b16 %v5455
        %v5580 = vunpack.c.l.b16 %v5456
        %v5581 = vunpack.c.l.b16 %v5457
        %v5582 = vunpack.c.l.b16 %v5458
        %v5583 = vunpack.c.l.b16 %v5459
        %v5584 = vunpack.c.l.b16 %v5460
        %v5585 = vunpack.c.l.b16 %v5461
        %v5586 = vunpack.c.l.b16 %v5462
        %v5587 = vunpack.c.l.b16 %v5463
        %v5588 = vunpack.c.l.b16 %v5464
        %v5589 = vunpack.c.l.b16 %v5465
        %v5590 = vunpack.c.l.b16 %v5466
        %v5591 = vunpack.c.l.b16 %v5467
        %v5592 = vunpack.c.l.b16 %v5468
        %v5593 = vunpack.c.l.b16 %v5469
        %v5594 = vunpack.c.l.b16 %v5470
        %v5595 = vunpack.c.l.b16 %v5471
        %v5596 = vunpack.c.l.b16 %v5472
        %v5597 = vunpack.c.l.b16 %v5473
        %v5598 = vunpack.c.l.b16 %v5474
        %v5599 = vunpack.c.l.b16 %v5475
        %v5600 = vunpack.c.l.b16 %v5476
        %v5601 = vunpack.c.l.b16 %v5477
        %v5602 = vunpack.c.l.b16 %v5478
        %v5603 = vunpack.c.l.b16 %v5479
        %v5604 = vunpack.c.l.b16 %v5480
        %v5605 = vunpack.c.l.b16 %v5481
        %v5606 = vunpack.c.l.b16 %v5482
        %v5607 = vunpack.c.l.b16 %v5483
        %v5608 = vunpack.c.l.b16 %v5484
        %v5609 = vunpack.c.l.b16 %v5485
        %v5610 = vunpack.c.l.b16 %v5486
        %v5611 = vunpack.c.l.b16 %v5487
        %v5612 = vunpack.c.l.b16 %v5488
        %v5613 = vunpack.c.l.b16 %v5489
        %v5614 = vunpack.c.l.b16 %v5490
        %v5615 = vunpack.c.l.b16 %v5491
        %v5616 = vunpack.c.l.b16 %v5492
        %v5617 = vpack.c.b16 %v5558, %v5557
        %v5618 = vpack.c.b16 %v5560, %v5559
        %v5619 = vpack.c.b16 %v5562, %v5561
        %v5620 = vpack.c.b16 %v5564, %v5563
        %v5621 = vpack.c.b16 %v5566, %v5565
        %v5622 = vpack.c.b16 %v5568, %v5567
        %v5623 = vpack.c.b16 %v5570, %v5569
        %v5624 = vpack.c.b16 %v5572, %v5571
        %v5625 = vpack.c.b16 %v5574, %v5573
        %v5626 = vpack.c.b16 %v5576, %v5575
        %v5627 = vpack.c.b16 %v5578, %v5577
        %v5628 = vpack.c.b16 %v5580, %v5579
        %v5629 = vpack.c.b16 %v5582, %v5581
        %v5630 = vpack.c.b16 %v5584, %v5583
        %v5631 = vpack.c.b16 %v5586, %v5585
        %v5632 = vpack.c.b16 %v5588, %v5587
        %v5633 = vpack.c.b16 %v5590, %v5589
        %v5634 = vpack.c.b16 %v5592, %v5591
        %v5635 = vpack.c.b16 %v5594, %v5593
        %v5636 = vpack.c.b16 %v5596, %v5595
        %v5637 = vpack.c.b16 %v5598, %v5597
        %v5638 = vpack.c.b16 %v5600, %v5599
        %v5639 = vpack.c.b16 %v5602, %v5601
        %v5640 = vpack.c.b16 %v5604, %v5603
        %v5641 = vpack.c.b16 %v5606, %v5605
        %v5642 = vpack.c.b16 %v5608, %v5607
        %v5643 = vpack.c.b16 %v5610, %v5609
        %v5644 = vpack.c.b16 %v5612, %v5611
        %v5645 = vpack.c.b16 %v5614, %v5613
        %v5646 = vpack.c.b16 %v5616, %v5615
        %v5678 = vsel %vm1329, %v5496, 0
        %5680 = vmatpush.bf16.msra.mxu0 %v5624
        %5681 = vmatpush.bf16.msra.mxu0 %v5623
        %5682 = vmatpush.bf16.msra.mxu0 %v5622
        %5683 = vmatpush.bf16.msra.mxu0 %v5621
        %5684 = vmatpush.bf16.msra.mxu0 %v5620
        %5685 = vmatpush.bf16.msra.mxu0 %v5619
        %5686 = vmatpush.bf16.msra.mxu0 %v5618
        %5687 = vmatpush.bf16.msra.mxu0 %v5617
        %5688 = vmatmul.bf16.gmra.mxu0 %v5493
        %v5689 = vpop.f32.mrf.mxu0
        %v5690 = vadd.f32 0.0, %v5689
        %v5691 = vpop.f32.mrf.mxu0
        %5692 = vdwg.mxu0
        %5693 = vmatpush.bf16.msra.mxu0 %v5632
        %5694 = vmatpush.bf16.msra.mxu0 %v5631
        %5695 = vmatpush.bf16.msra.mxu0 %v5630
        %5696 = vmatpush.bf16.msra.mxu0 %v5629
        %5697 = vmatpush.bf16.msra.mxu0 %v5628
        %5698 = vmatpush.bf16.msra.mxu0 %v5627
        %5699 = vmatpush.bf16.msra.mxu0 %v5626
        %5700 = vmatpush.bf16.msra.mxu0 %v5625
        %5701 = vmatmul.bf16.gmra.mxu0 %v5494
        %v5702 = vpop.f32.mrf.mxu0
        %v5703 = vadd.f32 %v5690, %v5702
        %v5704 = vpop.f32.mrf.mxu0
        %5705 = vdwg.mxu0
        %5706 = vmatpush.bf16.msra.mxu0 %v5640
        %5707 = vmatpush.bf16.msra.mxu0 %v5639
        %5708 = vmatpush.bf16.msra.mxu0 %v5638
        %5709 = vmatpush.bf16.msra.mxu0 %v5637
        %5710 = vmatpush.bf16.msra.mxu0 %v5636
        %5711 = vmatpush.bf16.msra.mxu0 %v5635
        %5712 = vmatpush.bf16.msra.mxu0 %v5634
        %5713 = vmatpush.bf16.msra.mxu0 %v5633
        %5714 = vmatmul.bf16.gmra.mxu0 %v5495
        %v5715 = vpop.f32.mrf.mxu0
        %v5716 = vadd.f32 %v5703, %v5715
        %v5717 = vpop.f32.mrf.mxu0
        %5718 = vdwg.mxu0
        %5719 = vmatpush.bf16.msra.mxu0 0
        %5720 = vmatpush.bf16.msra.mxu0 0
        %5721 = vmatpush.bf16.msra.mxu0 %v5646
        %5722 = vmatpush.bf16.msra.mxu0 %v5645
        %5723 = vmatpush.bf16.msra.mxu0 %v5644
        %5724 = vmatpush.bf16.msra.mxu0 %v5643
        %5725 = vmatpush.bf16.msra.mxu0 %v5642
        %5726 = vmatpush.bf16.msra.mxu0 %v5641
        %5727 = vmatmul.bf16.gmra.mxu0 %v5678
        %v5728 = vpop.f32.mrf.mxu0
        %v5729 = vadd.f32 %v5716, %v5728
        %v5730 = vpop.f32.mrf.mxu0
        %5731 = vdwg.mxu0
        %v5732 = vadd.f32 %v5052, %v5729
        %v5733 = vld [vmem:[%s276 + $0x18] sm:$0xff]
        %v5734 = vld [vmem:[%s276 + $0x20] sm:$0xff]
        %v5735 = vpack.c.bf16 %v5733, %v5733
        %v5736 = vpack.c.bf16 %v5734, %v5734
        %5739 = vrot.lane.b32.xlu0 %v5735, 120
        %v5740 = vpop.permute.xlu0 %5739
        %5741 = vrot.lane.b32.xlu0 %v5736, 120
        %v5742 = vpop.permute.xlu0 %5741
        %vm5743 = vcmask 982016
        %v5744 = vsel %vm5743, %v5740, %v5742
        %v5747 = vsel %vm919, %v5742, 0
        %5749 = vmatpush.bf16.msra.mxu0 %v799
        %5750 = vmatpush.bf16.msra.mxu0 %v787
        %5751 = vmatpush.bf16.msra.mxu0 %v775
        %5752 = vmatpush.bf16.msra.mxu0 %v763
        %5753 = vmatpush.bf16.msra.mxu0 %v751
        %5754 = vmatpush.bf16.msra.mxu0 %v739
        %5755 = vmatpush.bf16.msra.mxu0 %v727
        %5756 = vmatpush.bf16.msra.mxu0 %v715
        %5757 = vmatmul.bf16.gmra.mxu0 %v5744
        %v5758 = vpop.f32.mrf.mxu0
        %v5759 = vadd.f32 0.0, %v5758
        %v5760 = vpop.f32.mrf.mxu0
        %5761 = vdwg.mxu0
        %5762 = vmatpush.bf16.msra.mxu0 0
        %5763 = vmatpush.bf16.msra.mxu0 0
        %5764 = vmatpush.bf16.msra.mxu0 0
        %5765 = vmatpush.bf16.msra.mxu0 0
        %5766 = vmatpush.bf16.msra.mxu0 0
        %5767 = vmatpush.bf16.msra.mxu0 0
        %5768 = vmatpush.bf16.msra.mxu0 0
        %5769 = vmatpush.bf16.msra.mxu0 %v925
        %5770 = vmatmul.bf16.gmra.mxu0 %v5747
        %v5771 = vpop.f32.mrf.mxu0
        %v5772 = vadd.f32 %v5759, %v5771
        %v5773 = vpop.f32.mrf.mxu0
        %5774 = vdwg.mxu0
        %5775 = vmatpush.bf16.msra.mxu0 %v800
        %5776 = vmatpush.bf16.msra.mxu0 %v788
        %5777 = vmatpush.bf16.msra.mxu0 %v776
        %5778 = vmatpush.bf16.msra.mxu0 %v764
        %5779 = vmatpush.bf16.msra.mxu0 %v752
        %5780 = vmatpush.bf16.msra.mxu0 %v740
        %5781 = vmatpush.bf16.msra.mxu0 %v728
        %5782 = vmatpush.bf16.msra.mxu0 %v716
        %5783 = vmatmul.bf16.gmra.mxu0 %v5744
        %v5784 = vpop.f32.mrf.mxu0
        %v5785 = vadd.f32 0.0, %v5784
        %v5786 = vpop.f32.mrf.mxu0
        %5787 = vdwg.mxu0
        %5788 = vmatpush.bf16.msra.mxu0 0
        %5789 = vmatpush.bf16.msra.mxu0 0
        %5790 = vmatpush.bf16.msra.mxu0 0
        %5791 = vmatpush.bf16.msra.mxu0 0
        %5792 = vmatpush.bf16.msra.mxu0 0
        %5793 = vmatpush.bf16.msra.mxu0 0
        %5794 = vmatpush.bf16.msra.mxu0 0
        %5795 = vmatpush.bf16.msra.mxu0 %v928
        %5796 = vmatmul.bf16.gmra.mxu0 %v5747
        %v5797 = vpop.f32.mrf.mxu0
        %v5798 = vadd.f32 %v5785, %v5797
        %v5799 = vpop.f32.mrf.mxu0
        %5800 = vdwg.mxu0
        %5801 = vmatpush.bf16.msra.mxu0 %v801
        %5802 = vmatpush.bf16.msra.mxu0 %v789
        %5803 = vmatpush.bf16.msra.mxu0 %v777
        %5804 = vmatpush.bf16.msra.mxu0 %v765
        %5805 = vmatpush.bf16.msra.mxu0 %v753
        %5806 = vmatpush.bf16.msra.mxu0 %v741
        %5807 = vmatpush.bf16.msra.mxu0 %v729
        %5808 = vmatpush.bf16.msra.mxu0 %v717
        %5809 = vmatmul.bf16.gmra.mxu0 %v5744
        %v5810 = vpop.f32.mrf.mxu0
        %v5811 = vadd.f32 0.0, %v5810
        %v5812 = vpop.f32.mrf.mxu0
        %5813 = vdwg.mxu0
        %5814 = vmatpush.bf16.msra.mxu0 0
        %5815 = vmatpush.bf16.msra.mxu0 0
        %5816 = vmatpush.bf16.msra.mxu0 0
        %5817 = vmatpush.bf16.msra.mxu0 0
        %5818 = vmatpush.bf16.msra.mxu0 0
        %5819 = vmatpush.bf16.msra.mxu0 0
        %5820 = vmatpush.bf16.msra.mxu0 0
        %5821 = vmatpush.bf16.msra.mxu0 %v931
        %5822 = vmatmul.bf16.gmra.mxu0 %v5747
        %v5823 = vpop.f32.mrf.mxu0
        %v5824 = vadd.f32 %v5811, %v5823
        %v5825 = vpop.f32.mrf.mxu0
        %5826 = vdwg.mxu0
        %5827 = vmatpush.bf16.msra.mxu0 %v802
        %5828 = vmatpush.bf16.msra.mxu0 %v790
        %5829 = vmatpush.bf16.msra.mxu0 %v778
        %5830 = vmatpush.bf16.msra.mxu0 %v766
        %5831 = vmatpush.bf16.msra.mxu0 %v754
        %5832 = vmatpush.bf16.msra.mxu0 %v742
        %5833 = vmatpush.bf16.msra.mxu0 %v730
        %5834 = vmatpush.bf16.msra.mxu0 %v718
        %5835 = vmatmul.bf16.gmra.mxu0 %v5744
        %v5836 = vpop.f32.mrf.mxu0
        %v5837 = vadd.f32 0.0, %v5836
        %v5838 = vpop.f32.mrf.mxu0
        %5839 = vdwg.mxu0
        %5840 = vmatpush.bf16.msra.mxu0 0
        %5841 = vmatpush.bf16.msra.mxu0 0
        %5842 = vmatpush.bf16.msra.mxu0 0
        %5843 = vmatpush.bf16.msra.mxu0 0
        %5844 = vmatpush.bf16.msra.mxu0 0
        %5845 = vmatpush.bf16.msra.mxu0 0
        %5846 = vmatpush.bf16.msra.mxu0 0
        %5847 = vmatpush.bf16.msra.mxu0 %v934
        %5848 = vmatmul.bf16.gmra.mxu0 %v5747
        %v5849 = vpop.f32.mrf.mxu0
        %v5850 = vadd.f32 %v5837, %v5849
        %v5851 = vpop.f32.mrf.mxu0
        %5852 = vdwg.mxu0
        %5853 = vmatpush.bf16.msra.mxu0 %v803
        %5854 = vmatpush.bf16.msra.mxu0 %v791
        %5855 = vmatpush.bf16.msra.mxu0 %v779
        %5856 = vmatpush.bf16.msra.mxu0 %v767
        %5857 = vmatpush.bf16.msra.mxu0 %v755
        %5858 = vmatpush.bf16.msra.mxu0 %v743
        %5859 = vmatpush.bf16.msra.mxu0 %v731
        %5860 = vmatpush.bf16.msra.mxu0 %v719
        %5861 = vmatmul.bf16.gmra.mxu0 %v5744
        %v5862 = vpop.f32.mrf.mxu0
        %v5863 = vadd.f32 0.0, %v5862
        %v5864 = vpop.f32.mrf.mxu0
        %5865 = vdwg.mxu0
        %5866 = vmatpush.bf16.msra.mxu0 0
        %5867 = vmatpush.bf16.msra.mxu0 0
        %5868 = vmatpush.bf16.msra.mxu0 0
        %5869 = vmatpush.bf16.msra.mxu0 0
        %5870 = vmatpush.bf16.msra.mxu0 0
        %5871 = vmatpush.bf16.msra.mxu0 0
        %5872 = vmatpush.bf16.msra.mxu0 0
        %5873 = vmatpush.bf16.msra.mxu0 %v937
        %5874 = vmatmul.bf16.gmra.mxu0 %v5747
        %v5875 = vpop.f32.mrf.mxu0
        %v5876 = vadd.f32 %v5863, %v5875
        %v5877 = vpop.f32.mrf.mxu0
        %5878 = vdwg.mxu0
        %5879 = vmatpush.bf16.msra.mxu0 %v804
        %5880 = vmatpush.bf16.msra.mxu0 %v792
        %5881 = vmatpush.bf16.msra.mxu0 %v780
        %5882 = vmatpush.bf16.msra.mxu0 %v768
        %5883 = vmatpush.bf16.msra.mxu0 %v756
        %5884 = vmatpush.bf16.msra.mxu0 %v744
        %5885 = vmatpush.bf16.msra.mxu0 %v732
        %5886 = vmatpush.bf16.msra.mxu0 %v720
        %5887 = vmatmul.bf16.gmra.mxu0 %v5744
        %v5888 = vpop.f32.mrf.mxu0
        %v5889 = vadd.f32 0.0, %v5888
        %v5890 = vpop.f32.mrf.mxu0
        %5891 = vdwg.mxu0
        %5892 = vmatpush.bf16.msra.mxu0 0
        %5893 = vmatpush.bf16.msra.mxu0 0
        %5894 = vmatpush.bf16.msra.mxu0 0
        %5895 = vmatpush.bf16.msra.mxu0 0
        %5896 = vmatpush.bf16.msra.mxu0 0
        %5897 = vmatpush.bf16.msra.mxu0 0
        %5898 = vmatpush.bf16.msra.mxu0 0
        %5899 = vmatpush.bf16.msra.mxu0 %v940
        %5900 = vmatmul.bf16.gmra.mxu0 %v5747
        %v5901 = vpop.f32.mrf.mxu0
        %v5902 = vadd.f32 %v5889, %v5901
        %v5903 = vpop.f32.mrf.mxu0
        %5904 = vdwg.mxu0
        %5905 = vmatpush.bf16.msra.mxu0 %v805
        %5906 = vmatpush.bf16.msra.mxu0 %v793
        %5907 = vmatpush.bf16.msra.mxu0 %v781
        %5908 = vmatpush.bf16.msra.mxu0 %v769
        %5909 = vmatpush.bf16.msra.mxu0 %v757
        %5910 = vmatpush.bf16.msra.mxu0 %v745
        %5911 = vmatpush.bf16.msra.mxu0 %v733
        %5912 = vmatpush.bf16.msra.mxu0 %v721
        %5913 = vmatmul.bf16.gmra.mxu0 %v5744
        %v5914 = vpop.f32.mrf.mxu0
        %v5915 = vadd.f32 0.0, %v5914
        %v5916 = vpop.f32.mrf.mxu0
        %5917 = vdwg.mxu0
        %5918 = vmatpush.bf16.msra.mxu0 0
        %5919 = vmatpush.bf16.msra.mxu0 0
        %5920 = vmatpush.bf16.msra.mxu0 0
        %5921 = vmatpush.bf16.msra.mxu0 0
        %5922 = vmatpush.bf16.msra.mxu0 0
        %5923 = vmatpush.bf16.msra.mxu0 0
        %5924 = vmatpush.bf16.msra.mxu0 0
        %5925 = vmatpush.bf16.msra.mxu0 %v943
        %5926 = vmatmul.bf16.gmra.mxu0 %v5747
        %v5927 = vpop.f32.mrf.mxu0
        %v5928 = vadd.f32 %v5915, %v5927
        %v5929 = vpop.f32.mrf.mxu0
        %5930 = vdwg.mxu0
        %5931 = vmatpush.bf16.msra.mxu0 %v806
        %5932 = vmatpush.bf16.msra.mxu0 %v794
        %5933 = vmatpush.bf16.msra.mxu0 %v782
        %5934 = vmatpush.bf16.msra.mxu0 %v770
        %5935 = vmatpush.bf16.msra.mxu0 %v758
        %5936 = vmatpush.bf16.msra.mxu0 %v746
        %5937 = vmatpush.bf16.msra.mxu0 %v734
        %5938 = vmatpush.bf16.msra.mxu0 %v722
        %5939 = vmatmul.bf16.gmra.mxu0 %v5744
        %v5940 = vpop.f32.mrf.mxu0
        %v5941 = vadd.f32 0.0, %v5940
        %v5942 = vpop.f32.mrf.mxu0
        %5943 = vdwg.mxu0
        %5944 = vmatpush.bf16.msra.mxu0 0
        %5945 = vmatpush.bf16.msra.mxu0 0
        %5946 = vmatpush.bf16.msra.mxu0 0
        %5947 = vmatpush.bf16.msra.mxu0 0
        %5948 = vmatpush.bf16.msra.mxu0 0
        %5949 = vmatpush.bf16.msra.mxu0 0
        %5950 = vmatpush.bf16.msra.mxu0 0
        %5951 = vmatpush.bf16.msra.mxu0 %v946
        %5952 = vmatmul.bf16.gmra.mxu0 %v5747
        %v5953 = vpop.f32.mrf.mxu0
        %v5954 = vadd.f32 %v5941, %v5953
        %v5955 = vpop.f32.mrf.mxu0
        %5956 = vdwg.mxu0
        %5957 = vmatpush.bf16.msra.mxu0 %v807
        %5958 = vmatpush.bf16.msra.mxu0 %v795
        %5959 = vmatpush.bf16.msra.mxu0 %v783
        %5960 = vmatpush.bf16.msra.mxu0 %v771
        %5961 = vmatpush.bf16.msra.mxu0 %v759
        %5962 = vmatpush.bf16.msra.mxu0 %v747
        %5963 = vmatpush.bf16.msra.mxu0 %v735
        %5964 = vmatpush.bf16.msra.mxu0 %v723
        %5965 = vmatmul.bf16.gmra.mxu0 %v5744
        %v5966 = vpop.f32.mrf.mxu0
        %v5967 = vadd.f32 0.0, %v5966
        %v5968 = vpop.f32.mrf.mxu0
        %5969 = vdwg.mxu0
        %5970 = vmatpush.bf16.msra.mxu0 0
        %5971 = vmatpush.bf16.msra.mxu0 0
        %5972 = vmatpush.bf16.msra.mxu0 0
        %5973 = vmatpush.bf16.msra.mxu0 0
        %5974 = vmatpush.bf16.msra.mxu0 0
        %5975 = vmatpush.bf16.msra.mxu0 0
        %5976 = vmatpush.bf16.msra.mxu0 0
        %5977 = vmatpush.bf16.msra.mxu0 %v949
        %5978 = vmatmul.bf16.gmra.mxu0 %v5747
        %v5979 = vpop.f32.mrf.mxu0
        %v5980 = vadd.f32 %v5967, %v5979
        %v5981 = vpop.f32.mrf.mxu0
        %5982 = vdwg.mxu0
        %5983 = vmatpush.bf16.msra.mxu0 %v808
        %5984 = vmatpush.bf16.msra.mxu0 %v796
        %5985 = vmatpush.bf16.msra.mxu0 %v784
        %5986 = vmatpush.bf16.msra.mxu0 %v772
        %5987 = vmatpush.bf16.msra.mxu0 %v760
        %5988 = vmatpush.bf16.msra.mxu0 %v748
        %5989 = vmatpush.bf16.msra.mxu0 %v736
        %5990 = vmatpush.bf16.msra.mxu0 %v724
        %5991 = vmatmul.bf16.gmra.mxu0 %v5744
        %v5992 = vpop.f32.mrf.mxu0
        %v5993 = vadd.f32 0.0, %v5992
        %v5994 = vpop.f32.mrf.mxu0
        %5995 = vdwg.mxu0
        %5996 = vmatpush.bf16.msra.mxu0 0
        %5997 = vmatpush.bf16.msra.mxu0 0
        %5998 = vmatpush.bf16.msra.mxu0 0
        %5999 = vmatpush.bf16.msra.mxu0 0
        %6000 = vmatpush.bf16.msra.mxu0 0
        %6001 = vmatpush.bf16.msra.mxu0 0
        %6002 = vmatpush.bf16.msra.mxu0 0
        %6003 = vmatpush.bf16.msra.mxu0 %v952
        %6004 = vmatmul.bf16.gmra.mxu0 %v5747
        %v6005 = vpop.f32.mrf.mxu0
        %v6006 = vadd.f32 %v5993, %v6005
        %v6007 = vpop.f32.mrf.mxu0
        %6008 = vdwg.mxu0
        %6009 = vmatpush.bf16.msra.mxu0 %v809
        %6010 = vmatpush.bf16.msra.mxu0 %v797
        %6011 = vmatpush.bf16.msra.mxu0 %v785
        %6012 = vmatpush.bf16.msra.mxu0 %v773
        %6013 = vmatpush.bf16.msra.mxu0 %v761
        %6014 = vmatpush.bf16.msra.mxu0 %v749
        %6015 = vmatpush.bf16.msra.mxu0 %v737
        %6016 = vmatpush.bf16.msra.mxu0 %v725
        %6017 = vmatmul.bf16.gmra.mxu0 %v5744
        %v6018 = vpop.f32.mrf.mxu0
        %v6019 = vadd.f32 0.0, %v6018
        %v6020 = vpop.f32.mrf.mxu0
        %6021 = vdwg.mxu0
        %6022 = vmatpush.bf16.msra.mxu0 0
        %6023 = vmatpush.bf16.msra.mxu0 0
        %6024 = vmatpush.bf16.msra.mxu0 0
        %6025 = vmatpush.bf16.msra.mxu0 0
        %6026 = vmatpush.bf16.msra.mxu0 0
        %6027 = vmatpush.bf16.msra.mxu0 0
        %6028 = vmatpush.bf16.msra.mxu0 0
        %6029 = vmatpush.bf16.msra.mxu0 %v955
        %6030 = vmatmul.bf16.gmra.mxu0 %v5747
        %v6031 = vpop.f32.mrf.mxu0
        %v6032 = vadd.f32 %v6019, %v6031
        %v6033 = vpop.f32.mrf.mxu0
        %6034 = vdwg.mxu0
        %6035 = vmatpush.bf16.msra.mxu0 %v810
        %6036 = vmatpush.bf16.msra.mxu0 %v798
        %6037 = vmatpush.bf16.msra.mxu0 %v786
        %6038 = vmatpush.bf16.msra.mxu0 %v774
        %6039 = vmatpush.bf16.msra.mxu0 %v762
        %6040 = vmatpush.bf16.msra.mxu0 %v750
        %6041 = vmatpush.bf16.msra.mxu0 %v738
        %6042 = vmatpush.bf16.msra.mxu0 %v726
        %6043 = vmatmul.bf16.gmra.mxu0 %v5744
        %v6044 = vpop.f32.mrf.mxu0
        %v6045 = vadd.f32 0.0, %v6044
        %v6046 = vpop.f32.mrf.mxu0
        %6047 = vdwg.mxu0
        %6048 = vmatpush.bf16.msra.mxu0 0
        %6049 = vmatpush.bf16.msra.mxu0 0
        %6050 = vmatpush.bf16.msra.mxu0 0
        %6051 = vmatpush.bf16.msra.mxu0 0
        %6052 = vmatpush.bf16.msra.mxu0 0
        %6053 = vmatpush.bf16.msra.mxu0 0
        %6054 = vmatpush.bf16.msra.mxu0 0
        %6055 = vmatpush.bf16.msra.mxu0 %v958
        %6056 = vmatmul.bf16.gmra.mxu0 %v5747
        %v6057 = vpop.f32.mrf.mxu0
        %v6058 = vadd.f32 %v6045, %v6057
        %v6059 = vpop.f32.mrf.mxu0
        %6060 = vdwg.mxu0
        %v6061 = vmax.f32 %v5772, %v5876
        %v6062 = vmax.f32 %v5798, %v5902
        %v6063 = vmax.f32 %v5824, %v5928
        %v6064 = vmax.f32 %v5850, %v5954
        %v6065 = vmax.f32 %v6061, %v5980
        %v6066 = vmax.f32 %v6062, %v6006
        %v6067 = vmax.f32 %v6063, %v6032
        %v6068 = vmax.f32 %v6064, %v6058
        %v6069 = vadd.f32 %v6065, %v1281
        %v6070 = vadd.f32 %v6066, %v1282
        %v6071 = vadd.f32 %v6067, %v1283
        %v6072 = vadd.f32 %v6068, %v1284
        %v6073 = vmax.f32 %v6069, 0.0
        %v6074 = vmax.f32 %v6070, 0.0
        %v6075 = vmax.f32 %v6071, 0.0
        %v6076 = vmax.f32 %v6072, 0.0
        %6081 = vrot.lane.b32.xlu0 %v6073, 112
        %v6082 = vpop.permute.xlu0 %6081
        %6083 = vrot.lane.b32.xlu0 %v6074, 112
        %v6084 = vpop.permute.xlu0 %6083
        %6085 = vrot.lane.b32.xlu0 %v6075, 112
        %v6086 = vpop.permute.xlu0 %6085
        %6087 = vrot.lane.b32.xlu0 %v6076, 112
        %v6088 = vpop.permute.xlu0 %6087
        %v6089 = vsel %vm1309, %v6082, %v6084
        %v6090 = vsel %vm1309, %v6084, %v6086
        %v6091 = vsel %vm1309, %v6086, %v6088
        %v6096 = vmax.f32 %v6073, %v6089
        %v6097 = vmax.f32 %v6074, %v6090
        %v6098 = vmax.f32 %v6075, %v6091
        %v6099 = vmax.f32 %v6076, %v6088
        %6100 = vrot.lane.b32.xlu0 %v6073, 96
        %v6101 = vpop.permute.xlu0 %6100
        %6102 = vrot.lane.b32.xlu0 %v6074, 96
        %v6103 = vpop.permute.xlu0 %6102
        %6104 = vrot.lane.b32.xlu0 %v6075, 96
        %v6105 = vpop.permute.xlu0 %6104
        %6106 = vrot.lane.b32.xlu0 %v6076, 96
        %v6107 = vpop.permute.xlu0 %6106
        %v6108 = vsel %vm1329, %v6101, %v6103
        %v6109 = vsel %vm1329, %v6103, %v6105
        %v6110 = vsel %vm1329, %v6105, %v6107
        %v6115 = vmax.f32 %v6096, %v6108
        %v6116 = vmax.f32 %v6097, %v6109
        %v6117 = vmax.f32 %v6098, %v6110
        %v6118 = vmax.f32 %v6099, %v6107
        %v6119 = vld [vmem:[%s3 + $0x690] sm:$0xf]
        %v6120 = vld [vmem:[%s3 + $0x694] sm:$0xf]
        %v6121 = vld [vmem:[%s3 + $0x698] sm:$0xf]
        %v6122 = vld [vmem:[%s3 + $0x69c] sm:$0xf]
        %v6123 = vld [vmem:[%s3 + $0x6a0] sm:$0xf]
        %v6124 = vld [vmem:[%s3 + $0x6a4] sm:$0xf]
        %v6125 = vld [vmem:[%s3 + $0x6a8] sm:$0xf]
        %v6126 = vld [vmem:[%s3 + $0x6ac] sm:$0xf]
        %v6127 = vld [vmem:[%s3 + $0x6b0] sm:$0xf]
        %v6128 = vld [vmem:[%s3 + $0x6b4] sm:$0xf]
        %v6129 = vld [vmem:[%s3 + $0x6b8] sm:$0xf]
        %v6130 = vld [vmem:[%s3 + $0x6bc] sm:$0xf]
        %v6131 = vld [vmem:[%s3 + $0x6c0] sm:$0xf]
        %v6132 = vld [vmem:[%s3 + $0x6c4] sm:$0xf]
        %v6133 = vld [vmem:[%s3 + $0x6c8] sm:$0xf]
        %v6134 = vld [vmem:[%s3 + $0x6cc] sm:$0xf]
        %v6135 = vld [vmem:[%s3 + $0x6d0] sm:$0xf]
        %v6136 = vld [vmem:[%s3 + $0x6d4] sm:$0xf]
        %v6137 = vld [vmem:[%s3 + $0x6d8] sm:$0xf]
        %v6138 = vld [vmem:[%s3 + $0x6dc] sm:$0xf]
        %v6139 = vld [vmem:[%s3 + $0x6e0] sm:$0xf]
        %v6140 = vld [vmem:[%s3 + $0x6e4] sm:$0xf]
        %v6141 = vld [vmem:[%s3 + $0x6e8] sm:$0xf]
        %v6142 = vld [vmem:[%s3 + $0x6ec] sm:$0xf]
        %v6143 = vld [vmem:[%s3 + $0x6f0] sm:$0xf]
        %v6144 = vld [vmem:[%s3 + $0x6f4] sm:$0xf]
        %v6145 = vld [vmem:[%s3 + $0x6f8] sm:$0xf]
        %v6146 = vld [vmem:[%s3 + $0x6fc] sm:$0xf]
        %v6147 = vld [vmem:[%s3 + $0x700] sm:$0xf]
        %v6148 = vld [vmem:[%s3 + $0x704] sm:$0xf]
        %v6149 = vld [vmem:[%s3 + $0x708] sm:$0xf]
        %v6150 = vld [vmem:[%s3 + $0x70c] sm:$0xf]
        %v6151 = vld [vmem:[%s3 + $0x710] sm:$0xf]
        %v6152 = vld [vmem:[%s3 + $0x714] sm:$0xf]
        %v6153 = vld [vmem:[%s3 + $0x718] sm:$0xf]
        %v6154 = vld [vmem:[%s3 + $0x71c] sm:$0xf]
        %v6155 = vld [vmem:[%s3 + $0x720] sm:$0xf]
        %v6156 = vld [vmem:[%s3 + $0x724] sm:$0xf]
        %v6157 = vld [vmem:[%s3 + $0x728] sm:$0xf]
        %v6158 = vld [vmem:[%s3 + $0x72c] sm:$0xf]
        %v6159 = vld [vmem:[%s3 + $0x730] sm:$0xf]
        %v6160 = vld [vmem:[%s3 + $0x734] sm:$0xf]
        %v6161 = vld [vmem:[%s3 + $0x738] sm:$0xf]
        %v6162 = vld [vmem:[%s3 + $0x73c] sm:$0xf]
        %v6163 = vld [vmem:[%s3 + $0x740] sm:$0xf]
        %v6164 = vld [vmem:[%s3 + $0x744] sm:$0xf]
        %v6165 = vld [vmem:[%s3 + $0x748] sm:$0xf]
        %v6166 = vld [vmem:[%s3 + $0x74c] sm:$0xf]
        %v6167 = vld [vmem:[%s3 + $0x750] sm:$0xf]
        %v6168 = vld [vmem:[%s3 + $0x754] sm:$0xf]
        %v6169 = vld [vmem:[%s3 + $0x758] sm:$0xf]
        %v6170 = vld [vmem:[%s3 + $0x75c] sm:$0xf]
        %v6171 = vld [vmem:[%s3 + $0x760] sm:$0xf]
        %v6172 = vld [vmem:[%s3 + $0x764] sm:$0xf]
        %v6173 = vld [vmem:[%s3 + $0x768] sm:$0xf]
        %v6174 = vld [vmem:[%s3 + $0x76c] sm:$0xf]
        %v6175 = vld [vmem:[%s3 + $0x770] sm:$0xf]
        %v6176 = vld [vmem:[%s3 + $0x774] sm:$0xf]
        %v6177 = vld [vmem:[%s3 + $0x778] sm:$0xf]
        %v6178 = vld [vmem:[%s3 + $0x77c] sm:$0xf]
        %v6179 = vpack.c.bf16 %v6115, %v6115
        %v6180 = vpack.c.bf16 %v6116, %v6116
        %v6181 = vpack.c.bf16 %v6117, %v6117
        %v6182 = vpack.c.bf16 %v6118, %v6118
        %v6243 = vunpack.c.l.b16 %v6119
        %v6244 = vunpack.c.l.b16 %v6120
        %v6245 = vunpack.c.l.b16 %v6121
        %v6246 = vunpack.c.l.b16 %v6122
        %v6247 = vunpack.c.l.b16 %v6123
        %v6248 = vunpack.c.l.b16 %v6124
        %v6249 = vunpack.c.l.b16 %v6125
        %v6250 = vunpack.c.l.b16 %v6126
        %v6251 = vunpack.c.l.b16 %v6127
        %v6252 = vunpack.c.l.b16 %v6128
        %v6253 = vunpack.c.l.b16 %v6129
        %v6254 = vunpack.c.l.b16 %v6130
        %v6255 = vunpack.c.l.b16 %v6131
        %v6256 = vunpack.c.l.b16 %v6132
        %v6257 = vunpack.c.l.b16 %v6133
        %v6258 = vunpack.c.l.b16 %v6134
        %v6259 = vunpack.c.l.b16 %v6135
        %v6260 = vunpack.c.l.b16 %v6136
        %v6261 = vunpack.c.l.b16 %v6137
        %v6262 = vunpack.c.l.b16 %v6138
        %v6263 = vunpack.c.l.b16 %v6139
        %v6264 = vunpack.c.l.b16 %v6140
        %v6265 = vunpack.c.l.b16 %v6141
        %v6266 = vunpack.c.l.b16 %v6142
        %v6267 = vunpack.c.l.b16 %v6143
        %v6268 = vunpack.c.l.b16 %v6144
        %v6269 = vunpack.c.l.b16 %v6145
        %v6270 = vunpack.c.l.b16 %v6146
        %v6271 = vunpack.c.l.b16 %v6147
        %v6272 = vunpack.c.l.b16 %v6148
        %v6273 = vunpack.c.l.b16 %v6149
        %v6274 = vunpack.c.l.b16 %v6150
        %v6275 = vunpack.c.l.b16 %v6151
        %v6276 = vunpack.c.l.b16 %v6152
        %v6277 = vunpack.c.l.b16 %v6153
        %v6278 = vunpack.c.l.b16 %v6154
        %v6279 = vunpack.c.l.b16 %v6155
        %v6280 = vunpack.c.l.b16 %v6156
        %v6281 = vunpack.c.l.b16 %v6157
        %v6282 = vunpack.c.l.b16 %v6158
        %v6283 = vunpack.c.l.b16 %v6159
        %v6284 = vunpack.c.l.b16 %v6160
        %v6285 = vunpack.c.l.b16 %v6161
        %v6286 = vunpack.c.l.b16 %v6162
        %v6287 = vunpack.c.l.b16 %v6163
        %v6288 = vunpack.c.l.b16 %v6164
        %v6289 = vunpack.c.l.b16 %v6165
        %v6290 = vunpack.c.l.b16 %v6166
        %v6291 = vunpack.c.l.b16 %v6167
        %v6292 = vunpack.c.l.b16 %v6168
        %v6293 = vunpack.c.l.b16 %v6169
        %v6294 = vunpack.c.l.b16 %v6170
        %v6295 = vunpack.c.l.b16 %v6171
        %v6296 = vunpack.c.l.b16 %v6172
        %v6297 = vunpack.c.l.b16 %v6173
        %v6298 = vunpack.c.l.b16 %v6174
        %v6299 = vunpack.c.l.b16 %v6175
        %v6300 = vunpack.c.l.b16 %v6176
        %v6301 = vunpack.c.l.b16 %v6177
        %v6302 = vunpack.c.l.b16 %v6178
        %v6303 = vpack.c.b16 %v6244, %v6243
        %v6304 = vpack.c.b16 %v6246, %v6245
        %v6305 = vpack.c.b16 %v6248, %v6247
        %v6306 = vpack.c.b16 %v6250, %v6249
        %v6307 = vpack.c.b16 %v6252, %v6251
        %v6308 = vpack.c.b16 %v6254, %v6253
        %v6309 = vpack.c.b16 %v6256, %v6255
        %v6310 = vpack.c.b16 %v6258, %v6257
        %v6311 = vpack.c.b16 %v6260, %v6259
        %v6312 = vpack.c.b16 %v6262, %v6261
        %v6313 = vpack.c.b16 %v6264, %v6263
        %v6314 = vpack.c.b16 %v6266, %v6265
        %v6315 = vpack.c.b16 %v6268, %v6267
        %v6316 = vpack.c.b16 %v6270, %v6269
        %v6317 = vpack.c.b16 %v6272, %v6271
        %v6318 = vpack.c.b16 %v6274, %v6273
        %v6319 = vpack.c.b16 %v6276, %v6275
        %v6320 = vpack.c.b16 %v6278, %v6277
        %v6321 = vpack.c.b16 %v6280, %v6279
        %v6322 = vpack.c.b16 %v6282, %v6281
        %v6323 = vpack.c.b16 %v6284, %v6283
        %v6324 = vpack.c.b16 %v6286, %v6285
        %v6325 = vpack.c.b16 %v6288, %v6287
        %v6326 = vpack.c.b16 %v6290, %v6289
        %v6327 = vpack.c.b16 %v6292, %v6291
        %v6328 = vpack.c.b16 %v6294, %v6293
        %v6329 = vpack.c.b16 %v6296, %v6295
        %v6330 = vpack.c.b16 %v6298, %v6297
        %v6331 = vpack.c.b16 %v6300, %v6299
        %v6332 = vpack.c.b16 %v6302, %v6301
        %v6364 = vsel %vm1329, %v6182, 0
        %6366 = vmatpush.bf16.msra.mxu0 %v6310
        %6367 = vmatpush.bf16.msra.mxu0 %v6309
        %6368 = vmatpush.bf16.msra.mxu0 %v6308
        %6369 = vmatpush.bf16.msra.mxu0 %v6307
        %6370 = vmatpush.bf16.msra.mxu0 %v6306
        %6371 = vmatpush.bf16.msra.mxu0 %v6305
        %6372 = vmatpush.bf16.msra.mxu0 %v6304
        %6373 = vmatpush.bf16.msra.mxu0 %v6303
        %6374 = vmatmul.bf16.gmra.mxu0 %v6179
        %v6375 = vpop.f32.mrf.mxu0
        %v6376 = vadd.f32 0.0, %v6375
        %v6377 = vpop.f32.mrf.mxu0
        %6378 = vdwg.mxu0
        %6379 = vmatpush.bf16.msra.mxu0 %v6318
        %6380 = vmatpush.bf16.msra.mxu0 %v6317
        %6381 = vmatpush.bf16.msra.mxu0 %v6316
        %6382 = vmatpush.bf16.msra.mxu0 %v6315
        %6383 = vmatpush.bf16.msra.mxu0 %v6314
        %6384 = vmatpush.bf16.msra.mxu0 %v6313
        %6385 = vmatpush.bf16.msra.mxu0 %v6312
        %6386 = vmatpush.bf16.msra.mxu0 %v6311
        %6387 = vmatmul.bf16.gmra.mxu0 %v6180
        %v6388 = vpop.f32.mrf.mxu0
        %v6389 = vadd.f32 %v6376, %v6388
        %v6390 = vpop.f32.mrf.mxu0
        %6391 = vdwg.mxu0
        %6392 = vmatpush.bf16.msra.mxu0 %v6326
        %6393 = vmatpush.bf16.msra.mxu0 %v6325
        %6394 = vmatpush.bf16.msra.mxu0 %v6324
        %6395 = vmatpush.bf16.msra.mxu0 %v6323
        %6396 = vmatpush.bf16.msra.mxu0 %v6322
        %6397 = vmatpush.bf16.msra.mxu0 %v6321
        %6398 = vmatpush.bf16.msra.mxu0 %v6320
        %6399 = vmatpush.bf16.msra.mxu0 %v6319
        %6400 = vmatmul.bf16.gmra.mxu0 %v6181
        %v6401 = vpop.f32.mrf.mxu0
        %v6402 = vadd.f32 %v6389, %v6401
        %v6403 = vpop.f32.mrf.mxu0
        %6404 = vdwg.mxu0
        %6405 = vmatpush.bf16.msra.mxu0 0
        %6406 = vmatpush.bf16.msra.mxu0 0
        %6407 = vmatpush.bf16.msra.mxu0 %v6332
        %6408 = vmatpush.bf16.msra.mxu0 %v6331
        %6409 = vmatpush.bf16.msra.mxu0 %v6330
        %6410 = vmatpush.bf16.msra.mxu0 %v6329
        %6411 = vmatpush.bf16.msra.mxu0 %v6328
        %6412 = vmatpush.bf16.msra.mxu0 %v6327
        %6413 = vmatmul.bf16.gmra.mxu0 %v6364
        %v6414 = vpop.f32.mrf.mxu0
        %v6415 = vadd.f32 %v6402, %v6414
        %v6416 = vpop.f32.mrf.mxu0
        %6417 = vdwg.mxu0
        %v6418 = vadd.f32 %v5732, %v6415
        %6419 = vrot.lane.b32.xlu0 %v5735, 64
        %v6420 = vpop.permute.xlu0 %6419
        %6421 = vrot.lane.b32.xlu0 %v5736, 64
        %v6422 = vpop.permute.xlu0 %6421
        %vm6423 = vcmask 523264
        %v6424 = vsel %vm6423, %v6420, %v6422
        %v6427 = vsel %vm919, %v6422, 0
        %6429 = vmatpush.bf16.msra.mxu0 %v799
        %6430 = vmatpush.bf16.msra.mxu0 %v787
        %6431 = vmatpush.bf16.msra.mxu0 %v775
        %6432 = vmatpush.bf16.msra.mxu0 %v763
        %6433 = vmatpush.bf16.msra.mxu0 %v751
        %6434 = vmatpush.bf16.msra.mxu0 %v739
        %6435 = vmatpush.bf16.msra.mxu0 %v727
        %6436 = vmatpush.bf16.msra.mxu0 %v715
        %6437 = vmatmul.bf16.gmra.mxu0 %v6424
        %v6438 = vpop.f32.mrf.mxu0
        %v6439 = vadd.f32 0.0, %v6438
        %v6440 = vpop.f32.mrf.mxu0
        %6441 = vdwg.mxu0
        %6442 = vmatpush.bf16.msra.mxu0 0
        %6443 = vmatpush.bf16.msra.mxu0 0
        %6444 = vmatpush.bf16.msra.mxu0 0
        %6445 = vmatpush.bf16.msra.mxu0 0
        %6446 = vmatpush.bf16.msra.mxu0 0
        %6447 = vmatpush.bf16.msra.mxu0 0
        %6448 = vmatpush.bf16.msra.mxu0 0
        %6449 = vmatpush.bf16.msra.mxu0 %v925
        %6450 = vmatmul.bf16.gmra.mxu0 %v6427
        %v6451 = vpop.f32.mrf.mxu0
        %v6452 = vadd.f32 %v6439, %v6451
        %v6453 = vpop.f32.mrf.mxu0
        %6454 = vdwg.mxu0
        %6455 = vmatpush.bf16.msra.mxu0 %v800
        %6456 = vmatpush.bf16.msra.mxu0 %v788
        %6457 = vmatpush.bf16.msra.mxu0 %v776
        %6458 = vmatpush.bf16.msra.mxu0 %v764
        %6459 = vmatpush.bf16.msra.mxu0 %v752
        %6460 = vmatpush.bf16.msra.mxu0 %v740
        %6461 = vmatpush.bf16.msra.mxu0 %v728
        %6462 = vmatpush.bf16.msra.mxu0 %v716
        %6463 = vmatmul.bf16.gmra.mxu0 %v6424
        %v6464 = vpop.f32.mrf.mxu0
        %v6465 = vadd.f32 0.0, %v6464
        %v6466 = vpop.f32.mrf.mxu0
        %6467 = vdwg.mxu0
        %6468 = vmatpush.bf16.msra.mxu0 0
        %6469 = vmatpush.bf16.msra.mxu0 0
        %6470 = vmatpush.bf16.msra.mxu0 0
        %6471 = vmatpush.bf16.msra.mxu0 0
        %6472 = vmatpush.bf16.msra.mxu0 0
        %6473 = vmatpush.bf16.msra.mxu0 0
        %6474 = vmatpush.bf16.msra.mxu0 0
        %6475 = vmatpush.bf16.msra.mxu0 %v928
        %6476 = vmatmul.bf16.gmra.mxu0 %v6427
        %v6477 = vpop.f32.mrf.mxu0
        %v6478 = vadd.f32 %v6465, %v6477
        %v6479 = vpop.f32.mrf.mxu0
        %6480 = vdwg.mxu0
        %6481 = vmatpush.bf16.msra.mxu0 %v801
        %6482 = vmatpush.bf16.msra.mxu0 %v789
        %6483 = vmatpush.bf16.msra.mxu0 %v777
        %6484 = vmatpush.bf16.msra.mxu0 %v765
        %6485 = vmatpush.bf16.msra.mxu0 %v753
        %6486 = vmatpush.bf16.msra.mxu0 %v741
        %6487 = vmatpush.bf16.msra.mxu0 %v729
        %6488 = vmatpush.bf16.msra.mxu0 %v717
        %6489 = vmatmul.bf16.gmra.mxu0 %v6424
        %v6490 = vpop.f32.mrf.mxu0
        %v6491 = vadd.f32 0.0, %v6490
        %v6492 = vpop.f32.mrf.mxu0
        %6493 = vdwg.mxu0
        %6494 = vmatpush.bf16.msra.mxu0 0
        %6495 = vmatpush.bf16.msra.mxu0 0
        %6496 = vmatpush.bf16.msra.mxu0 0
        %6497 = vmatpush.bf16.msra.mxu0 0
        %6498 = vmatpush.bf16.msra.mxu0 0
        %6499 = vmatpush.bf16.msra.mxu0 0
        %6500 = vmatpush.bf16.msra.mxu0 0
        %6501 = vmatpush.bf16.msra.mxu0 %v931
        %6502 = vmatmul.bf16.gmra.mxu0 %v6427
        %v6503 = vpop.f32.mrf.mxu0
        %v6504 = vadd.f32 %v6491, %v6503
        %v6505 = vpop.f32.mrf.mxu0
        %6506 = vdwg.mxu0
        %6507 = vmatpush.bf16.msra.mxu0 %v802
        %6508 = vmatpush.bf16.msra.mxu0 %v790
        %6509 = vmatpush.bf16.msra.mxu0 %v778
        %6510 = vmatpush.bf16.msra.mxu0 %v766
        %6511 = vmatpush.bf16.msra.mxu0 %v754
        %6512 = vmatpush.bf16.msra.mxu0 %v742
        %6513 = vmatpush.bf16.msra.mxu0 %v730
        %6514 = vmatpush.bf16.msra.mxu0 %v718
        %6515 = vmatmul.bf16.gmra.mxu0 %v6424
        %v6516 = vpop.f32.mrf.mxu0
        %v6517 = vadd.f32 0.0, %v6516
        %v6518 = vpop.f32.mrf.mxu0
        %6519 = vdwg.mxu0
        %6520 = vmatpush.bf16.msra.mxu0 0
        %6521 = vmatpush.bf16.msra.mxu0 0
        %6522 = vmatpush.bf16.msra.mxu0 0
        %6523 = vmatpush.bf16.msra.mxu0 0
        %6524 = vmatpush.bf16.msra.mxu0 0
        %6525 = vmatpush.bf16.msra.mxu0 0
        %6526 = vmatpush.bf16.msra.mxu0 0
        %6527 = vmatpush.bf16.msra.mxu0 %v934
        %6528 = vmatmul.bf16.gmra.mxu0 %v6427
        %v6529 = vpop.f32.mrf.mxu0
        %v6530 = vadd.f32 %v6517, %v6529
        %v6531 = vpop.f32.mrf.mxu0
        %6532 = vdwg.mxu0
        %6533 = vmatpush.bf16.msra.mxu0 %v803
        %6534 = vmatpush.bf16.msra.mxu0 %v791
        %6535 = vmatpush.bf16.msra.mxu0 %v779
        %6536 = vmatpush.bf16.msra.mxu0 %v767
        %6537 = vmatpush.bf16.msra.mxu0 %v755
        %6538 = vmatpush.bf16.msra.mxu0 %v743
        %6539 = vmatpush.bf16.msra.mxu0 %v731
        %6540 = vmatpush.bf16.msra.mxu0 %v719
        %6541 = vmatmul.bf16.gmra.mxu0 %v6424
        %v6542 = vpop.f32.mrf.mxu0
        %v6543 = vadd.f32 0.0, %v6542
        %v6544 = vpop.f32.mrf.mxu0
        %6545 = vdwg.mxu0
        %6546 = vmatpush.bf16.msra.mxu0 0
        %6547 = vmatpush.bf16.msra.mxu0 0
        %6548 = vmatpush.bf16.msra.mxu0 0
        %6549 = vmatpush.bf16.msra.mxu0 0
        %6550 = vmatpush.bf16.msra.mxu0 0
        %6551 = vmatpush.bf16.msra.mxu0 0
        %6552 = vmatpush.bf16.msra.mxu0 0
        %6553 = vmatpush.bf16.msra.mxu0 %v937
        %6554 = vmatmul.bf16.gmra.mxu0 %v6427
        %v6555 = vpop.f32.mrf.mxu0
        %v6556 = vadd.f32 %v6543, %v6555
        %v6557 = vpop.f32.mrf.mxu0
        %6558 = vdwg.mxu0
        %6559 = vmatpush.bf16.msra.mxu0 %v804
        %6560 = vmatpush.bf16.msra.mxu0 %v792
        %6561 = vmatpush.bf16.msra.mxu0 %v780
        %6562 = vmatpush.bf16.msra.mxu0 %v768
        %6563 = vmatpush.bf16.msra.mxu0 %v756
        %6564 = vmatpush.bf16.msra.mxu0 %v744
        %6565 = vmatpush.bf16.msra.mxu0 %v732
        %6566 = vmatpush.bf16.msra.mxu0 %v720
        %6567 = vmatmul.bf16.gmra.mxu0 %v6424
        %v6568 = vpop.f32.mrf.mxu0
        %v6569 = vadd.f32 0.0, %v6568
        %v6570 = vpop.f32.mrf.mxu0
        %6571 = vdwg.mxu0
        %6572 = vmatpush.bf16.msra.mxu0 0
        %6573 = vmatpush.bf16.msra.mxu0 0
        %6574 = vmatpush.bf16.msra.mxu0 0
        %6575 = vmatpush.bf16.msra.mxu0 0
        %6576 = vmatpush.bf16.msra.mxu0 0
        %6577 = vmatpush.bf16.msra.mxu0 0
        %6578 = vmatpush.bf16.msra.mxu0 0
        %6579 = vmatpush.bf16.msra.mxu0 %v940
        %6580 = vmatmul.bf16.gmra.mxu0 %v6427
        %v6581 = vpop.f32.mrf.mxu0
        %v6582 = vadd.f32 %v6569, %v6581
        %v6583 = vpop.f32.mrf.mxu0
        %6584 = vdwg.mxu0
        %6585 = vmatpush.bf16.msra.mxu0 %v805
        %6586 = vmatpush.bf16.msra.mxu0 %v793
        %6587 = vmatpush.bf16.msra.mxu0 %v781
        %6588 = vmatpush.bf16.msra.mxu0 %v769
        %6589 = vmatpush.bf16.msra.mxu0 %v757
        %6590 = vmatpush.bf16.msra.mxu0 %v745
        %6591 = vmatpush.bf16.msra.mxu0 %v733
        %6592 = vmatpush.bf16.msra.mxu0 %v721
        %6593 = vmatmul.bf16.gmra.mxu0 %v6424
        %v6594 = vpop.f32.mrf.mxu0
        %v6595 = vadd.f32 0.0, %v6594
        %v6596 = vpop.f32.mrf.mxu0
        %6597 = vdwg.mxu0
        %6598 = vmatpush.bf16.msra.mxu0 0
        %6599 = vmatpush.bf16.msra.mxu0 0
        %6600 = vmatpush.bf16.msra.mxu0 0
        %6601 = vmatpush.bf16.msra.mxu0 0
        %6602 = vmatpush.bf16.msra.mxu0 0
        %6603 = vmatpush.bf16.msra.mxu0 0
        %6604 = vmatpush.bf16.msra.mxu0 0
        %6605 = vmatpush.bf16.msra.mxu0 %v943
        %6606 = vmatmul.bf16.gmra.mxu0 %v6427
        %v6607 = vpop.f32.mrf.mxu0
        %v6608 = vadd.f32 %v6595, %v6607
        %v6609 = vpop.f32.mrf.mxu0
        %6610 = vdwg.mxu0
        %6611 = vmatpush.bf16.msra.mxu0 %v806
        %6612 = vmatpush.bf16.msra.mxu0 %v794
        %6613 = vmatpush.bf16.msra.mxu0 %v782
        %6614 = vmatpush.bf16.msra.mxu0 %v770
        %6615 = vmatpush.bf16.msra.mxu0 %v758
        %6616 = vmatpush.bf16.msra.mxu0 %v746
        %6617 = vmatpush.bf16.msra.mxu0 %v734
        %6618 = vmatpush.bf16.msra.mxu0 %v722
        %6619 = vmatmul.bf16.gmra.mxu0 %v6424
        %v6620 = vpop.f32.mrf.mxu0
        %v6621 = vadd.f32 0.0, %v6620
        %v6622 = vpop.f32.mrf.mxu0
        %6623 = vdwg.mxu0
        %6624 = vmatpush.bf16.msra.mxu0 0
        %6625 = vmatpush.bf16.msra.mxu0 0
        %6626 = vmatpush.bf16.msra.mxu0 0
        %6627 = vmatpush.bf16.msra.mxu0 0
        %6628 = vmatpush.bf16.msra.mxu0 0
        %6629 = vmatpush.bf16.msra.mxu0 0
        %6630 = vmatpush.bf16.msra.mxu0 0
        %6631 = vmatpush.bf16.msra.mxu0 %v946
        %6632 = vmatmul.bf16.gmra.mxu0 %v6427
        %v6633 = vpop.f32.mrf.mxu0
        %v6634 = vadd.f32 %v6621, %v6633
        %v6635 = vpop.f32.mrf.mxu0
        %6636 = vdwg.mxu0
        %6637 = vmatpush.bf16.msra.mxu0 %v807
        %6638 = vmatpush.bf16.msra.mxu0 %v795
        %6639 = vmatpush.bf16.msra.mxu0 %v783
        %6640 = vmatpush.bf16.msra.mxu0 %v771
        %6641 = vmatpush.bf16.msra.mxu0 %v759
        %6642 = vmatpush.bf16.msra.mxu0 %v747
        %6643 = vmatpush.bf16.msra.mxu0 %v735
        %6644 = vmatpush.bf16.msra.mxu0 %v723
        %6645 = vmatmul.bf16.gmra.mxu0 %v6424
        %v6646 = vpop.f32.mrf.mxu0
        %v6647 = vadd.f32 0.0, %v6646
        %v6648 = vpop.f32.mrf.mxu0
        %6649 = vdwg.mxu0
        %6650 = vmatpush.bf16.msra.mxu0 0
        %6651 = vmatpush.bf16.msra.mxu0 0
        %6652 = vmatpush.bf16.msra.mxu0 0
        %6653 = vmatpush.bf16.msra.mxu0 0
        %6654 = vmatpush.bf16.msra.mxu0 0
        %6655 = vmatpush.bf16.msra.mxu0 0
        %6656 = vmatpush.bf16.msra.mxu0 0
        %6657 = vmatpush.bf16.msra.mxu0 %v949
        %6658 = vmatmul.bf16.gmra.mxu0 %v6427
        %v6659 = vpop.f32.mrf.mxu0
        %v6660 = vadd.f32 %v6647, %v6659
        %v6661 = vpop.f32.mrf.mxu0
        %6662 = vdwg.mxu0
        %6663 = vmatpush.bf16.msra.mxu0 %v808
        %6664 = vmatpush.bf16.msra.mxu0 %v796
        %6665 = vmatpush.bf16.msra.mxu0 %v784
        %6666 = vmatpush.bf16.msra.mxu0 %v772
        %6667 = vmatpush.bf16.msra.mxu0 %v760
        %6668 = vmatpush.bf16.msra.mxu0 %v748
        %6669 = vmatpush.bf16.msra.mxu0 %v736
        %6670 = vmatpush.bf16.msra.mxu0 %v724
        %6671 = vmatmul.bf16.gmra.mxu0 %v6424
        %v6672 = vpop.f32.mrf.mxu0
        %v6673 = vadd.f32 0.0, %v6672
        %v6674 = vpop.f32.mrf.mxu0
        %6675 = vdwg.mxu0
        %6676 = vmatpush.bf16.msra.mxu0 0
        %6677 = vmatpush.bf16.msra.mxu0 0
        %6678 = vmatpush.bf16.msra.mxu0 0
        %6679 = vmatpush.bf16.msra.mxu0 0
        %6680 = vmatpush.bf16.msra.mxu0 0
        %6681 = vmatpush.bf16.msra.mxu0 0
        %6682 = vmatpush.bf16.msra.mxu0 0
        %6683 = vmatpush.bf16.msra.mxu0 %v952
        %6684 = vmatmul.bf16.gmra.mxu0 %v6427
        %v6685 = vpop.f32.mrf.mxu0
        %v6686 = vadd.f32 %v6673, %v6685
        %v6687 = vpop.f32.mrf.mxu0
        %6688 = vdwg.mxu0
        %6689 = vmatpush.bf16.msra.mxu0 %v809
        %6690 = vmatpush.bf16.msra.mxu0 %v797
        %6691 = vmatpush.bf16.msra.mxu0 %v785
        %6692 = vmatpush.bf16.msra.mxu0 %v773
        %6693 = vmatpush.bf16.msra.mxu0 %v761
        %6694 = vmatpush.bf16.msra.mxu0 %v749
        %6695 = vmatpush.bf16.msra.mxu0 %v737
        %6696 = vmatpush.bf16.msra.mxu0 %v725
        %6697 = vmatmul.bf16.gmra.mxu0 %v6424
        %v6698 = vpop.f32.mrf.mxu0
        %v6699 = vadd.f32 0.0, %v6698
        %v6700 = vpop.f32.mrf.mxu0
        %6701 = vdwg.mxu0
        %6702 = vmatpush.bf16.msra.mxu0 0
        %6703 = vmatpush.bf16.msra.mxu0 0
        %6704 = vmatpush.bf16.msra.mxu0 0
        %6705 = vmatpush.bf16.msra.mxu0 0
        %6706 = vmatpush.bf16.msra.mxu0 0
        %6707 = vmatpush.bf16.msra.mxu0 0
        %6708 = vmatpush.bf16.msra.mxu0 0
        %6709 = vmatpush.bf16.msra.mxu0 %v955
        %6710 = vmatmul.bf16.gmra.mxu0 %v6427
        %v6711 = vpop.f32.mrf.mxu0
        %v6712 = vadd.f32 %v6699, %v6711
        %v6713 = vpop.f32.mrf.mxu0
        %6714 = vdwg.mxu0
        %6715 = vmatpush.bf16.msra.mxu0 %v810
        %6716 = vmatpush.bf16.msra.mxu0 %v798
        %6717 = vmatpush.bf16.msra.mxu0 %v786
        %6718 = vmatpush.bf16.msra.mxu0 %v774
        %6719 = vmatpush.bf16.msra.mxu0 %v762
        %6720 = vmatpush.bf16.msra.mxu0 %v750
        %6721 = vmatpush.bf16.msra.mxu0 %v738
        %6722 = vmatpush.bf16.msra.mxu0 %v726
        %6723 = vmatmul.bf16.gmra.mxu0 %v6424
        %v6724 = vpop.f32.mrf.mxu0
        %v6725 = vadd.f32 0.0, %v6724
        %v6726 = vpop.f32.mrf.mxu0
        %6727 = vdwg.mxu0
        %6728 = vmatpush.bf16.msra.mxu0 0
        %6729 = vmatpush.bf16.msra.mxu0 0
        %6730 = vmatpush.bf16.msra.mxu0 0
        %6731 = vmatpush.bf16.msra.mxu0 0
        %6732 = vmatpush.bf16.msra.mxu0 0
        %6733 = vmatpush.bf16.msra.mxu0 0
        %6734 = vmatpush.bf16.msra.mxu0 0
        %6735 = vmatpush.bf16.msra.mxu0 %v958
        %6736 = vmatmul.bf16.gmra.mxu0 %v6427
        %v6737 = vpop.f32.mrf.mxu0
        %v6738 = vadd.f32 %v6725, %v6737
        %v6739 = vpop.f32.mrf.mxu0
        %6740 = vdwg.mxu0
        %v6741 = vmax.f32 %v6452, %v6556
        %v6742 = vmax.f32 %v6478, %v6582
        %v6743 = vmax.f32 %v6504, %v6608
        %v6744 = vmax.f32 %v6530, %v6634
        %v6745 = vmax.f32 %v6741, %v6660
        %v6746 = vmax.f32 %v6742, %v6686
        %v6747 = vmax.f32 %v6743, %v6712
        %v6748 = vmax.f32 %v6744, %v6738
        %v6749 = vadd.f32 %v6745, %v1281
        %v6750 = vadd.f32 %v6746, %v1282
        %v6751 = vadd.f32 %v6747, %v1283
        %v6752 = vadd.f32 %v6748, %v1284
        %v6753 = vmax.f32 %v6749, 0.0
        %v6754 = vmax.f32 %v6750, 0.0
        %v6755 = vmax.f32 %v6751, 0.0
        %v6756 = vmax.f32 %v6752, 0.0
        %6761 = vrot.lane.b32.xlu0 %v6753, 112
        %v6762 = vpop.permute.xlu0 %6761
        %6763 = vrot.lane.b32.xlu0 %v6754, 112
        %v6764 = vpop.permute.xlu0 %6763
        %6765 = vrot.lane.b32.xlu0 %v6755, 112
        %v6766 = vpop.permute.xlu0 %6765
        %6767 = vrot.lane.b32.xlu0 %v6756, 112
        %v6768 = vpop.permute.xlu0 %6767
        %v6769 = vsel %vm1309, %v6762, %v6764
        %v6770 = vsel %vm1309, %v6764, %v6766
        %v6771 = vsel %vm1309, %v6766, %v6768
        %v6776 = vmax.f32 %v6753, %v6769
        %v6777 = vmax.f32 %v6754, %v6770
        %v6778 = vmax.f32 %v6755, %v6771
        %v6779 = vmax.f32 %v6756, %v6768
        %6780 = vrot.lane.b32.xlu0 %v6753, 96
        %v6781 = vpop.permute.xlu0 %6780
        %6782 = vrot.lane.b32.xlu0 %v6754, 96
        %v6783 = vpop.permute.xlu0 %6782
        %6784 = vrot.lane.b32.xlu0 %v6755, 96
        %v6785 = vpop.permute.xlu0 %6784
        %6786 = vrot.lane.b32.xlu0 %v6756, 96
        %v6787 = vpop.permute.xlu0 %6786
        %v6788 = vsel %vm1329, %v6781, %v6783
        %v6789 = vsel %vm1329, %v6783, %v6785
        %v6790 = vsel %vm1329, %v6785, %v6787
        %v6795 = vmax.f32 %v6776, %v6788
        %v6796 = vmax.f32 %v6777, %v6789
        %v6797 = vmax.f32 %v6778, %v6790
        %v6798 = vmax.f32 %v6779, %v6787
        %v6799 = vld [vmem:[%s3 + $0x780] sm:$0xf]
        %v6800 = vld [vmem:[%s3 + $0x784] sm:$0xf]
        %v6801 = vld [vmem:[%s3 + $0x788] sm:$0xf]
        %v6802 = vld [vmem:[%s3 + $0x78c] sm:$0xf]
        %v6803 = vld [vmem:[%s3 + $0x790] sm:$0xf]
        %v6804 = vld [vmem:[%s3 + $0x794] sm:$0xf]
        %v6805 = vld [vmem:[%s3 + $0x798] sm:$0xf]
        %v6806 = vld [vmem:[%s3 + $0x79c] sm:$0xf]
        %v6807 = vld [vmem:[%s3 + $0x7a0] sm:$0xf]
        %v6808 = vld [vmem:[%s3 + $0x7a4] sm:$0xf]
        %v6809 = vld [vmem:[%s3 + $0x7a8] sm:$0xf]
        %v6810 = vld [vmem:[%s3 + $0x7ac] sm:$0xf]
        %v6811 = vld [vmem:[%s3 + $0x7b0] sm:$0xf]
        %v6812 = vld [vmem:[%s3 + $0x7b4] sm:$0xf]
        %v6813 = vld [vmem:[%s3 + $0x7b8] sm:$0xf]
        %v6814 = vld [vmem:[%s3 + $0x7bc] sm:$0xf]
        %v6815 = vld [vmem:[%s3 + $0x7c0] sm:$0xf]
        %v6816 = vld [vmem:[%s3 + $0x7c4] sm:$0xf]
        %v6817 = vld [vmem:[%s3 + $0x7c8] sm:$0xf]
        %v6818 = vld [vmem:[%s3 + $0x7cc] sm:$0xf]
        %v6819 = vld [vmem:[%s3 + $0x7d0] sm:$0xf]
        %v6820 = vld [vmem:[%s3 + $0x7d4] sm:$0xf]
        %v6821 = vld [vmem:[%s3 + $0x7d8] sm:$0xf]
        %v6822 = vld [vmem:[%s3 + $0x7dc] sm:$0xf]
        %v6823 = vld [vmem:[%s3 + $0x7e0] sm:$0xf]
        %v6824 = vld [vmem:[%s3 + $0x7e4] sm:$0xf]
        %v6825 = vld [vmem:[%s3 + $0x7e8] sm:$0xf]
        %v6826 = vld [vmem:[%s3 + $0x7ec] sm:$0xf]
        %v6827 = vld [vmem:[%s3 + $0x7f0] sm:$0xf]
        %v6828 = vld [vmem:[%s3 + $0x7f4] sm:$0xf]
        %v6829 = vld [vmem:[%s3 + $0x7f8] sm:$0xf]
        %v6830 = vld [vmem:[%s3 + $0x7fc] sm:$0xf]
        %v6831 = vld [vmem:[%s3 + $0x800] sm:$0xf]
        %v6832 = vld [vmem:[%s3 + $0x804] sm:$0xf]
        %v6833 = vld [vmem:[%s3 + $0x808] sm:$0xf]
        %v6834 = vld [vmem:[%s3 + $0x80c] sm:$0xf]
        %v6835 = vld [vmem:[%s3 + $0x810] sm:$0xf]
        %v6836 = vld [vmem:[%s3 + $0x814] sm:$0xf]
        %v6837 = vld [vmem:[%s3 + $0x818] sm:$0xf]
        %v6838 = vld [vmem:[%s3 + $0x81c] sm:$0xf]
        %v6839 = vld [vmem:[%s3 + $0x820] sm:$0xf]
        %v6840 = vld [vmem:[%s3 + $0x824] sm:$0xf]
        %v6841 = vld [vmem:[%s3 + $0x828] sm:$0xf]
        %v6842 = vld [vmem:[%s3 + $0x82c] sm:$0xf]
        %v6843 = vld [vmem:[%s3 + $0x830] sm:$0xf]
        %v6844 = vld [vmem:[%s3 + $0x834] sm:$0xf]
        %v6845 = vld [vmem:[%s3 + $0x838] sm:$0xf]
        %v6846 = vld [vmem:[%s3 + $0x83c] sm:$0xf]
        %v6847 = vld [vmem:[%s3 + $0x840] sm:$0xf]
        %v6848 = vld [vmem:[%s3 + $0x844] sm:$0xf]
        %v6849 = vld [vmem:[%s3 + $0x848] sm:$0xf]
        %v6850 = vld [vmem:[%s3 + $0x84c] sm:$0xf]
        %v6851 = vld [vmem:[%s3 + $0x850] sm:$0xf]
        %v6852 = vld [vmem:[%s3 + $0x854] sm:$0xf]
        %v6853 = vld [vmem:[%s3 + $0x858] sm:$0xf]
        %v6854 = vld [vmem:[%s3 + $0x85c] sm:$0xf]
        %v6855 = vld [vmem:[%s3 + $0x860] sm:$0xf]
        %v6856 = vld [vmem:[%s3 + $0x864] sm:$0xf]
        %v6857 = vld [vmem:[%s3 + $0x868] sm:$0xf]
        %v6858 = vld [vmem:[%s3 + $0x86c] sm:$0xf]
        %v6859 = vpack.c.bf16 %v6795, %v6795
        %v6860 = vpack.c.bf16 %v6796, %v6796
        %v6861 = vpack.c.bf16 %v6797, %v6797
        %v6862 = vpack.c.bf16 %v6798, %v6798
        %v6923 = vunpack.c.l.b16 %v6799
        %v6924 = vunpack.c.l.b16 %v6800
        %v6925 = vunpack.c.l.b16 %v6801
        %v6926 = vunpack.c.l.b16 %v6802
        %v6927 = vunpack.c.l.b16 %v6803
        %v6928 = vunpack.c.l.b16 %v6804
        %v6929 = vunpack.c.l.b16 %v6805
        %v6930 = vunpack.c.l.b16 %v6806
        %v6931 = vunpack.c.l.b16 %v6807
        %v6932 = vunpack.c.l.b16 %v6808
        %v6933 = vunpack.c.l.b16 %v6809
        %v6934 = vunpack.c.l.b16 %v6810
        %v6935 = vunpack.c.l.b16 %v6811
        %v6936 = vunpack.c.l.b16 %v6812
        %v6937 = vunpack.c.l.b16 %v6813
        %v6938 = vunpack.c.l.b16 %v6814
        %v6939 = vunpack.c.l.b16 %v6815
        %v6940 = vunpack.c.l.b16 %v6816
        %v6941 = vunpack.c.l.b16 %v6817
        %v6942 = vunpack.c.l.b16 %v6818
        %v6943 = vunpack.c.l.b16 %v6819
        %v6944 = vunpack.c.l.b16 %v6820
        %v6945 = vunpack.c.l.b16 %v6821
        %v6946 = vunpack.c.l.b16 %v6822
        %v6947 = vunpack.c.l.b16 %v6823
        %v6948 = vunpack.c.l.b16 %v6824
        %v6949 = vunpack.c.l.b16 %v6825
        %v6950 = vunpack.c.l.b16 %v6826
        %v6951 = vunpack.c.l.b16 %v6827
        %v6952 = vunpack.c.l.b16 %v6828
        %v6953 = vunpack.c.l.b16 %v6829
        %v6954 = vunpack.c.l.b16 %v6830
        %v6955 = vunpack.c.l.b16 %v6831
        %v6956 = vunpack.c.l.b16 %v6832
        %v6957 = vunpack.c.l.b16 %v6833
        %v6958 = vunpack.c.l.b16 %v6834
        %v6959 = vunpack.c.l.b16 %v6835
        %v6960 = vunpack.c.l.b16 %v6836
        %v6961 = vunpack.c.l.b16 %v6837
        %v6962 = vunpack.c.l.b16 %v6838
        %v6963 = vunpack.c.l.b16 %v6839
        %v6964 = vunpack.c.l.b16 %v6840
        %v6965 = vunpack.c.l.b16 %v6841
        %v6966 = vunpack.c.l.b16 %v6842
        %v6967 = vunpack.c.l.b16 %v6843
        %v6968 = vunpack.c.l.b16 %v6844
        %v6969 = vunpack.c.l.b16 %v6845
        %v6970 = vunpack.c.l.b16 %v6846
        %v6971 = vunpack.c.l.b16 %v6847
        %v6972 = vunpack.c.l.b16 %v6848
        %v6973 = vunpack.c.l.b16 %v6849
        %v6974 = vunpack.c.l.b16 %v6850
        %v6975 = vunpack.c.l.b16 %v6851
        %v6976 = vunpack.c.l.b16 %v6852
        %v6977 = vunpack.c.l.b16 %v6853
        %v6978 = vunpack.c.l.b16 %v6854
        %v6979 = vunpack.c.l.b16 %v6855
        %v6980 = vunpack.c.l.b16 %v6856
        %v6981 = vunpack.c.l.b16 %v6857
        %v6982 = vunpack.c.l.b16 %v6858
        %v6983 = vpack.c.b16 %v6924, %v6923
        %v6984 = vpack.c.b16 %v6926, %v6925
        %v6985 = vpack.c.b16 %v6928, %v6927
        %v6986 = vpack.c.b16 %v6930, %v6929
        %v6987 = vpack.c.b16 %v6932, %v6931
        %v6988 = vpack.c.b16 %v6934, %v6933
        %v6989 = vpack.c.b16 %v6936, %v6935
        %v6990 = vpack.c.b16 %v6938, %v6937
        %v6991 = vpack.c.b16 %v6940, %v6939
        %v6992 = vpack.c.b16 %v6942, %v6941
        %v6993 = vpack.c.b16 %v6944, %v6943
        %v6994 = vpack.c.b16 %v6946, %v6945
        %v6995 = vpack.c.b16 %v6948, %v6947
        %v6996 = vpack.c.b16 %v6950, %v6949
        %v6997 = vpack.c.b16 %v6952, %v6951
        %v6998 = vpack.c.b16 %v6954, %v6953
        %v6999 = vpack.c.b16 %v6956, %v6955
        %v7000 = vpack.c.b16 %v6958, %v6957
        %v7001 = vpack.c.b16 %v6960, %v6959
        %v7002 = vpack.c.b16 %v6962, %v6961
        %v7003 = vpack.c.b16 %v6964, %v6963
        %v7004 = vpack.c.b16 %v6966, %v6965
        %v7005 = vpack.c.b16 %v6968, %v6967
        %v7006 = vpack.c.b16 %v6970, %v6969
        %v7007 = vpack.c.b16 %v6972, %v6971
        %v7008 = vpack.c.b16 %v6974, %v6973
        %v7009 = vpack.c.b16 %v6976, %v6975
        %v7010 = vpack.c.b16 %v6978, %v6977
        %v7011 = vpack.c.b16 %v6980, %v6979
        %v7012 = vpack.c.b16 %v6982, %v6981
        %v7044 = vsel %vm1329, %v6862, 0
        %7046 = vmatpush.bf16.msra.mxu0 %v6990
        %7047 = vmatpush.bf16.msra.mxu0 %v6989
        %7048 = vmatpush.bf16.msra.mxu0 %v6988
        %7049 = vmatpush.bf16.msra.mxu0 %v6987
        %7050 = vmatpush.bf16.msra.mxu0 %v6986
        %7051 = vmatpush.bf16.msra.mxu0 %v6985
        %7052 = vmatpush.bf16.msra.mxu0 %v6984
        %7053 = vmatpush.bf16.msra.mxu0 %v6983
        %7054 = vmatmul.bf16.gmra.mxu0 %v6859
        %v7055 = vpop.f32.mrf.mxu0
        %v7056 = vadd.f32 0.0, %v7055
        %v7057 = vpop.f32.mrf.mxu0
        %7058 = vdwg.mxu0
        %7059 = vmatpush.bf16.msra.mxu0 %v6998
        %7060 = vmatpush.bf16.msra.mxu0 %v6997
        %7061 = vmatpush.bf16.msra.mxu0 %v6996
        %7062 = vmatpush.bf16.msra.mxu0 %v6995
        %7063 = vmatpush.bf16.msra.mxu0 %v6994
        %7064 = vmatpush.bf16.msra.mxu0 %v6993
        %7065 = vmatpush.bf16.msra.mxu0 %v6992
        %7066 = vmatpush.bf16.msra.mxu0 %v6991
        %7067 = vmatmul.bf16.gmra.mxu0 %v6860
        %v7068 = vpop.f32.mrf.mxu0
        %v7069 = vadd.f32 %v7056, %v7068
        %v7070 = vpop.f32.mrf.mxu0
        %7071 = vdwg.mxu0
        %7072 = vmatpush.bf16.msra.mxu0 %v7006
        %7073 = vmatpush.bf16.msra.mxu0 %v7005
        %7074 = vmatpush.bf16.msra.mxu0 %v7004
        %7075 = vmatpush.bf16.msra.mxu0 %v7003
        %7076 = vmatpush.bf16.msra.mxu0 %v7002
        %7077 = vmatpush.bf16.msra.mxu0 %v7001
        %7078 = vmatpush.bf16.msra.mxu0 %v7000
        %7079 = vmatpush.bf16.msra.mxu0 %v6999
        %7080 = vmatmul.bf16.gmra.mxu0 %v6861
        %v7081 = vpop.f32.mrf.mxu0
        %v7082 = vadd.f32 %v7069, %v7081
        %v7083 = vpop.f32.mrf.mxu0
        %7084 = vdwg.mxu0
        %7085 = vmatpush.bf16.msra.mxu0 0
        %7086 = vmatpush.bf16.msra.mxu0 0
        %7087 = vmatpush.bf16.msra.mxu0 %v7012
        %7088 = vmatpush.bf16.msra.mxu0 %v7011
        %7089 = vmatpush.bf16.msra.mxu0 %v7010
        %7090 = vmatpush.bf16.msra.mxu0 %v7009
        %7091 = vmatpush.bf16.msra.mxu0 %v7008
        %7092 = vmatpush.bf16.msra.mxu0 %v7007
        %7093 = vmatmul.bf16.gmra.mxu0 %v7044
        %v7094 = vpop.f32.mrf.mxu0
        %v7095 = vadd.f32 %v7082, %v7094
        %v7096 = vpop.f32.mrf.mxu0
        %7097 = vdwg.mxu0
        %v7098 = vadd.f32 %v6418, %v7095
        %v7099 = vld [vmem:[%s276 + $0x18] sm:$0xff]
        %v7100 = vld [vmem:[%s276 + $0x20] sm:$0xff]
        %v7101 = vld [vmem:[%s276 + $0x28] sm:$0xff]
        %v7102 = vpack.c.bf16 %v7099, %v7099
        %v7103 = vpack.c.bf16 %v7100, %v7100
        %v7104 = vpack.c.bf16 %v7101, %v7101
        %7108 = vrot.lane.b32.xlu0 %v7102, 8
        %v7109 = vpop.permute.xlu0 %7108
        %7110 = vrot.lane.b32.xlu0 %v7103, 8
        %v7111 = vpop.permute.xlu0 %7110
        %7112 = vrot.lane.b32.xlu0 %v7104, 8
        %v7113 = vpop.permute.xlu0 %7112
        %vm7114 = vcmask 64512
        %v7115 = vsel %vm7114, %v7109, %v7111
        %v7116 = vsel %vm7114, %v7111, %v7113
        %v7119 = vsel %vm919, %v7116, 0
        %7121 = vmatpush.bf16.msra.mxu0 %v799
        %7122 = vmatpush.bf16.msra.mxu0 %v787
        %7123 = vmatpush.bf16.msra.mxu0 %v775
        %7124 = vmatpush.bf16.msra.mxu0 %v763
        %7125 = vmatpush.bf16.msra.mxu0 %v751
        %7126 = vmatpush.bf16.msra.mxu0 %v739
        %7127 = vmatpush.bf16.msra.mxu0 %v727
        %7128 = vmatpush.bf16.msra.mxu0 %v715
        %7129 = vmatmul.bf16.gmra.mxu0 %v7115
        %v7130 = vpop.f32.mrf.mxu0
        %v7131 = vadd.f32 0.0, %v7130
        %v7132 = vpop.f32.mrf.mxu0
        %7133 = vdwg.mxu0
        %7134 = vmatpush.bf16.msra.mxu0 0
        %7135 = vmatpush.bf16.msra.mxu0 0
        %7136 = vmatpush.bf16.msra.mxu0 0
        %7137 = vmatpush.bf16.msra.mxu0 0
        %7138 = vmatpush.bf16.msra.mxu0 0
        %7139 = vmatpush.bf16.msra.mxu0 0
        %7140 = vmatpush.bf16.msra.mxu0 0
        %7141 = vmatpush.bf16.msra.mxu0 %v925
        %7142 = vmatmul.bf16.gmra.mxu0 %v7119
        %v7143 = vpop.f32.mrf.mxu0
        %v7144 = vadd.f32 %v7131, %v7143
        %v7145 = vpop.f32.mrf.mxu0
        %7146 = vdwg.mxu0
        %7147 = vmatpush.bf16.msra.mxu0 %v800
        %7148 = vmatpush.bf16.msra.mxu0 %v788
        %7149 = vmatpush.bf16.msra.mxu0 %v776
        %7150 = vmatpush.bf16.msra.mxu0 %v764
        %7151 = vmatpush.bf16.msra.mxu0 %v752
        %7152 = vmatpush.bf16.msra.mxu0 %v740
        %7153 = vmatpush.bf16.msra.mxu0 %v728
        %7154 = vmatpush.bf16.msra.mxu0 %v716
        %7155 = vmatmul.bf16.gmra.mxu0 %v7115
        %v7156 = vpop.f32.mrf.mxu0
        %v7157 = vadd.f32 0.0, %v7156
        %v7158 = vpop.f32.mrf.mxu0
        %7159 = vdwg.mxu0
        %7160 = vmatpush.bf16.msra.mxu0 0
        %7161 = vmatpush.bf16.msra.mxu0 0
        %7162 = vmatpush.bf16.msra.mxu0 0
        %7163 = vmatpush.bf16.msra.mxu0 0
        %7164 = vmatpush.bf16.msra.mxu0 0
        %7165 = vmatpush.bf16.msra.mxu0 0
        %7166 = vmatpush.bf16.msra.mxu0 0
        %7167 = vmatpush.bf16.msra.mxu0 %v928
        %7168 = vmatmul.bf16.gmra.mxu0 %v7119
        %v7169 = vpop.f32.mrf.mxu0
        %v7170 = vadd.f32 %v7157, %v7169
        %v7171 = vpop.f32.mrf.mxu0
        %7172 = vdwg.mxu0
        %7173 = vmatpush.bf16.msra.mxu0 %v801
        %7174 = vmatpush.bf16.msra.mxu0 %v789
        %7175 = vmatpush.bf16.msra.mxu0 %v777
        %7176 = vmatpush.bf16.msra.mxu0 %v765
        %7177 = vmatpush.bf16.msra.mxu0 %v753
        %7178 = vmatpush.bf16.msra.mxu0 %v741
        %7179 = vmatpush.bf16.msra.mxu0 %v729
        %7180 = vmatpush.bf16.msra.mxu0 %v717
        %7181 = vmatmul.bf16.gmra.mxu0 %v7115
        %v7182 = vpop.f32.mrf.mxu0
        %v7183 = vadd.f32 0.0, %v7182
        %v7184 = vpop.f32.mrf.mxu0
        %7185 = vdwg.mxu0
        %7186 = vmatpush.bf16.msra.mxu0 0
        %7187 = vmatpush.bf16.msra.mxu0 0
        %7188 = vmatpush.bf16.msra.mxu0 0
        %7189 = vmatpush.bf16.msra.mxu0 0
        %7190 = vmatpush.bf16.msra.mxu0 0
        %7191 = vmatpush.bf16.msra.mxu0 0
        %7192 = vmatpush.bf16.msra.mxu0 0
        %7193 = vmatpush.bf16.msra.mxu0 %v931
        %7194 = vmatmul.bf16.gmra.mxu0 %v7119
        %v7195 = vpop.f32.mrf.mxu0
        %v7196 = vadd.f32 %v7183, %v7195
        %v7197 = vpop.f32.mrf.mxu0
        %7198 = vdwg.mxu0
        %7199 = vmatpush.bf16.msra.mxu0 %v802
        %7200 = vmatpush.bf16.msra.mxu0 %v790
        %7201 = vmatpush.bf16.msra.mxu0 %v778
        %7202 = vmatpush.bf16.msra.mxu0 %v766
        %7203 = vmatpush.bf16.msra.mxu0 %v754
        %7204 = vmatpush.bf16.msra.mxu0 %v742
        %7205 = vmatpush.bf16.msra.mxu0 %v730
        %7206 = vmatpush.bf16.msra.mxu0 %v718
        %7207 = vmatmul.bf16.gmra.mxu0 %v7115
        %v7208 = vpop.f32.mrf.mxu0
        %v7209 = vadd.f32 0.0, %v7208
        %v7210 = vpop.f32.mrf.mxu0
        %7211 = vdwg.mxu0
        %7212 = vmatpush.bf16.msra.mxu0 0
        %7213 = vmatpush.bf16.msra.mxu0 0
        %7214 = vmatpush.bf16.msra.mxu0 0
        %7215 = vmatpush.bf16.msra.mxu0 0
        %7216 = vmatpush.bf16.msra.mxu0 0
        %7217 = vmatpush.bf16.msra.mxu0 0
        %7218 = vmatpush.bf16.msra.mxu0 0
        %7219 = vmatpush.bf16.msra.mxu0 %v934
        %7220 = vmatmul.bf16.gmra.mxu0 %v7119
        %v7221 = vpop.f32.mrf.mxu0
        %v7222 = vadd.f32 %v7209, %v7221
        %v7223 = vpop.f32.mrf.mxu0
        %7224 = vdwg.mxu0
        %7225 = vmatpush.bf16.msra.mxu0 %v803
        %7226 = vmatpush.bf16.msra.mxu0 %v791
        %7227 = vmatpush.bf16.msra.mxu0 %v779
        %7228 = vmatpush.bf16.msra.mxu0 %v767
        %7229 = vmatpush.bf16.msra.mxu0 %v755
        %7230 = vmatpush.bf16.msra.mxu0 %v743
        %7231 = vmatpush.bf16.msra.mxu0 %v731
        %7232 = vmatpush.bf16.msra.mxu0 %v719
        %7233 = vmatmul.bf16.gmra.mxu0 %v7115
        %v7234 = vpop.f32.mrf.mxu0
        %v7235 = vadd.f32 0.0, %v7234
        %v7236 = vpop.f32.mrf.mxu0
        %7237 = vdwg.mxu0
        %7238 = vmatpush.bf16.msra.mxu0 0
        %7239 = vmatpush.bf16.msra.mxu0 0
        %7240 = vmatpush.bf16.msra.mxu0 0
        %7241 = vmatpush.bf16.msra.mxu0 0
        %7242 = vmatpush.bf16.msra.mxu0 0
        %7243 = vmatpush.bf16.msra.mxu0 0
        %7244 = vmatpush.bf16.msra.mxu0 0
        %7245 = vmatpush.bf16.msra.mxu0 %v937
        %7246 = vmatmul.bf16.gmra.mxu0 %v7119
        %v7247 = vpop.f32.mrf.mxu0
        %v7248 = vadd.f32 %v7235, %v7247
        %v7249 = vpop.f32.mrf.mxu0
        %7250 = vdwg.mxu0
        %7251 = vmatpush.bf16.msra.mxu0 %v804
        %7252 = vmatpush.bf16.msra.mxu0 %v792
        %7253 = vmatpush.bf16.msra.mxu0 %v780
        %7254 = vmatpush.bf16.msra.mxu0 %v768
        %7255 = vmatpush.bf16.msra.mxu0 %v756
        %7256 = vmatpush.bf16.msra.mxu0 %v744
        %7257 = vmatpush.bf16.msra.mxu0 %v732
        %7258 = vmatpush.bf16.msra.mxu0 %v720
        %7259 = vmatmul.bf16.gmra.mxu0 %v7115
        %v7260 = vpop.f32.mrf.mxu0
        %v7261 = vadd.f32 0.0, %v7260
        %v7262 = vpop.f32.mrf.mxu0
        %7263 = vdwg.mxu0
        %7264 = vmatpush.bf16.msra.mxu0 0
        %7265 = vmatpush.bf16.msra.mxu0 0
        %7266 = vmatpush.bf16.msra.mxu0 0
        %7267 = vmatpush.bf16.msra.mxu0 0
        %7268 = vmatpush.bf16.msra.mxu0 0
        %7269 = vmatpush.bf16.msra.mxu0 0
        %7270 = vmatpush.bf16.msra.mxu0 0
        %7271 = vmatpush.bf16.msra.mxu0 %v940
        %7272 = vmatmul.bf16.gmra.mxu0 %v7119
        %v7273 = vpop.f32.mrf.mxu0
        %v7274 = vadd.f32 %v7261, %v7273
        %v7275 = vpop.f32.mrf.mxu0
        %7276 = vdwg.mxu0
        %7277 = vmatpush.bf16.msra.mxu0 %v805
        %7278 = vmatpush.bf16.msra.mxu0 %v793
        %7279 = vmatpush.bf16.msra.mxu0 %v781
        %7280 = vmatpush.bf16.msra.mxu0 %v769
        %7281 = vmatpush.bf16.msra.mxu0 %v757
        %7282 = vmatpush.bf16.msra.mxu0 %v745
        %7283 = vmatpush.bf16.msra.mxu0 %v733
        %7284 = vmatpush.bf16.msra.mxu0 %v721
        %7285 = vmatmul.bf16.gmra.mxu0 %v7115
        %v7286 = vpop.f32.mrf.mxu0
        %v7287 = vadd.f32 0.0, %v7286
        %v7288 = vpop.f32.mrf.mxu0
        %7289 = vdwg.mxu0
        %7290 = vmatpush.bf16.msra.mxu0 0
        %7291 = vmatpush.bf16.msra.mxu0 0
        %7292 = vmatpush.bf16.msra.mxu0 0
        %7293 = vmatpush.bf16.msra.mxu0 0
        %7294 = vmatpush.bf16.msra.mxu0 0
        %7295 = vmatpush.bf16.msra.mxu0 0
        %7296 = vmatpush.bf16.msra.mxu0 0
        %7297 = vmatpush.bf16.msra.mxu0 %v943
        %7298 = vmatmul.bf16.gmra.mxu0 %v7119
        %v7299 = vpop.f32.mrf.mxu0
        %v7300 = vadd.f32 %v7287, %v7299
        %v7301 = vpop.f32.mrf.mxu0
        %7302 = vdwg.mxu0
        %7303 = vmatpush.bf16.msra.mxu0 %v806
        %7304 = vmatpush.bf16.msra.mxu0 %v794
        %7305 = vmatpush.bf16.msra.mxu0 %v782
        %7306 = vmatpush.bf16.msra.mxu0 %v770
        %7307 = vmatpush.bf16.msra.mxu0 %v758
        %7308 = vmatpush.bf16.msra.mxu0 %v746
        %7309 = vmatpush.bf16.msra.mxu0 %v734
        %7310 = vmatpush.bf16.msra.mxu0 %v722
        %7311 = vmatmul.bf16.gmra.mxu0 %v7115
        %v7312 = vpop.f32.mrf.mxu0
        %v7313 = vadd.f32 0.0, %v7312
        %v7314 = vpop.f32.mrf.mxu0
        %7315 = vdwg.mxu0
        %7316 = vmatpush.bf16.msra.mxu0 0
        %7317 = vmatpush.bf16.msra.mxu0 0
        %7318 = vmatpush.bf16.msra.mxu0 0
        %7319 = vmatpush.bf16.msra.mxu0 0
        %7320 = vmatpush.bf16.msra.mxu0 0
        %7321 = vmatpush.bf16.msra.mxu0 0
        %7322 = vmatpush.bf16.msra.mxu0 0
        %7323 = vmatpush.bf16.msra.mxu0 %v946
        %7324 = vmatmul.bf16.gmra.mxu0 %v7119
        %v7325 = vpop.f32.mrf.mxu0
        %v7326 = vadd.f32 %v7313, %v7325
        %v7327 = vpop.f32.mrf.mxu0
        %7328 = vdwg.mxu0
        %7329 = vmatpush.bf16.msra.mxu0 %v807
        %7330 = vmatpush.bf16.msra.mxu0 %v795
        %7331 = vmatpush.bf16.msra.mxu0 %v783
        %7332 = vmatpush.bf16.msra.mxu0 %v771
        %7333 = vmatpush.bf16.msra.mxu0 %v759
        %7334 = vmatpush.bf16.msra.mxu0 %v747
        %7335 = vmatpush.bf16.msra.mxu0 %v735
        %7336 = vmatpush.bf16.msra.mxu0 %v723
        %7337 = vmatmul.bf16.gmra.mxu0 %v7115
        %v7338 = vpop.f32.mrf.mxu0
        %v7339 = vadd.f32 0.0, %v7338
        %v7340 = vpop.f32.mrf.mxu0
        %7341 = vdwg.mxu0
        %7342 = vmatpush.bf16.msra.mxu0 0
        %7343 = vmatpush.bf16.msra.mxu0 0
        %7344 = vmatpush.bf16.msra.mxu0 0
        %7345 = vmatpush.bf16.msra.mxu0 0
        %7346 = vmatpush.bf16.msra.mxu0 0
        %7347 = vmatpush.bf16.msra.mxu0 0
        %7348 = vmatpush.bf16.msra.mxu0 0
        %7349 = vmatpush.bf16.msra.mxu0 %v949
        %7350 = vmatmul.bf16.gmra.mxu0 %v7119
        %v7351 = vpop.f32.mrf.mxu0
        %v7352 = vadd.f32 %v7339, %v7351
        %v7353 = vpop.f32.mrf.mxu0
        %7354 = vdwg.mxu0
        %7355 = vmatpush.bf16.msra.mxu0 %v808
        %7356 = vmatpush.bf16.msra.mxu0 %v796
        %7357 = vmatpush.bf16.msra.mxu0 %v784
        %7358 = vmatpush.bf16.msra.mxu0 %v772
        %7359 = vmatpush.bf16.msra.mxu0 %v760
        %7360 = vmatpush.bf16.msra.mxu0 %v748
        %7361 = vmatpush.bf16.msra.mxu0 %v736
        %7362 = vmatpush.bf16.msra.mxu0 %v724
        %7363 = vmatmul.bf16.gmra.mxu0 %v7115
        %v7364 = vpop.f32.mrf.mxu0
        %v7365 = vadd.f32 0.0, %v7364
        %v7366 = vpop.f32.mrf.mxu0
        %7367 = vdwg.mxu0
        %7368 = vmatpush.bf16.msra.mxu0 0
        %7369 = vmatpush.bf16.msra.mxu0 0
        %7370 = vmatpush.bf16.msra.mxu0 0
        %7371 = vmatpush.bf16.msra.mxu0 0
        %7372 = vmatpush.bf16.msra.mxu0 0
        %7373 = vmatpush.bf16.msra.mxu0 0
        %7374 = vmatpush.bf16.msra.mxu0 0
        %7375 = vmatpush.bf16.msra.mxu0 %v952
        %7376 = vmatmul.bf16.gmra.mxu0 %v7119
        %v7377 = vpop.f32.mrf.mxu0
        %v7378 = vadd.f32 %v7365, %v7377
        %v7379 = vpop.f32.mrf.mxu0
        %7380 = vdwg.mxu0
        %7381 = vmatpush.bf16.msra.mxu0 %v809
        %7382 = vmatpush.bf16.msra.mxu0 %v797
        %7383 = vmatpush.bf16.msra.mxu0 %v785
        %7384 = vmatpush.bf16.msra.mxu0 %v773
        %7385 = vmatpush.bf16.msra.mxu0 %v761
        %7386 = vmatpush.bf16.msra.mxu0 %v749
        %7387 = vmatpush.bf16.msra.mxu0 %v737
        %7388 = vmatpush.bf16.msra.mxu0 %v725
        %7389 = vmatmul.bf16.gmra.mxu0 %v7115
        %v7390 = vpop.f32.mrf.mxu0
        %v7391 = vadd.f32 0.0, %v7390
        %v7392 = vpop.f32.mrf.mxu0
        %7393 = vdwg.mxu0
        %7394 = vmatpush.bf16.msra.mxu0 0
        %7395 = vmatpush.bf16.msra.mxu0 0
        %7396 = vmatpush.bf16.msra.mxu0 0
        %7397 = vmatpush.bf16.msra.mxu0 0
        %7398 = vmatpush.bf16.msra.mxu0 0
        %7399 = vmatpush.bf16.msra.mxu0 0
        %7400 = vmatpush.bf16.msra.mxu0 0
        %7401 = vmatpush.bf16.msra.mxu0 %v955
        %7402 = vmatmul.bf16.gmra.mxu0 %v7119
        %v7403 = vpop.f32.mrf.mxu0
        %v7404 = vadd.f32 %v7391, %v7403
        %v7405 = vpop.f32.mrf.mxu0
        %7406 = vdwg.mxu0
        %7407 = vmatpush.bf16.msra.mxu0 %v810
        %7408 = vmatpush.bf16.msra.mxu0 %v798
        %7409 = vmatpush.bf16.msra.mxu0 %v786
        %7410 = vmatpush.bf16.msra.mxu0 %v774
        %7411 = vmatpush.bf16.msra.mxu0 %v762
        %7412 = vmatpush.bf16.msra.mxu0 %v750
        %7413 = vmatpush.bf16.msra.mxu0 %v738
        %7414 = vmatpush.bf16.msra.mxu0 %v726
        %7415 = vmatmul.bf16.gmra.mxu0 %v7115
        %v7416 = vpop.f32.mrf.mxu0
        %v7417 = vadd.f32 0.0, %v7416
        %v7418 = vpop.f32.mrf.mxu0
        %7419 = vdwg.mxu0
        %7420 = vmatpush.bf16.msra.mxu0 0
        %7421 = vmatpush.bf16.msra.mxu0 0
        %7422 = vmatpush.bf16.msra.mxu0 0
        %7423 = vmatpush.bf16.msra.mxu0 0
        %7424 = vmatpush.bf16.msra.mxu0 0
        %7425 = vmatpush.bf16.msra.mxu0 0
        %7426 = vmatpush.bf16.msra.mxu0 0
        %7427 = vmatpush.bf16.msra.mxu0 %v958
        %7428 = vmatmul.bf16.gmra.mxu0 %v7119
        %v7429 = vpop.f32.mrf.mxu0
        %v7430 = vadd.f32 %v7417, %v7429
        %v7431 = vpop.f32.mrf.mxu0
        %7432 = vdwg.mxu0
        %v7433 = vmax.f32 %v7144, %v7248
        %v7434 = vmax.f32 %v7170, %v7274
        %v7435 = vmax.f32 %v7196, %v7300
        %v7436 = vmax.f32 %v7222, %v7326
        %v7437 = vmax.f32 %v7433, %v7352
        %v7438 = vmax.f32 %v7434, %v7378
        %v7439 = vmax.f32 %v7435, %v7404
        %v7440 = vmax.f32 %v7436, %v7430
        %v7441 = vadd.f32 %v7437, %v1281
        %v7442 = vadd.f32 %v7438, %v1282
        %v7443 = vadd.f32 %v7439, %v1283
        %v7444 = vadd.f32 %v7440, %v1284
        %v7445 = vmax.f32 %v7441, 0.0
        %v7446 = vmax.f32 %v7442, 0.0
        %v7447 = vmax.f32 %v7443, 0.0
        %v7448 = vmax.f32 %v7444, 0.0
        %7453 = vrot.lane.b32.xlu0 %v7445, 112
        %v7454 = vpop.permute.xlu0 %7453
        %7455 = vrot.lane.b32.xlu0 %v7446, 112
        %v7456 = vpop.permute.xlu0 %7455
        %7457 = vrot.lane.b32.xlu0 %v7447, 112
        %v7458 = vpop.permute.xlu0 %7457
        %7459 = vrot.lane.b32.xlu0 %v7448, 112
        %v7460 = vpop.permute.xlu0 %7459
        %v7461 = vsel %vm1309, %v7454, %v7456
        %v7462 = vsel %vm1309, %v7456, %v7458
        %v7463 = vsel %vm1309, %v7458, %v7460
        %v7468 = vmax.f32 %v7445, %v7461
        %v7469 = vmax.f32 %v7446, %v7462
        %v7470 = vmax.f32 %v7447, %v7463
        %v7471 = vmax.f32 %v7448, %v7460
        %7472 = vrot.lane.b32.xlu0 %v7445, 96
        %v7473 = vpop.permute.xlu0 %7472
        %7474 = vrot.lane.b32.xlu0 %v7446, 96
        %v7475 = vpop.permute.xlu0 %7474
        %7476 = vrot.lane.b32.xlu0 %v7447, 96
        %v7477 = vpop.permute.xlu0 %7476
        %7478 = vrot.lane.b32.xlu0 %v7448, 96
        %v7479 = vpop.permute.xlu0 %7478
        %v7480 = vsel %vm1329, %v7473, %v7475
        %v7481 = vsel %vm1329, %v7475, %v7477
        %v7482 = vsel %vm1329, %v7477, %v7479
        %v7487 = vmax.f32 %v7468, %v7480
        %v7488 = vmax.f32 %v7469, %v7481
        %v7489 = vmax.f32 %v7470, %v7482
        %v7490 = vmax.f32 %v7471, %v7479
        %v7491 = vld [vmem:[%s3 + $0x870] sm:$0xf]
        %v7492 = vld [vmem:[%s3 + $0x874] sm:$0xf]
        %v7493 = vld [vmem:[%s3 + $0x878] sm:$0xf]
        %v7494 = vld [vmem:[%s3 + $0x87c] sm:$0xf]
        %v7495 = vld [vmem:[%s3 + $0x880] sm:$0xf]
        %v7496 = vld [vmem:[%s3 + $0x884] sm:$0xf]
        %v7497 = vld [vmem:[%s3 + $0x888] sm:$0xf]
        %v7498 = vld [vmem:[%s3 + $0x88c] sm:$0xf]
        %v7499 = vld [vmem:[%s3 + $0x890] sm:$0xf]
        %v7500 = vld [vmem:[%s3 + $0x894] sm:$0xf]
        %v7501 = vld [vmem:[%s3 + $0x898] sm:$0xf]
        %v7502 = vld [vmem:[%s3 + $0x89c] sm:$0xf]
        %v7503 = vld [vmem:[%s3 + $0x8a0] sm:$0xf]
        %v7504 = vld [vmem:[%s3 + $0x8a4] sm:$0xf]
        %v7505 = vld [vmem:[%s3 + $0x8a8] sm:$0xf]
        %v7506 = vld [vmem:[%s3 + $0x8ac] sm:$0xf]
        %v7507 = vld [vmem:[%s3 + $0x8b0] sm:$0xf]
        %v7508 = vld [vmem:[%s3 + $0x8b4] sm:$0xf]
        %v7509 = vld [vmem:[%s3 + $0x8b8] sm:$0xf]
        %v7510 = vld [vmem:[%s3 + $0x8bc] sm:$0xf]
        %v7511 = vld [vmem:[%s3 + $0x8c0] sm:$0xf]
        %v7512 = vld [vmem:[%s3 + $0x8c4] sm:$0xf]
        %v7513 = vld [vmem:[%s3 + $0x8c8] sm:$0xf]
        %v7514 = vld [vmem:[%s3 + $0x8cc] sm:$0xf]
        %v7515 = vld [vmem:[%s3 + $0x8d0] sm:$0xf]
        %v7516 = vld [vmem:[%s3 + $0x8d4] sm:$0xf]
        %v7517 = vld [vmem:[%s3 + $0x8d8] sm:$0xf]
        %v7518 = vld [vmem:[%s3 + $0x8dc] sm:$0xf]
        %v7519 = vld [vmem:[%s3 + $0x8e0] sm:$0xf]
        %v7520 = vld [vmem:[%s3 + $0x8e4] sm:$0xf]
        %v7521 = vld [vmem:[%s3 + $0x8e8] sm:$0xf]
        %v7522 = vld [vmem:[%s3 + $0x8ec] sm:$0xf]
        %v7523 = vld [vmem:[%s3 + $0x8f0] sm:$0xf]
        %v7524 = vld [vmem:[%s3 + $0x8f4] sm:$0xf]
        %v7525 = vld [vmem:[%s3 + $0x8f8] sm:$0xf]
        %v7526 = vld [vmem:[%s3 + $0x8fc] sm:$0xf]
        %v7527 = vld [vmem:[%s3 + $0x900] sm:$0xf]
        %v7528 = vld [vmem:[%s3 + $0x904] sm:$0xf]
        %v7529 = vld [vmem:[%s3 + $0x908] sm:$0xf]
        %v7530 = vld [vmem:[%s3 + $0x90c] sm:$0xf]
        %v7531 = vld [vmem:[%s3 + $0x910] sm:$0xf]
        %v7532 = vld [vmem:[%s3 + $0x914] sm:$0xf]
        %v7533 = vld [vmem:[%s3 + $0x918] sm:$0xf]
        %v7534 = vld [vmem:[%s3 + $0x91c] sm:$0xf]
        %v7535 = vld [vmem:[%s3 + $0x920] sm:$0xf]
        %v7536 = vld [vmem:[%s3 + $0x924] sm:$0xf]
        %v7537 = vld [vmem:[%s3 + $0x928] sm:$0xf]
        %v7538 = vld [vmem:[%s3 + $0x92c] sm:$0xf]
        %v7539 = vld [vmem:[%s3 + $0x930] sm:$0xf]
        %v7540 = vld [vmem:[%s3 + $0x934] sm:$0xf]
        %v7541 = vld [vmem:[%s3 + $0x938] sm:$0xf]
        %v7542 = vld [vmem:[%s3 + $0x93c] sm:$0xf]
        %v7543 = vld [vmem:[%s3 + $0x940] sm:$0xf]
        %v7544 = vld [vmem:[%s3 + $0x944] sm:$0xf]
        %v7545 = vld [vmem:[%s3 + $0x948] sm:$0xf]
        %v7546 = vld [vmem:[%s3 + $0x94c] sm:$0xf]
        %v7547 = vld [vmem:[%s3 + $0x950] sm:$0xf]
        %v7548 = vld [vmem:[%s3 + $0x954] sm:$0xf]
        %v7549 = vld [vmem:[%s3 + $0x958] sm:$0xf]
        %v7550 = vld [vmem:[%s3 + $0x95c] sm:$0xf]
        %v7551 = vpack.c.bf16 %v7487, %v7487
        %v7552 = vpack.c.bf16 %v7488, %v7488
        %v7553 = vpack.c.bf16 %v7489, %v7489
        %v7554 = vpack.c.bf16 %v7490, %v7490
        %v7615 = vunpack.c.l.b16 %v7491
        %v7616 = vunpack.c.l.b16 %v7492
        %v7617 = vunpack.c.l.b16 %v7493
        %v7618 = vunpack.c.l.b16 %v7494
        %v7619 = vunpack.c.l.b16 %v7495
        %v7620 = vunpack.c.l.b16 %v7496
        %v7621 = vunpack.c.l.b16 %v7497
        %v7622 = vunpack.c.l.b16 %v7498
        %v7623 = vunpack.c.l.b16 %v7499
        %v7624 = vunpack.c.l.b16 %v7500
        %v7625 = vunpack.c.l.b16 %v7501
        %v7626 = vunpack.c.l.b16 %v7502
        %v7627 = vunpack.c.l.b16 %v7503
        %v7628 = vunpack.c.l.b16 %v7504
        %v7629 = vunpack.c.l.b16 %v7505
        %v7630 = vunpack.c.l.b16 %v7506
        %v7631 = vunpack.c.l.b16 %v7507
        %v7632 = vunpack.c.l.b16 %v7508
        %v7633 = vunpack.c.l.b16 %v7509
        %v7634 = vunpack.c.l.b16 %v7510
        %v7635 = vunpack.c.l.b16 %v7511
        %v7636 = vunpack.c.l.b16 %v7512
        %v7637 = vunpack.c.l.b16 %v7513
        %v7638 = vunpack.c.l.b16 %v7514
        %v7639 = vunpack.c.l.b16 %v7515
        %v7640 = vunpack.c.l.b16 %v7516
        %v7641 = vunpack.c.l.b16 %v7517
        %v7642 = vunpack.c.l.b16 %v7518
        %v7643 = vunpack.c.l.b16 %v7519
        %v7644 = vunpack.c.l.b16 %v7520
        %v7645 = vunpack.c.l.b16 %v7521
        %v7646 = vunpack.c.l.b16 %v7522
        %v7647 = vunpack.c.l.b16 %v7523
        %v7648 = vunpack.c.l.b16 %v7524
        %v7649 = vunpack.c.l.b16 %v7525
        %v7650 = vunpack.c.l.b16 %v7526
        %v7651 = vunpack.c.l.b16 %v7527
        %v7652 = vunpack.c.l.b16 %v7528
        %v7653 = vunpack.c.l.b16 %v7529
        %v7654 = vunpack.c.l.b16 %v7530
        %v7655 = vunpack.c.l.b16 %v7531
        %v7656 = vunpack.c.l.b16 %v7532
        %v7657 = vunpack.c.l.b16 %v7533
        %v7658 = vunpack.c.l.b16 %v7534
        %v7659 = vunpack.c.l.b16 %v7535
        %v7660 = vunpack.c.l.b16 %v7536
        %v7661 = vunpack.c.l.b16 %v7537
        %v7662 = vunpack.c.l.b16 %v7538
        %v7663 = vunpack.c.l.b16 %v7539
        %v7664 = vunpack.c.l.b16 %v7540
        %v7665 = vunpack.c.l.b16 %v7541
        %v7666 = vunpack.c.l.b16 %v7542
        %v7667 = vunpack.c.l.b16 %v7543
        %v7668 = vunpack.c.l.b16 %v7544
        %v7669 = vunpack.c.l.b16 %v7545
        %v7670 = vunpack.c.l.b16 %v7546
        %v7671 = vunpack.c.l.b16 %v7547
        %v7672 = vunpack.c.l.b16 %v7548
        %v7673 = vunpack.c.l.b16 %v7549
        %v7674 = vunpack.c.l.b16 %v7550
        %v7675 = vpack.c.b16 %v7616, %v7615
        %v7676 = vpack.c.b16 %v7618, %v7617
        %v7677 = vpack.c.b16 %v7620, %v7619
        %v7678 = vpack.c.b16 %v7622, %v7621
        %v7679 = vpack.c.b16 %v7624, %v7623
        %v7680 = vpack.c.b16 %v7626, %v7625
        %v7681 = vpack.c.b16 %v7628, %v7627
        %v7682 = vpack.c.b16 %v7630, %v7629
        %v7683 = vpack.c.b16 %v7632, %v7631
        %v7684 = vpack.c.b16 %v7634, %v7633
        %v7685 = vpack.c.b16 %v7636, %v7635
        %v7686 = vpack.c.b16 %v7638, %v7637
        %v7687 = vpack.c.b16 %v7640, %v7639
        %v7688 = vpack.c.b16 %v7642, %v7641
        %v7689 = vpack.c.b16 %v7644, %v7643
        %v7690 = vpack.c.b16 %v7646, %v7645
        %v7691 = vpack.c.b16 %v7648, %v7647
        %v7692 = vpack.c.b16 %v7650, %v7649
        %v7693 = vpack.c.b16 %v7652, %v7651
        %v7694 = vpack.c.b16 %v7654, %v7653
        %v7695 = vpack.c.b16 %v7656, %v7655
        %v7696 = vpack.c.b16 %v7658, %v7657
        %v7697 = vpack.c.b16 %v7660, %v7659
        %v7698 = vpack.c.b16 %v7662, %v7661
        %v7699 = vpack.c.b16 %v7664, %v7663
        %v7700 = vpack.c.b16 %v7666, %v7665
        %v7701 = vpack.c.b16 %v7668, %v7667
        %v7702 = vpack.c.b16 %v7670, %v7669
        %v7703 = vpack.c.b16 %v7672, %v7671
        %v7704 = vpack.c.b16 %v7674, %v7673
        %v7736 = vsel %vm1329, %v7554, 0
        %7738 = vmatpush.bf16.msra.mxu0 %v7682
        %7739 = vmatpush.bf16.msra.mxu0 %v7681
        %7740 = vmatpush.bf16.msra.mxu0 %v7680
        %7741 = vmatpush.bf16.msra.mxu0 %v7679
        %7742 = vmatpush.bf16.msra.mxu0 %v7678
        %7743 = vmatpush.bf16.msra.mxu0 %v7677
        %7744 = vmatpush.bf16.msra.mxu0 %v7676
        %7745 = vmatpush.bf16.msra.mxu0 %v7675
        %7746 = vmatmul.bf16.gmra.mxu0 %v7551
        %v7747 = vpop.f32.mrf.mxu0
        %v7748 = vadd.f32 0.0, %v7747
        %v7749 = vpop.f32.mrf.mxu0
        %7750 = vdwg.mxu0
        %7751 = vmatpush.bf16.msra.mxu0 %v7690
        %7752 = vmatpush.bf16.msra.mxu0 %v7689
        %7753 = vmatpush.bf16.msra.mxu0 %v7688
        %7754 = vmatpush.bf16.msra.mxu0 %v7687
        %7755 = vmatpush.bf16.msra.mxu0 %v7686
        %7756 = vmatpush.bf16.msra.mxu0 %v7685
        %7757 = vmatpush.bf16.msra.mxu0 %v7684
        %7758 = vmatpush.bf16.msra.mxu0 %v7683
        %7759 = vmatmul.bf16.gmra.mxu0 %v7552
        %v7760 = vpop.f32.mrf.mxu0
        %v7761 = vadd.f32 %v7748, %v7760
        %v7762 = vpop.f32.mrf.mxu0
        %7763 = vdwg.mxu0
        %7764 = vmatpush.bf16.msra.mxu0 %v7698
        %7765 = vmatpush.bf16.msra.mxu0 %v7697
        %7766 = vmatpush.bf16.msra.mxu0 %v7696
        %7767 = vmatpush.bf16.msra.mxu0 %v7695
        %7768 = vmatpush.bf16.msra.mxu0 %v7694
        %7769 = vmatpush.bf16.msra.mxu0 %v7693
        %7770 = vmatpush.bf16.msra.mxu0 %v7692
        %7771 = vmatpush.bf16.msra.mxu0 %v7691
        %7772 = vmatmul.bf16.gmra.mxu0 %v7553
        %v7773 = vpop.f32.mrf.mxu0
        %v7774 = vadd.f32 %v7761, %v7773
        %v7775 = vpop.f32.mrf.mxu0
        %7776 = vdwg.mxu0
        %7777 = vmatpush.bf16.msra.mxu0 0
        %7778 = vmatpush.bf16.msra.mxu0 0
        %7779 = vmatpush.bf16.msra.mxu0 %v7704
        %7780 = vmatpush.bf16.msra.mxu0 %v7703
        %7781 = vmatpush.bf16.msra.mxu0 %v7702
        %7782 = vmatpush.bf16.msra.mxu0 %v7701
        %7783 = vmatpush.bf16.msra.mxu0 %v7700
        %7784 = vmatpush.bf16.msra.mxu0 %v7699
        %7785 = vmatmul.bf16.gmra.mxu0 %v7736
        %v7786 = vpop.f32.mrf.mxu0
        %v7787 = vadd.f32 %v7774, %v7786
        %v7788 = vpop.f32.mrf.mxu0
        %7789 = vdwg.mxu0
        %v7790 = vadd.f32 %v7098, %v7787
        %7791 = vrot.lane.b32.xlu0 %v7103, 80
        %v7792 = vpop.permute.xlu0 %7791
        %7793 = vrot.lane.b32.xlu0 %v7104, 80
        %v7794 = vpop.permute.xlu0 %7793
        %vm7795 = vcmask 654336
        %v7796 = vsel %vm7795, %v7792, %v7794
        %v7799 = vsel %vm919, %v7794, 0
        %7801 = vmatpush.bf16.msra.mxu0 %v799
        %7802 = vmatpush.bf16.msra.mxu0 %v787
        %7803 = vmatpush.bf16.msra.mxu0 %v775
        %7804 = vmatpush.bf16.msra.mxu0 %v763
        %7805 = vmatpush.bf16.msra.mxu0 %v751
        %7806 = vmatpush.bf16.msra.mxu0 %v739
        %7807 = vmatpush.bf16.msra.mxu0 %v727
        %7808 = vmatpush.bf16.msra.mxu0 %v715
        %7809 = vmatmul.bf16.gmra.mxu0 %v7796
        %v7810 = vpop.f32.mrf.mxu0
        %v7811 = vadd.f32 0.0, %v7810
        %v7812 = vpop.f32.mrf.mxu0
        %7813 = vdwg.mxu0
        %7814 = vmatpush.bf16.msra.mxu0 0
        %7815 = vmatpush.bf16.msra.mxu0 0
        %7816 = vmatpush.bf16.msra.mxu0 0
        %7817 = vmatpush.bf16.msra.mxu0 0
        %7818 = vmatpush.bf16.msra.mxu0 0
        %7819 = vmatpush.bf16.msra.mxu0 0
        %7820 = vmatpush.bf16.msra.mxu0 0
        %7821 = vmatpush.bf16.msra.mxu0 %v925
        %7822 = vmatmul.bf16.gmra.mxu0 %v7799
        %v7823 = vpop.f32.mrf.mxu0
        %v7824 = vadd.f32 %v7811, %v7823
        %v7825 = vpop.f32.mrf.mxu0
        %7826 = vdwg.mxu0
        %7827 = vmatpush.bf16.msra.mxu0 %v800
        %7828 = vmatpush.bf16.msra.mxu0 %v788
        %7829 = vmatpush.bf16.msra.mxu0 %v776
        %7830 = vmatpush.bf16.msra.mxu0 %v764
        %7831 = vmatpush.bf16.msra.mxu0 %v752
        %7832 = vmatpush.bf16.msra.mxu0 %v740
        %7833 = vmatpush.bf16.msra.mxu0 %v728
        %7834 = vmatpush.bf16.msra.mxu0 %v716
        %7835 = vmatmul.bf16.gmra.mxu0 %v7796
        %v7836 = vpop.f32.mrf.mxu0
        %v7837 = vadd.f32 0.0, %v7836
        %v7838 = vpop.f32.mrf.mxu0
        %7839 = vdwg.mxu0
        %7840 = vmatpush.bf16.msra.mxu0 0
        %7841 = vmatpush.bf16.msra.mxu0 0
        %7842 = vmatpush.bf16.msra.mxu0 0
        %7843 = vmatpush.bf16.msra.mxu0 0
        %7844 = vmatpush.bf16.msra.mxu0 0
        %7845 = vmatpush.bf16.msra.mxu0 0
        %7846 = vmatpush.bf16.msra.mxu0 0
        %7847 = vmatpush.bf16.msra.mxu0 %v928
        %7848 = vmatmul.bf16.gmra.mxu0 %v7799
        %v7849 = vpop.f32.mrf.mxu0
        %v7850 = vadd.f32 %v7837, %v7849
        %v7851 = vpop.f32.mrf.mxu0
        %7852 = vdwg.mxu0
        %7853 = vmatpush.bf16.msra.mxu0 %v801
        %7854 = vmatpush.bf16.msra.mxu0 %v789
        %7855 = vmatpush.bf16.msra.mxu0 %v777
        %7856 = vmatpush.bf16.msra.mxu0 %v765
        %7857 = vmatpush.bf16.msra.mxu0 %v753
        %7858 = vmatpush.bf16.msra.mxu0 %v741
        %7859 = vmatpush.bf16.msra.mxu0 %v729
        %7860 = vmatpush.bf16.msra.mxu0 %v717
        %7861 = vmatmul.bf16.gmra.mxu0 %v7796
        %v7862 = vpop.f32.mrf.mxu0
        %v7863 = vadd.f32 0.0, %v7862
        %v7864 = vpop.f32.mrf.mxu0
        %7865 = vdwg.mxu0
        %7866 = vmatpush.bf16.msra.mxu0 0
        %7867 = vmatpush.bf16.msra.mxu0 0
        %7868 = vmatpush.bf16.msra.mxu0 0
        %7869 = vmatpush.bf16.msra.mxu0 0
        %7870 = vmatpush.bf16.msra.mxu0 0
        %7871 = vmatpush.bf16.msra.mxu0 0
        %7872 = vmatpush.bf16.msra.mxu0 0
        %7873 = vmatpush.bf16.msra.mxu0 %v931
        %7874 = vmatmul.bf16.gmra.mxu0 %v7799
        %v7875 = vpop.f32.mrf.mxu0
        %v7876 = vadd.f32 %v7863, %v7875
        %v7877 = vpop.f32.mrf.mxu0
        %7878 = vdwg.mxu0
        %7879 = vmatpush.bf16.msra.mxu0 %v802
        %7880 = vmatpush.bf16.msra.mxu0 %v790
        %7881 = vmatpush.bf16.msra.mxu0 %v778
        %7882 = vmatpush.bf16.msra.mxu0 %v766
        %7883 = vmatpush.bf16.msra.mxu0 %v754
        %7884 = vmatpush.bf16.msra.mxu0 %v742
        %7885 = vmatpush.bf16.msra.mxu0 %v730
        %7886 = vmatpush.bf16.msra.mxu0 %v718
        %7887 = vmatmul.bf16.gmra.mxu0 %v7796
        %v7888 = vpop.f32.mrf.mxu0
        %v7889 = vadd.f32 0.0, %v7888
        %v7890 = vpop.f32.mrf.mxu0
        %7891 = vdwg.mxu0
        %7892 = vmatpush.bf16.msra.mxu0 0
        %7893 = vmatpush.bf16.msra.mxu0 0
        %7894 = vmatpush.bf16.msra.mxu0 0
        %7895 = vmatpush.bf16.msra.mxu0 0
        %7896 = vmatpush.bf16.msra.mxu0 0
        %7897 = vmatpush.bf16.msra.mxu0 0
        %7898 = vmatpush.bf16.msra.mxu0 0
        %7899 = vmatpush.bf16.msra.mxu0 %v934
        %7900 = vmatmul.bf16.gmra.mxu0 %v7799
        %v7901 = vpop.f32.mrf.mxu0
        %v7902 = vadd.f32 %v7889, %v7901
        %v7903 = vpop.f32.mrf.mxu0
        %7904 = vdwg.mxu0
        %7905 = vmatpush.bf16.msra.mxu0 %v803
        %7906 = vmatpush.bf16.msra.mxu0 %v791
        %7907 = vmatpush.bf16.msra.mxu0 %v779
        %7908 = vmatpush.bf16.msra.mxu0 %v767
        %7909 = vmatpush.bf16.msra.mxu0 %v755
        %7910 = vmatpush.bf16.msra.mxu0 %v743
        %7911 = vmatpush.bf16.msra.mxu0 %v731
        %7912 = vmatpush.bf16.msra.mxu0 %v719
        %7913 = vmatmul.bf16.gmra.mxu0 %v7796
        %v7914 = vpop.f32.mrf.mxu0
        %v7915 = vadd.f32 0.0, %v7914
        %v7916 = vpop.f32.mrf.mxu0
        %7917 = vdwg.mxu0
        %7918 = vmatpush.bf16.msra.mxu0 0
        %7919 = vmatpush.bf16.msra.mxu0 0
        %7920 = vmatpush.bf16.msra.mxu0 0
        %7921 = vmatpush.bf16.msra.mxu0 0
        %7922 = vmatpush.bf16.msra.mxu0 0
        %7923 = vmatpush.bf16.msra.mxu0 0
        %7924 = vmatpush.bf16.msra.mxu0 0
        %7925 = vmatpush.bf16.msra.mxu0 %v937
        %7926 = vmatmul.bf16.gmra.mxu0 %v7799
        %v7927 = vpop.f32.mrf.mxu0
        %v7928 = vadd.f32 %v7915, %v7927
        %v7929 = vpop.f32.mrf.mxu0
        %7930 = vdwg.mxu0
        %7931 = vmatpush.bf16.msra.mxu0 %v804
        %7932 = vmatpush.bf16.msra.mxu0 %v792
        %7933 = vmatpush.bf16.msra.mxu0 %v780
        %7934 = vmatpush.bf16.msra.mxu0 %v768
        %7935 = vmatpush.bf16.msra.mxu0 %v756
        %7936 = vmatpush.bf16.msra.mxu0 %v744
        %7937 = vmatpush.bf16.msra.mxu0 %v732
        %7938 = vmatpush.bf16.msra.mxu0 %v720
        %7939 = vmatmul.bf16.gmra.mxu0 %v7796
        %v7940 = vpop.f32.mrf.mxu0
        %v7941 = vadd.f32 0.0, %v7940
        %v7942 = vpop.f32.mrf.mxu0
        %7943 = vdwg.mxu0
        %7944 = vmatpush.bf16.msra.mxu0 0
        %7945 = vmatpush.bf16.msra.mxu0 0
        %7946 = vmatpush.bf16.msra.mxu0 0
        %7947 = vmatpush.bf16.msra.mxu0 0
        %7948 = vmatpush.bf16.msra.mxu0 0
        %7949 = vmatpush.bf16.msra.mxu0 0
        %7950 = vmatpush.bf16.msra.mxu0 0
        %7951 = vmatpush.bf16.msra.mxu0 %v940
        %7952 = vmatmul.bf16.gmra.mxu0 %v7799
        %v7953 = vpop.f32.mrf.mxu0
        %v7954 = vadd.f32 %v7941, %v7953
        %v7955 = vpop.f32.mrf.mxu0
        %7956 = vdwg.mxu0
        %7957 = vmatpush.bf16.msra.mxu0 %v805
        %7958 = vmatpush.bf16.msra.mxu0 %v793
        %7959 = vmatpush.bf16.msra.mxu0 %v781
        %7960 = vmatpush.bf16.msra.mxu0 %v769
        %7961 = vmatpush.bf16.msra.mxu0 %v757
        %7962 = vmatpush.bf16.msra.mxu0 %v745
        %7963 = vmatpush.bf16.msra.mxu0 %v733
        %7964 = vmatpush.bf16.msra.mxu0 %v721
        %7965 = vmatmul.bf16.gmra.mxu0 %v7796
        %v7966 = vpop.f32.mrf.mxu0
        %v7967 = vadd.f32 0.0, %v7966
        %v7968 = vpop.f32.mrf.mxu0
        %7969 = vdwg.mxu0
        %7970 = vmatpush.bf16.msra.mxu0 0
        %7971 = vmatpush.bf16.msra.mxu0 0
        %7972 = vmatpush.bf16.msra.mxu0 0
        %7973 = vmatpush.bf16.msra.mxu0 0
        %7974 = vmatpush.bf16.msra.mxu0 0
        %7975 = vmatpush.bf16.msra.mxu0 0
        %7976 = vmatpush.bf16.msra.mxu0 0
        %7977 = vmatpush.bf16.msra.mxu0 %v943
        %7978 = vmatmul.bf16.gmra.mxu0 %v7799
        %v7979 = vpop.f32.mrf.mxu0
        %v7980 = vadd.f32 %v7967, %v7979
        %v7981 = vpop.f32.mrf.mxu0
        %7982 = vdwg.mxu0
        %7983 = vmatpush.bf16.msra.mxu0 %v806
        %7984 = vmatpush.bf16.msra.mxu0 %v794
        %7985 = vmatpush.bf16.msra.mxu0 %v782
        %7986 = vmatpush.bf16.msra.mxu0 %v770
        %7987 = vmatpush.bf16.msra.mxu0 %v758
        %7988 = vmatpush.bf16.msra.mxu0 %v746
        %7989 = vmatpush.bf16.msra.mxu0 %v734
        %7990 = vmatpush.bf16.msra.mxu0 %v722
        %7991 = vmatmul.bf16.gmra.mxu0 %v7796
        %v7992 = vpop.f32.mrf.mxu0
        %v7993 = vadd.f32 0.0, %v7992
        %v7994 = vpop.f32.mrf.mxu0
        %7995 = vdwg.mxu0
        %7996 = vmatpush.bf16.msra.mxu0 0
        %7997 = vmatpush.bf16.msra.mxu0 0
        %7998 = vmatpush.bf16.msra.mxu0 0
        %7999 = vmatpush.bf16.msra.mxu0 0
        %8000 = vmatpush.bf16.msra.mxu0 0
        %8001 = vmatpush.bf16.msra.mxu0 0
        %8002 = vmatpush.bf16.msra.mxu0 0
        %8003 = vmatpush.bf16.msra.mxu0 %v946
        %8004 = vmatmul.bf16.gmra.mxu0 %v7799
        %v8005 = vpop.f32.mrf.mxu0
        %v8006 = vadd.f32 %v7993, %v8005
        %v8007 = vpop.f32.mrf.mxu0
        %8008 = vdwg.mxu0
        %8009 = vmatpush.bf16.msra.mxu0 %v807
        %8010 = vmatpush.bf16.msra.mxu0 %v795
        %8011 = vmatpush.bf16.msra.mxu0 %v783
        %8012 = vmatpush.bf16.msra.mxu0 %v771
        %8013 = vmatpush.bf16.msra.mxu0 %v759
        %8014 = vmatpush.bf16.msra.mxu0 %v747
        %8015 = vmatpush.bf16.msra.mxu0 %v735
        %8016 = vmatpush.bf16.msra.mxu0 %v723
        %8017 = vmatmul.bf16.gmra.mxu0 %v7796
        %v8018 = vpop.f32.mrf.mxu0
        %v8019 = vadd.f32 0.0, %v8018
        %v8020 = vpop.f32.mrf.mxu0
        %8021 = vdwg.mxu0
        %8022 = vmatpush.bf16.msra.mxu0 0
        %8023 = vmatpush.bf16.msra.mxu0 0
        %8024 = vmatpush.bf16.msra.mxu0 0
        %8025 = vmatpush.bf16.msra.mxu0 0
        %8026 = vmatpush.bf16.msra.mxu0 0
        %8027 = vmatpush.bf16.msra.mxu0 0
        %8028 = vmatpush.bf16.msra.mxu0 0
        %8029 = vmatpush.bf16.msra.mxu0 %v949
        %8030 = vmatmul.bf16.gmra.mxu0 %v7799
        %v8031 = vpop.f32.mrf.mxu0
        %v8032 = vadd.f32 %v8019, %v8031
        %v8033 = vpop.f32.mrf.mxu0
        %8034 = vdwg.mxu0
        %8035 = vmatpush.bf16.msra.mxu0 %v808
        %8036 = vmatpush.bf16.msra.mxu0 %v796
        %8037 = vmatpush.bf16.msra.mxu0 %v784
        %8038 = vmatpush.bf16.msra.mxu0 %v772
        %8039 = vmatpush.bf16.msra.mxu0 %v760
        %8040 = vmatpush.bf16.msra.mxu0 %v748
        %8041 = vmatpush.bf16.msra.mxu0 %v736
        %8042 = vmatpush.bf16.msra.mxu0 %v724
        %8043 = vmatmul.bf16.gmra.mxu0 %v7796
        %v8044 = vpop.f32.mrf.mxu0
        %v8045 = vadd.f32 0.0, %v8044
        %v8046 = vpop.f32.mrf.mxu0
        %8047 = vdwg.mxu0
        %8048 = vmatpush.bf16.msra.mxu0 0
        %8049 = vmatpush.bf16.msra.mxu0 0
        %8050 = vmatpush.bf16.msra.mxu0 0
        %8051 = vmatpush.bf16.msra.mxu0 0
        %8052 = vmatpush.bf16.msra.mxu0 0
        %8053 = vmatpush.bf16.msra.mxu0 0
        %8054 = vmatpush.bf16.msra.mxu0 0
        %8055 = vmatpush.bf16.msra.mxu0 %v952
        %8056 = vmatmul.bf16.gmra.mxu0 %v7799
        %v8057 = vpop.f32.mrf.mxu0
        %v8058 = vadd.f32 %v8045, %v8057
        %v8059 = vpop.f32.mrf.mxu0
        %8060 = vdwg.mxu0
        %8061 = vmatpush.bf16.msra.mxu0 %v809
        %8062 = vmatpush.bf16.msra.mxu0 %v797
        %8063 = vmatpush.bf16.msra.mxu0 %v785
        %8064 = vmatpush.bf16.msra.mxu0 %v773
        %8065 = vmatpush.bf16.msra.mxu0 %v761
        %8066 = vmatpush.bf16.msra.mxu0 %v749
        %8067 = vmatpush.bf16.msra.mxu0 %v737
        %8068 = vmatpush.bf16.msra.mxu0 %v725
        %8069 = vmatmul.bf16.gmra.mxu0 %v7796
        %v8070 = vpop.f32.mrf.mxu0
        %v8071 = vadd.f32 0.0, %v8070
        %v8072 = vpop.f32.mrf.mxu0
        %8073 = vdwg.mxu0
        %8074 = vmatpush.bf16.msra.mxu0 0
        %8075 = vmatpush.bf16.msra.mxu0 0
        %8076 = vmatpush.bf16.msra.mxu0 0
        %8077 = vmatpush.bf16.msra.mxu0 0
        %8078 = vmatpush.bf16.msra.mxu0 0
        %8079 = vmatpush.bf16.msra.mxu0 0
        %8080 = vmatpush.bf16.msra.mxu0 0
        %8081 = vmatpush.bf16.msra.mxu0 %v955
        %8082 = vmatmul.bf16.gmra.mxu0 %v7799
        %v8083 = vpop.f32.mrf.mxu0
        %v8084 = vadd.f32 %v8071, %v8083
        %v8085 = vpop.f32.mrf.mxu0
        %8086 = vdwg.mxu0
        %8087 = vmatpush.bf16.msra.mxu0 %v810
        %8088 = vmatpush.bf16.msra.mxu0 %v798
        %8089 = vmatpush.bf16.msra.mxu0 %v786
        %8090 = vmatpush.bf16.msra.mxu0 %v774
        %8091 = vmatpush.bf16.msra.mxu0 %v762
        %8092 = vmatpush.bf16.msra.mxu0 %v750
        %8093 = vmatpush.bf16.msra.mxu0 %v738
        %8094 = vmatpush.bf16.msra.mxu0 %v726
        %8095 = vmatmul.bf16.gmra.mxu0 %v7796
        %v8096 = vpop.f32.mrf.mxu0
        %v8097 = vadd.f32 0.0, %v8096
        %v8098 = vpop.f32.mrf.mxu0
        %8099 = vdwg.mxu0
        %8100 = vmatpush.bf16.msra.mxu0 0
        %8101 = vmatpush.bf16.msra.mxu0 0
        %8102 = vmatpush.bf16.msra.mxu0 0
        %8103 = vmatpush.bf16.msra.mxu0 0
        %8104 = vmatpush.bf16.msra.mxu0 0
        %8105 = vmatpush.bf16.msra.mxu0 0
        %8106 = vmatpush.bf16.msra.mxu0 0
        %8107 = vmatpush.bf16.msra.mxu0 %v958
        %8108 = vmatmul.bf16.gmra.mxu0 %v7799
        %v8109 = vpop.f32.mrf.mxu0
        %v8110 = vadd.f32 %v8097, %v8109
        %v8111 = vpop.f32.mrf.mxu0
        %8112 = vdwg.mxu0
        %v8113 = vmax.f32 %v7824, %v7928
        %v8114 = vmax.f32 %v7850, %v7954
        %v8115 = vmax.f32 %v7876, %v7980
        %v8116 = vmax.f32 %v7902, %v8006
        %v8117 = vmax.f32 %v8113, %v8032
        %v8118 = vmax.f32 %v8114, %v8058
        %v8119 = vmax.f32 %v8115, %v8084
        %v8120 = vmax.f32 %v8116, %v8110
        %v8121 = vadd.f32 %v8117, %v1281
        %v8122 = vadd.f32 %v8118, %v1282
        %v8123 = vadd.f32 %v8119, %v1283
        %v8124 = vadd.f32 %v8120, %v1284
        %v8125 = vmax.f32 %v8121, 0.0
        %v8126 = vmax.f32 %v8122, 0.0
        %v8127 = vmax.f32 %v8123, 0.0
        %v8128 = vmax.f32 %v8124, 0.0
        %8133 = vrot.lane.b32.xlu0 %v8125, 112
        %v8134 = vpop.permute.xlu0 %8133
        %8135 = vrot.lane.b32.xlu0 %v8126, 112
        %v8136 = vpop.permute.xlu0 %8135
        %8137 = vrot.lane.b32.xlu0 %v8127, 112
        %v8138 = vpop.permute.xlu0 %8137
        %8139 = vrot.lane.b32.xlu0 %v8128, 112
        %v8140 = vpop.permute.xlu0 %8139
        %v8141 = vsel %vm1309, %v8134, %v8136
        %v8142 = vsel %vm1309, %v8136, %v8138
        %v8143 = vsel %vm1309, %v8138, %v8140
        %v8148 = vmax.f32 %v8125, %v8141
        %v8149 = vmax.f32 %v8126, %v8142
        %v8150 = vmax.f32 %v8127, %v8143
        %v8151 = vmax.f32 %v8128, %v8140
        %8152 = vrot.lane.b32.xlu0 %v8125, 96
        %v8153 = vpop.permute.xlu0 %8152
        %8154 = vrot.lane.b32.xlu0 %v8126, 96
        %v8155 = vpop.permute.xlu0 %8154
        %8156 = vrot.lane.b32.xlu0 %v8127, 96
        %v8157 = vpop.permute.xlu0 %8156
        %8158 = vrot.lane.b32.xlu0 %v8128, 96
        %v8159 = vpop.permute.xlu0 %8158
        %v8160 = vsel %vm1329, %v8153, %v8155
        %v8161 = vsel %vm1329, %v8155, %v8157
        %v8162 = vsel %vm1329, %v8157, %v8159
        %v8167 = vmax.f32 %v8148, %v8160
        %v8168 = vmax.f32 %v8149, %v8161
        %v8169 = vmax.f32 %v8150, %v8162
        %v8170 = vmax.f32 %v8151, %v8159
        %v8171 = vld [vmem:[%s3 + $0x960] sm:$0xf]
        %v8172 = vld [vmem:[%s3 + $0x964] sm:$0xf]
        %v8173 = vld [vmem:[%s3 + $0x968] sm:$0xf]
        %v8174 = vld [vmem:[%s3 + $0x96c] sm:$0xf]
        %v8175 = vld [vmem:[%s3 + $0x970] sm:$0xf]
        %v8176 = vld [vmem:[%s3 + $0x974] sm:$0xf]
        %v8177 = vld [vmem:[%s3 + $0x978] sm:$0xf]
        %v8178 = vld [vmem:[%s3 + $0x97c] sm:$0xf]
        %v8179 = vld [vmem:[%s3 + $0x980] sm:$0xf]
        %v8180 = vld [vmem:[%s3 + $0x984] sm:$0xf]
        %v8181 = vld [vmem:[%s3 + $0x988] sm:$0xf]
        %v8182 = vld [vmem:[%s3 + $0x98c] sm:$0xf]
        %v8183 = vld [vmem:[%s3 + $0x990] sm:$0xf]
        %v8184 = vld [vmem:[%s3 + $0x994] sm:$0xf]
        %v8185 = vld [vmem:[%s3 + $0x998] sm:$0xf]
        %v8186 = vld [vmem:[%s3 + $0x99c] sm:$0xf]
        %v8187 = vld [vmem:[%s3 + $0x9a0] sm:$0xf]
        %v8188 = vld [vmem:[%s3 + $0x9a4] sm:$0xf]
        %v8189 = vld [vmem:[%s3 + $0x9a8] sm:$0xf]
        %v8190 = vld [vmem:[%s3 + $0x9ac] sm:$0xf]
        %v8191 = vld [vmem:[%s3 + $0x9b0] sm:$0xf]
        %v8192 = vld [vmem:[%s3 + $0x9b4] sm:$0xf]
        %v8193 = vld [vmem:[%s3 + $0x9b8] sm:$0xf]
        %v8194 = vld [vmem:[%s3 + $0x9bc] sm:$0xf]
        %v8195 = vld [vmem:[%s3 + $0x9c0] sm:$0xf]
        %v8196 = vld [vmem:[%s3 + $0x9c4] sm:$0xf]
        %v8197 = vld [vmem:[%s3 + $0x9c8] sm:$0xf]
        %v8198 = vld [vmem:[%s3 + $0x9cc] sm:$0xf]
        %v8199 = vld [vmem:[%s3 + $0x9d0] sm:$0xf]
        %v8200 = vld [vmem:[%s3 + $0x9d4] sm:$0xf]
        %v8201 = vld [vmem:[%s3 + $0x9d8] sm:$0xf]
        %v8202 = vld [vmem:[%s3 + $0x9dc] sm:$0xf]
        %v8203 = vld [vmem:[%s3 + $0x9e0] sm:$0xf]
        %v8204 = vld [vmem:[%s3 + $0x9e4] sm:$0xf]
        %v8205 = vld [vmem:[%s3 + $0x9e8] sm:$0xf]
        %v8206 = vld [vmem:[%s3 + $0x9ec] sm:$0xf]
        %v8207 = vld [vmem:[%s3 + $0x9f0] sm:$0xf]
        %v8208 = vld [vmem:[%s3 + $0x9f4] sm:$0xf]
        %v8209 = vld [vmem:[%s3 + $0x9f8] sm:$0xf]
        %v8210 = vld [vmem:[%s3 + $0x9fc] sm:$0xf]
        %v8211 = vld [vmem:[%s3 + $0xa00] sm:$0xf]
        %v8212 = vld [vmem:[%s3 + $0xa04] sm:$0xf]
        %v8213 = vld [vmem:[%s3 + $0xa08] sm:$0xf]
        %v8214 = vld [vmem:[%s3 + $0xa0c] sm:$0xf]
        %v8215 = vld [vmem:[%s3 + $0xa10] sm:$0xf]
        %v8216 = vld [vmem:[%s3 + $0xa14] sm:$0xf]
        %v8217 = vld [vmem:[%s3 + $0xa18] sm:$0xf]
        %v8218 = vld [vmem:[%s3 + $0xa1c] sm:$0xf]
        %v8219 = vld [vmem:[%s3 + $0xa20] sm:$0xf]
        %v8220 = vld [vmem:[%s3 + $0xa24] sm:$0xf]
        %v8221 = vld [vmem:[%s3 + $0xa28] sm:$0xf]
        %v8222 = vld [vmem:[%s3 + $0xa2c] sm:$0xf]
        %v8223 = vld [vmem:[%s3 + $0xa30] sm:$0xf]
        %v8224 = vld [vmem:[%s3 + $0xa34] sm:$0xf]
        %v8225 = vld [vmem:[%s3 + $0xa38] sm:$0xf]
        %v8226 = vld [vmem:[%s3 + $0xa3c] sm:$0xf]
        %v8227 = vld [vmem:[%s3 + $0xa40] sm:$0xf]
        %v8228 = vld [vmem:[%s3 + $0xa44] sm:$0xf]
        %v8229 = vld [vmem:[%s3 + $0xa48] sm:$0xf]
        %v8230 = vld [vmem:[%s3 + $0xa4c] sm:$0xf]
        %v8231 = vpack.c.bf16 %v8167, %v8167
        %v8232 = vpack.c.bf16 %v8168, %v8168
        %v8233 = vpack.c.bf16 %v8169, %v8169
        %v8234 = vpack.c.bf16 %v8170, %v8170
        %v8295 = vunpack.c.l.b16 %v8171
        %v8296 = vunpack.c.l.b16 %v8172
        %v8297 = vunpack.c.l.b16 %v8173
        %v8298 = vunpack.c.l.b16 %v8174
        %v8299 = vunpack.c.l.b16 %v8175
        %v8300 = vunpack.c.l.b16 %v8176
        %v8301 = vunpack.c.l.b16 %v8177
        %v8302 = vunpack.c.l.b16 %v8178
        %v8303 = vunpack.c.l.b16 %v8179
        %v8304 = vunpack.c.l.b16 %v8180
        %v8305 = vunpack.c.l.b16 %v8181
        %v8306 = vunpack.c.l.b16 %v8182
        %v8307 = vunpack.c.l.b16 %v8183
        %v8308 = vunpack.c.l.b16 %v8184
        %v8309 = vunpack.c.l.b16 %v8185
        %v8310 = vunpack.c.l.b16 %v8186
        %v8311 = vunpack.c.l.b16 %v8187
        %v8312 = vunpack.c.l.b16 %v8188
        %v8313 = vunpack.c.l.b16 %v8189
        %v8314 = vunpack.c.l.b16 %v8190
        %v8315 = vunpack.c.l.b16 %v8191
        %v8316 = vunpack.c.l.b16 %v8192
        %v8317 = vunpack.c.l.b16 %v8193
        %v8318 = vunpack.c.l.b16 %v8194
        %v8319 = vunpack.c.l.b16 %v8195
        %v8320 = vunpack.c.l.b16 %v8196
        %v8321 = vunpack.c.l.b16 %v8197
        %v8322 = vunpack.c.l.b16 %v8198
        %v8323 = vunpack.c.l.b16 %v8199
        %v8324 = vunpack.c.l.b16 %v8200
        %v8325 = vunpack.c.l.b16 %v8201
        %v8326 = vunpack.c.l.b16 %v8202
        %v8327 = vunpack.c.l.b16 %v8203
        %v8328 = vunpack.c.l.b16 %v8204
        %v8329 = vunpack.c.l.b16 %v8205
        %v8330 = vunpack.c.l.b16 %v8206
        %v8331 = vunpack.c.l.b16 %v8207
        %v8332 = vunpack.c.l.b16 %v8208
        %v8333 = vunpack.c.l.b16 %v8209
        %v8334 = vunpack.c.l.b16 %v8210
        %v8335 = vunpack.c.l.b16 %v8211
        %v8336 = vunpack.c.l.b16 %v8212
        %v8337 = vunpack.c.l.b16 %v8213
        %v8338 = vunpack.c.l.b16 %v8214
        %v8339 = vunpack.c.l.b16 %v8215
        %v8340 = vunpack.c.l.b16 %v8216
        %v8341 = vunpack.c.l.b16 %v8217
        %v8342 = vunpack.c.l.b16 %v8218
        %v8343 = vunpack.c.l.b16 %v8219
        %v8344 = vunpack.c.l.b16 %v8220
        %v8345 = vunpack.c.l.b16 %v8221
        %v8346 = vunpack.c.l.b16 %v8222
        %v8347 = vunpack.c.l.b16 %v8223
        %v8348 = vunpack.c.l.b16 %v8224
        %v8349 = vunpack.c.l.b16 %v8225
        %v8350 = vunpack.c.l.b16 %v8226
        %v8351 = vunpack.c.l.b16 %v8227
        %v8352 = vunpack.c.l.b16 %v8228
        %v8353 = vunpack.c.l.b16 %v8229
        %v8354 = vunpack.c.l.b16 %v8230
        %v8355 = vpack.c.b16 %v8296, %v8295
        %v8356 = vpack.c.b16 %v8298, %v8297
        %v8357 = vpack.c.b16 %v8300, %v8299
        %v8358 = vpack.c.b16 %v8302, %v8301
        %v8359 = vpack.c.b16 %v8304, %v8303
        %v8360 = vpack.c.b16 %v8306, %v8305
        %v8361 = vpack.c.b16 %v8308, %v8307
        %v8362 = vpack.c.b16 %v8310, %v8309
        %v8363 = vpack.c.b16 %v8312, %v8311
        %v8364 = vpack.c.b16 %v8314, %v8313
        %v8365 = vpack.c.b16 %v8316, %v8315
        %v8366 = vpack.c.b16 %v8318, %v8317
        %v8367 = vpack.c.b16 %v8320, %v8319
        %v8368 = vpack.c.b16 %v8322, %v8321
        %v8369 = vpack.c.b16 %v8324, %v8323
        %v8370 = vpack.c.b16 %v8326, %v8325
        %v8371 = vpack.c.b16 %v8328, %v8327
        %v8372 = vpack.c.b16 %v8330, %v8329
        %v8373 = vpack.c.b16 %v8332, %v8331
        %v8374 = vpack.c.b16 %v8334, %v8333
        %v8375 = vpack.c.b16 %v8336, %v8335
        %v8376 = vpack.c.b16 %v8338, %v8337
        %v8377 = vpack.c.b16 %v8340, %v8339
        %v8378 = vpack.c.b16 %v8342, %v8341
        %v8379 = vpack.c.b16 %v8344, %v8343
        %v8380 = vpack.c.b16 %v8346, %v8345
        %v8381 = vpack.c.b16 %v8348, %v8347
        %v8382 = vpack.c.b16 %v8350, %v8349
        %v8383 = vpack.c.b16 %v8352, %v8351
        %v8384 = vpack.c.b16 %v8354, %v8353
        %v8416 = vsel %vm1329, %v8234, 0
        %8418 = vmatpush.bf16.msra.mxu0 %v8362
        %8419 = vmatpush.bf16.msra.mxu0 %v8361
        %8420 = vmatpush.bf16.msra.mxu0 %v8360
        %8421 = vmatpush.bf16.msra.mxu0 %v8359
        %8422 = vmatpush.bf16.msra.mxu0 %v8358
        %8423 = vmatpush.bf16.msra.mxu0 %v8357
        %8424 = vmatpush.bf16.msra.mxu0 %v8356
        %8425 = vmatpush.bf16.msra.mxu0 %v8355
        %8426 = vmatmul.bf16.gmra.mxu0 %v8231
        %v8427 = vpop.f32.mrf.mxu0
        %v8428 = vadd.f32 0.0, %v8427
        %v8429 = vpop.f32.mrf.mxu0
        %8430 = vdwg.mxu0
        %8431 = vmatpush.bf16.msra.mxu0 %v8370
        %8432 = vmatpush.bf16.msra.mxu0 %v8369
        %8433 = vmatpush.bf16.msra.mxu0 %v8368
        %8434 = vmatpush.bf16.msra.mxu0 %v8367
        %8435 = vmatpush.bf16.msra.mxu0 %v8366
        %8436 = vmatpush.bf16.msra.mxu0 %v8365
        %8437 = vmatpush.bf16.msra.mxu0 %v8364
        %8438 = vmatpush.bf16.msra.mxu0 %v8363
        %8439 = vmatmul.bf16.gmra.mxu0 %v8232
        %v8440 = vpop.f32.mrf.mxu0
        %v8441 = vadd.f32 %v8428, %v8440
        %v8442 = vpop.f32.mrf.mxu0
        %8443 = vdwg.mxu0
        %8444 = vmatpush.bf16.msra.mxu0 %v8378
        %8445 = vmatpush.bf16.msra.mxu0 %v8377
        %8446 = vmatpush.bf16.msra.mxu0 %v8376
        %8447 = vmatpush.bf16.msra.mxu0 %v8375
        %8448 = vmatpush.bf16.msra.mxu0 %v8374
        %8449 = vmatpush.bf16.msra.mxu0 %v8373
        %8450 = vmatpush.bf16.msra.mxu0 %v8372
        %8451 = vmatpush.bf16.msra.mxu0 %v8371
        %8452 = vmatmul.bf16.gmra.mxu0 %v8233
        %v8453 = vpop.f32.mrf.mxu0
        %v8454 = vadd.f32 %v8441, %v8453
        %v8455 = vpop.f32.mrf.mxu0
        %8456 = vdwg.mxu0
        %8457 = vmatpush.bf16.msra.mxu0 0
        %8458 = vmatpush.bf16.msra.mxu0 0
        %8459 = vmatpush.bf16.msra.mxu0 %v8384
        %8460 = vmatpush.bf16.msra.mxu0 %v8383
        %8461 = vmatpush.bf16.msra.mxu0 %v8382
        %8462 = vmatpush.bf16.msra.mxu0 %v8381
        %8463 = vmatpush.bf16.msra.mxu0 %v8380
        %8464 = vmatpush.bf16.msra.mxu0 %v8379
        %8465 = vmatmul.bf16.gmra.mxu0 %v8416
        %v8466 = vpop.f32.mrf.mxu0
        %v8467 = vadd.f32 %v8454, %v8466
        %v8468 = vpop.f32.mrf.mxu0
        %8469 = vdwg.mxu0
        %v8470 = vadd.f32 %v7790, %v8467
        %8471 = vrot.lane.b32.xlu0 %v7103, 24
        %v8472 = vpop.permute.xlu0 %8471
        %8473 = vrot.lane.b32.xlu0 %v7104, 24
        %v8474 = vpop.permute.xlu0 %8473
        %vm8475 = vcmask 195584
        %v8476 = vsel %vm8475, %v8472, %v8474
        %v8479 = vsel %vm919, %v8474, 0
        %8481 = vmatpush.bf16.msra.mxu0 %v799
        %8482 = vmatpush.bf16.msra.mxu0 %v787
        %8483 = vmatpush.bf16.msra.mxu0 %v775
        %8484 = vmatpush.bf16.msra.mxu0 %v763
        %8485 = vmatpush.bf16.msra.mxu0 %v751
        %8486 = vmatpush.bf16.msra.mxu0 %v739
        %8487 = vmatpush.bf16.msra.mxu0 %v727
        %8488 = vmatpush.bf16.msra.mxu0 %v715
        %8489 = vmatmul.bf16.gmra.mxu0 %v8476
        %v8490 = vpop.f32.mrf.mxu0
        %v8491 = vadd.f32 0.0, %v8490
        %v8492 = vpop.f32.mrf.mxu0
        %8493 = vdwg.mxu0
        %8494 = vmatpush.bf16.msra.mxu0 0
        %8495 = vmatpush.bf16.msra.mxu0 0
        %8496 = vmatpush.bf16.msra.mxu0 0
        %8497 = vmatpush.bf16.msra.mxu0 0
        %8498 = vmatpush.bf16.msra.mxu0 0
        %8499 = vmatpush.bf16.msra.mxu0 0
        %8500 = vmatpush.bf16.msra.mxu0 0
        %8501 = vmatpush.bf16.msra.mxu0 %v925
        %8502 = vmatmul.bf16.gmra.mxu0 %v8479
        %v8503 = vpop.f32.mrf.mxu0
        %v8504 = vadd.f32 %v8491, %v8503
        %v8505 = vpop.f32.mrf.mxu0
        %8506 = vdwg.mxu0
        %8507 = vmatpush.bf16.msra.mxu0 %v800
        %8508 = vmatpush.bf16.msra.mxu0 %v788
        %8509 = vmatpush.bf16.msra.mxu0 %v776
        %8510 = vmatpush.bf16.msra.mxu0 %v764
        %8511 = vmatpush.bf16.msra.mxu0 %v752
        %8512 = vmatpush.bf16.msra.mxu0 %v740
        %8513 = vmatpush.bf16.msra.mxu0 %v728
        %8514 = vmatpush.bf16.msra.mxu0 %v716
        %8515 = vmatmul.bf16.gmra.mxu0 %v8476
        %v8516 = vpop.f32.mrf.mxu0
        %v8517 = vadd.f32 0.0, %v8516
        %v8518 = vpop.f32.mrf.mxu0
        %8519 = vdwg.mxu0
        %8520 = vmatpush.bf16.msra.mxu0 0
        %8521 = vmatpush.bf16.msra.mxu0 0
        %8522 = vmatpush.bf16.msra.mxu0 0
        %8523 = vmatpush.bf16.msra.mxu0 0
        %8524 = vmatpush.bf16.msra.mxu0 0
        %8525 = vmatpush.bf16.msra.mxu0 0
        %8526 = vmatpush.bf16.msra.mxu0 0
        %8527 = vmatpush.bf16.msra.mxu0 %v928
        %8528 = vmatmul.bf16.gmra.mxu0 %v8479
        %v8529 = vpop.f32.mrf.mxu0
        %v8530 = vadd.f32 %v8517, %v8529
        %v8531 = vpop.f32.mrf.mxu0
        %8532 = vdwg.mxu0
        %8533 = vmatpush.bf16.msra.mxu0 %v801
        %8534 = vmatpush.bf16.msra.mxu0 %v789
        %8535 = vmatpush.bf16.msra.mxu0 %v777
        %8536 = vmatpush.bf16.msra.mxu0 %v765
        %8537 = vmatpush.bf16.msra.mxu0 %v753
        %8538 = vmatpush.bf16.msra.mxu0 %v741
        %8539 = vmatpush.bf16.msra.mxu0 %v729
        %8540 = vmatpush.bf16.msra.mxu0 %v717
        %8541 = vmatmul.bf16.gmra.mxu0 %v8476
        %v8542 = vpop.f32.mrf.mxu0
        %v8543 = vadd.f32 0.0, %v8542
        %v8544 = vpop.f32.mrf.mxu0
        %8545 = vdwg.mxu0
        %8546 = vmatpush.bf16.msra.mxu0 0
        %8547 = vmatpush.bf16.msra.mxu0 0
        %8548 = vmatpush.bf16.msra.mxu0 0
        %8549 = vmatpush.bf16.msra.mxu0 0
        %8550 = vmatpush.bf16.msra.mxu0 0
        %8551 = vmatpush.bf16.msra.mxu0 0
        %8552 = vmatpush.bf16.msra.mxu0 0
        %8553 = vmatpush.bf16.msra.mxu0 %v931
        %8554 = vmatmul.bf16.gmra.mxu0 %v8479
        %v8555 = vpop.f32.mrf.mxu0
        %v8556 = vadd.f32 %v8543, %v8555
        %v8557 = vpop.f32.mrf.mxu0
        %8558 = vdwg.mxu0
        %8559 = vmatpush.bf16.msra.mxu0 %v802
        %8560 = vmatpush.bf16.msra.mxu0 %v790
        %8561 = vmatpush.bf16.msra.mxu0 %v778
        %8562 = vmatpush.bf16.msra.mxu0 %v766
        %8563 = vmatpush.bf16.msra.mxu0 %v754
        %8564 = vmatpush.bf16.msra.mxu0 %v742
        %8565 = vmatpush.bf16.msra.mxu0 %v730
        %8566 = vmatpush.bf16.msra.mxu0 %v718
        %8567 = vmatmul.bf16.gmra.mxu0 %v8476
        %v8568 = vpop.f32.mrf.mxu0
        %v8569 = vadd.f32 0.0, %v8568
        %v8570 = vpop.f32.mrf.mxu0
        %8571 = vdwg.mxu0
        %8572 = vmatpush.bf16.msra.mxu0 0
        %8573 = vmatpush.bf16.msra.mxu0 0
        %8574 = vmatpush.bf16.msra.mxu0 0
        %8575 = vmatpush.bf16.msra.mxu0 0
        %8576 = vmatpush.bf16.msra.mxu0 0
        %8577 = vmatpush.bf16.msra.mxu0 0
        %8578 = vmatpush.bf16.msra.mxu0 0
        %8579 = vmatpush.bf16.msra.mxu0 %v934
        %8580 = vmatmul.bf16.gmra.mxu0 %v8479
        %v8581 = vpop.f32.mrf.mxu0
        %v8582 = vadd.f32 %v8569, %v8581
        %v8583 = vpop.f32.mrf.mxu0
        %8584 = vdwg.mxu0
        %8585 = vmatpush.bf16.msra.mxu0 %v803
        %8586 = vmatpush.bf16.msra.mxu0 %v791
        %8587 = vmatpush.bf16.msra.mxu0 %v779
        %8588 = vmatpush.bf16.msra.mxu0 %v767
        %8589 = vmatpush.bf16.msra.mxu0 %v755
        %8590 = vmatpush.bf16.msra.mxu0 %v743
        %8591 = vmatpush.bf16.msra.mxu0 %v731
        %8592 = vmatpush.bf16.msra.mxu0 %v719
        %8593 = vmatmul.bf16.gmra.mxu0 %v8476
        %v8594 = vpop.f32.mrf.mxu0
        %v8595 = vadd.f32 0.0, %v8594
        %v8596 = vpop.f32.mrf.mxu0
        %8597 = vdwg.mxu0
        %8598 = vmatpush.bf16.msra.mxu0 0
        %8599 = vmatpush.bf16.msra.mxu0 0
        %8600 = vmatpush.bf16.msra.mxu0 0
        %8601 = vmatpush.bf16.msra.mxu0 0
        %8602 = vmatpush.bf16.msra.mxu0 0
        %8603 = vmatpush.bf16.msra.mxu0 0
        %8604 = vmatpush.bf16.msra.mxu0 0
        %8605 = vmatpush.bf16.msra.mxu0 %v937
        %8606 = vmatmul.bf16.gmra.mxu0 %v8479
        %v8607 = vpop.f32.mrf.mxu0
        %v8608 = vadd.f32 %v8595, %v8607
        %v8609 = vpop.f32.mrf.mxu0
        %8610 = vdwg.mxu0
        %8611 = vmatpush.bf16.msra.mxu0 %v804
        %8612 = vmatpush.bf16.msra.mxu0 %v792
        %8613 = vmatpush.bf16.msra.mxu0 %v780
        %8614 = vmatpush.bf16.msra.mxu0 %v768
        %8615 = vmatpush.bf16.msra.mxu0 %v756
        %8616 = vmatpush.bf16.msra.mxu0 %v744
        %8617 = vmatpush.bf16.msra.mxu0 %v732
        %8618 = vmatpush.bf16.msra.mxu0 %v720
        %8619 = vmatmul.bf16.gmra.mxu0 %v8476
        %v8620 = vpop.f32.mrf.mxu0
        %v8621 = vadd.f32 0.0, %v8620
        %v8622 = vpop.f32.mrf.mxu0
        %8623 = vdwg.mxu0
        %8624 = vmatpush.bf16.msra.mxu0 0
        %8625 = vmatpush.bf16.msra.mxu0 0
        %8626 = vmatpush.bf16.msra.mxu0 0
        %8627 = vmatpush.bf16.msra.mxu0 0
        %8628 = vmatpush.bf16.msra.mxu0 0
        %8629 = vmatpush.bf16.msra.mxu0 0
        %8630 = vmatpush.bf16.msra.mxu0 0
        %8631 = vmatpush.bf16.msra.mxu0 %v940
        %8632 = vmatmul.bf16.gmra.mxu0 %v8479
        %v8633 = vpop.f32.mrf.mxu0
        %v8634 = vadd.f32 %v8621, %v8633
        %v8635 = vpop.f32.mrf.mxu0
        %8636 = vdwg.mxu0
        %8637 = vmatpush.bf16.msra.mxu0 %v805
        %8638 = vmatpush.bf16.msra.mxu0 %v793
        %8639 = vmatpush.bf16.msra.mxu0 %v781
        %8640 = vmatpush.bf16.msra.mxu0 %v769
        %8641 = vmatpush.bf16.msra.mxu0 %v757
        %8642 = vmatpush.bf16.msra.mxu0 %v745
        %8643 = vmatpush.bf16.msra.mxu0 %v733
        %8644 = vmatpush.bf16.msra.mxu0 %v721
        %8645 = vmatmul.bf16.gmra.mxu0 %v8476
        %v8646 = vpop.f32.mrf.mxu0
        %v8647 = vadd.f32 0.0, %v8646
        %v8648 = vpop.f32.mrf.mxu0
        %8649 = vdwg.mxu0
        %8650 = vmatpush.bf16.msra.mxu0 0
        %8651 = vmatpush.bf16.msra.mxu0 0
        %8652 = vmatpush.bf16.msra.mxu0 0
        %8653 = vmatpush.bf16.msra.mxu0 0
        %8654 = vmatpush.bf16.msra.mxu0 0
        %8655 = vmatpush.bf16.msra.mxu0 0
        %8656 = vmatpush.bf16.msra.mxu0 0
        %8657 = vmatpush.bf16.msra.mxu0 %v943
        %8658 = vmatmul.bf16.gmra.mxu0 %v8479
        %v8659 = vpop.f32.mrf.mxu0
        %v8660 = vadd.f32 %v8647, %v8659
        %v8661 = vpop.f32.mrf.mxu0
        %8662 = vdwg.mxu0
        %8663 = vmatpush.bf16.msra.mxu0 %v806
        %8664 = vmatpush.bf16.msra.mxu0 %v794
        %8665 = vmatpush.bf16.msra.mxu0 %v782
        %8666 = vmatpush.bf16.msra.mxu0 %v770
        %8667 = vmatpush.bf16.msra.mxu0 %v758
        %8668 = vmatpush.bf16.msra.mxu0 %v746
        %8669 = vmatpush.bf16.msra.mxu0 %v734
        %8670 = vmatpush.bf16.msra.mxu0 %v722
        %8671 = vmatmul.bf16.gmra.mxu0 %v8476
        %v8672 = vpop.f32.mrf.mxu0
        %v8673 = vadd.f32 0.0, %v8672
        %v8674 = vpop.f32.mrf.mxu0
        %8675 = vdwg.mxu0
        %8676 = vmatpush.bf16.msra.mxu0 0
        %8677 = vmatpush.bf16.msra.mxu0 0
        %8678 = vmatpush.bf16.msra.mxu0 0
        %8679 = vmatpush.bf16.msra.mxu0 0
        %8680 = vmatpush.bf16.msra.mxu0 0
        %8681 = vmatpush.bf16.msra.mxu0 0
        %8682 = vmatpush.bf16.msra.mxu0 0
        %8683 = vmatpush.bf16.msra.mxu0 %v946
        %8684 = vmatmul.bf16.gmra.mxu0 %v8479
        %v8685 = vpop.f32.mrf.mxu0
        %v8686 = vadd.f32 %v8673, %v8685
        %v8687 = vpop.f32.mrf.mxu0
        %8688 = vdwg.mxu0
        %8689 = vmatpush.bf16.msra.mxu0 %v807
        %8690 = vmatpush.bf16.msra.mxu0 %v795
        %8691 = vmatpush.bf16.msra.mxu0 %v783
        %8692 = vmatpush.bf16.msra.mxu0 %v771
        %8693 = vmatpush.bf16.msra.mxu0 %v759
        %8694 = vmatpush.bf16.msra.mxu0 %v747
        %8695 = vmatpush.bf16.msra.mxu0 %v735
        %8696 = vmatpush.bf16.msra.mxu0 %v723
        %8697 = vmatmul.bf16.gmra.mxu0 %v8476
        %v8698 = vpop.f32.mrf.mxu0
        %v8699 = vadd.f32 0.0, %v8698
        %v8700 = vpop.f32.mrf.mxu0
        %8701 = vdwg.mxu0
        %8702 = vmatpush.bf16.msra.mxu0 0
        %8703 = vmatpush.bf16.msra.mxu0 0
        %8704 = vmatpush.bf16.msra.mxu0 0
        %8705 = vmatpush.bf16.msra.mxu0 0
        %8706 = vmatpush.bf16.msra.mxu0 0
        %8707 = vmatpush.bf16.msra.mxu0 0
        %8708 = vmatpush.bf16.msra.mxu0 0
        %8709 = vmatpush.bf16.msra.mxu0 %v949
        %8710 = vmatmul.bf16.gmra.mxu0 %v8479
        %v8711 = vpop.f32.mrf.mxu0
        %v8712 = vadd.f32 %v8699, %v8711
        %v8713 = vpop.f32.mrf.mxu0
        %8714 = vdwg.mxu0
        %8715 = vmatpush.bf16.msra.mxu0 %v808
        %8716 = vmatpush.bf16.msra.mxu0 %v796
        %8717 = vmatpush.bf16.msra.mxu0 %v784
        %8718 = vmatpush.bf16.msra.mxu0 %v772
        %8719 = vmatpush.bf16.msra.mxu0 %v760
        %8720 = vmatpush.bf16.msra.mxu0 %v748
        %8721 = vmatpush.bf16.msra.mxu0 %v736
        %8722 = vmatpush.bf16.msra.mxu0 %v724
        %8723 = vmatmul.bf16.gmra.mxu0 %v8476
        %v8724 = vpop.f32.mrf.mxu0
        %v8725 = vadd.f32 0.0, %v8724
        %v8726 = vpop.f32.mrf.mxu0
        %8727 = vdwg.mxu0
        %8728 = vmatpush.bf16.msra.mxu0 0
        %8729 = vmatpush.bf16.msra.mxu0 0
        %8730 = vmatpush.bf16.msra.mxu0 0
        %8731 = vmatpush.bf16.msra.mxu0 0
        %8732 = vmatpush.bf16.msra.mxu0 0
        %8733 = vmatpush.bf16.msra.mxu0 0
        %8734 = vmatpush.bf16.msra.mxu0 0
        %8735 = vmatpush.bf16.msra.mxu0 %v952
        %8736 = vmatmul.bf16.gmra.mxu0 %v8479
        %v8737 = vpop.f32.mrf.mxu0
        %v8738 = vadd.f32 %v8725, %v8737
        %v8739 = vpop.f32.mrf.mxu0
        %8740 = vdwg.mxu0
        %8741 = vmatpush.bf16.msra.mxu0 %v809
        %8742 = vmatpush.bf16.msra.mxu0 %v797
        %8743 = vmatpush.bf16.msra.mxu0 %v785
        %8744 = vmatpush.bf16.msra.mxu0 %v773
        %8745 = vmatpush.bf16.msra.mxu0 %v761
        %8746 = vmatpush.bf16.msra.mxu0 %v749
        %8747 = vmatpush.bf16.msra.mxu0 %v737
        %8748 = vmatpush.bf16.msra.mxu0 %v725
        %8749 = vmatmul.bf16.gmra.mxu0 %v8476
        %v8750 = vpop.f32.mrf.mxu0
        %v8751 = vadd.f32 0.0, %v8750
        %v8752 = vpop.f32.mrf.mxu0
        %8753 = vdwg.mxu0
        %8754 = vmatpush.bf16.msra.mxu0 0
        %8755 = vmatpush.bf16.msra.mxu0 0
        %8756 = vmatpush.bf16.msra.mxu0 0
        %8757 = vmatpush.bf16.msra.mxu0 0
        %8758 = vmatpush.bf16.msra.mxu0 0
        %8759 = vmatpush.bf16.msra.mxu0 0
        %8760 = vmatpush.bf16.msra.mxu0 0
        %8761 = vmatpush.bf16.msra.mxu0 %v955
        %8762 = vmatmul.bf16.gmra.mxu0 %v8479
        %v8763 = vpop.f32.mrf.mxu0
        %v8764 = vadd.f32 %v8751, %v8763
        %v8765 = vpop.f32.mrf.mxu0
        %8766 = vdwg.mxu0
        %8767 = vmatpush.bf16.msra.mxu0 %v810
        %8768 = vmatpush.bf16.msra.mxu0 %v798
        %8769 = vmatpush.bf16.msra.mxu0 %v786
        %8770 = vmatpush.bf16.msra.mxu0 %v774
        %8771 = vmatpush.bf16.msra.mxu0 %v762
        %8772 = vmatpush.bf16.msra.mxu0 %v750
        %8773 = vmatpush.bf16.msra.mxu0 %v738
        %8774 = vmatpush.bf16.msra.mxu0 %v726
        %8775 = vmatmul.bf16.gmra.mxu0 %v8476
        %v8776 = vpop.f32.mrf.mxu0
        %v8777 = vadd.f32 0.0, %v8776
        %v8778 = vpop.f32.mrf.mxu0
        %8779 = vdwg.mxu0
        %8780 = vmatpush.bf16.msra.mxu0 0
        %8781 = vmatpush.bf16.msra.mxu0 0
        %8782 = vmatpush.bf16.msra.mxu0 0
        %8783 = vmatpush.bf16.msra.mxu0 0
        %8784 = vmatpush.bf16.msra.mxu0 0
        %8785 = vmatpush.bf16.msra.mxu0 0
        %8786 = vmatpush.bf16.msra.mxu0 0
        %8787 = vmatpush.bf16.msra.mxu0 %v958
        %8788 = vmatmul.bf16.gmra.mxu0 %v8479
        %v8789 = vpop.f32.mrf.mxu0
        %v8790 = vadd.f32 %v8777, %v8789
        %v8791 = vpop.f32.mrf.mxu0
        %8792 = vdwg.mxu0
        %v8793 = vmax.f32 %v8504, %v8608
        %v8794 = vmax.f32 %v8530, %v8634
        %v8795 = vmax.f32 %v8556, %v8660
        %v8796 = vmax.f32 %v8582, %v8686
        %v8797 = vmax.f32 %v8793, %v8712
        %v8798 = vmax.f32 %v8794, %v8738
        %v8799 = vmax.f32 %v8795, %v8764
        %v8800 = vmax.f32 %v8796, %v8790
        %v8801 = vadd.f32 %v8797, %v1281
        %v8802 = vadd.f32 %v8798, %v1282
        %v8803 = vadd.f32 %v8799, %v1283
        %v8804 = vadd.f32 %v8800, %v1284
        %v8805 = vmax.f32 %v8801, 0.0
        %v8806 = vmax.f32 %v8802, 0.0
        %v8807 = vmax.f32 %v8803, 0.0
        %v8808 = vmax.f32 %v8804, 0.0
        %8813 = vrot.lane.b32.xlu0 %v8805, 112
        %v8814 = vpop.permute.xlu0 %8813
        %8815 = vrot.lane.b32.xlu0 %v8806, 112
        %v8816 = vpop.permute.xlu0 %8815
        %8817 = vrot.lane.b32.xlu0 %v8807, 112
        %v8818 = vpop.permute.xlu0 %8817
        %8819 = vrot.lane.b32.xlu0 %v8808, 112
        %v8820 = vpop.permute.xlu0 %8819
        %v8821 = vsel %vm1309, %v8814, %v8816
        %v8822 = vsel %vm1309, %v8816, %v8818
        %v8823 = vsel %vm1309, %v8818, %v8820
        %v8828 = vmax.f32 %v8805, %v8821
        %v8829 = vmax.f32 %v8806, %v8822
        %v8830 = vmax.f32 %v8807, %v8823
        %v8831 = vmax.f32 %v8808, %v8820
        %8832 = vrot.lane.b32.xlu0 %v8805, 96
        %v8833 = vpop.permute.xlu0 %8832
        %8834 = vrot.lane.b32.xlu0 %v8806, 96
        %v8835 = vpop.permute.xlu0 %8834
        %8836 = vrot.lane.b32.xlu0 %v8807, 96
        %v8837 = vpop.permute.xlu0 %8836
        %8838 = vrot.lane.b32.xlu0 %v8808, 96
        %v8839 = vpop.permute.xlu0 %8838
        %v8840 = vsel %vm1329, %v8833, %v8835
        %v8841 = vsel %vm1329, %v8835, %v8837
        %v8842 = vsel %vm1329, %v8837, %v8839
        %v8847 = vmax.f32 %v8828, %v8840
        %v8848 = vmax.f32 %v8829, %v8841
        %v8849 = vmax.f32 %v8830, %v8842
        %v8850 = vmax.f32 %v8831, %v8839
        %v8851 = vld [vmem:[%s3 + $0xa50] sm:$0xf]
        %v8852 = vld [vmem:[%s3 + $0xa54] sm:$0xf]
        %v8853 = vld [vmem:[%s3 + $0xa58] sm:$0xf]
        %v8854 = vld [vmem:[%s3 + $0xa5c] sm:$0xf]
        %v8855 = vld [vmem:[%s3 + $0xa60] sm:$0xf]
        %v8856 = vld [vmem:[%s3 + $0xa64] sm:$0xf]
        %v8857 = vld [vmem:[%s3 + $0xa68] sm:$0xf]
        %v8858 = vld [vmem:[%s3 + $0xa6c] sm:$0xf]
        %v8859 = vld [vmem:[%s3 + $0xa70] sm:$0xf]
        %v8860 = vld [vmem:[%s3 + $0xa74] sm:$0xf]
        %v8861 = vld [vmem:[%s3 + $0xa78] sm:$0xf]
        %v8862 = vld [vmem:[%s3 + $0xa7c] sm:$0xf]
        %v8863 = vld [vmem:[%s3 + $0xa80] sm:$0xf]
        %v8864 = vld [vmem:[%s3 + $0xa84] sm:$0xf]
        %v8865 = vld [vmem:[%s3 + $0xa88] sm:$0xf]
        %v8866 = vld [vmem:[%s3 + $0xa8c] sm:$0xf]
        %v8867 = vld [vmem:[%s3 + $0xa90] sm:$0xf]
        %v8868 = vld [vmem:[%s3 + $0xa94] sm:$0xf]
        %v8869 = vld [vmem:[%s3 + $0xa98] sm:$0xf]
        %v8870 = vld [vmem:[%s3 + $0xa9c] sm:$0xf]
        %v8871 = vld [vmem:[%s3 + $0xaa0] sm:$0xf]
        %v8872 = vld [vmem:[%s3 + $0xaa4] sm:$0xf]
        %v8873 = vld [vmem:[%s3 + $0xaa8] sm:$0xf]
        %v8874 = vld [vmem:[%s3 + $0xaac] sm:$0xf]
        %v8875 = vld [vmem:[%s3 + $0xab0] sm:$0xf]
        %v8876 = vld [vmem:[%s3 + $0xab4] sm:$0xf]
        %v8877 = vld [vmem:[%s3 + $0xab8] sm:$0xf]
        %v8878 = vld [vmem:[%s3 + $0xabc] sm:$0xf]
        %v8879 = vld [vmem:[%s3 + $0xac0] sm:$0xf]
        %v8880 = vld [vmem:[%s3 + $0xac4] sm:$0xf]
        %v8881 = vld [vmem:[%s3 + $0xac8] sm:$0xf]
        %v8882 = vld [vmem:[%s3 + $0xacc] sm:$0xf]
        %v8883 = vld [vmem:[%s3 + $0xad0] sm:$0xf]
        %v8884 = vld [vmem:[%s3 + $0xad4] sm:$0xf]
        %v8885 = vld [vmem:[%s3 + $0xad8] sm:$0xf]
        %v8886 = vld [vmem:[%s3 + $0xadc] sm:$0xf]
        %v8887 = vld [vmem:[%s3 + $0xae0] sm:$0xf]
        %v8888 = vld [vmem:[%s3 + $0xae4] sm:$0xf]
        %v8889 = vld [vmem:[%s3 + $0xae8] sm:$0xf]
        %v8890 = vld [vmem:[%s3 + $0xaec] sm:$0xf]
        %v8891 = vld [vmem:[%s3 + $0xaf0] sm:$0xf]
        %v8892 = vld [vmem:[%s3 + $0xaf4] sm:$0xf]
        %v8893 = vld [vmem:[%s3 + $0xaf8] sm:$0xf]
        %v8894 = vld [vmem:[%s3 + $0xafc] sm:$0xf]
        %v8895 = vld [vmem:[%s3 + $0xb00] sm:$0xf]
        %v8896 = vld [vmem:[%s3 + $0xb04] sm:$0xf]
        %v8897 = vld [vmem:[%s3 + $0xb08] sm:$0xf]
        %v8898 = vld [vmem:[%s3 + $0xb0c] sm:$0xf]
        %v8899 = vld [vmem:[%s3 + $0xb10] sm:$0xf]
        %v8900 = vld [vmem:[%s3 + $0xb14] sm:$0xf]
        %v8901 = vld [vmem:[%s3 + $0xb18] sm:$0xf]
        %v8902 = vld [vmem:[%s3 + $0xb1c] sm:$0xf]
        %v8903 = vld [vmem:[%s3 + $0xb20] sm:$0xf]
        %v8904 = vld [vmem:[%s3 + $0xb24] sm:$0xf]
        %v8905 = vld [vmem:[%s3 + $0xb28] sm:$0xf]
        %v8906 = vld [vmem:[%s3 + $0xb2c] sm:$0xf]
        %v8907 = vld [vmem:[%s3 + $0xb30] sm:$0xf]
        %v8908 = vld [vmem:[%s3 + $0xb34] sm:$0xf]
        %v8909 = vld [vmem:[%s3 + $0xb38] sm:$0xf]
        %v8910 = vld [vmem:[%s3 + $0xb3c] sm:$0xf]
        %v8911 = vpack.c.bf16 %v8847, %v8847
        %v8912 = vpack.c.bf16 %v8848, %v8848
        %v8913 = vpack.c.bf16 %v8849, %v8849
        %v8914 = vpack.c.bf16 %v8850, %v8850
        %v8975 = vunpack.c.l.b16 %v8851
        %v8976 = vunpack.c.l.b16 %v8852
        %v8977 = vunpack.c.l.b16 %v8853
        %v8978 = vunpack.c.l.b16 %v8854
        %v8979 = vunpack.c.l.b16 %v8855
        %v8980 = vunpack.c.l.b16 %v8856
        %v8981 = vunpack.c.l.b16 %v8857
        %v8982 = vunpack.c.l.b16 %v8858
        %v8983 = vunpack.c.l.b16 %v8859
        %v8984 = vunpack.c.l.b16 %v8860
        %v8985 = vunpack.c.l.b16 %v8861
        %v8986 = vunpack.c.l.b16 %v8862
        %v8987 = vunpack.c.l.b16 %v8863
        %v8988 = vunpack.c.l.b16 %v8864
        %v8989 = vunpack.c.l.b16 %v8865
        %v8990 = vunpack.c.l.b16 %v8866
        %v8991 = vunpack.c.l.b16 %v8867
        %v8992 = vunpack.c.l.b16 %v8868
        %v8993 = vunpack.c.l.b16 %v8869
        %v8994 = vunpack.c.l.b16 %v8870
        %v8995 = vunpack.c.l.b16 %v8871
        %v8996 = vunpack.c.l.b16 %v8872
        %v8997 = vunpack.c.l.b16 %v8873
        %v8998 = vunpack.c.l.b16 %v8874
        %v8999 = vunpack.c.l.b16 %v8875
        %v9000 = vunpack.c.l.b16 %v8876
        %v9001 = vunpack.c.l.b16 %v8877
        %v9002 = vunpack.c.l.b16 %v8878
        %v9003 = vunpack.c.l.b16 %v8879
        %v9004 = vunpack.c.l.b16 %v8880
        %v9005 = vunpack.c.l.b16 %v8881
        %v9006 = vunpack.c.l.b16 %v8882
        %v9007 = vunpack.c.l.b16 %v8883
        %v9008 = vunpack.c.l.b16 %v8884
        %v9009 = vunpack.c.l.b16 %v8885
        %v9010 = vunpack.c.l.b16 %v8886
        %v9011 = vunpack.c.l.b16 %v8887
        %v9012 = vunpack.c.l.b16 %v8888
        %v9013 = vunpack.c.l.b16 %v8889
        %v9014 = vunpack.c.l.b16 %v8890
        %v9015 = vunpack.c.l.b16 %v8891
        %v9016 = vunpack.c.l.b16 %v8892
        %v9017 = vunpack.c.l.b16 %v8893
        %v9018 = vunpack.c.l.b16 %v8894
        %v9019 = vunpack.c.l.b16 %v8895
        %v9020 = vunpack.c.l.b16 %v8896
        %v9021 = vunpack.c.l.b16 %v8897
        %v9022 = vunpack.c.l.b16 %v8898
        %v9023 = vunpack.c.l.b16 %v8899
        %v9024 = vunpack.c.l.b16 %v8900
        %v9025 = vunpack.c.l.b16 %v8901
        %v9026 = vunpack.c.l.b16 %v8902
        %v9027 = vunpack.c.l.b16 %v8903
        %v9028 = vunpack.c.l.b16 %v8904
        %v9029 = vunpack.c.l.b16 %v8905
        %v9030 = vunpack.c.l.b16 %v8906
        %v9031 = vunpack.c.l.b16 %v8907
        %v9032 = vunpack.c.l.b16 %v8908
        %v9033 = vunpack.c.l.b16 %v8909
        %v9034 = vunpack.c.l.b16 %v8910
        %v9035 = vpack.c.b16 %v8976, %v8975
        %v9036 = vpack.c.b16 %v8978, %v8977
        %v9037 = vpack.c.b16 %v8980, %v8979
        %v9038 = vpack.c.b16 %v8982, %v8981
        %v9039 = vpack.c.b16 %v8984, %v8983
        %v9040 = vpack.c.b16 %v8986, %v8985
        %v9041 = vpack.c.b16 %v8988, %v8987
        %v9042 = vpack.c.b16 %v8990, %v8989
        %v9043 = vpack.c.b16 %v8992, %v8991
        %v9044 = vpack.c.b16 %v8994, %v8993
        %v9045 = vpack.c.b16 %v8996, %v8995
        %v9046 = vpack.c.b16 %v8998, %v8997
        %v9047 = vpack.c.b16 %v9000, %v8999
        %v9048 = vpack.c.b16 %v9002, %v9001
        %v9049 = vpack.c.b16 %v9004, %v9003
        %v9050 = vpack.c.b16 %v9006, %v9005
        %v9051 = vpack.c.b16 %v9008, %v9007
        %v9052 = vpack.c.b16 %v9010, %v9009
        %v9053 = vpack.c.b16 %v9012, %v9011
        %v9054 = vpack.c.b16 %v9014, %v9013
        %v9055 = vpack.c.b16 %v9016, %v9015
        %v9056 = vpack.c.b16 %v9018, %v9017
        %v9057 = vpack.c.b16 %v9020, %v9019
        %v9058 = vpack.c.b16 %v9022, %v9021
        %v9059 = vpack.c.b16 %v9024, %v9023
        %v9060 = vpack.c.b16 %v9026, %v9025
        %v9061 = vpack.c.b16 %v9028, %v9027
        %v9062 = vpack.c.b16 %v9030, %v9029
        %v9063 = vpack.c.b16 %v9032, %v9031
        %v9064 = vpack.c.b16 %v9034, %v9033
        %v9096 = vsel %vm1329, %v8914, 0
        %9098 = vmatpush.bf16.msra.mxu0 %v9042
        %9099 = vmatpush.bf16.msra.mxu0 %v9041
        %9100 = vmatpush.bf16.msra.mxu0 %v9040
        %9101 = vmatpush.bf16.msra.mxu0 %v9039
        %9102 = vmatpush.bf16.msra.mxu0 %v9038
        %9103 = vmatpush.bf16.msra.mxu0 %v9037
        %9104 = vmatpush.bf16.msra.mxu0 %v9036
        %9105 = vmatpush.bf16.msra.mxu0 %v9035
        %9106 = vmatmul.bf16.gmra.mxu0 %v8911
        %v9107 = vpop.f32.mrf.mxu0
        %v9108 = vadd.f32 0.0, %v9107
        %v9109 = vpop.f32.mrf.mxu0
        %9110 = vdwg.mxu0
        %9111 = vmatpush.bf16.msra.mxu0 %v9050
        %9112 = vmatpush.bf16.msra.mxu0 %v9049
        %9113 = vmatpush.bf16.msra.mxu0 %v9048
        %9114 = vmatpush.bf16.msra.mxu0 %v9047
        %9115 = vmatpush.bf16.msra.mxu0 %v9046
        %9116 = vmatpush.bf16.msra.mxu0 %v9045
        %9117 = vmatpush.bf16.msra.mxu0 %v9044
        %9118 = vmatpush.bf16.msra.mxu0 %v9043
        %9119 = vmatmul.bf16.gmra.mxu0 %v8912
        %v9120 = vpop.f32.mrf.mxu0
        %v9121 = vadd.f32 %v9108, %v9120
        %v9122 = vpop.f32.mrf.mxu0
        %9123 = vdwg.mxu0
        %9124 = vmatpush.bf16.msra.mxu0 %v9058
        %9125 = vmatpush.bf16.msra.mxu0 %v9057
        %9126 = vmatpush.bf16.msra.mxu0 %v9056
        %9127 = vmatpush.bf16.msra.mxu0 %v9055
        %9128 = vmatpush.bf16.msra.mxu0 %v9054
        %9129 = vmatpush.bf16.msra.mxu0 %v9053
        %9130 = vmatpush.bf16.msra.mxu0 %v9052
        %9131 = vmatpush.bf16.msra.mxu0 %v9051
        %9132 = vmatmul.bf16.gmra.mxu0 %v8913
        %v9133 = vpop.f32.mrf.mxu0
        %v9134 = vadd.f32 %v9121, %v9133
        %v9135 = vpop.f32.mrf.mxu0
        %9136 = vdwg.mxu0
        %9137 = vmatpush.bf16.msra.mxu0 0
        %9138 = vmatpush.bf16.msra.mxu0 0
        %9139 = vmatpush.bf16.msra.mxu0 %v9064
        %9140 = vmatpush.bf16.msra.mxu0 %v9063
        %9141 = vmatpush.bf16.msra.mxu0 %v9062
        %9142 = vmatpush.bf16.msra.mxu0 %v9061
        %9143 = vmatpush.bf16.msra.mxu0 %v9060
        %9144 = vmatpush.bf16.msra.mxu0 %v9059
        %9145 = vmatmul.bf16.gmra.mxu0 %v9096
        %v9146 = vpop.f32.mrf.mxu0
        %v9147 = vadd.f32 %v9134, %v9146
        %v9148 = vpop.f32.mrf.mxu0
        %9149 = vdwg.mxu0
        %v9150 = vadd.f32 %v8470, %v9147
        %v9151 = vld [vmem:[%s4] sm:$0x1]
        %v9153 = vperm.slane %v9151, 0
        %v9155 = vadd.f32 %v9150, %v9153
        %v9156 = vmax.f32 %v9155, 0.0
        %v9157 = vpack.c.bf16 %v9156, %v9156
        %v9158 = vld [vmem:[%s5] sm:$0xff]
        %v9159 = vld [vmem:[%s5 + $0x8] sm:$0xff]
        %v9160 = vld [vmem:[%s5 + $0x10] sm:$0xff]
        %v9161 = vld [vmem:[%s5 + $0x18] sm:$0xff]
        %v9162 = vpack.c.bf16 %v9159, %v9158
        %v9163 = vpack.c.bf16 %v9161, %v9160
        %v9164 = vld [vmem:[%s6] sm:$0x1]
        %v9166 = vperm.slane %v9164, 0
        %vm9168 = vcmask 261120
        %v9170 = vsel %vm9168, %v9157, 0
        %9172 = vmatpush.bf16.msra.mxu0 0
        %9173 = vmatpush.bf16.msra.mxu0 0
        %9174 = vmatpush.bf16.msra.mxu0 0
        %9175 = vmatpush.bf16.msra.mxu0 0
        %9176 = vmatpush.bf16.msra.mxu0 0
        %9177 = vmatpush.bf16.msra.mxu0 0
        %9178 = vmatpush.bf16.msra.mxu0 %v9163
        %9179 = vmatpush.bf16.msra.mxu0 %v9162
        %9180 = vmatmul.bf16.gmra.mxu0 %v9170
        %v9181 = vpop.f32.mrf.mxu0
        %v9182 = vadd.f32 %v9166, %v9181
        %v9183 = vpop.f32.mrf.mxu0
        %9184 = vdwg.mxu0
        %vm9185 = vcmask 80896
        %v9186 = vsel %vm9185, %v9182, -inf
        %9187 = vmax.xlane.f32.xlu0 %v9186
        %v9188 = vpop.xlane.xlu0 %9187
        %v9189 = vsub.f32 %v9182, %v9188
        %v9190 = vmul.f32 %v9189, 1.442695
        %v9191 = vpow.pop %v9190
        %v9192 = vsel %vm9185, %v9191, 0.0
        %9193 = vadd.xlane.f32.xlu0 %v9192
        %v9194 = vpop.xlane.xlu0 %9193
        %v9195 = vlog2.pop %v9194
        %v9196 = vmul.f32 %v9195, 0.6931472
        %v9197 = vsub.f32 %v9189, %v9196
        %9198 = vst.msk [vmem:[%s271] sm:$0xff] %vm9185, %v9197
        %s9199 = sand.u32 %s181, 1
        %s9200 = scalar_lea.sflag [#allocation3], %s9199
        %s9201 = sand.u32 %s181, 1
        %s9202 = smul.addr %s9201, 8
        %s9203 = scalar_lea.vmem [#allocation2], %s9202
        // Predicated region
        $region49: #{net_forward.1} parent=47 // pred_check
          %p9204 = pneg %p191
        $region50: #{net_forward.1} parent=47 // pred_check_branch
          %9206 = sbr.rel (%p9204) target = $region52
        $region51: #{net_forward.1} parent=47 // pred_region
          %9208 = vsyncadd %s9200, 0
          %s9209 = smul.addr %s21, 8
          %s9210 = scalar_lea.hbm %s7, %s9209
          %s9212 = sshll.u32 %s9203, 4
          %s9213 = int_to_ptr.vmem [resolvable:$true] %s9212
          %s9214 = sshll.u32 %s9210, 4
          %s9215 = int_to_ptr.hbm [resolvable:$true] %s9214
          %9217 = dma.vmem_to_hbm [thread:$0]  %s9213, 128, %s9215, %s9200
        $region52: #{net_forward.1} parent=47 // pred_fallthru
          _
      $region48: #{net_forward.1} parent=5 // pred_fallthru
        _
      %p9218 = scmp.le.s32.totalorder 2, %s16
      // Predicated region
      $region53: #{net_forward.1} parent=5 // pred_check
        %p9219 = pneg %p9218
      $region54: #{net_forward.1} parent=5 // pred_check_branch
        %9221 = sbr.rel (%p9219) target = $region56
      $region55: #{net_forward.1} parent=5 // pred_region
        %s9222 = ssub.s32 %s16, 2
        // Predicated region
        $region57: #{net_forward.1} parent=55 // pred_check
          %p9223 = pneg %p197
        $region58: #{net_forward.1} parent=55 // pred_check_branch
          %9225 = sbr.rel (%p9223) target = $region60
        $region59: #{net_forward.1} parent=55 // pred_region
          %s9226 = sand.u32 %s182, 1
          %s9227 = scalar_lea.sflag [#allocation3], %s9226
          %s9228 = sand.u32 %s182, 1
          %s9229 = smul.addr %s9228, 8
          %s9230 = scalar_lea.vmem [#allocation2], %s9229
          %9232 = dma.done %s9227, 128
        $region60: #{net_forward.1} parent=55 // pred_fallthru
          _
      $region56: #{net_forward.1} parent=5 // pred_fallthru
        _
    $region6: #{net_forward.1} parent=1 // loop_footer
      %s20 = sadd.s32 1, %s16
    $region7: #{net_forward.1} parent=1 // loop_footer_branch
      %15 = sbr.rel target = $region3
    $region8: #{net_forward.1} parent=1 // loop_exit
      _
    %9233 = vsyncpa [#allocation3], 1
    %s9234 = scalar_lea.sflag [#allocation3], 1
    %9235 = vsyncpa %s9234, 1

</llo_original>
